<compile_context>
chip_gen: v6e
topology: v6e:2x2x1
jax: 0.10.0
libtpu: 0.0.40
codegen_flags: <defaults>
</compile_context>

<pallas_src>
import math

import jax
import jax.numpy as jnp
from jax.experimental import pallas as pl
from jax.experimental.pallas import tpu as pltpu

IMAGE_SIZE = 28     # MnistCgan.IMAGE_SIZE
K = 5               # conv kernel size
NEG_SLOPE = 0.01    # LeakyReLU slope


def _leaky_relu(x):
    return jnp.where(x > 0, x, NEG_SLOPE * x)


def _round_up(x, m):
    return ((x + m - 1) // m) * m


# ----------------------------- Pallas kernels ------------------------------

def conv_stack_kernel(xcat_ref, bias1_ref, w1c_ref, w2b_ref, b2_ref, feat_ref):
    """Fused conv1 + pool + LeakyReLU + conv2 + pool + LeakyReLU + flatten.

    xcat_ref : (TB, 2, 12, 140) bf16  kh-tap-concatenated image rows,
               [b, dh, ph, kh*28 + j] = image[b, 2*ph + dh + kh, j]
    bias1_ref: (TB, 384) f32          per-image conv1 bias (label-fold + b1),
               tiled every 32 lanes
    w1c_ref  : (140, 768) bf16        banded conv1 weight, cols = (dw, pw, oc)
    w2b_ref  : (5, 384, 512) bf16     banded conv2 weights, cols = (dw, ow2, oc2)
    b2_ref   : (1, 256) f32           conv2 bias tiled every 64 lanes
    feat_ref : (TB, 4, 256) bf16      pooled conv2 activations, lanes=(ow2, oc2)
    """
    xc = xcat_ref[...]                                   # (TB, 2, 12, 140)
    tb = xc.shape[0]

    # ---- conv1 as one matmul over the 5 kh taps -------------------------
    z1 = jnp.einsum('bik,kn->bin',
                    xc.reshape(tb * 2, 12, 140), w1c_ref[...],
                    preferred_element_type=jnp.float32)  # (2*TB, 12, 768)
    z1 = z1.reshape(tb, 2, 12, 768)
    z1 = jnp.maximum(z1[:, 0], z1[:, 1])                 # pool over dh (leading dim)
    z1 = jnp.maximum(z1[..., :384], z1[..., 384:])       # pool over dw (lane halves)
    # bias (constant per image/channel) and LeakyReLU commute with max-pool.
    f1 = _leaky_relu(z1 + bias1_ref[...][:, None, :]).astype(jnp.bfloat16)
    # f1: (TB, 12, 384), lanes = pw*32 + c  (row-flattened channels-last)

    # ---- conv2 as 5 row-shifted matmuls against banded weights ----------
    z2 = None
    for kh in range(K):
        part = jnp.einsum('bik,kn->bin',
                          f1[:, kh:kh + 8, :], w2b_ref[kh],
                          preferred_element_type=jnp.float32)  # (TB, 8, 512)
        z2 = part if z2 is None else z2 + part
    z2 = jnp.maximum(z2[..., :256], z2[..., 256:])        # pool over dw (lane halves)
    z2 = jnp.max(z2.reshape(tb, 4, 2, 256), axis=2)       # pool over oh pairs
    feat_ref[...] = _leaky_relu(z2 + b2_ref[...][None]).astype(feat_ref.dtype)


def mlp_kernel(x_ref, w3_ref, b3_ref, w4_ref, b4_ref, o_ref):
    """Linear(1024,1024) + LeakyReLU + Linear(1024,1).

    x_ref : (TB, 1024) bf16   compact flattened conv2 output
    w3_ref: (1024, 1024) bf16 row-permuted first Linear weight
    b3_ref: (1, 1024) f32
    w4_ref: (1, 1024) f32     second Linear weight as a row vector
    b4_ref: (1, 1) f32
    o_ref : (TB, 1) f32
    """
    h = jnp.dot(x_ref[...], w3_ref[...],
                preferred_element_type=jnp.float32) + b3_ref[...]
    h = _leaky_relu(h)
    o = jnp.sum(h * w4_ref[...], axis=-1, keepdims=True) + b4_ref[...]
    o_ref[...] = o.astype(o_ref.dtype)


# ------------------------------ call wrappers -------------------------------

def conv_stack_call(xcat, bias1, w1cat, w2big, b2row, tile_a):
    n_pad = xcat.shape[0]
    grid = (n_pad // tile_a,)
    return pl.pallas_call(
        conv_stack_kernel,
        out_shape=jax.ShapeDtypeStruct((n_pad, 4, 256), jnp.bfloat16),
        grid=grid,
        in_specs=[
            pl.BlockSpec((tile_a, 2, 12, 140), lambda i: (i, 0, 0, 0)),
            pl.BlockSpec((tile_a, 384), lambda i: (i, 0)),
            pl.BlockSpec((140, 768), lambda i: (0, 0)),        # resident weights
            pl.BlockSpec((5, 384, 512), lambda i: (0, 0, 0)),  # resident weights
            pl.BlockSpec((1, 256), lambda i: (0, 0)),          # resident bias
        ],
        out_specs=pl.BlockSpec((tile_a, 4, 256), lambda i: (i, 0, 0)),
        compiler_params=pltpu.CompilerParams(
            dimension_semantics=("parallel",),
            vmem_limit_bytes=32 * 1024 * 1024),
    )(xcat, bias1, w1cat, w2big, b2row)


def mlp_call(x, w3, b3, w4_row, b4, tile_b):
    n_pad = x.shape[0]
    grid = (n_pad // tile_b,)
    return pl.pallas_call(
        mlp_kernel,
        out_shape=jax.ShapeDtypeStruct((n_pad, 1), jnp.float32),
        grid=grid,
        in_specs=[
            pl.BlockSpec((tile_b, 1024), lambda i: (i, 0)),
            pl.BlockSpec((1024, 1024), lambda i: (0, 0)),       # resident weights
            pl.BlockSpec((1, 1024), lambda i: (0, 0)),
            pl.BlockSpec((1, 1024), lambda i: (0, 0)),
            pl.BlockSpec((1, 1), lambda i: (0, 0)),
        ],
        out_specs=pl.BlockSpec((tile_b, 1), lambda i: (i, 0)),
        compiler_params=pltpu.CompilerParams(
            dimension_semantics=("parallel",)),
    )(x, w3, b3, w4_row, b4)


# ------------------------------- JAX glue ----------------------------------

def _batch_tiling(n):
    """Pad the batch and pick row tiles for the two pallas_calls."""
    if n <= 32:
        n_pad = _round_up(n, 8)
        return n_pad, n_pad, n_pad
    n_pad = _round_up(n, 64)
    return n_pad, 32, 64


def discriminator_forward(kp, image_flat, label):
    n = image_flat.shape[0]
    n_pad, tile_a, tile_b = _batch_tiling(n)

    x = image_flat.reshape(n, IMAGE_SIZE, IMAGE_SIZE)
    if n_pad != n:
        x = jnp.pad(x, ((0, n_pad - n), (0, 0), (0, 0)))
        label = jnp.pad(label, ((0, n_pad - n), (0, 0)))
    xb = x.astype(jnp.bfloat16)

    # kh-tap / pool-row-offset prepacked conv1 LHS: (N, 2, 12, 140), ~6.7KB/img.
    slabs = []
    for dh in range(2):
        taps = [xb[:, dh + kh: dh + kh + 24: 2, :] for kh in range(K)]
        slabs.append(jnp.concatenate(taps, axis=-1))      # (N, 12, 140)
    xcat = jnp.stack(slabs, axis=1)                        # (N, 2, 12, 140)

    # Constant label planes folded into a per-image conv1 bias, tiled to 384.
    cb1 = label @ kp["w1sum"] + kp["b1"]                   # (N, 32) f32
    bias1 = jnp.tile(cb1, (1, 12))                         # (N, 384)

    feat = conv_stack_call(xcat, bias1, kp["w1cat"], kp["w2big"],
                           kp["b2row"], tile_a)            # (N, 4, 256) bf16
    flat = feat.reshape(n_pad, 1024)                       # free reshape in XLA

    out = mlp_call(flat, kp["w3p"], kp["b3"], kp["w4r"], kp["b4"], tile_b)
    return out[:n]


# ------------------------- deterministic parameters -------------------------

def _xavier_uniform(key, shape, fan_in, fan_out):
    a = math.sqrt(6.0 / (fan_in + fan_out))
    return jax.random.uniform(key, shape, jnp.float32, -a, a)


def init_params(key):
    ks = jax.random.split(key, 8)
    w1 = _xavier_uniform(ks[0], (K, K, 11, 32), 11 * K * K, 32 * K * K)   # HWIO
    b1 = jax.random.uniform(ks[1], (1, 32), jnp.float32, -0.06, 0.06)
    w2 = _xavier_uniform(ks[2], (K, K, 32, 64), 32 * K * K, 64 * K * K)   # HWIO
    b2 = jax.random.uniform(ks[3], (1, 64), jnp.float32, -0.035, 0.035)
    w3 = _xavier_uniform(ks[4], (1024, 1024), 1024, 1024)   # rows: torch (c,h,w)
    b3 = jax.random.uniform(ks[5], (1, 1024), jnp.float32, -1.0 / 32, 1.0 / 32)
    w4 = _xavier_uniform(ks[6], (1024, 1), 1024, 1)
    b4 = jax.random.uniform(ks[7], (1, 1), jnp.float32, -1.0 / 32, 1.0 / 32)
    return dict(w1=w1, b1=b1, w2=w2, b2=b2, w3=w3, b3=b3, w4=w4, b4=b4)


def pack_params(p):
    """Kernel-side parameters: banded conv weights, label-fold, permuted w3."""
    # --- conv1 banded weight (image channel only): (140, 768) ---------------
    w1img = p["w1"][:, :, 0, :]                            # (kh, kw, oc)
    j = jnp.arange(28)[:, None, None]
    dw = jnp.arange(2)[None, :, None]
    pw = jnp.arange(12)[None, None, :]
    kw = j - 2 * pw - dw                                   # (28, 2, 12)
    mask = (kw >= 0) & (kw < K)
    vals = w1img[:, jnp.clip(kw, 0, K - 1), :]             # (5, 28, 2, 12, 32)
    vals = jnp.where(mask[None, :, :, :, None], vals, 0.0)
    w1cat = vals.reshape(K * 28, 768)                      # rows = kh*28 + j

    # --- label-plane fold: per-image bias weight (10, 32) -------------------
    w1sum = p["w1"][:, :, 1:, :].sum(axis=(0, 1))

    # --- conv2 banded weights: (5, 384, 512) --------------------------------
    w_in = jnp.arange(12)[:, None, None]
    dw2 = jnp.arange(2)[None, :, None]
    ow2 = jnp.arange(4)[None, None, :]
    kw2 = w_in - 2 * ow2 - dw2                             # (12, 2, 4)
    mask2 = (kw2 >= 0) & (kw2 < K)
    vals2 = p["w2"][:, jnp.clip(kw2, 0, K - 1), :, :]      # (5, 12, 2, 4, 32, 64)
    vals2 = jnp.where(mask2[None, :, :, :, None, None], vals2, 0.0)
    w2big = vals2.transpose(0, 1, 4, 2, 3, 5).reshape(K, 384, 512)

    # --- fold the torch Flatten (c,h,w) ordering into w3's rows -------------
    # kernel flatten index = h*256 + w*64 + c ; torch index = c*16 + h*4 + w
    w3p = p["w3"].reshape(64, 4, 4, 1024).transpose(1, 2, 0, 3).reshape(1024, 1024)

    return dict(
        w1cat=w1cat.astype(jnp.bfloat16),
        w1sum=w1sum, b1=p["b1"],
        w2big=w2big.astype(jnp.bfloat16),
        b2row=jnp.tile(p["b2"], (1, 4)),                   # (1, 256)
        w3p=w3p.astype(jnp.bfloat16), b3=p["b3"],
        w4r=p["w4"].T, b4=p["b4"],
    )


# ------------------------------ pure-JAX reference ---------------------------

def reference_forward(params, image_flat, label):
    n = image_flat.shape[0]
    image = image_flat.reshape(n, 1, IMAGE_SIZE, IMAGE_SIZE)
    label_exp = jnp.broadcast_to(label[:, :, None, None],
                                 (n, 10, IMAGE_SIZE, IMAGE_SIZE))
    x = jnp.concatenate([image, label_exp], axis=1)        # (N, 11, 28, 28)

    def conv(x, w, b):
        y = jax.lax.conv_general_dilated(
            x, w, (1, 1), "VALID",
            dimension_numbers=("NCHW", "HWIO", "NCHW"))
        return y + b.reshape(1, -1, 1, 1)

    def pool(x):
        return jax.lax.reduce_window(x, -jnp.inf, jax.lax.max,
                                     (1, 1, 2, 2), (1, 1, 2, 2), "VALID")

    y = pool(_leaky_relu(conv(x, params["w1"], params["b1"])))
    y = pool(_leaky_relu(conv(y, params["w2"], params["b2"])))
    y = y.reshape(n, 1024)                                  # torch (c,h,w) order
    y = _leaky_relu(y @ params["w3"] + params["b3"])
    return y @ params["w4"] + params["b4"]


# ----------------------------------- main -----------------------------------

if __name__ == "__main__":
    key = jax.random.PRNGKey(0)
    kp_key, ki, kl = jax.random.split(key, 3)
    params = init_params(kp_key)
    kparams = pack_params(params)

    n = 2  # spatial size 28 is fixed by the architecture (Flatten(1024))
    image = jax.random.normal(ki, (n, IMAGE_SIZE * IMAGE_SIZE), jnp.float32)
    label = jax.nn.one_hot(jax.random.randint(kl, (n,), 0, 10), 10,
                           dtype=jnp.float32)

    out = jax.jit(discriminator_forward)(kparams, image, label)
    out = jax.block_until_ready(out)
    assert out.shape == (n, 1), out.shape
    assert bool(jnp.all(jnp.isfinite(out)))

    ref = jax.block_until_ready(reference_forward(params, image, label))
    # bf16 matmul operands vs f32 reference -> loose tolerance (intentional).
    assert bool(jnp.allclose(out, ref, atol=5e-2, rtol=5e-2)), (out, ref)

    print("KERNEL_OK")
</pallas_src>

<mosaic_0001>
module attributes {stable_mosaic.version = 11 : i64} {
  func.func @mlp_kernel(%arg0: i32, %arg1: memref<8x1024xbf16, #tpu.memory_space<vmem>>, %arg2: memref<1024x1024xbf16, #tpu.memory_space<vmem>>, %arg3: memref<1x1024xf32, #tpu.memory_space<vmem>>, %arg4: memref<1x1024xf32, #tpu.memory_space<vmem>>, %arg5: memref<1x1xf32, #tpu.memory_space<vmem>>, %arg6: memref<8x1xf32, #tpu.memory_space<vmem>>) attributes {dimension_semantics = [#tpu.dimension_semantics<parallel>], iteration_bounds = array<i64: 1>, scalar_prefetch = 0 : i64, scratch_operands = 0 : i64, tpu.core_type = #tpu.core_type<tc>, window_params = [{transform_indices = @transform_0, window_bounds = array<i64: 8, 1024>}, {pipeline_mode = #tpu.pipeline_mode<synchronous>, transform_indices = @transform_1, window_bounds = array<i64: 1024, 1024>}, {pipeline_mode = #tpu.pipeline_mode<synchronous>, transform_indices = @transform_2, window_bounds = array<i64: 1, 1024>}, {pipeline_mode = #tpu.pipeline_mode<synchronous>, transform_indices = @transform_3, window_bounds = array<i64: 1, 1024>}, {pipeline_mode = #tpu.pipeline_mode<synchronous>, transform_indices = @transform_4, window_bounds = array<i64: 1, 1>}, {transform_indices = @transform_5, window_bounds = array<i64: 8, 1>}]} {
    %c0 = arith.constant 0 : index
    %c0_0 = arith.constant 0 : index
    %0 = vector.load %arg1[%c0, %c0_0] : memref<8x1024xbf16, #tpu.memory_space<vmem>>, vector<8x1024xbf16>
    %c0_1 = arith.constant 0 : index
    %c0_2 = arith.constant 0 : index
    %1 = vector.load %arg2[%c0_1, %c0_2] : memref<1024x1024xbf16, #tpu.memory_space<vmem>>, vector<1024x1024xbf16>
    %cst = arith.constant dense<0.000000e+00> : vector<8x1024xf32>
    %2 = tpu.matmul %0, %1, %cst {dimension_numbers = #tpu.dot_dimension_numbers<[1], [0], [0], [1], [0, 0, 1, 1], [], []>} : vector<8x1024xbf16>, vector<1024x1024xbf16>, vector<8x1024xf32> -> vector<8x1024xf32>
    %c0_3 = arith.constant 0 : index
    %c0_4 = arith.constant 0 : index
    %3 = vector.load %arg3[%c0_3, %c0_4] : memref<1x1024xf32, #tpu.memory_space<vmem>>, vector<1x1024xf32>
    %4 = vector.broadcast %3 : vector<1x1024xf32> to vector<8x1024xf32>
    %5 = arith.addf %2, %4 : vector<8x1024xf32>
    %cst_5 = arith.constant 0.000000e+00 : f32
    %6 = vector.broadcast %cst_5 : f32 to vector<8x1024xf32>
    %7 = arith.cmpf ogt, %5, %6 : vector<8x1024xf32>
    %cst_6 = arith.constant 0.00999999977 : f32
    %8 = vector.broadcast %cst_6 : f32 to vector<8x1024xf32>
    %9 = arith.mulf %8, %5 : vector<8x1024xf32>
    %10 = arith.select %7, %5, %9 : vector<8x1024xi1>, vector<8x1024xf32>
    %c0_7 = arith.constant 0 : index
    %c0_8 = arith.constant 0 : index
    %11 = vector.load %arg4[%c0_7, %c0_8] : memref<1x1024xf32, #tpu.memory_space<vmem>>, vector<1x1024xf32>
    %12 = vector.broadcast %11 : vector<1x1024xf32> to vector<8x1024xf32>
    %13 = arith.mulf %10, %12 : vector<8x1024xf32>
    %cst_9 = arith.constant dense<0.000000e+00> : vector<8xf32>
    %14 = vector.multi_reduction <add>, %13, %cst_9 [1] : vector<8x1024xf32> to vector<8xf32>
    %15 = vector.shape_cast %14 : vector<8xf32> to vector<8x1xf32>
    %c0_10 = arith.constant 0 : index
    %c0_11 = arith.constant 0 : index
    %16 = vector.load %arg5[%c0_10, %c0_11] : memref<1x1xf32, #tpu.memory_space<vmem>>, vector<1x1xf32>
    %17 = vector.broadcast %16 : vector<1x1xf32> to vector<8x1xf32>
    %18 = arith.addf %15, %17 : vector<8x1xf32>
    %c0_12 = arith.constant 0 : index
    %c0_13 = arith.constant 0 : index
    %19 = vector.load %arg6[%c0_12, %c0_13] : memref<8x1xf32, #tpu.memory_space<vmem>>, vector<8x1xf32>
    tpu.vector_store %arg6[%c0_12, %c0_13], %18 {strides = array<i32>} : memref<8x1xf32, #tpu.memory_space<vmem>>, vector<8x1xf32>,
    return
  }
  func.func @transform_0(%arg0: i32) -> (i32, i32) {
    %c0_i32 = arith.constant 0 : i32
    %c0_i32_0 = arith.constant 0 : i32
    return %arg0, %c0_i32 : i32, i32
  }
  func.func @transform_1(%arg0: i32) -> (i32, i32) {
    %c0_i32 = arith.constant 0 : i32
    %c0_i32_0 = arith.constant 0 : i32
    %c0_i32_1 = arith.constant 0 : i32
    return %c0_i32, %c0_i32_0 : i32, i32
  }
  func.func @transform_2(%arg0: i32) -> (i32, i32) {
    %c0_i32 = arith.constant 0 : i32
    %c0_i32_0 = arith.constant 0 : i32
    %c0_i32_1 = arith.constant 0 : i32
    return %c0_i32, %c0_i32_0 : i32, i32
  }
  func.func @transform_3(%arg0: i32) -> (i32, i32) {
    %c0_i32 = arith.constant 0 : i32
    %c0_i32_0 = arith.constant 0 : i32
    %c0_i32_1 = arith.constant 0 : i32
    return %c0_i32, %c0_i32_0 : i32, i32
  }
  func.func @transform_4(%arg0: i32) -> (i32, i32) {
    %c0_i32 = arith.constant 0 : i32
    %c0_i32_0 = arith.constant 0 : i32
    %c0_i32_1 = arith.constant 0 : i32
    return %c0_i32, %c0_i32_0 : i32, i32
  }
  func.func @transform_5(%arg0: i32) -> (i32, i32) {
    %c0_i32 = arith.constant 0 : i32
    %c0_i32_0 = arith.constant 0 : i32
    return %arg0, %c0_i32 : i32, i32
  }
}

module attributes {stable_mosaic.version = 11 : i64} {
  func.func @conv_stack_kernel(%arg0: i32, %arg1: memref<8x2x12x140xbf16, #tpu.memory_space<vmem>>, %arg2: memref<8x384xf32, #tpu.memory_space<vmem>>, %arg3: memref<140x768xbf16, #tpu.memory_space<vmem>>, %arg4: memref<5x384x512xbf16, #tpu.memory_space<vmem>>, %arg5: memref<1x256xf32, #tpu.memory_space<vmem>>, %arg6: memref<8x4x256xbf16, #tpu.memory_space<vmem>>) attributes {dimension_semantics = [#tpu.dimension_semantics<parallel>], iteration_bounds = array<i64: 1>, scalar_prefetch = 0 : i64, scratch_operands = 0 : i64, tpu.core_type = #tpu.core_type<tc>, window_params = [{transform_indices = @transform_0, window_bounds = array<i64: 8, 2, 12, 140>}, {transform_indices = @transform_1, window_bounds = array<i64: 8, 384>}, {pipeline_mode = #tpu.pipeline_mode<synchronous>, transform_indices = @transform_2, window_bounds = array<i64: 140, 768>}, {pipeline_mode = #tpu.pipeline_mode<synchronous>, transform_indices = @transform_3, window_bounds = array<i64: 5, 384, 512>}, {pipeline_mode = #tpu.pipeline_mode<synchronous>, transform_indices = @transform_4, window_bounds = array<i64: 1, 256>}, {transform_indices = @transform_5, window_bounds = array<i64: 8, 4, 256>}]} {
    %c0 = arith.constant 0 : index
    %c0_0 = arith.constant 0 : index
    %c0_1 = arith.constant 0 : index
    %c0_2 = arith.constant 0 : index
    %0 = vector.load %arg1[%c0, %c0_0, %c0_1, %c0_2] : memref<8x2x12x140xbf16, #tpu.memory_space<vmem>>, vector<8x2x12x140xbf16>
    %1 = vector.shape_cast %0 : vector<8x2x12x140xbf16> to vector<16x12x140xbf16>
    %c0_3 = arith.constant 0 : index
    %c0_4 = arith.constant 0 : index
    %2 = vector.load %arg3[%c0_3, %c0_4] : memref<140x768xbf16, #tpu.memory_space<vmem>>, vector<140x768xbf16>
    "tpu.trace_start"() <{level = 10 : i32, message = "bik,kn->bin"}> : () -> ()
    %cst = arith.constant dense<0.000000e+00> : vector<16x12x768xf32>
    %3 = tpu.matmul %1, %2, %cst {dimension_numbers = #tpu.dot_dimension_numbers<[2], [0], [0, 1], [1], [0, 0, 0, 1, 1, 1], [], []>} : vector<16x12x140xbf16>, vector<140x768xbf16>, vector<16x12x768xf32> -> vector<16x12x768xf32>
    "tpu.trace_stop"() : () -> ()
    %4 = vector.shape_cast %3 : vector<16x12x768xf32> to vector<8x2x12x768xf32>
    %5 = vector.extract_strided_slice %4 {offsets = [0, 0, 0, 0], sizes = [8, 1, 12, 768], strides = [1, 1, 1, 1]} : vector<8x2x12x768xf32> to vector<8x1x12x768xf32>
    %6 = vector.shape_cast %5 : vector<8x1x12x768xf32> to vector<8x12x768xf32>
    %7 = vector.extract_strided_slice %4 {offsets = [0, 1, 0, 0], sizes = [8, 1, 12, 768], strides = [1, 1, 1, 1]} : vector<8x2x12x768xf32> to vector<8x1x12x768xf32>
    %8 = vector.shape_cast %7 : vector<8x1x12x768xf32> to vector<8x12x768xf32>
    %9 = arith.maximumf %6, %8 : vector<8x12x768xf32>
    %10 = vector.extract_strided_slice %9 {offsets = [0, 0, 0], sizes = [8, 12, 384], strides = [1, 1, 1]} : vector<8x12x768xf32> to vector<8x12x384xf32>
    %11 = vector.extract_strided_slice %9 {offsets = [0, 0, 384], sizes = [8, 12, 384], strides = [1, 1, 1]} : vector<8x12x768xf32> to vector<8x12x384xf32>
    %12 = arith.maximumf %10, %11 : vector<8x12x384xf32>
    %c0_5 = arith.constant 0 : index
    %c0_6 = arith.constant 0 : index
    %13 = vector.load %arg2[%c0_5, %c0_6] : memref<8x384xf32, #tpu.memory_space<vmem>>, vector<8x384xf32>
    %14 = vector.shape_cast %13 : vector<8x384xf32> to vector<8x1x384xf32>
    %15 = vector.broadcast %14 : vector<8x1x384xf32> to vector<8x12x384xf32>
    %16 = arith.addf %12, %15 : vector<8x12x384xf32>
    %cst_7 = arith.constant 0.000000e+00 : f32
    %17 = vector.broadcast %cst_7 : f32 to vector<8x12x384xf32>
    %18 = arith.cmpf ogt, %16, %17 : vector<8x12x384xf32>
    %cst_8 = arith.constant 0.00999999977 : f32
    %19 = vector.broadcast %cst_8 : f32 to vector<8x12x384xf32>
    %20 = arith.mulf %19, %16 : vector<8x12x384xf32>
    %21 = arith.select %18, %16, %20 : vector<8x12x384xi1>, vector<8x12x384xf32>
    %22 = arith.truncf %21 : vector<8x12x384xf32> to vector<8x12x384xbf16>
    %23 = vector.extract_strided_slice %22 {offsets = [0, 0, 0], sizes = [8, 8, 384], strides = [1, 1, 1]} : vector<8x12x384xbf16> to vector<8x8x384xbf16>
    %c0_9 = arith.constant 0 : index
    %c0_10 = arith.constant 0 : index
    %c0_11 = arith.constant 0 : index
    %24 = vector.load %arg4[%c0_9, %c0_10, %c0_11] : memref<5x384x512xbf16, #tpu.memory_space<vmem>>, vector<1x384x512xbf16>
    %25 = vector.shape_cast %24 : vector<1x384x512xbf16> to vector<384x512xbf16>
    "tpu.trace_start"() <{level = 10 : i32, message = "bik,kn->bin"}> : () -> ()
    %cst_12 = arith.constant dense<0.000000e+00> : vector<8x8x512xf32>
    %26 = tpu.matmul %23, %25, %cst_12 {dimension_numbers = #tpu.dot_dimension_numbers<[2], [0], [0, 1], [1], [0, 0, 0, 1, 1, 1], [], []>} : vector<8x8x384xbf16>, vector<384x512xbf16>, vector<8x8x512xf32> -> vector<8x8x512xf32>
    "tpu.trace_stop"() : () -> ()
    %27 = vector.extract_strided_slice %22 {offsets = [0, 1, 0], sizes = [8, 8, 384], strides = [1, 1, 1]} : vector<8x12x384xbf16> to vector<8x8x384xbf16>
    %c1 = arith.constant 1 : index
    %c0_13 = arith.constant 0 : index
    %c0_14 = arith.constant 0 : index
    %28 = vector.load %arg4[%c1, %c0_13, %c0_14] : memref<5x384x512xbf16, #tpu.memory_space<vmem>>, vector<1x384x512xbf16>
    %29 = vector.shape_cast %28 : vector<1x384x512xbf16> to vector<384x512xbf16>
    "tpu.trace_start"() <{level = 10 : i32, message = "bik,kn->bin"}> : () -> ()
    %cst_15 = arith.constant dense<0.000000e+00> : vector<8x8x512xf32>
    %30 = tpu.matmul %27, %29, %cst_15 {dimension_numbers = #tpu.dot_dimension_numbers<[2], [0], [0, 1], [1], [0, 0, 0, 1, 1, 1], [], []>} : vector<8x8x384xbf16>, vector<384x512xbf16>, vector<8x8x512xf32> -> vector<8x8x512xf32>
    "tpu.trace_stop"() : () -> ()
    %31 = arith.addf %26, %30 : vector<8x8x512xf32>
    %32 = vector.extract_strided_slice %22 {offsets = [0, 2, 0], sizes = [8, 8, 384], strides = [1, 1, 1]} : vector<8x12x384xbf16> to vector<8x8x384xbf16>
    %c2 = arith.constant 2 : index
    %c0_16 = arith.constant 0 : index
    %c0_17 = arith.constant 0 : index
    %33 = vector.load %arg4[%c2, %c0_16, %c0_17] : memref<5x384x512xbf16, #tpu.memory_space<vmem>>, vector<1x384x512xbf16>
    %34 = vector.shape_cast %33 : vector<1x384x512xbf16> to vector<384x512xbf16>
    "tpu.trace_start"() <{level = 10 : i32, message = "bik,kn->bin"}> : () -> ()
    %cst_18 = arith.constant dense<0.000000e+00> : vector<8x8x512xf32>
    %35 = tpu.matmul %32, %34, %cst_18 {dimension_numbers = #tpu.dot_dimension_numbers<[2], [0], [0, 1], [1], [0, 0, 0, 1, 1, 1], [], []>} : vector<8x8x384xbf16>, vector<384x512xbf16>, vector<8x8x512xf32> -> vector<8x8x512xf32>
    "tpu.trace_stop"() : () -> ()
    %36 = arith.addf %31, %35 : vector<8x8x512xf32>
    %37 = vector.extract_strided_slice %22 {offsets = [0, 3, 0], sizes = [8, 8, 384], strides = [1, 1, 1]} : vector<8x12x384xbf16> to vector<8x8x384xbf16>
    %c3 = arith.constant 3 : index
    %c0_19 = arith.constant 0 : index
    %c0_20 = arith.constant 0 : index
    %38 = vector.load %arg4[%c3, %c0_19, %c0_20] : memref<5x384x512xbf16, #tpu.memory_space<vmem>>, vector<1x384x512xbf16>
    %39 = vector.shape_cast %38 : vector<1x384x512xbf16> to vector<384x512xbf16>
    "tpu.trace_start"() <{level = 10 : i32, message = "bik,kn->bin"}> : () -> ()
    %cst_21 = arith.constant dense<0.000000e+00> : vector<8x8x512xf32>
    %40 = tpu.matmul %37, %39, %cst_21 {dimension_numbers = #tpu.dot_dimension_numbers<[2], [0], [0, 1], [1], [0, 0, 0, 1, 1, 1], [], []>} : vector<8x8x384xbf16>, vector<384x512xbf16>, vector<8x8x512xf32> -> vector<8x8x512xf32>
    "tpu.trace_stop"() : () -> ()
    %41 = arith.addf %36, %40 : vector<8x8x512xf32>
    %42 = vector.extract_strided_slice %22 {offsets = [0, 4, 0], sizes = [8, 8, 384], strides = [1, 1, 1]} : vector<8x12x384xbf16> to vector<8x8x384xbf16>
    %c4 = arith.constant 4 : index
    %c0_22 = arith.constant 0 : index
    %c0_23 = arith.constant 0 : index
    %43 = vector.load %arg4[%c4, %c0_22, %c0_23] : memref<5x384x512xbf16, #tpu.memory_space<vmem>>, vector<1x384x512xbf16>
    %44 = vector.shape_cast %43 : vector<1x384x512xbf16> to vector<384x512xbf16>
    "tpu.trace_start"() <{level = 10 : i32, message = "bik,kn->bin"}> : () -> ()
    %cst_24 = arith.constant dense<0.000000e+00> : vector<8x8x512xf32>
    %45 = tpu.matmul %42, %44, %cst_24 {dimension_numbers = #tpu.dot_dimension_numbers<[2], [0], [0, 1], [1], [0, 0, 0, 1, 1, 1], [], []>} : vector<8x8x384xbf16>, vector<384x512xbf16>, vector<8x8x512xf32> -> vector<8x8x512xf32>
    "tpu.trace_stop"() : () -> ()
    %46 = arith.addf %41, %45 : vector<8x8x512xf32>
    %47 = vector.extract_strided_slice %46 {offsets = [0, 0, 0], sizes = [8, 8, 256], strides = [1, 1, 1]} : vector<8x8x512xf32> to vector<8x8x256xf32>
    %48 = vector.extract_strided_slice %46 {offsets = [0, 0, 256], sizes = [8, 8, 256], strides = [1, 1, 1]} : vector<8x8x512xf32> to vector<8x8x256xf32>
    %49 = arith.maximumf %47, %48 : vector<8x8x256xf32>
    %50 = vector.shape_cast %49 : vector<8x8x256xf32> to vector<8x4x2x256xf32>
    %cst_25 = arith.constant dense<0xFF800000> : vector<8x4x256xf32>
    %51 = vector.multi_reduction <maximumf>, %50, %cst_25 [2] : vector<8x4x2x256xf32> to vector<8x4x256xf32>
    %c0_26 = arith.constant 0 : index
    %c0_27 = arith.constant 0 : index
    %52 = vector.load %arg5[%c0_26, %c0_27] : memref<1x256xf32, #tpu.memory_space<vmem>>, vector<1x256xf32>
    %53 = vector.shape_cast %52 : vector<1x256xf32> to vector<1x1x256xf32>
    %54 = vector.broadcast %53 : vector<1x1x256xf32> to vector<8x4x256xf32>
    %55 = arith.addf %51, %54 : vector<8x4x256xf32>
    %cst_28 = arith.constant 0.000000e+00 : f32
    %56 = vector.broadcast %cst_28 : f32 to vector<8x4x256xf32>
    %57 = arith.cmpf ogt, %55, %56 : vector<8x4x256xf32>
    %cst_29 = arith.constant 0.00999999977 : f32
    %58 = vector.broadcast %cst_29 : f32 to vector<8x4x256xf32>
    %59 = arith.mulf %58, %55 : vector<8x4x256xf32>
    %60 = arith.select %57, %55, %59 : vector<8x4x256xi1>, vector<8x4x256xf32>
    %61 = arith.truncf %60 : vector<8x4x256xf32> to vector<8x4x256xbf16>
    %c0_30 = arith.constant 0 : index
    %c0_31 = arith.constant 0 : index
    %c0_32 = arith.constant 0 : index
    %62 = vector.load %arg6[%c0_30, %c0_31, %c0_32] : memref<8x4x256xbf16, #tpu.memory_space<vmem>>, vector<8x4x256xbf16>
    tpu.vector_store %arg6[%c0_30, %c0_31, %c0_32], %61 {strides = array<i32>} : memref<8x4x256xbf16, #tpu.memory_space<vmem>>, vector<8x4x256xbf16>,
    return
  }
  func.func @transform_0(%arg0: i32) -> (i32, i32, i32, i32) {
    %c0_i32 = arith.constant 0 : i32
    %c0_i32_0 = arith.constant 0 : i32
    %c0_i32_1 = arith.constant 0 : i32
    %c0_i32_2 = arith.constant 0 : i32
    return %arg0, %c0_i32, %c0_i32_0, %c0_i32_1 : i32, i32, i32, i32
  }
  func.func @transform_1(%arg0: i32) -> (i32, i32) {
    %c0_i32 = arith.constant 0 : i32
    %c0_i32_0 = arith.constant 0 : i32
    return %arg0, %c0_i32 : i32, i32
  }
  func.func @transform_2(%arg0: i32) -> (i32, i32) {
    %c0_i32 = arith.constant 0 : i32
    %c0_i32_0 = arith.constant 0 : i32
    %c0_i32_1 = arith.constant 0 : i32
    return %c0_i32, %c0_i32_0 : i32, i32
  }
  func.func @transform_3(%arg0: i32) -> (i32, i32, i32) {
    %c0_i32 = arith.constant 0 : i32
    %c0_i32_0 = arith.constant 0 : i32
    %c0_i32_1 = arith.constant 0 : i32
    %c0_i32_2 = arith.constant 0 : i32
    return %c0_i32, %c0_i32_0, %c0_i32_1 : i32, i32, i32
  }
  func.func @transform_4(%arg0: i32) -> (i32, i32) {
    %c0_i32 = arith.constant 0 : i32
    %c0_i32_0 = arith.constant 0 : i32
    %c0_i32_1 = arith.constant 0 : i32
    return %c0_i32, %c0_i32_0 : i32, i32
  }
  func.func @transform_5(%arg0: i32) -> (i32, i32, i32) {
    %c0_i32 = arith.constant 0 : i32
    %c0_i32_0 = arith.constant 0 : i32
    %c0_i32_1 = arith.constant 0 : i32
    return %arg0, %c0_i32, %c0_i32_0 : i32, i32, i32
  }
}

</mosaic_0001>

<llo_original>
// kernel: tile.9
$region0: #{tile.9}
  %s0 = inlined_call_operand.vmem [shape: f32[8,12,32], index: 0, kind: input, shape index: {}]
  %s1 = inlined_call_operand.vmem [shape: f32[8,384], index: 1, kind: output, shape index: {}]
  %v2 = vld [vmem:[%s0] ss:$4 sm:$0x7]
  %vm3 = vcmask 261120
  %4 = vst.msk [vmem:[%s1] ss:$8 sm:$0x7] %vm3, %v2
  %s5 = scalar_lea.vmem %s0, 16
  %v6 = vld [vmem:[%s5] ss:$4 sm:$0x7]
  %vm7 = vcmask 261120
  %s8 = scalar_lea.vmem %s1, 1
  %9 = vst.msk [vmem:[%s8] ss:$8 sm:$0x7] %vm7, %v6
  %s10 = scalar_lea.vmem %s0, 32
  %v11 = vld [vmem:[%s10] ss:$4 sm:$0x7]
  %vm12 = vcmask 261120
  %s13 = scalar_lea.vmem %s1, 2
  %14 = vst.msk [vmem:[%s13] ss:$8 sm:$0x7] %vm12, %v11
  %s15 = scalar_lea.vmem %s0, 48
  %v16 = vld [vmem:[%s15] ss:$4 sm:$0x7]
  %vm17 = vcmask 261120
  %s18 = scalar_lea.vmem %s1, 3
  %19 = vst.msk [vmem:[%s18] ss:$8 sm:$0x7] %vm17, %v16
  %s20 = scalar_lea.vmem %s0, 64
  %v21 = vld [vmem:[%s20] ss:$4 sm:$0x7]
  %vm22 = vcmask 261120
  %s23 = scalar_lea.vmem %s1, 4
  %24 = vst.msk [vmem:[%s23] ss:$8 sm:$0x7] %vm22, %v21
  %s25 = scalar_lea.vmem %s0, 80
  %v26 = vld [vmem:[%s25] ss:$4 sm:$0x7]
  %vm27 = vcmask 261120
  %s28 = scalar_lea.vmem %s1, 5
  %29 = vst.msk [vmem:[%s28] ss:$8 sm:$0x7] %vm27, %v26
  %s30 = scalar_lea.vmem %s0, 96
  %v31 = vld [vmem:[%s30] ss:$4 sm:$0x7]
  %vm32 = vcmask 261120
  %s33 = scalar_lea.vmem %s1, 6
  %34 = vst.msk [vmem:[%s33] ss:$8 sm:$0x7] %vm32, %v31
  %s35 = scalar_lea.vmem %s0, 112
  %v36 = vld [vmem:[%s35] ss:$4 sm:$0x7]
  %vm37 = vcmask 261120
  %s38 = scalar_lea.vmem %s1, 7
  %39 = vst.msk [vmem:[%s38] ss:$8 sm:$0x7] %vm37, %v36
  %s40 = scalar_lea.vmem %s0, 3
  %s41 = smov 3
  %v42 = vld [vmem:[%s40] ss:$16 sm:%s41]
  %s43 = scalar_lea.vmem %s0, 3
  %s44 = smov 12
  %v45 = vld [vmem:[%s43] ss:$16 sm:%s44]
  %vm46 = vcmask 1043458
  %v47 = vsel %vm46, %v45, %v42
  %s48 = scalar_lea.vmem %s0, 3
  %s49 = smov 48
  %v50 = vld [vmem:[%s48] ss:$16 sm:%s49]
  %vm51 = vcmask 1045508
  %v52 = vsel %vm51, %v50, %v47
  %s53 = scalar_lea.vmem %s0, 3
  %s54 = smov 192
  %v55 = vld [vmem:[%s53] ss:$16 sm:%s54]
  %vm56 = vcmask 1047558
  %v57 = vsel %vm56, %v55, %v52
  %58 = vrot.lane.b32.xlu0 %v57, 96
  %v59 = vpop.permute.xlu0 %58
  %vm60 = vcmask 1048320
  %61 = vst.msk [vmem:[%s1] sm:$0xff] %vm60, %v59
  %s62 = scalar_lea.vmem %s0, 7
  %s63 = smov 3
  %v64 = vld [vmem:[%s62] ss:$16 sm:%s63]
  %s65 = scalar_lea.vmem %s0, 7
  %s66 = smov 12
  %v67 = vld [vmem:[%s65] ss:$16 sm:%s66]
  %vm68 = vcmask 1043458
  %v69 = vsel %vm68, %v67, %v64
  %s70 = scalar_lea.vmem %s0, 7
  %s71 = smov 48
  %v72 = vld [vmem:[%s70] ss:$16 sm:%s71]
  %vm73 = vcmask 1045508
  %v74 = vsel %vm73, %v72, %v69
  %s75 = scalar_lea.vmem %s0, 7
  %s76 = smov 192
  %v77 = vld [vmem:[%s75] ss:$16 sm:%s76]
  %vm78 = vcmask 1047558
  %v79 = vsel %vm78, %v77, %v74
  %80 = vrot.lane.b32.xlu0 %v79, 96
  %v81 = vpop.permute.xlu0 %80
  %vm82 = vcmask 1048320
  %s83 = scalar_lea.vmem %s1, 8
  %84 = vst.msk [vmem:[%s83] sm:$0xff] %vm82, %v81
  %s85 = scalar_lea.vmem %s0, 11
  %s86 = smov 3
  %v87 = vld [vmem:[%s85] ss:$16 sm:%s86]
  %s88 = scalar_lea.vmem %s0, 11
  %s89 = smov 12
  %v90 = vld [vmem:[%s88] ss:$16 sm:%s89]
  %vm91 = vcmask 1043458
  %v92 = vsel %vm91, %v90, %v87
  %s93 = scalar_lea.vmem %s0, 11
  %s94 = smov 48
  %v95 = vld [vmem:[%s93] ss:$16 sm:%s94]
  %vm96 = vcmask 1045508
  %v97 = vsel %vm96, %v95, %v92
  %s98 = scalar_lea.vmem %s0, 11
  %s99 = smov 192
  %v100 = vld [vmem:[%s98] ss:$16 sm:%s99]
  %vm101 = vcmask 1047558
  %v102 = vsel %vm101, %v100, %v97
  %103 = vrot.lane.b32.xlu0 %v102, 96
  %v104 = vpop.permute.xlu0 %103
  %vm105 = vcmask 1048320
  %s106 = scalar_lea.vmem %s1, 16
  %107 = vst.msk [vmem:[%s106] sm:$0xff] %vm105, %v104
  %s108 = scalar_lea.vmem %s0, 2
  %s109 = smov 3
  %v110 = vld [vmem:[%s108] ss:$16 sm:%s109]
  %s111 = scalar_lea.vmem %s0, 2
  %s112 = smov 12
  %v113 = vld [vmem:[%s111] ss:$16 sm:%s112]
  %vm114 = vcmask 1043458
  %v115 = vsel %vm114, %v113, %v110
  %s116 = scalar_lea.vmem %s0, 2
  %s117 = smov 48
  %v118 = vld [vmem:[%s116] ss:$16 sm:%s117]
  %vm119 = vcmask 1045508
  %v120 = vsel %vm119, %v118, %v115
  %s121 = scalar_lea.vmem %s0, 2
  %s122 = smov 192
  %v123 = vld [vmem:[%s121] ss:$16 sm:%s122]
  %vm124 = vcmask 1047558
  %v125 = vsel %vm124, %v123, %v120
  %126 = vrot.lane.b32.xlu0 %v125, 64
  %v127 = vpop.permute.xlu0 %126
  %vm128 = vcmask 785920
  %129 = vst.msk [vmem:[%s1] sm:$0xff] %vm128, %v127
  %s130 = scalar_lea.vmem %s0, 6
  %s131 = smov 3
  %v132 = vld [vmem:[%s130] ss:$16 sm:%s131]
  %s133 = scalar_lea.vmem %s0, 6
  %s134 = smov 12
  %v135 = vld [vmem:[%s133] ss:$16 sm:%s134]
  %vm136 = vcmask 1043458
  %v137 = vsel %vm136, %v135, %v132
  %s138 = scalar_lea.vmem %s0, 6
  %s139 = smov 48
  %v140 = vld [vmem:[%s138] ss:$16 sm:%s139]
  %vm141 = vcmask 1045508
  %v142 = vsel %vm141, %v140, %v137
  %s143 = scalar_lea.vmem %s0, 6
  %s144 = smov 192
  %v145 = vld [vmem:[%s143] ss:$16 sm:%s144]
  %vm146 = vcmask 1047558
  %v147 = vsel %vm146, %v145, %v142
  %148 = vrot.lane.b32.xlu0 %v147, 64
  %v149 = vpop.permute.xlu0 %148
  %vm150 = vcmask 785920
  %s151 = scalar_lea.vmem %s1, 8
  %152 = vst.msk [vmem:[%s151] sm:$0xff] %vm150, %v149
  %s153 = scalar_lea.vmem %s0, 10
  %s154 = smov 3
  %v155 = vld [vmem:[%s153] ss:$16 sm:%s154]
  %s156 = scalar_lea.vmem %s0, 10
  %s157 = smov 12
  %v158 = vld [vmem:[%s156] ss:$16 sm:%s157]
  %vm159 = vcmask 1043458
  %v160 = vsel %vm159, %v158, %v155
  %s161 = scalar_lea.vmem %s0, 10
  %s162 = smov 48
  %v163 = vld [vmem:[%s161] ss:$16 sm:%s162]
  %vm164 = vcmask 1045508
  %v165 = vsel %vm164, %v163, %v160
  %s166 = scalar_lea.vmem %s0, 10
  %s167 = smov 192
  %v168 = vld [vmem:[%s166] ss:$16 sm:%s167]
  %vm169 = vcmask 1047558
  %v170 = vsel %vm169, %v168, %v165
  %171 = vrot.lane.b32.xlu0 %v170, 64
  %v172 = vpop.permute.xlu0 %171
  %vm173 = vcmask 785920
  %s174 = scalar_lea.vmem %s1, 16
  %175 = vst.msk [vmem:[%s174] sm:$0xff] %vm173, %v172
  %s176 = scalar_lea.vmem %s0, 1
  %s177 = smov 3
  %v178 = vld [vmem:[%s176] ss:$16 sm:%s177]
  %s179 = scalar_lea.vmem %s0, 1
  %s180 = smov 12
  %v181 = vld [vmem:[%s179] ss:$16 sm:%s180]
  %vm182 = vcmask 1043458
  %v183 = vsel %vm182, %v181, %v178
  %s184 = scalar_lea.vmem %s0, 1
  %s185 = smov 48
  %v186 = vld [vmem:[%s184] ss:$16 sm:%s185]
  %vm187 = vcmask 1045508
  %v188 = vsel %vm187, %v186, %v183
  %s189 = scalar_lea.vmem %s0, 1
  %s190 = smov 192
  %v191 = vld [vmem:[%s189] ss:$16 sm:%s190]
  %vm192 = vcmask 1047558
  %v193 = vsel %vm192, %v191, %v188
  %194 = vrot.lane.b32.xlu0 %v193, 32
  %v195 = vpop.permute.xlu0 %194
  %vm196 = vcmask 523520
  %197 = vst.msk [vmem:[%s1] sm:$0xff] %vm196, %v195
  %s198 = scalar_lea.vmem %s0, 5
  %s199 = smov 3
  %v200 = vld [vmem:[%s198] ss:$16 sm:%s199]
  %s201 = scalar_lea.vmem %s0, 5
  %s202 = smov 12
  %v203 = vld [vmem:[%s201] ss:$16 sm:%s202]
  %vm204 = vcmask 1043458
  %v205 = vsel %vm204, %v203, %v200
  %s206 = scalar_lea.vmem %s0, 5
  %s207 = smov 48
  %v208 = vld [vmem:[%s206] ss:$16 sm:%s207]
  %vm209 = vcmask 1045508
  %v210 = vsel %vm209, %v208, %v205
  %s211 = scalar_lea.vmem %s0, 5
  %s212 = smov 192
  %v213 = vld [vmem:[%s211] ss:$16 sm:%s212]
  %vm214 = vcmask 1047558
  %v215 = vsel %vm214, %v213, %v210
  %216 = vrot.lane.b32.xlu0 %v215, 32
  %v217 = vpop.permute.xlu0 %216
  %vm218 = vcmask 523520
  %s219 = scalar_lea.vmem %s1, 8
  %220 = vst.msk [vmem:[%s219] sm:$0xff] %vm218, %v217
  %s221 = scalar_lea.vmem %s0, 9
  %s222 = smov 3
  %v223 = vld [vmem:[%s221] ss:$16 sm:%s222]
  %s224 = scalar_lea.vmem %s0, 9
  %s225 = smov 12
  %v226 = vld [vmem:[%s224] ss:$16 sm:%s225]
  %vm227 = vcmask 1043458
  %v228 = vsel %vm227, %v226, %v223
  %s229 = scalar_lea.vmem %s0, 9
  %s230 = smov 48
  %v231 = vld [vmem:[%s229] ss:$16 sm:%s230]
  %vm232 = vcmask 1045508
  %v233 = vsel %vm232, %v231, %v228
  %s234 = scalar_lea.vmem %s0, 9
  %s235 = smov 192
  %v236 = vld [vmem:[%s234] ss:$16 sm:%s235]
  %vm237 = vcmask 1047558
  %v238 = vsel %vm237, %v236, %v233
  %239 = vrot.lane.b32.xlu0 %v238, 32
  %v240 = vpop.permute.xlu0 %239
  %vm241 = vcmask 523520
  %s242 = scalar_lea.vmem %s1, 16
  %243 = vst.msk [vmem:[%s242] sm:$0xff] %vm241, %v240

// kernel: discriminator_forward.3
$region0: #{discriminator_forward.3}
  #allocation0 [shape = 'u32[]', space=smem, size = 0x4, offset = 0x4, fixed_abs, tag = 'smem constant byte address 0x4 - core index']
  #allocation1 [shape = 'u32[144,128]{1,0:T(1,128)}', space=vmem, size = 0x12000, scoped, tag = 'internal scratch']
  #allocation2 [shape = 'f32[1,1]{1,0:T(1,128)S(1)}', space=vmem, size = 0x200, scoped, tag = 'scoped memory for discriminator_forward.3']
  %s0 = inlined_call_operand.vmem [shape: bf16[8,1024], index: 0, kind: input, shape index: {}]
  %s1 = inlined_call_operand.vmem [shape: bf16[1024,1024], index: 1, kind: input, shape index: {}]
  %s2 = inlined_call_operand.vmem [shape: f32[1,1024], index: 2, kind: input, shape index: {}]
  %s3 = inlined_call_operand.vmem [shape: f32[1,1024], index: 3, kind: input, shape index: {}]
  %s4 = inlined_call_operand.<no memory space> [shape: f32[1,1], index: 4, kind: input, shape index: {}]
  %s5 = inlined_call_operand.vmem [shape: f32[8,1], index: 5, kind: output, shape index: {}]
  %s6 = sld [smem:[#allocation0]]
  $region30: #{discriminator_forward.3} parent=0
    _
  %s8 = ssub.s32 1, %s6
  %s9 = scalar_select 0, %s8, %s6
  %v10 = vstv %s4
  %11 = vst [vmem:[#allocation2] sm:$0x1] %v10
  // Predicated region
  $region2: #{discriminator_forward.3} parent=0 // pred_check
    _
  $region3: #{discriminator_forward.3} parent=0 // pred_check_branch
    %13 = sbr.rel (0) target = $region5
  $region4: #{discriminator_forward.3} parent=0 // pred_region
    _
  $region5: #{discriminator_forward.3} parent=0 // pred_fallthru
    _
  // Predicated region
  $region6: #{discriminator_forward.3} parent=0 // pred_check
    _
  $region7: #{discriminator_forward.3} parent=0 // pred_check_branch
    %15 = sbr.rel (0) target = $region9
  $region8: #{discriminator_forward.3} parent=0 // pred_region
    _
  $region9: #{discriminator_forward.3} parent=0 // pred_fallthru
    _
  // Predicated region
  $region10: #{discriminator_forward.3} parent=0 // pred_check
    _
  $region11: #{discriminator_forward.3} parent=0 // pred_check_branch
    %17 = sbr.rel (0) target = $region13
  $region12: #{discriminator_forward.3} parent=0 // pred_region
    _
  $region13: #{discriminator_forward.3} parent=0 // pred_fallthru
    _
  // Predicated region
  $region14: #{discriminator_forward.3} parent=0 // pred_check
    _
  $region15: #{discriminator_forward.3} parent=0 // pred_check_branch
    %19 = sbr.rel (0) target = $region17
  $region16: #{discriminator_forward.3} parent=0 // pred_region
    _
  $region17: #{discriminator_forward.3} parent=0 // pred_fallthru
    _
  // Predicated region
  $region18: #{discriminator_forward.3} parent=0 // pred_check
    _
  $region19: #{discriminator_forward.3} parent=0 // pred_check_branch
    %21 = sbr.rel (0) target = $region21
  $region20: #{discriminator_forward.3} parent=0 // pred_region
    _
  $region21: #{discriminator_forward.3} parent=0 // pred_fallthru
    _
  %v22 = vld [vmem:[%s0] sm:$0xff]
  %v23 = vld [vmem:[%s0 + $0x8] sm:$0xff]
  %v24 = vld [vmem:[%s0 + $0x10] sm:$0xff]
  %v25 = vld [vmem:[%s0 + $0x18] sm:$0xff]
  %v26 = vld [vmem:[%s1] sm:$0xff]
  %v27 = vld [vmem:[%s1 + $0x8] sm:$0xff]
  %v28 = vld [vmem:[%s1 + $0x10] sm:$0xff]
  %v29 = vld [vmem:[%s1 + $0x18] sm:$0xff]
  %v30 = vld [vmem:[%s1 + $0x20] sm:$0xff]
  %v31 = vld [vmem:[%s1 + $0x28] sm:$0xff]
  %v32 = vld [vmem:[%s1 + $0x30] sm:$0xff]
  %v33 = vld [vmem:[%s1 + $0x38] sm:$0xff]
  %v34 = vld [vmem:[%s1 + $0x40] sm:$0xff]
  %v35 = vld [vmem:[%s1 + $0x48] sm:$0xff]
  %v36 = vld [vmem:[%s1 + $0x50] sm:$0xff]
  %v37 = vld [vmem:[%s1 + $0x58] sm:$0xff]
  %v38 = vld [vmem:[%s1 + $0x60] sm:$0xff]
  %v39 = vld [vmem:[%s1 + $0x68] sm:$0xff]
  %v40 = vld [vmem:[%s1 + $0x70] sm:$0xff]
  %v41 = vld [vmem:[%s1 + $0x78] sm:$0xff]
  %v42 = vld [vmem:[%s1 + $0x80] sm:$0xff]
  %v43 = vld [vmem:[%s1 + $0x88] sm:$0xff]
  %v44 = vld [vmem:[%s1 + $0x90] sm:$0xff]
  %v45 = vld [vmem:[%s1 + $0x98] sm:$0xff]
  %v46 = vld [vmem:[%s1 + $0xa0] sm:$0xff]
  %v47 = vld [vmem:[%s1 + $0xa8] sm:$0xff]
  %v48 = vld [vmem:[%s1 + $0xb0] sm:$0xff]
  %v49 = vld [vmem:[%s1 + $0xb8] sm:$0xff]
  %v50 = vld [vmem:[%s1 + $0xc0] sm:$0xff]
  %v51 = vld [vmem:[%s1 + $0xc8] sm:$0xff]
  %v52 = vld [vmem:[%s1 + $0xd0] sm:$0xff]
  %v53 = vld [vmem:[%s1 + $0xd8] sm:$0xff]
  %v54 = vld [vmem:[%s1 + $0xe0] sm:$0xff]
  %v55 = vld [vmem:[%s1 + $0xe8] sm:$0xff]
  %v56 = vld [vmem:[%s1 + $0xf0] sm:$0xff]
  %v57 = vld [vmem:[%s1 + $0xf8] sm:$0xff]
  %v58 = vld [vmem:[%s1 + $0x100] sm:$0xff]
  %v59 = vld [vmem:[%s1 + $0x108] sm:$0xff]
  %v60 = vld [vmem:[%s1 + $0x110] sm:$0xff]
  %v61 = vld [vmem:[%s1 + $0x118] sm:$0xff]
  %v62 = vld [vmem:[%s1 + $0x120] sm:$0xff]
  %v63 = vld [vmem:[%s1 + $0x128] sm:$0xff]
  %v64 = vld [vmem:[%s1 + $0x130] sm:$0xff]
  %v65 = vld [vmem:[%s1 + $0x138] sm:$0xff]
  %v66 = vld [vmem:[%s1 + $0x140] sm:$0xff]
  %v67 = vld [vmem:[%s1 + $0x148] sm:$0xff]
  %v68 = vld [vmem:[%s1 + $0x150] sm:$0xff]
  %v69 = vld [vmem:[%s1 + $0x158] sm:$0xff]
  %v70 = vld [vmem:[%s1 + $0x160] sm:$0xff]
  %v71 = vld [vmem:[%s1 + $0x168] sm:$0xff]
  %v72 = vld [vmem:[%s1 + $0x170] sm:$0xff]
  %v73 = vld [vmem:[%s1 + $0x178] sm:$0xff]
  %v74 = vld [vmem:[%s1 + $0x180] sm:$0xff]
  %v75 = vld [vmem:[%s1 + $0x188] sm:$0xff]
  %v76 = vld [vmem:[%s1 + $0x190] sm:$0xff]
  %v77 = vld [vmem:[%s1 + $0x198] sm:$0xff]
  %v78 = vld [vmem:[%s1 + $0x1a0] sm:$0xff]
  %v79 = vld [vmem:[%s1 + $0x1a8] sm:$0xff]
  %v80 = vld [vmem:[%s1 + $0x1b0] sm:$0xff]
  %v81 = vld [vmem:[%s1 + $0x1b8] sm:$0xff]
  %v82 = vld [vmem:[%s1 + $0x1c0] sm:$0xff]
  %v83 = vld [vmem:[%s1 + $0x1c8] sm:$0xff]
  %v84 = vld [vmem:[%s1 + $0x1d0] sm:$0xff]
  %v85 = vld [vmem:[%s1 + $0x1d8] sm:$0xff]
  %v86 = vld [vmem:[%s1 + $0x1e0] sm:$0xff]
  %v87 = vld [vmem:[%s1 + $0x1e8] sm:$0xff]
  %v88 = vld [vmem:[%s1 + $0x1f0] sm:$0xff]
  %v89 = vld [vmem:[%s1 + $0x1f8] sm:$0xff]
  %v90 = vld [vmem:[%s1 + $0x200] sm:$0xff]
  %v91 = vld [vmem:[%s1 + $0x208] sm:$0xff]
  %v92 = vld [vmem:[%s1 + $0x210] sm:$0xff]
  %v93 = vld [vmem:[%s1 + $0x218] sm:$0xff]
  %v94 = vld [vmem:[%s1 + $0x220] sm:$0xff]
  %v95 = vld [vmem:[%s1 + $0x228] sm:$0xff]
  %v96 = vld [vmem:[%s1 + $0x230] sm:$0xff]
  %v97 = vld [vmem:[%s1 + $0x238] sm:$0xff]
  %v98 = vld [vmem:[%s1 + $0x240] sm:$0xff]
  %v99 = vld [vmem:[%s1 + $0x248] sm:$0xff]
  %v100 = vld [vmem:[%s1 + $0x250] sm:$0xff]
  %v101 = vld [vmem:[%s1 + $0x258] sm:$0xff]
  %v102 = vld [vmem:[%s1 + $0x260] sm:$0xff]
  %v103 = vld [vmem:[%s1 + $0x268] sm:$0xff]
  %v104 = vld [vmem:[%s1 + $0x270] sm:$0xff]
  %v105 = vld [vmem:[%s1 + $0x278] sm:$0xff]
  %v106 = vld [vmem:[%s1 + $0x280] sm:$0xff]
  %v107 = vld [vmem:[%s1 + $0x288] sm:$0xff]
  %v108 = vld [vmem:[%s1 + $0x290] sm:$0xff]
  %v109 = vld [vmem:[%s1 + $0x298] sm:$0xff]
  %v110 = vld [vmem:[%s1 + $0x2a0] sm:$0xff]
  %v111 = vld [vmem:[%s1 + $0x2a8] sm:$0xff]
  %v112 = vld [vmem:[%s1 + $0x2b0] sm:$0xff]
  %v113 = vld [vmem:[%s1 + $0x2b8] sm:$0xff]
  %v114 = vld [vmem:[%s1 + $0x2c0] sm:$0xff]
  %v115 = vld [vmem:[%s1 + $0x2c8] sm:$0xff]
  %v116 = vld [vmem:[%s1 + $0x2d0] sm:$0xff]
  %v117 = vld [vmem:[%s1 + $0x2d8] sm:$0xff]
  %v118 = vld [vmem:[%s1 + $0x2e0] sm:$0xff]
  %v119 = vld [vmem:[%s1 + $0x2e8] sm:$0xff]
  %v120 = vld [vmem:[%s1 + $0x2f0] sm:$0xff]
  %v121 = vld [vmem:[%s1 + $0x2f8] sm:$0xff]
  %v122 = vld [vmem:[%s1 + $0x300] sm:$0xff]
  %v123 = vld [vmem:[%s1 + $0x308] sm:$0xff]
  %v124 = vld [vmem:[%s1 + $0x310] sm:$0xff]
  %v125 = vld [vmem:[%s1 + $0x318] sm:$0xff]
  %v126 = vld [vmem:[%s1 + $0x320] sm:$0xff]
  %v127 = vld [vmem:[%s1 + $0x328] sm:$0xff]
  %v128 = vld [vmem:[%s1 + $0x330] sm:$0xff]
  %v129 = vld [vmem:[%s1 + $0x338] sm:$0xff]
  %v130 = vld [vmem:[%s1 + $0x340] sm:$0xff]
  %v131 = vld [vmem:[%s1 + $0x348] sm:$0xff]
  %v132 = vld [vmem:[%s1 + $0x350] sm:$0xff]
  %v133 = vld [vmem:[%s1 + $0x358] sm:$0xff]
  %v134 = vld [vmem:[%s1 + $0x360] sm:$0xff]
  %v135 = vld [vmem:[%s1 + $0x368] sm:$0xff]
  %v136 = vld [vmem:[%s1 + $0x370] sm:$0xff]
  %v137 = vld [vmem:[%s1 + $0x378] sm:$0xff]
  %v138 = vld [vmem:[%s1 + $0x380] sm:$0xff]
  %v139 = vld [vmem:[%s1 + $0x388] sm:$0xff]
  %v140 = vld [vmem:[%s1 + $0x390] sm:$0xff]
  %v141 = vld [vmem:[%s1 + $0x398] sm:$0xff]
  %v142 = vld [vmem:[%s1 + $0x3a0] sm:$0xff]
  %v143 = vld [vmem:[%s1 + $0x3a8] sm:$0xff]
  %v144 = vld [vmem:[%s1 + $0x3b0] sm:$0xff]
  %v145 = vld [vmem:[%s1 + $0x3b8] sm:$0xff]
  %v146 = vld [vmem:[%s1 + $0x3c0] sm:$0xff]
  %v147 = vld [vmem:[%s1 + $0x3c8] sm:$0xff]
  %v148 = vld [vmem:[%s1 + $0x3d0] sm:$0xff]
  %v149 = vld [vmem:[%s1 + $0x3d8] sm:$0xff]
  %v150 = vld [vmem:[%s1 + $0x3e0] sm:$0xff]
  %v151 = vld [vmem:[%s1 + $0x3e8] sm:$0xff]
  %v152 = vld [vmem:[%s1 + $0x3f0] sm:$0xff]
  %v153 = vld [vmem:[%s1 + $0x3f8] sm:$0xff]
  %v154 = vld [vmem:[%s1 + $0x400] sm:$0xff]
  %v155 = vld [vmem:[%s1 + $0x408] sm:$0xff]
  %v156 = vld [vmem:[%s1 + $0x410] sm:$0xff]
  %v157 = vld [vmem:[%s1 + $0x418] sm:$0xff]
  %v158 = vld [vmem:[%s1 + $0x420] sm:$0xff]
  %v159 = vld [vmem:[%s1 + $0x428] sm:$0xff]
  %v160 = vld [vmem:[%s1 + $0x430] sm:$0xff]
  %v161 = vld [vmem:[%s1 + $0x438] sm:$0xff]
  %v162 = vld [vmem:[%s1 + $0x440] sm:$0xff]
  %v163 = vld [vmem:[%s1 + $0x448] sm:$0xff]
  %v164 = vld [vmem:[%s1 + $0x450] sm:$0xff]
  %v165 = vld [vmem:[%s1 + $0x458] sm:$0xff]
  %v166 = vld [vmem:[%s1 + $0x460] sm:$0xff]
  %v167 = vld [vmem:[%s1 + $0x468] sm:$0xff]
  %v168 = vld [vmem:[%s1 + $0x470] sm:$0xff]
  %v169 = vld [vmem:[%s1 + $0x478] sm:$0xff]
  %v170 = vld [vmem:[%s1 + $0x480] sm:$0xff]
  %v171 = vld [vmem:[%s1 + $0x488] sm:$0xff]
  %v172 = vld [vmem:[%s1 + $0x490] sm:$0xff]
  %v173 = vld [vmem:[%s1 + $0x498] sm:$0xff]
  %v174 = vld [vmem:[%s1 + $0x4a0] sm:$0xff]
  %v175 = vld [vmem:[%s1 + $0x4a8] sm:$0xff]
  %v176 = vld [vmem:[%s1 + $0x4b0] sm:$0xff]
  %v177 = vld [vmem:[%s1 + $0x4b8] sm:$0xff]
  %v178 = vld [vmem:[%s1 + $0x4c0] sm:$0xff]
  %v179 = vld [vmem:[%s1 + $0x4c8] sm:$0xff]
  %v180 = vld [vmem:[%s1 + $0x4d0] sm:$0xff]
  %v181 = vld [vmem:[%s1 + $0x4d8] sm:$0xff]
  %v182 = vld [vmem:[%s1 + $0x4e0] sm:$0xff]
  %v183 = vld [vmem:[%s1 + $0x4e8] sm:$0xff]
  %v184 = vld [vmem:[%s1 + $0x4f0] sm:$0xff]
  %v185 = vld [vmem:[%s1 + $0x4f8] sm:$0xff]
  %v186 = vld [vmem:[%s1 + $0x500] sm:$0xff]
  %v187 = vld [vmem:[%s1 + $0x508] sm:$0xff]
  %v188 = vld [vmem:[%s1 + $0x510] sm:$0xff]
  %v189 = vld [vmem:[%s1 + $0x518] sm:$0xff]
  %v190 = vld [vmem:[%s1 + $0x520] sm:$0xff]
  %v191 = vld [vmem:[%s1 + $0x528] sm:$0xff]
  %v192 = vld [vmem:[%s1 + $0x530] sm:$0xff]
  %v193 = vld [vmem:[%s1 + $0x538] sm:$0xff]
  %v194 = vld [vmem:[%s1 + $0x540] sm:$0xff]
  %v195 = vld [vmem:[%s1 + $0x548] sm:$0xff]
  %v196 = vld [vmem:[%s1 + $0x550] sm:$0xff]
  %v197 = vld [vmem:[%s1 + $0x558] sm:$0xff]
  %v198 = vld [vmem:[%s1 + $0x560] sm:$0xff]
  %v199 = vld [vmem:[%s1 + $0x568] sm:$0xff]
  %v200 = vld [vmem:[%s1 + $0x570] sm:$0xff]
  %v201 = vld [vmem:[%s1 + $0x578] sm:$0xff]
  %v202 = vld [vmem:[%s1 + $0x580] sm:$0xff]
  %v203 = vld [vmem:[%s1 + $0x588] sm:$0xff]
  %v204 = vld [vmem:[%s1 + $0x590] sm:$0xff]
  %v205 = vld [vmem:[%s1 + $0x598] sm:$0xff]
  %v206 = vld [vmem:[%s1 + $0x5a0] sm:$0xff]
  %v207 = vld [vmem:[%s1 + $0x5a8] sm:$0xff]
  %v208 = vld [vmem:[%s1 + $0x5b0] sm:$0xff]
  %v209 = vld [vmem:[%s1 + $0x5b8] sm:$0xff]
  %v210 = vld [vmem:[%s1 + $0x5c0] sm:$0xff]
  %v211 = vld [vmem:[%s1 + $0x5c8] sm:$0xff]
  %v212 = vld [vmem:[%s1 + $0x5d0] sm:$0xff]
  %v213 = vld [vmem:[%s1 + $0x5d8] sm:$0xff]
  %v214 = vld [vmem:[%s1 + $0x5e0] sm:$0xff]
  %v215 = vld [vmem:[%s1 + $0x5e8] sm:$0xff]
  %v216 = vld [vmem:[%s1 + $0x5f0] sm:$0xff]
  %v217 = vld [vmem:[%s1 + $0x5f8] sm:$0xff]
  %v218 = vld [vmem:[%s1 + $0x600] sm:$0xff]
  %v219 = vld [vmem:[%s1 + $0x608] sm:$0xff]
  %v220 = vld [vmem:[%s1 + $0x610] sm:$0xff]
  %v221 = vld [vmem:[%s1 + $0x618] sm:$0xff]
  %v222 = vld [vmem:[%s1 + $0x620] sm:$0xff]
  %v223 = vld [vmem:[%s1 + $0x628] sm:$0xff]
  %v224 = vld [vmem:[%s1 + $0x630] sm:$0xff]
  %v225 = vld [vmem:[%s1 + $0x638] sm:$0xff]
  %v226 = vld [vmem:[%s1 + $0x640] sm:$0xff]
  %v227 = vld [vmem:[%s1 + $0x648] sm:$0xff]
  %v228 = vld [vmem:[%s1 + $0x650] sm:$0xff]
  %v229 = vld [vmem:[%s1 + $0x658] sm:$0xff]
  %v230 = vld [vmem:[%s1 + $0x660] sm:$0xff]
  %v231 = vld [vmem:[%s1 + $0x668] sm:$0xff]
  %v232 = vld [vmem:[%s1 + $0x670] sm:$0xff]
  %v233 = vld [vmem:[%s1 + $0x678] sm:$0xff]
  %v234 = vld [vmem:[%s1 + $0x680] sm:$0xff]
  %v235 = vld [vmem:[%s1 + $0x688] sm:$0xff]
  %v236 = vld [vmem:[%s1 + $0x690] sm:$0xff]
  %v237 = vld [vmem:[%s1 + $0x698] sm:$0xff]
  %v238 = vld [vmem:[%s1 + $0x6a0] sm:$0xff]
  %v239 = vld [vmem:[%s1 + $0x6a8] sm:$0xff]
  %v240 = vld [vmem:[%s1 + $0x6b0] sm:$0xff]
  %v241 = vld [vmem:[%s1 + $0x6b8] sm:$0xff]
  %v242 = vld [vmem:[%s1 + $0x6c0] sm:$0xff]
  %v243 = vld [vmem:[%s1 + $0x6c8] sm:$0xff]
  %v244 = vld [vmem:[%s1 + $0x6d0] sm:$0xff]
  %v245 = vld [vmem:[%s1 + $0x6d8] sm:$0xff]
  %v246 = vld [vmem:[%s1 + $0x6e0] sm:$0xff]
  %v247 = vld [vmem:[%s1 + $0x6e8] sm:$0xff]
  %v248 = vld [vmem:[%s1 + $0x6f0] sm:$0xff]
  %v249 = vld [vmem:[%s1 + $0x6f8] sm:$0xff]
  %v250 = vld [vmem:[%s1 + $0x700] sm:$0xff]
  %v251 = vld [vmem:[%s1 + $0x708] sm:$0xff]
  %v252 = vld [vmem:[%s1 + $0x710] sm:$0xff]
  %v253 = vld [vmem:[%s1 + $0x718] sm:$0xff]
  %v254 = vld [vmem:[%s1 + $0x720] sm:$0xff]
  %v255 = vld [vmem:[%s1 + $0x728] sm:$0xff]
  %v256 = vld [vmem:[%s1 + $0x730] sm:$0xff]
  %v257 = vld [vmem:[%s1 + $0x738] sm:$0xff]
  %v258 = vld [vmem:[%s1 + $0x740] sm:$0xff]
  %v259 = vld [vmem:[%s1 + $0x748] sm:$0xff]
  %v260 = vld [vmem:[%s1 + $0x750] sm:$0xff]
  %v261 = vld [vmem:[%s1 + $0x758] sm:$0xff]
  %v262 = vld [vmem:[%s1 + $0x760] sm:$0xff]
  %v263 = vld [vmem:[%s1 + $0x768] sm:$0xff]
  %v264 = vld [vmem:[%s1 + $0x770] sm:$0xff]
  %v265 = vld [vmem:[%s1 + $0x778] sm:$0xff]
  %v266 = vld [vmem:[%s1 + $0x780] sm:$0xff]
  %v267 = vld [vmem:[%s1 + $0x788] sm:$0xff]
  %v268 = vld [vmem:[%s1 + $0x790] sm:$0xff]
  %v269 = vld [vmem:[%s1 + $0x798] sm:$0xff]
  %v270 = vld [vmem:[%s1 + $0x7a0] sm:$0xff]
  %v271 = vld [vmem:[%s1 + $0x7a8] sm:$0xff]
  %v272 = vld [vmem:[%s1 + $0x7b0] sm:$0xff]
  %v273 = vld [vmem:[%s1 + $0x7b8] sm:$0xff]
  %v274 = vld [vmem:[%s1 + $0x7c0] sm:$0xff]
  %v275 = vld [vmem:[%s1 + $0x7c8] sm:$0xff]
  %v276 = vld [vmem:[%s1 + $0x7d0] sm:$0xff]
  %v277 = vld [vmem:[%s1 + $0x7d8] sm:$0xff]
  %v278 = vld [vmem:[%s1 + $0x7e0] sm:$0xff]
  %v279 = vld [vmem:[%s1 + $0x7e8] sm:$0xff]
  %v280 = vld [vmem:[%s1 + $0x7f0] sm:$0xff]
  %v281 = vld [vmem:[%s1 + $0x7f8] sm:$0xff]
  %v282 = vld [vmem:[%s1 + $0x800] sm:$0xff]
  %v283 = vld [vmem:[%s1 + $0x808] sm:$0xff]
  %v284 = vld [vmem:[%s1 + $0x810] sm:$0xff]
  %v285 = vld [vmem:[%s1 + $0x818] sm:$0xff]
  %v286 = vld [vmem:[%s1 + $0x820] sm:$0xff]
  %v287 = vld [vmem:[%s1 + $0x828] sm:$0xff]
  %v288 = vld [vmem:[%s1 + $0x830] sm:$0xff]
  %v289 = vld [vmem:[%s1 + $0x838] sm:$0xff]
  %v290 = vld [vmem:[%s1 + $0x840] sm:$0xff]
  %v291 = vld [vmem:[%s1 + $0x848] sm:$0xff]
  %v292 = vld [vmem:[%s1 + $0x850] sm:$0xff]
  %v293 = vld [vmem:[%s1 + $0x858] sm:$0xff]
  %v294 = vld [vmem:[%s1 + $0x860] sm:$0xff]
  %v295 = vld [vmem:[%s1 + $0x868] sm:$0xff]
  %v296 = vld [vmem:[%s1 + $0x870] sm:$0xff]
  %v297 = vld [vmem:[%s1 + $0x878] sm:$0xff]
  %v298 = vld [vmem:[%s1 + $0x880] sm:$0xff]
  %v299 = vld [vmem:[%s1 + $0x888] sm:$0xff]
  %v300 = vld [vmem:[%s1 + $0x890] sm:$0xff]
  %v301 = vld [vmem:[%s1 + $0x898] sm:$0xff]
  %v302 = vld [vmem:[%s1 + $0x8a0] sm:$0xff]
  %v303 = vld [vmem:[%s1 + $0x8a8] sm:$0xff]
  %v304 = vld [vmem:[%s1 + $0x8b0] sm:$0xff]
  %v305 = vld [vmem:[%s1 + $0x8b8] sm:$0xff]
  %v306 = vld [vmem:[%s1 + $0x8c0] sm:$0xff]
  %v307 = vld [vmem:[%s1 + $0x8c8] sm:$0xff]
  %v308 = vld [vmem:[%s1 + $0x8d0] sm:$0xff]
  %v309 = vld [vmem:[%s1 + $0x8d8] sm:$0xff]
  %v310 = vld [vmem:[%s1 + $0x8e0] sm:$0xff]
  %v311 = vld [vmem:[%s1 + $0x8e8] sm:$0xff]
  %v312 = vld [vmem:[%s1 + $0x8f0] sm:$0xff]
  %v313 = vld [vmem:[%s1 + $0x8f8] sm:$0xff]
  %v314 = vld [vmem:[%s1 + $0x900] sm:$0xff]
  %v315 = vld [vmem:[%s1 + $0x908] sm:$0xff]
  %v316 = vld [vmem:[%s1 + $0x910] sm:$0xff]
  %v317 = vld [vmem:[%s1 + $0x918] sm:$0xff]
  %v318 = vld [vmem:[%s1 + $0x920] sm:$0xff]
  %v319 = vld [vmem:[%s1 + $0x928] sm:$0xff]
  %v320 = vld [vmem:[%s1 + $0x930] sm:$0xff]
  %v321 = vld [vmem:[%s1 + $0x938] sm:$0xff]
  %v322 = vld [vmem:[%s1 + $0x940] sm:$0xff]
  %v323 = vld [vmem:[%s1 + $0x948] sm:$0xff]
  %v324 = vld [vmem:[%s1 + $0x950] sm:$0xff]
  %v325 = vld [vmem:[%s1 + $0x958] sm:$0xff]
  %v326 = vld [vmem:[%s1 + $0x960] sm:$0xff]
  %v327 = vld [vmem:[%s1 + $0x968] sm:$0xff]
  %v328 = vld [vmem:[%s1 + $0x970] sm:$0xff]
  %v329 = vld [vmem:[%s1 + $0x978] sm:$0xff]
  %v330 = vld [vmem:[%s1 + $0x980] sm:$0xff]
  %v331 = vld [vmem:[%s1 + $0x988] sm:$0xff]
  %v332 = vld [vmem:[%s1 + $0x990] sm:$0xff]
  %v333 = vld [vmem:[%s1 + $0x998] sm:$0xff]
  %v334 = vld [vmem:[%s1 + $0x9a0] sm:$0xff]
  %v335 = vld [vmem:[%s1 + $0x9a8] sm:$0xff]
  %v336 = vld [vmem:[%s1 + $0x9b0] sm:$0xff]
  %v337 = vld [vmem:[%s1 + $0x9b8] sm:$0xff]
  %v338 = vld [vmem:[%s1 + $0x9c0] sm:$0xff]
  %v339 = vld [vmem:[%s1 + $0x9c8] sm:$0xff]
  %v340 = vld [vmem:[%s1 + $0x9d0] sm:$0xff]
  %v341 = vld [vmem:[%s1 + $0x9d8] sm:$0xff]
  %v342 = vld [vmem:[%s1 + $0x9e0] sm:$0xff]
  %v343 = vld [vmem:[%s1 + $0x9e8] sm:$0xff]
  %v344 = vld [vmem:[%s1 + $0x9f0] sm:$0xff]
  %v345 = vld [vmem:[%s1 + $0x9f8] sm:$0xff]
  %v346 = vld [vmem:[%s1 + $0xa00] sm:$0xff]
  %v347 = vld [vmem:[%s1 + $0xa08] sm:$0xff]
  %v348 = vld [vmem:[%s1 + $0xa10] sm:$0xff]
  %v349 = vld [vmem:[%s1 + $0xa18] sm:$0xff]
  %v350 = vld [vmem:[%s1 + $0xa20] sm:$0xff]
  %v351 = vld [vmem:[%s1 + $0xa28] sm:$0xff]
  %v352 = vld [vmem:[%s1 + $0xa30] sm:$0xff]
  %v353 = vld [vmem:[%s1 + $0xa38] sm:$0xff]
  %v354 = vld [vmem:[%s1 + $0xa40] sm:$0xff]
  %v355 = vld [vmem:[%s1 + $0xa48] sm:$0xff]
  %v356 = vld [vmem:[%s1 + $0xa50] sm:$0xff]
  %v357 = vld [vmem:[%s1 + $0xa58] sm:$0xff]
  %v358 = vld [vmem:[%s1 + $0xa60] sm:$0xff]
  %v359 = vld [vmem:[%s1 + $0xa68] sm:$0xff]
  %v360 = vld [vmem:[%s1 + $0xa70] sm:$0xff]
  %v361 = vld [vmem:[%s1 + $0xa78] sm:$0xff]
  %v362 = vld [vmem:[%s1 + $0xa80] sm:$0xff]
  %v363 = vld [vmem:[%s1 + $0xa88] sm:$0xff]
  %v364 = vld [vmem:[%s1 + $0xa90] sm:$0xff]
  %v365 = vld [vmem:[%s1 + $0xa98] sm:$0xff]
  %v366 = vld [vmem:[%s1 + $0xaa0] sm:$0xff]
  %v367 = vld [vmem:[%s1 + $0xaa8] sm:$0xff]
  %v368 = vld [vmem:[%s1 + $0xab0] sm:$0xff]
  %v369 = vld [vmem:[%s1 + $0xab8] sm:$0xff]
  %v370 = vld [vmem:[%s1 + $0xac0] sm:$0xff]
  %v371 = vld [vmem:[%s1 + $0xac8] sm:$0xff]
  %v372 = vld [vmem:[%s1 + $0xad0] sm:$0xff]
  %v373 = vld [vmem:[%s1 + $0xad8] sm:$0xff]
  %v374 = vld [vmem:[%s1 + $0xae0] sm:$0xff]
  %v375 = vld [vmem:[%s1 + $0xae8] sm:$0xff]
  %v376 = vld [vmem:[%s1 + $0xaf0] sm:$0xff]
  %v377 = vld [vmem:[%s1 + $0xaf8] sm:$0xff]
  %v378 = vld [vmem:[%s1 + $0xb00] sm:$0xff]
  %v379 = vld [vmem:[%s1 + $0xb08] sm:$0xff]
  %v380 = vld [vmem:[%s1 + $0xb10] sm:$0xff]
  %v381 = vld [vmem:[%s1 + $0xb18] sm:$0xff]
  %v382 = vld [vmem:[%s1 + $0xb20] sm:$0xff]
  %v383 = vld [vmem:[%s1 + $0xb28] sm:$0xff]
  %v384 = vld [vmem:[%s1 + $0xb30] sm:$0xff]
  %v385 = vld [vmem:[%s1 + $0xb38] sm:$0xff]
  %v386 = vld [vmem:[%s1 + $0xb40] sm:$0xff]
  %v387 = vld [vmem:[%s1 + $0xb48] sm:$0xff]
  %v388 = vld [vmem:[%s1 + $0xb50] sm:$0xff]
  %v389 = vld [vmem:[%s1 + $0xb58] sm:$0xff]
  %v390 = vld [vmem:[%s1 + $0xb60] sm:$0xff]
  %v391 = vld [vmem:[%s1 + $0xb68] sm:$0xff]
  %v392 = vld [vmem:[%s1 + $0xb70] sm:$0xff]
  %v393 = vld [vmem:[%s1 + $0xb78] sm:$0xff]
  %v394 = vld [vmem:[%s1 + $0xb80] sm:$0xff]
  %v395 = vld [vmem:[%s1 + $0xb88] sm:$0xff]
  %v396 = vld [vmem:[%s1 + $0xb90] sm:$0xff]
  %v397 = vld [vmem:[%s1 + $0xb98] sm:$0xff]
  %v398 = vld [vmem:[%s1 + $0xba0] sm:$0xff]
  %v399 = vld [vmem:[%s1 + $0xba8] sm:$0xff]
  %v400 = vld [vmem:[%s1 + $0xbb0] sm:$0xff]
  %v401 = vld [vmem:[%s1 + $0xbb8] sm:$0xff]
  %v402 = vld [vmem:[%s1 + $0xbc0] sm:$0xff]
  %v403 = vld [vmem:[%s1 + $0xbc8] sm:$0xff]
  %v404 = vld [vmem:[%s1 + $0xbd0] sm:$0xff]
  %v405 = vld [vmem:[%s1 + $0xbd8] sm:$0xff]
  %v406 = vld [vmem:[%s1 + $0xbe0] sm:$0xff]
  %v407 = vld [vmem:[%s1 + $0xbe8] sm:$0xff]
  %v408 = vld [vmem:[%s1 + $0xbf0] sm:$0xff]
  %v409 = vld [vmem:[%s1 + $0xbf8] sm:$0xff]
  %v410 = vld [vmem:[%s1 + $0xc00] sm:$0xff]
  %v411 = vld [vmem:[%s1 + $0xc08] sm:$0xff]
  %v412 = vld [vmem:[%s1 + $0xc10] sm:$0xff]
  %v413 = vld [vmem:[%s1 + $0xc18] sm:$0xff]
  %v414 = vld [vmem:[%s1 + $0xc20] sm:$0xff]
  %v415 = vld [vmem:[%s1 + $0xc28] sm:$0xff]
  %v416 = vld [vmem:[%s1 + $0xc30] sm:$0xff]
  %v417 = vld [vmem:[%s1 + $0xc38] sm:$0xff]
  %v418 = vld [vmem:[%s1 + $0xc40] sm:$0xff]
  %v419 = vld [vmem:[%s1 + $0xc48] sm:$0xff]
  %v420 = vld [vmem:[%s1 + $0xc50] sm:$0xff]
  %v421 = vld [vmem:[%s1 + $0xc58] sm:$0xff]
  %v422 = vld [vmem:[%s1 + $0xc60] sm:$0xff]
  %v423 = vld [vmem:[%s1 + $0xc68] sm:$0xff]
  %v424 = vld [vmem:[%s1 + $0xc70] sm:$0xff]
  %v425 = vld [vmem:[%s1 + $0xc78] sm:$0xff]
  %v426 = vld [vmem:[%s1 + $0xc80] sm:$0xff]
  %v427 = vld [vmem:[%s1 + $0xc88] sm:$0xff]
  %v428 = vld [vmem:[%s1 + $0xc90] sm:$0xff]
  %v429 = vld [vmem:[%s1 + $0xc98] sm:$0xff]
  %v430 = vld [vmem:[%s1 + $0xca0] sm:$0xff]
  %v431 = vld [vmem:[%s1 + $0xca8] sm:$0xff]
  %v432 = vld [vmem:[%s1 + $0xcb0] sm:$0xff]
  %v433 = vld [vmem:[%s1 + $0xcb8] sm:$0xff]
  %v434 = vld [vmem:[%s1 + $0xcc0] sm:$0xff]
  %v435 = vld [vmem:[%s1 + $0xcc8] sm:$0xff]
  %v436 = vld [vmem:[%s1 + $0xcd0] sm:$0xff]
  %v437 = vld [vmem:[%s1 + $0xcd8] sm:$0xff]
  %v438 = vld [vmem:[%s1 + $0xce0] sm:$0xff]
  %v439 = vld [vmem:[%s1 + $0xce8] sm:$0xff]
  %v440 = vld [vmem:[%s1 + $0xcf0] sm:$0xff]
  %v441 = vld [vmem:[%s1 + $0xcf8] sm:$0xff]
  %v442 = vld [vmem:[%s1 + $0xd00] sm:$0xff]
  %v443 = vld [vmem:[%s1 + $0xd08] sm:$0xff]
  %v444 = vld [vmem:[%s1 + $0xd10] sm:$0xff]
  %v445 = vld [vmem:[%s1 + $0xd18] sm:$0xff]
  %v446 = vld [vmem:[%s1 + $0xd20] sm:$0xff]
  %v447 = vld [vmem:[%s1 + $0xd28] sm:$0xff]
  %v448 = vld [vmem:[%s1 + $0xd30] sm:$0xff]
  %v449 = vld [vmem:[%s1 + $0xd38] sm:$0xff]
  %v450 = vld [vmem:[%s1 + $0xd40] sm:$0xff]
  %v451 = vld [vmem:[%s1 + $0xd48] sm:$0xff]
  %v452 = vld [vmem:[%s1 + $0xd50] sm:$0xff]
  %v453 = vld [vmem:[%s1 + $0xd58] sm:$0xff]
  %v454 = vld [vmem:[%s1 + $0xd60] sm:$0xff]
  %v455 = vld [vmem:[%s1 + $0xd68] sm:$0xff]
  %v456 = vld [vmem:[%s1 + $0xd70] sm:$0xff]
  %v457 = vld [vmem:[%s1 + $0xd78] sm:$0xff]
  %v458 = vld [vmem:[%s1 + $0xd80] sm:$0xff]
  %v459 = vld [vmem:[%s1 + $0xd88] sm:$0xff]
  %v460 = vld [vmem:[%s1 + $0xd90] sm:$0xff]
  %v461 = vld [vmem:[%s1 + $0xd98] sm:$0xff]
  %v462 = vld [vmem:[%s1 + $0xda0] sm:$0xff]
  %v463 = vld [vmem:[%s1 + $0xda8] sm:$0xff]
  %v464 = vld [vmem:[%s1 + $0xdb0] sm:$0xff]
  %v465 = vld [vmem:[%s1 + $0xdb8] sm:$0xff]
  %v466 = vld [vmem:[%s1 + $0xdc0] sm:$0xff]
  %v467 = vld [vmem:[%s1 + $0xdc8] sm:$0xff]
  %v468 = vld [vmem:[%s1 + $0xdd0] sm:$0xff]
  %v469 = vld [vmem:[%s1 + $0xdd8] sm:$0xff]
  %v470 = vld [vmem:[%s1 + $0xde0] sm:$0xff]
  %v471 = vld [vmem:[%s1 + $0xde8] sm:$0xff]
  %v472 = vld [vmem:[%s1 + $0xdf0] sm:$0xff]
  %v473 = vld [vmem:[%s1 + $0xdf8] sm:$0xff]
  %v474 = vld [vmem:[%s1 + $0xe00] sm:$0xff]
  %v475 = vld [vmem:[%s1 + $0xe08] sm:$0xff]
  %v476 = vld [vmem:[%s1 + $0xe10] sm:$0xff]
  %v477 = vld [vmem:[%s1 + $0xe18] sm:$0xff]
  %v478 = vld [vmem:[%s1 + $0xe20] sm:$0xff]
  %v479 = vld [vmem:[%s1 + $0xe28] sm:$0xff]
  %v480 = vld [vmem:[%s1 + $0xe30] sm:$0xff]
  %v481 = vld [vmem:[%s1 + $0xe38] sm:$0xff]
  %v482 = vld [vmem:[%s1 + $0xe40] sm:$0xff]
  %v483 = vld [vmem:[%s1 + $0xe48] sm:$0xff]
  %v484 = vld [vmem:[%s1 + $0xe50] sm:$0xff]
  %v485 = vld [vmem:[%s1 + $0xe58] sm:$0xff]
  %v486 = vld [vmem:[%s1 + $0xe60] sm:$0xff]
  %v487 = vld [vmem:[%s1 + $0xe68] sm:$0xff]
  %v488 = vld [vmem:[%s1 + $0xe70] sm:$0xff]
  %v489 = vld [vmem:[%s1 + $0xe78] sm:$0xff]
  %v490 = vld [vmem:[%s1 + $0xe80] sm:$0xff]
  %v491 = vld [vmem:[%s1 + $0xe88] sm:$0xff]
  %v492 = vld [vmem:[%s1 + $0xe90] sm:$0xff]
  %v493 = vld [vmem:[%s1 + $0xe98] sm:$0xff]
  %v494 = vld [vmem:[%s1 + $0xea0] sm:$0xff]
  %v495 = vld [vmem:[%s1 + $0xea8] sm:$0xff]
  %v496 = vld [vmem:[%s1 + $0xeb0] sm:$0xff]
  %v497 = vld [vmem:[%s1 + $0xeb8] sm:$0xff]
  %v498 = vld [vmem:[%s1 + $0xec0] sm:$0xff]
  %v499 = vld [vmem:[%s1 + $0xec8] sm:$0xff]
  %v500 = vld [vmem:[%s1 + $0xed0] sm:$0xff]
  %v501 = vld [vmem:[%s1 + $0xed8] sm:$0xff]
  %v502 = vld [vmem:[%s1 + $0xee0] sm:$0xff]
  %v503 = vld [vmem:[%s1 + $0xee8] sm:$0xff]
  %v504 = vld [vmem:[%s1 + $0xef0] sm:$0xff]
  %v505 = vld [vmem:[%s1 + $0xef8] sm:$0xff]
  %v506 = vld [vmem:[%s1 + $0xf00] sm:$0xff]
  %v507 = vld [vmem:[%s1 + $0xf08] sm:$0xff]
  %v508 = vld [vmem:[%s1 + $0xf10] sm:$0xff]
  %v509 = vld [vmem:[%s1 + $0xf18] sm:$0xff]
  %v510 = vld [vmem:[%s1 + $0xf20] sm:$0xff]
  %v511 = vld [vmem:[%s1 + $0xf28] sm:$0xff]
  %v512 = vld [vmem:[%s1 + $0xf30] sm:$0xff]
  %v513 = vld [vmem:[%s1 + $0xf38] sm:$0xff]
  %v514 = vld [vmem:[%s1 + $0xf40] sm:$0xff]
  %v515 = vld [vmem:[%s1 + $0xf48] sm:$0xff]
  %v516 = vld [vmem:[%s1 + $0xf50] sm:$0xff]
  %v517 = vld [vmem:[%s1 + $0xf58] sm:$0xff]
  %v518 = vld [vmem:[%s1 + $0xf60] sm:$0xff]
  %v519 = vld [vmem:[%s1 + $0xf68] sm:$0xff]
  %v520 = vld [vmem:[%s1 + $0xf70] sm:$0xff]
  %v521 = vld [vmem:[%s1 + $0xf78] sm:$0xff]
  %v522 = vld [vmem:[%s1 + $0xf80] sm:$0xff]
  %v523 = vld [vmem:[%s1 + $0xf88] sm:$0xff]
  %v524 = vld [vmem:[%s1 + $0xf90] sm:$0xff]
  %v525 = vld [vmem:[%s1 + $0xf98] sm:$0xff]
  %v526 = vld [vmem:[%s1 + $0xfa0] sm:$0xff]
  %v527 = vld [vmem:[%s1 + $0xfa8] sm:$0xff]
  %v528 = vld [vmem:[%s1 + $0xfb0] sm:$0xff]
  %v529 = vld [vmem:[%s1 + $0xfb8] sm:$0xff]
  %v530 = vld [vmem:[%s1 + $0xfc0] sm:$0xff]
  %v531 = vld [vmem:[%s1 + $0xfc8] sm:$0xff]
  %v532 = vld [vmem:[%s1 + $0xfd0] sm:$0xff]
  %v533 = vld [vmem:[%s1 + $0xfd8] sm:$0xff]
  %v534 = vld [vmem:[%s1 + $0xfe0] sm:$0xff]
  %v535 = vld [vmem:[%s1 + $0xfe8] sm:$0xff]
  %v536 = vld [vmem:[%s1 + $0xff0] sm:$0xff]
  %v537 = vld [vmem:[%s1 + $0xff8] sm:$0xff]
  %v538 = vld [vmem:[%s2] sm:$0xff]
  %v540 = vlaneseq
  %v541 = vshrl.u32 %v540, 7
  %v542 = vsub.s32 0, %v541
  %v543 = vrot.slane %v538, %v542
  %v544 = vlaneseq
  %v545 = vshrl.u32 %v544, 7
  %v546 = vsub.s32 1, %v545
  %v547 = vrot.slane %v538, %v546
  %v548 = vlaneseq
  %v549 = vshrl.u32 %v548, 7
  %v550 = vsub.s32 2, %v549
  %v551 = vrot.slane %v538, %v550
  %v552 = vlaneseq
  %v553 = vshrl.u32 %v552, 7
  %v554 = vsub.s32 3, %v553
  %v555 = vrot.slane %v538, %v554
  %v556 = vlaneseq
  %v557 = vshrl.u32 %v556, 7
  %v558 = vsub.s32 4, %v557
  %v559 = vrot.slane %v538, %v558
  %v560 = vlaneseq
  %v561 = vshrl.u32 %v560, 7
  %v562 = vsub.s32 5, %v561
  %v563 = vrot.slane %v538, %v562
  %v564 = vlaneseq
  %v565 = vshrl.u32 %v564, 7
  %v566 = vsub.s32 6, %v565
  %v567 = vrot.slane %v538, %v566
  %v568 = vlaneseq
  %v569 = vshrl.u32 %v568, 7
  %v570 = vsub.s32 7, %v569
  %v571 = vrot.slane %v538, %v570
  %v584 = vunpack.c.l.b16 %v22
  %v585 = vunpack.c.h.b16 %v22
  %v586 = vunpack.c.l.b16 %v23
  %v587 = vunpack.c.h.b16 %v23
  %v588 = vunpack.c.l.b16 %v24
  %v589 = vunpack.c.h.b16 %v24
  %v590 = vunpack.c.l.b16 %v25
  %v591 = vunpack.c.h.b16 %v25
  %v592 = vpack.c.b16 %v584, %v584
  %v593 = vpack.c.b16 %v585, %v585
  %v594 = vpack.c.b16 %v586, %v586
  %v595 = vpack.c.b16 %v587, %v587
  %v596 = vpack.c.b16 %v588, %v588
  %v597 = vpack.c.b16 %v589, %v589
  %v598 = vpack.c.b16 %v590, %v590
  %v599 = vpack.c.b16 %v591, %v591
  %v1120 = vunpack.c.l.b16 %v26
  %v1121 = vunpack.c.h.b16 %v26
  %v1122 = vunpack.c.l.b16 %v27
  %v1123 = vunpack.c.h.b16 %v27
  %v1124 = vunpack.c.l.b16 %v28
  %v1125 = vunpack.c.h.b16 %v28
  %v1126 = vunpack.c.l.b16 %v29
  %v1127 = vunpack.c.h.b16 %v29
  %v1128 = vunpack.c.l.b16 %v30
  %v1129 = vunpack.c.h.b16 %v30
  %v1130 = vunpack.c.l.b16 %v31
  %v1131 = vunpack.c.h.b16 %v31
  %v1132 = vunpack.c.l.b16 %v32
  %v1133 = vunpack.c.h.b16 %v32
  %v1134 = vunpack.c.l.b16 %v33
  %v1135 = vunpack.c.h.b16 %v33
  %v1136 = vunpack.c.l.b16 %v34
  %v1137 = vunpack.c.h.b16 %v34
  %v1138 = vunpack.c.l.b16 %v35
  %v1139 = vunpack.c.h.b16 %v35
  %v1140 = vunpack.c.l.b16 %v36
  %v1141 = vunpack.c.h.b16 %v36
  %v1142 = vunpack.c.l.b16 %v37
  %v1143 = vunpack.c.h.b16 %v37
  %v1144 = vunpack.c.l.b16 %v38
  %v1145 = vunpack.c.h.b16 %v38
  %v1146 = vunpack.c.l.b16 %v39
  %v1147 = vunpack.c.h.b16 %v39
  %v1148 = vunpack.c.l.b16 %v40
  %v1149 = vunpack.c.h.b16 %v40
  %v1150 = vunpack.c.l.b16 %v41
  %v1151 = vunpack.c.h.b16 %v41
  %v1152 = vunpack.c.l.b16 %v42
  %v1153 = vunpack.c.h.b16 %v42
  %v1154 = vunpack.c.l.b16 %v43
  %v1155 = vunpack.c.h.b16 %v43
  %v1156 = vunpack.c.l.b16 %v44
  %v1157 = vunpack.c.h.b16 %v44
  %v1158 = vunpack.c.l.b16 %v45
  %v1159 = vunpack.c.h.b16 %v45
  %v1160 = vunpack.c.l.b16 %v46
  %v1161 = vunpack.c.h.b16 %v46
  %v1162 = vunpack.c.l.b16 %v47
  %v1163 = vunpack.c.h.b16 %v47
  %v1164 = vunpack.c.l.b16 %v48
  %v1165 = vunpack.c.h.b16 %v48
  %v1166 = vunpack.c.l.b16 %v49
  %v1167 = vunpack.c.h.b16 %v49
  %v1168 = vunpack.c.l.b16 %v50
  %v1169 = vunpack.c.h.b16 %v50
  %v1170 = vunpack.c.l.b16 %v51
  %v1171 = vunpack.c.h.b16 %v51
  %v1172 = vunpack.c.l.b16 %v52
  %v1173 = vunpack.c.h.b16 %v52
  %v1174 = vunpack.c.l.b16 %v53
  %v1175 = vunpack.c.h.b16 %v53
  %v1176 = vunpack.c.l.b16 %v54
  %v1177 = vunpack.c.h.b16 %v54
  %v1178 = vunpack.c.l.b16 %v55
  %v1179 = vunpack.c.h.b16 %v55
  %v1180 = vunpack.c.l.b16 %v56
  %v1181 = vunpack.c.h.b16 %v56
  %v1182 = vunpack.c.l.b16 %v57
  %v1183 = vunpack.c.h.b16 %v57
  %v1184 = vunpack.c.l.b16 %v58
  %v1185 = vunpack.c.h.b16 %v58
  %v1186 = vunpack.c.l.b16 %v59
  %v1187 = vunpack.c.h.b16 %v59
  %v1188 = vunpack.c.l.b16 %v60
  %v1189 = vunpack.c.h.b16 %v60
  %v1190 = vunpack.c.l.b16 %v61
  %v1191 = vunpack.c.h.b16 %v61
  %v1192 = vunpack.c.l.b16 %v62
  %v1193 = vunpack.c.h.b16 %v62
  %v1194 = vunpack.c.l.b16 %v63
  %v1195 = vunpack.c.h.b16 %v63
  %v1196 = vunpack.c.l.b16 %v64
  %v1197 = vunpack.c.h.b16 %v64
  %v1198 = vunpack.c.l.b16 %v65
  %v1199 = vunpack.c.h.b16 %v65
  %v1200 = vunpack.c.l.b16 %v66
  %v1201 = vunpack.c.h.b16 %v66
  %v1202 = vunpack.c.l.b16 %v67
  %v1203 = vunpack.c.h.b16 %v67
  %v1204 = vunpack.c.l.b16 %v68
  %v1205 = vunpack.c.h.b16 %v68
  %v1206 = vunpack.c.l.b16 %v69
  %v1207 = vunpack.c.h.b16 %v69
  %v1208 = vunpack.c.l.b16 %v70
  %v1209 = vunpack.c.h.b16 %v70
  %v1210 = vunpack.c.l.b16 %v71
  %v1211 = vunpack.c.h.b16 %v71
  %v1212 = vunpack.c.l.b16 %v72
  %v1213 = vunpack.c.h.b16 %v72
  %v1214 = vunpack.c.l.b16 %v73
  %v1215 = vunpack.c.h.b16 %v73
  %v1216 = vunpack.c.l.b16 %v74
  %v1217 = vunpack.c.h.b16 %v74
  %v1218 = vunpack.c.l.b16 %v75
  %v1219 = vunpack.c.h.b16 %v75
  %v1220 = vunpack.c.l.b16 %v76
  %v1221 = vunpack.c.h.b16 %v76
  %v1222 = vunpack.c.l.b16 %v77
  %v1223 = vunpack.c.h.b16 %v77
  %v1224 = vunpack.c.l.b16 %v78
  %v1225 = vunpack.c.h.b16 %v78
  %v1226 = vunpack.c.l.b16 %v79
  %v1227 = vunpack.c.h.b16 %v79
  %v1228 = vunpack.c.l.b16 %v80
  %v1229 = vunpack.c.h.b16 %v80
  %v1230 = vunpack.c.l.b16 %v81
  %v1231 = vunpack.c.h.b16 %v81
  %v1232 = vunpack.c.l.b16 %v82
  %v1233 = vunpack.c.h.b16 %v82
  %v1234 = vunpack.c.l.b16 %v83
  %v1235 = vunpack.c.h.b16 %v83
  %v1236 = vunpack.c.l.b16 %v84
  %v1237 = vunpack.c.h.b16 %v84
  %v1238 = vunpack.c.l.b16 %v85
  %v1239 = vunpack.c.h.b16 %v85
  %v1240 = vunpack.c.l.b16 %v86
  %v1241 = vunpack.c.h.b16 %v86
  %v1242 = vunpack.c.l.b16 %v87
  %v1243 = vunpack.c.h.b16 %v87
  %v1244 = vunpack.c.l.b16 %v88
  %v1245 = vunpack.c.h.b16 %v88
  %v1246 = vunpack.c.l.b16 %v89
  %v1247 = vunpack.c.h.b16 %v89
  %v1248 = vunpack.c.l.b16 %v90
  %v1249 = vunpack.c.h.b16 %v90
  %v1250 = vunpack.c.l.b16 %v91
  %v1251 = vunpack.c.h.b16 %v91
  %v1252 = vunpack.c.l.b16 %v92
  %v1253 = vunpack.c.h.b16 %v92
  %v1254 = vunpack.c.l.b16 %v93
  %v1255 = vunpack.c.h.b16 %v93
  %v1256 = vunpack.c.l.b16 %v94
  %v1257 = vunpack.c.h.b16 %v94
  %v1258 = vunpack.c.l.b16 %v95
  %v1259 = vunpack.c.h.b16 %v95
  %v1260 = vunpack.c.l.b16 %v96
  %v1261 = vunpack.c.h.b16 %v96
  %v1262 = vunpack.c.l.b16 %v97
  %v1263 = vunpack.c.h.b16 %v97
  %v1264 = vunpack.c.l.b16 %v98
  %v1265 = vunpack.c.h.b16 %v98
  %v1266 = vunpack.c.l.b16 %v99
  %v1267 = vunpack.c.h.b16 %v99
  %v1268 = vunpack.c.l.b16 %v100
  %v1269 = vunpack.c.h.b16 %v100
  %v1270 = vunpack.c.l.b16 %v101
  %v1271 = vunpack.c.h.b16 %v101
  %v1272 = vunpack.c.l.b16 %v102
  %v1273 = vunpack.c.h.b16 %v102
  %v1274 = vunpack.c.l.b16 %v103
  %v1275 = vunpack.c.h.b16 %v103
  %v1276 = vunpack.c.l.b16 %v104
  %v1277 = vunpack.c.h.b16 %v104
  %v1278 = vunpack.c.l.b16 %v105
  %v1279 = vunpack.c.h.b16 %v105
  %v1280 = vunpack.c.l.b16 %v106
  %v1281 = vunpack.c.h.b16 %v106
  %v1282 = vunpack.c.l.b16 %v107
  %v1283 = vunpack.c.h.b16 %v107
  %v1284 = vunpack.c.l.b16 %v108
  %v1285 = vunpack.c.h.b16 %v108
  %v1286 = vunpack.c.l.b16 %v109
  %v1287 = vunpack.c.h.b16 %v109
  %v1288 = vunpack.c.l.b16 %v110
  %v1289 = vunpack.c.h.b16 %v110
  %v1290 = vunpack.c.l.b16 %v111
  %v1291 = vunpack.c.h.b16 %v111
  %v1292 = vunpack.c.l.b16 %v112
  %v1293 = vunpack.c.h.b16 %v112
  %v1294 = vunpack.c.l.b16 %v113
  %v1295 = vunpack.c.h.b16 %v113
  %v1296 = vunpack.c.l.b16 %v114
  %v1297 = vunpack.c.h.b16 %v114
  %v1298 = vunpack.c.l.b16 %v115
  %v1299 = vunpack.c.h.b16 %v115
  %v1300 = vunpack.c.l.b16 %v116
  %v1301 = vunpack.c.h.b16 %v116
  %v1302 = vunpack.c.l.b16 %v117
  %v1303 = vunpack.c.h.b16 %v117
  %v1304 = vunpack.c.l.b16 %v118
  %v1305 = vunpack.c.h.b16 %v118
  %v1306 = vunpack.c.l.b16 %v119
  %v1307 = vunpack.c.h.b16 %v119
  %v1308 = vunpack.c.l.b16 %v120
  %v1309 = vunpack.c.h.b16 %v120
  %v1310 = vunpack.c.l.b16 %v121
  %v1311 = vunpack.c.h.b16 %v121
  %v1312 = vunpack.c.l.b16 %v122
  %v1313 = vunpack.c.h.b16 %v122
  %v1314 = vunpack.c.l.b16 %v123
  %v1315 = vunpack.c.h.b16 %v123
  %v1316 = vunpack.c.l.b16 %v124
  %v1317 = vunpack.c.h.b16 %v124
  %v1318 = vunpack.c.l.b16 %v125
  %v1319 = vunpack.c.h.b16 %v125
  %v1320 = vunpack.c.l.b16 %v126
  %v1321 = vunpack.c.h.b16 %v126
  %v1322 = vunpack.c.l.b16 %v127
  %v1323 = vunpack.c.h.b16 %v127
  %v1324 = vunpack.c.l.b16 %v128
  %v1325 = vunpack.c.h.b16 %v128
  %v1326 = vunpack.c.l.b16 %v129
  %v1327 = vunpack.c.h.b16 %v129
  %v1328 = vunpack.c.l.b16 %v130
  %v1329 = vunpack.c.h.b16 %v130
  %v1330 = vunpack.c.l.b16 %v131
  %v1331 = vunpack.c.h.b16 %v131
  %v1332 = vunpack.c.l.b16 %v132
  %v1333 = vunpack.c.h.b16 %v132
  %v1334 = vunpack.c.l.b16 %v133
  %v1335 = vunpack.c.h.b16 %v133
  %v1336 = vunpack.c.l.b16 %v134
  %v1337 = vunpack.c.h.b16 %v134
  %v1338 = vunpack.c.l.b16 %v135
  %v1339 = vunpack.c.h.b16 %v135
  %v1340 = vunpack.c.l.b16 %v136
  %v1341 = vunpack.c.h.b16 %v136
  %v1342 = vunpack.c.l.b16 %v137
  %v1343 = vunpack.c.h.b16 %v137
  %v1344 = vunpack.c.l.b16 %v138
  %v1345 = vunpack.c.h.b16 %v138
  %v1346 = vunpack.c.l.b16 %v139
  %v1347 = vunpack.c.h.b16 %v139
  %v1348 = vunpack.c.l.b16 %v140
  %v1349 = vunpack.c.h.b16 %v140
  %v1350 = vunpack.c.l.b16 %v141
  %v1351 = vunpack.c.h.b16 %v141
  %v1352 = vunpack.c.l.b16 %v142
  %v1353 = vunpack.c.h.b16 %v142
  %v1354 = vunpack.c.l.b16 %v143
  %v1355 = vunpack.c.h.b16 %v143
  %v1356 = vunpack.c.l.b16 %v144
  %v1357 = vunpack.c.h.b16 %v144
  %v1358 = vunpack.c.l.b16 %v145
  %v1359 = vunpack.c.h.b16 %v145
  %v1360 = vunpack.c.l.b16 %v146
  %v1361 = vunpack.c.h.b16 %v146
  %v1362 = vunpack.c.l.b16 %v147
  %v1363 = vunpack.c.h.b16 %v147
  %v1364 = vunpack.c.l.b16 %v148
  %v1365 = vunpack.c.h.b16 %v148
  %v1366 = vunpack.c.l.b16 %v149
  %v1367 = vunpack.c.h.b16 %v149
  %v1368 = vunpack.c.l.b16 %v150
  %v1369 = vunpack.c.h.b16 %v150
  %v1370 = vunpack.c.l.b16 %v151
  %v1371 = vunpack.c.h.b16 %v151
  %v1372 = vunpack.c.l.b16 %v152
  %v1373 = vunpack.c.h.b16 %v152
  %v1374 = vunpack.c.l.b16 %v153
  %v1375 = vunpack.c.h.b16 %v153
  %v1376 = vunpack.c.l.b16 %v154
  %v1377 = vunpack.c.h.b16 %v154
  %v1378 = vunpack.c.l.b16 %v155
  %v1379 = vunpack.c.h.b16 %v155
  %v1380 = vunpack.c.l.b16 %v156
  %v1381 = vunpack.c.h.b16 %v156
  %v1382 = vunpack.c.l.b16 %v157
  %v1383 = vunpack.c.h.b16 %v157
  %v1384 = vunpack.c.l.b16 %v158
  %v1385 = vunpack.c.h.b16 %v158
  %v1386 = vunpack.c.l.b16 %v159
  %v1387 = vunpack.c.h.b16 %v159
  %v1388 = vunpack.c.l.b16 %v160
  %v1389 = vunpack.c.h.b16 %v160
  %v1390 = vunpack.c.l.b16 %v161
  %v1391 = vunpack.c.h.b16 %v161
  %v1392 = vunpack.c.l.b16 %v162
  %v1393 = vunpack.c.h.b16 %v162
  %v1394 = vunpack.c.l.b16 %v163
  %v1395 = vunpack.c.h.b16 %v163
  %v1396 = vunpack.c.l.b16 %v164
  %v1397 = vunpack.c.h.b16 %v164
  %v1398 = vunpack.c.l.b16 %v165
  %v1399 = vunpack.c.h.b16 %v165
  %v1400 = vunpack.c.l.b16 %v166
  %v1401 = vunpack.c.h.b16 %v166
  %v1402 = vunpack.c.l.b16 %v167
  %v1403 = vunpack.c.h.b16 %v167
  %v1404 = vunpack.c.l.b16 %v168
  %v1405 = vunpack.c.h.b16 %v168
  %v1406 = vunpack.c.l.b16 %v169
  %v1407 = vunpack.c.h.b16 %v169
  %v1408 = vunpack.c.l.b16 %v170
  %v1409 = vunpack.c.h.b16 %v170
  %v1410 = vunpack.c.l.b16 %v171
  %v1411 = vunpack.c.h.b16 %v171
  %v1412 = vunpack.c.l.b16 %v172
  %v1413 = vunpack.c.h.b16 %v172
  %v1414 = vunpack.c.l.b16 %v173
  %v1415 = vunpack.c.h.b16 %v173
  %v1416 = vunpack.c.l.b16 %v174
  %v1417 = vunpack.c.h.b16 %v174
  %v1418 = vunpack.c.l.b16 %v175
  %v1419 = vunpack.c.h.b16 %v175
  %v1420 = vunpack.c.l.b16 %v176
  %v1421 = vunpack.c.h.b16 %v176
  %v1422 = vunpack.c.l.b16 %v177
  %v1423 = vunpack.c.h.b16 %v177
  %v1424 = vunpack.c.l.b16 %v178
  %v1425 = vunpack.c.h.b16 %v178
  %v1426 = vunpack.c.l.b16 %v179
  %v1427 = vunpack.c.h.b16 %v179
  %v1428 = vunpack.c.l.b16 %v180
  %v1429 = vunpack.c.h.b16 %v180
  %v1430 = vunpack.c.l.b16 %v181
  %v1431 = vunpack.c.h.b16 %v181
  %v1432 = vunpack.c.l.b16 %v182
  %v1433 = vunpack.c.h.b16 %v182
  %v1434 = vunpack.c.l.b16 %v183
  %v1435 = vunpack.c.h.b16 %v183
  %v1436 = vunpack.c.l.b16 %v184
  %v1437 = vunpack.c.h.b16 %v184
  %v1438 = vunpack.c.l.b16 %v185
  %v1439 = vunpack.c.h.b16 %v185
  %v1440 = vunpack.c.l.b16 %v186
  %v1441 = vunpack.c.h.b16 %v186
  %v1442 = vunpack.c.l.b16 %v187
  %v1443 = vunpack.c.h.b16 %v187
  %v1444 = vunpack.c.l.b16 %v188
  %v1445 = vunpack.c.h.b16 %v188
  %v1446 = vunpack.c.l.b16 %v189
  %v1447 = vunpack.c.h.b16 %v189
  %v1448 = vunpack.c.l.b16 %v190
  %v1449 = vunpack.c.h.b16 %v190
  %v1450 = vunpack.c.l.b16 %v191
  %v1451 = vunpack.c.h.b16 %v191
  %v1452 = vunpack.c.l.b16 %v192
  %v1453 = vunpack.c.h.b16 %v192
  %v1454 = vunpack.c.l.b16 %v193
  %v1455 = vunpack.c.h.b16 %v193
  %v1456 = vunpack.c.l.b16 %v194
  %v1457 = vunpack.c.h.b16 %v194
  %v1458 = vunpack.c.l.b16 %v195
  %v1459 = vunpack.c.h.b16 %v195
  %v1460 = vunpack.c.l.b16 %v196
  %v1461 = vunpack.c.h.b16 %v196
  %v1462 = vunpack.c.l.b16 %v197
  %v1463 = vunpack.c.h.b16 %v197
  %v1464 = vunpack.c.l.b16 %v198
  %v1465 = vunpack.c.h.b16 %v198
  %v1466 = vunpack.c.l.b16 %v199
  %v1467 = vunpack.c.h.b16 %v199
  %v1468 = vunpack.c.l.b16 %v200
  %v1469 = vunpack.c.h.b16 %v200
  %v1470 = vunpack.c.l.b16 %v201
  %v1471 = vunpack.c.h.b16 %v201
  %v1472 = vunpack.c.l.b16 %v202
  %v1473 = vunpack.c.h.b16 %v202
  %v1474 = vunpack.c.l.b16 %v203
  %v1475 = vunpack.c.h.b16 %v203
  %v1476 = vunpack.c.l.b16 %v204
  %v1477 = vunpack.c.h.b16 %v204
  %v1478 = vunpack.c.l.b16 %v205
  %v1479 = vunpack.c.h.b16 %v205
  %v1480 = vunpack.c.l.b16 %v206
  %v1481 = vunpack.c.h.b16 %v206
  %v1482 = vunpack.c.l.b16 %v207
  %v1483 = vunpack.c.h.b16 %v207
  %v1484 = vunpack.c.l.b16 %v208
  %v1485 = vunpack.c.h.b16 %v208
  %v1486 = vunpack.c.l.b16 %v209
  %v1487 = vunpack.c.h.b16 %v209
  %v1488 = vunpack.c.l.b16 %v210
  %v1489 = vunpack.c.h.b16 %v210
  %v1490 = vunpack.c.l.b16 %v211
  %v1491 = vunpack.c.h.b16 %v211
  %v1492 = vunpack.c.l.b16 %v212
  %v1493 = vunpack.c.h.b16 %v212
  %v1494 = vunpack.c.l.b16 %v213
  %v1495 = vunpack.c.h.b16 %v213
  %v1496 = vunpack.c.l.b16 %v214
  %v1497 = vunpack.c.h.b16 %v214
  %v1498 = vunpack.c.l.b16 %v215
  %v1499 = vunpack.c.h.b16 %v215
  %v1500 = vunpack.c.l.b16 %v216
  %v1501 = vunpack.c.h.b16 %v216
  %v1502 = vunpack.c.l.b16 %v217
  %v1503 = vunpack.c.h.b16 %v217
  %v1504 = vunpack.c.l.b16 %v218
  %v1505 = vunpack.c.h.b16 %v218
  %v1506 = vunpack.c.l.b16 %v219
  %v1507 = vunpack.c.h.b16 %v219
  %v1508 = vunpack.c.l.b16 %v220
  %v1509 = vunpack.c.h.b16 %v220
  %v1510 = vunpack.c.l.b16 %v221
  %v1511 = vunpack.c.h.b16 %v221
  %v1512 = vunpack.c.l.b16 %v222
  %v1513 = vunpack.c.h.b16 %v222
  %v1514 = vunpack.c.l.b16 %v223
  %v1515 = vunpack.c.h.b16 %v223
  %v1516 = vunpack.c.l.b16 %v224
  %v1517 = vunpack.c.h.b16 %v224
  %v1518 = vunpack.c.l.b16 %v225
  %v1519 = vunpack.c.h.b16 %v225
  %v1520 = vunpack.c.l.b16 %v226
  %v1521 = vunpack.c.h.b16 %v226
  %v1522 = vunpack.c.l.b16 %v227
  %v1523 = vunpack.c.h.b16 %v227
  %v1524 = vunpack.c.l.b16 %v228
  %v1525 = vunpack.c.h.b16 %v228
  %v1526 = vunpack.c.l.b16 %v229
  %v1527 = vunpack.c.h.b16 %v229
  %v1528 = vunpack.c.l.b16 %v230
  %v1529 = vunpack.c.h.b16 %v230
  %v1530 = vunpack.c.l.b16 %v231
  %v1531 = vunpack.c.h.b16 %v231
  %v1532 = vunpack.c.l.b16 %v232
  %v1533 = vunpack.c.h.b16 %v232
  %v1534 = vunpack.c.l.b16 %v233
  %v1535 = vunpack.c.h.b16 %v233
  %v1536 = vunpack.c.l.b16 %v234
  %v1537 = vunpack.c.h.b16 %v234
  %v1538 = vunpack.c.l.b16 %v235
  %v1539 = vunpack.c.h.b16 %v235
  %v1540 = vunpack.c.l.b16 %v236
  %v1541 = vunpack.c.h.b16 %v236
  %v1542 = vunpack.c.l.b16 %v237
  %v1543 = vunpack.c.h.b16 %v237
  %v1544 = vunpack.c.l.b16 %v238
  %v1545 = vunpack.c.h.b16 %v238
  %v1546 = vunpack.c.l.b16 %v239
  %v1547 = vunpack.c.h.b16 %v239
  %v1548 = vunpack.c.l.b16 %v240
  %v1549 = vunpack.c.h.b16 %v240
  %v1550 = vunpack.c.l.b16 %v241
  %v1551 = vunpack.c.h.b16 %v241
  %v1552 = vunpack.c.l.b16 %v242
  %v1553 = vunpack.c.h.b16 %v242
  %v1554 = vunpack.c.l.b16 %v243
  %v1555 = vunpack.c.h.b16 %v243
  %v1556 = vunpack.c.l.b16 %v244
  %v1557 = vunpack.c.h.b16 %v244
  %v1558 = vunpack.c.l.b16 %v245
  %v1559 = vunpack.c.h.b16 %v245
  %v1560 = vunpack.c.l.b16 %v246
  %v1561 = vunpack.c.h.b16 %v246
  %v1562 = vunpack.c.l.b16 %v247
  %v1563 = vunpack.c.h.b16 %v247
  %v1564 = vunpack.c.l.b16 %v248
  %v1565 = vunpack.c.h.b16 %v248
  %v1566 = vunpack.c.l.b16 %v249
  %v1567 = vunpack.c.h.b16 %v249
  %v1568 = vunpack.c.l.b16 %v250
  %v1569 = vunpack.c.h.b16 %v250
  %v1570 = vunpack.c.l.b16 %v251
  %v1571 = vunpack.c.h.b16 %v251
  %v1572 = vunpack.c.l.b16 %v252
  %v1573 = vunpack.c.h.b16 %v252
  %v1574 = vunpack.c.l.b16 %v253
  %v1575 = vunpack.c.h.b16 %v253
  %v1576 = vunpack.c.l.b16 %v254
  %v1577 = vunpack.c.h.b16 %v254
  %v1578 = vunpack.c.l.b16 %v255
  %v1579 = vunpack.c.h.b16 %v255
  %v1580 = vunpack.c.l.b16 %v256
  %v1581 = vunpack.c.h.b16 %v256
  %v1582 = vunpack.c.l.b16 %v257
  %v1583 = vunpack.c.h.b16 %v257
  %v1584 = vunpack.c.l.b16 %v258
  %v1585 = vunpack.c.h.b16 %v258
  %v1586 = vunpack.c.l.b16 %v259
  %v1587 = vunpack.c.h.b16 %v259
  %v1588 = vunpack.c.l.b16 %v260
  %v1589 = vunpack.c.h.b16 %v260
  %v1590 = vunpack.c.l.b16 %v261
  %v1591 = vunpack.c.h.b16 %v261
  %v1592 = vunpack.c.l.b16 %v262
  %v1593 = vunpack.c.h.b16 %v262
  %v1594 = vunpack.c.l.b16 %v263
  %v1595 = vunpack.c.h.b16 %v263
  %v1596 = vunpack.c.l.b16 %v264
  %v1597 = vunpack.c.h.b16 %v264
  %v1598 = vunpack.c.l.b16 %v265
  %v1599 = vunpack.c.h.b16 %v265
  %v1600 = vunpack.c.l.b16 %v266
  %v1601 = vunpack.c.h.b16 %v266
  %v1602 = vunpack.c.l.b16 %v267
  %v1603 = vunpack.c.h.b16 %v267
  %v1604 = vunpack.c.l.b16 %v268
  %v1605 = vunpack.c.h.b16 %v268
  %v1606 = vunpack.c.l.b16 %v269
  %v1607 = vunpack.c.h.b16 %v269
  %v1608 = vunpack.c.l.b16 %v270
  %v1609 = vunpack.c.h.b16 %v270
  %v1610 = vunpack.c.l.b16 %v271
  %v1611 = vunpack.c.h.b16 %v271
  %v1612 = vunpack.c.l.b16 %v272
  %v1613 = vunpack.c.h.b16 %v272
  %v1614 = vunpack.c.l.b16 %v273
  %v1615 = vunpack.c.h.b16 %v273
  %v1616 = vunpack.c.l.b16 %v274
  %v1617 = vunpack.c.h.b16 %v274
  %v1618 = vunpack.c.l.b16 %v275
  %v1619 = vunpack.c.h.b16 %v275
  %v1620 = vunpack.c.l.b16 %v276
  %v1621 = vunpack.c.h.b16 %v276
  %v1622 = vunpack.c.l.b16 %v277
  %v1623 = vunpack.c.h.b16 %v277
  %v1624 = vunpack.c.l.b16 %v278
  %v1625 = vunpack.c.h.b16 %v278
  %v1626 = vunpack.c.l.b16 %v279
  %v1627 = vunpack.c.h.b16 %v279
  %v1628 = vunpack.c.l.b16 %v280
  %v1629 = vunpack.c.h.b16 %v280
  %v1630 = vunpack.c.l.b16 %v281
  %v1631 = vunpack.c.h.b16 %v281
  %v1632 = vunpack.c.l.b16 %v282
  %v1633 = vunpack.c.h.b16 %v282
  %v1634 = vunpack.c.l.b16 %v283
  %v1635 = vunpack.c.h.b16 %v283
  %v1636 = vunpack.c.l.b16 %v284
  %v1637 = vunpack.c.h.b16 %v284
  %v1638 = vunpack.c.l.b16 %v285
  %v1639 = vunpack.c.h.b16 %v285
  %v1640 = vunpack.c.l.b16 %v286
  %v1641 = vunpack.c.h.b16 %v286
  %v1642 = vunpack.c.l.b16 %v287
  %v1643 = vunpack.c.h.b16 %v287
  %v1644 = vunpack.c.l.b16 %v288
  %v1645 = vunpack.c.h.b16 %v288
  %v1646 = vunpack.c.l.b16 %v289
  %v1647 = vunpack.c.h.b16 %v289
  %v1648 = vunpack.c.l.b16 %v290
  %v1649 = vunpack.c.h.b16 %v290
  %v1650 = vunpack.c.l.b16 %v291
  %v1651 = vunpack.c.h.b16 %v291
  %v1652 = vunpack.c.l.b16 %v292
  %v1653 = vunpack.c.h.b16 %v292
  %v1654 = vunpack.c.l.b16 %v293
  %v1655 = vunpack.c.h.b16 %v293
  %v1656 = vunpack.c.l.b16 %v294
  %v1657 = vunpack.c.h.b16 %v294
  %v1658 = vunpack.c.l.b16 %v295
  %v1659 = vunpack.c.h.b16 %v295
  %v1660 = vunpack.c.l.b16 %v296
  %v1661 = vunpack.c.h.b16 %v296
  %v1662 = vunpack.c.l.b16 %v297
  %v1663 = vunpack.c.h.b16 %v297
  %v1664 = vunpack.c.l.b16 %v298
  %v1665 = vunpack.c.h.b16 %v298
  %v1666 = vunpack.c.l.b16 %v299
  %v1667 = vunpack.c.h.b16 %v299
  %v1668 = vunpack.c.l.b16 %v300
  %v1669 = vunpack.c.h.b16 %v300
  %v1670 = vunpack.c.l.b16 %v301
  %v1671 = vunpack.c.h.b16 %v301
  %v1672 = vunpack.c.l.b16 %v302
  %v1673 = vunpack.c.h.b16 %v302
  %v1674 = vunpack.c.l.b16 %v303
  %v1675 = vunpack.c.h.b16 %v303
  %v1676 = vunpack.c.l.b16 %v304
  %v1677 = vunpack.c.h.b16 %v304
  %v1678 = vunpack.c.l.b16 %v305
  %v1679 = vunpack.c.h.b16 %v305
  %v1680 = vunpack.c.l.b16 %v306
  %v1681 = vunpack.c.h.b16 %v306
  %v1682 = vunpack.c.l.b16 %v307
  %v1683 = vunpack.c.h.b16 %v307
  %v1684 = vunpack.c.l.b16 %v308
  %v1685 = vunpack.c.h.b16 %v308
  %v1686 = vunpack.c.l.b16 %v309
  %v1687 = vunpack.c.h.b16 %v309
  %v1688 = vunpack.c.l.b16 %v310
  %v1689 = vunpack.c.h.b16 %v310
  %v1690 = vunpack.c.l.b16 %v311
  %v1691 = vunpack.c.h.b16 %v311
  %v1692 = vunpack.c.l.b16 %v312
  %v1693 = vunpack.c.h.b16 %v312
  %v1694 = vunpack.c.l.b16 %v313
  %v1695 = vunpack.c.h.b16 %v313
  %v1696 = vunpack.c.l.b16 %v314
  %v1697 = vunpack.c.h.b16 %v314
  %v1698 = vunpack.c.l.b16 %v315
  %v1699 = vunpack.c.h.b16 %v315
  %v1700 = vunpack.c.l.b16 %v316
  %v1701 = vunpack.c.h.b16 %v316
  %v1702 = vunpack.c.l.b16 %v317
  %v1703 = vunpack.c.h.b16 %v317
  %v1704 = vunpack.c.l.b16 %v318
  %v1705 = vunpack.c.h.b16 %v318
  %v1706 = vunpack.c.l.b16 %v319
  %v1707 = vunpack.c.h.b16 %v319
  %v1708 = vunpack.c.l.b16 %v320
  %v1709 = vunpack.c.h.b16 %v320
  %v1710 = vunpack.c.l.b16 %v321
  %v1711 = vunpack.c.h.b16 %v321
  %v1712 = vunpack.c.l.b16 %v322
  %v1713 = vunpack.c.h.b16 %v322
  %v1714 = vunpack.c.l.b16 %v323
  %v1715 = vunpack.c.h.b16 %v323
  %v1716 = vunpack.c.l.b16 %v324
  %v1717 = vunpack.c.h.b16 %v324
  %v1718 = vunpack.c.l.b16 %v325
  %v1719 = vunpack.c.h.b16 %v325
  %v1720 = vunpack.c.l.b16 %v326
  %v1721 = vunpack.c.h.b16 %v326
  %v1722 = vunpack.c.l.b16 %v327
  %v1723 = vunpack.c.h.b16 %v327
  %v1724 = vunpack.c.l.b16 %v328
  %v1725 = vunpack.c.h.b16 %v328
  %v1726 = vunpack.c.l.b16 %v329
  %v1727 = vunpack.c.h.b16 %v329
  %v1728 = vunpack.c.l.b16 %v330
  %v1729 = vunpack.c.h.b16 %v330
  %v1730 = vunpack.c.l.b16 %v331
  %v1731 = vunpack.c.h.b16 %v331
  %v1732 = vunpack.c.l.b16 %v332
  %v1733 = vunpack.c.h.b16 %v332
  %v1734 = vunpack.c.l.b16 %v333
  %v1735 = vunpack.c.h.b16 %v333
  %v1736 = vunpack.c.l.b16 %v334
  %v1737 = vunpack.c.h.b16 %v334
  %v1738 = vunpack.c.l.b16 %v335
  %v1739 = vunpack.c.h.b16 %v335
  %v1740 = vunpack.c.l.b16 %v336
  %v1741 = vunpack.c.h.b16 %v336
  %v1742 = vunpack.c.l.b16 %v337
  %v1743 = vunpack.c.h.b16 %v337
  %v1744 = vunpack.c.l.b16 %v338
  %v1745 = vunpack.c.h.b16 %v338
  %v1746 = vunpack.c.l.b16 %v339
  %v1747 = vunpack.c.h.b16 %v339
  %v1748 = vunpack.c.l.b16 %v340
  %v1749 = vunpack.c.h.b16 %v340
  %v1750 = vunpack.c.l.b16 %v341
  %v1751 = vunpack.c.h.b16 %v341
  %v1752 = vunpack.c.l.b16 %v342
  %v1753 = vunpack.c.h.b16 %v342
  %v1754 = vunpack.c.l.b16 %v343
  %v1755 = vunpack.c.h.b16 %v343
  %v1756 = vunpack.c.l.b16 %v344
  %v1757 = vunpack.c.h.b16 %v344
  %v1758 = vunpack.c.l.b16 %v345
  %v1759 = vunpack.c.h.b16 %v345
  %v1760 = vunpack.c.l.b16 %v346
  %v1761 = vunpack.c.h.b16 %v346
  %v1762 = vunpack.c.l.b16 %v347
  %v1763 = vunpack.c.h.b16 %v347
  %v1764 = vunpack.c.l.b16 %v348
  %v1765 = vunpack.c.h.b16 %v348
  %v1766 = vunpack.c.l.b16 %v349
  %v1767 = vunpack.c.h.b16 %v349
  %v1768 = vunpack.c.l.b16 %v350
  %v1769 = vunpack.c.h.b16 %v350
  %v1770 = vunpack.c.l.b16 %v351
  %v1771 = vunpack.c.h.b16 %v351
  %v1772 = vunpack.c.l.b16 %v352
  %v1773 = vunpack.c.h.b16 %v352
  %v1774 = vunpack.c.l.b16 %v353
  %v1775 = vunpack.c.h.b16 %v353
  %v1776 = vunpack.c.l.b16 %v354
  %v1777 = vunpack.c.h.b16 %v354
  %v1778 = vunpack.c.l.b16 %v355
  %v1779 = vunpack.c.h.b16 %v355
  %v1780 = vunpack.c.l.b16 %v356
  %v1781 = vunpack.c.h.b16 %v356
  %v1782 = vunpack.c.l.b16 %v357
  %v1783 = vunpack.c.h.b16 %v357
  %v1784 = vunpack.c.l.b16 %v358
  %v1785 = vunpack.c.h.b16 %v358
  %v1786 = vunpack.c.l.b16 %v359
  %v1787 = vunpack.c.h.b16 %v359
  %v1788 = vunpack.c.l.b16 %v360
  %v1789 = vunpack.c.h.b16 %v360
  %v1790 = vunpack.c.l.b16 %v361
  %v1791 = vunpack.c.h.b16 %v361
  %v1792 = vunpack.c.l.b16 %v362
  %v1793 = vunpack.c.h.b16 %v362
  %v1794 = vunpack.c.l.b16 %v363
  %v1795 = vunpack.c.h.b16 %v363
  %v1796 = vunpack.c.l.b16 %v364
  %v1797 = vunpack.c.h.b16 %v364
  %v1798 = vunpack.c.l.b16 %v365
  %v1799 = vunpack.c.h.b16 %v365
  %v1800 = vunpack.c.l.b16 %v366
  %v1801 = vunpack.c.h.b16 %v366
  %v1802 = vunpack.c.l.b16 %v367
  %v1803 = vunpack.c.h.b16 %v367
  %v1804 = vunpack.c.l.b16 %v368
  %v1805 = vunpack.c.h.b16 %v368
  %v1806 = vunpack.c.l.b16 %v369
  %v1807 = vunpack.c.h.b16 %v369
  %v1808 = vunpack.c.l.b16 %v370
  %v1809 = vunpack.c.h.b16 %v370
  %v1810 = vunpack.c.l.b16 %v371
  %v1811 = vunpack.c.h.b16 %v371
  %v1812 = vunpack.c.l.b16 %v372
  %v1813 = vunpack.c.h.b16 %v372
  %v1814 = vunpack.c.l.b16 %v373
  %v1815 = vunpack.c.h.b16 %v373
  %v1816 = vunpack.c.l.b16 %v374
  %v1817 = vunpack.c.h.b16 %v374
  %v1818 = vunpack.c.l.b16 %v375
  %v1819 = vunpack.c.h.b16 %v375
  %v1820 = vunpack.c.l.b16 %v376
  %v1821 = vunpack.c.h.b16 %v376
  %v1822 = vunpack.c.l.b16 %v377
  %v1823 = vunpack.c.h.b16 %v377
  %v1824 = vunpack.c.l.b16 %v378
  %v1825 = vunpack.c.h.b16 %v378
  %v1826 = vunpack.c.l.b16 %v379
  %v1827 = vunpack.c.h.b16 %v379
  %v1828 = vunpack.c.l.b16 %v380
  %v1829 = vunpack.c.h.b16 %v380
  %v1830 = vunpack.c.l.b16 %v381
  %v1831 = vunpack.c.h.b16 %v381
  %v1832 = vunpack.c.l.b16 %v382
  %v1833 = vunpack.c.h.b16 %v382
  %v1834 = vunpack.c.l.b16 %v383
  %v1835 = vunpack.c.h.b16 %v383
  %v1836 = vunpack.c.l.b16 %v384
  %v1837 = vunpack.c.h.b16 %v384
  %v1838 = vunpack.c.l.b16 %v385
  %v1839 = vunpack.c.h.b16 %v385
  %v1840 = vunpack.c.l.b16 %v386
  %v1841 = vunpack.c.h.b16 %v386
  %v1842 = vunpack.c.l.b16 %v387
  %v1843 = vunpack.c.h.b16 %v387
  %v1844 = vunpack.c.l.b16 %v388
  %v1845 = vunpack.c.h.b16 %v388
  %v1846 = vunpack.c.l.b16 %v389
  %v1847 = vunpack.c.h.b16 %v389
  %v1848 = vunpack.c.l.b16 %v390
  %v1849 = vunpack.c.h.b16 %v390
  %v1850 = vunpack.c.l.b16 %v391
  %v1851 = vunpack.c.h.b16 %v391
  %v1852 = vunpack.c.l.b16 %v392
  %v1853 = vunpack.c.h.b16 %v392
  %v1854 = vunpack.c.l.b16 %v393
  %v1855 = vunpack.c.h.b16 %v393
  %v1856 = vunpack.c.l.b16 %v394
  %v1857 = vunpack.c.h.b16 %v394
  %v1858 = vunpack.c.l.b16 %v395
  %v1859 = vunpack.c.h.b16 %v395
  %v1860 = vunpack.c.l.b16 %v396
  %v1861 = vunpack.c.h.b16 %v396
  %v1862 = vunpack.c.l.b16 %v397
  %v1863 = vunpack.c.h.b16 %v397
  %v1864 = vunpack.c.l.b16 %v398
  %v1865 = vunpack.c.h.b16 %v398
  %v1866 = vunpack.c.l.b16 %v399
  %v1867 = vunpack.c.h.b16 %v399
  %v1868 = vunpack.c.l.b16 %v400
  %v1869 = vunpack.c.h.b16 %v400
  %v1870 = vunpack.c.l.b16 %v401
  %v1871 = vunpack.c.h.b16 %v401
  %v1872 = vunpack.c.l.b16 %v402
  %v1873 = vunpack.c.h.b16 %v402
  %v1874 = vunpack.c.l.b16 %v403
  %v1875 = vunpack.c.h.b16 %v403
  %v1876 = vunpack.c.l.b16 %v404
  %v1877 = vunpack.c.h.b16 %v404
  %v1878 = vunpack.c.l.b16 %v405
  %v1879 = vunpack.c.h.b16 %v405
  %v1880 = vunpack.c.l.b16 %v406
  %v1881 = vunpack.c.h.b16 %v406
  %v1882 = vunpack.c.l.b16 %v407
  %v1883 = vunpack.c.h.b16 %v407
  %v1884 = vunpack.c.l.b16 %v408
  %v1885 = vunpack.c.h.b16 %v408
  %v1886 = vunpack.c.l.b16 %v409
  %v1887 = vunpack.c.h.b16 %v409
  %v1888 = vunpack.c.l.b16 %v410
  %v1889 = vunpack.c.h.b16 %v410
  %v1890 = vunpack.c.l.b16 %v411
  %v1891 = vunpack.c.h.b16 %v411
  %v1892 = vunpack.c.l.b16 %v412
  %v1893 = vunpack.c.h.b16 %v412
  %v1894 = vunpack.c.l.b16 %v413
  %v1895 = vunpack.c.h.b16 %v413
  %v1896 = vunpack.c.l.b16 %v414
  %v1897 = vunpack.c.h.b16 %v414
  %v1898 = vunpack.c.l.b16 %v415
  %v1899 = vunpack.c.h.b16 %v415
  %v1900 = vunpack.c.l.b16 %v416
  %v1901 = vunpack.c.h.b16 %v416
  %v1902 = vunpack.c.l.b16 %v417
  %v1903 = vunpack.c.h.b16 %v417
  %v1904 = vunpack.c.l.b16 %v418
  %v1905 = vunpack.c.h.b16 %v418
  %v1906 = vunpack.c.l.b16 %v419
  %v1907 = vunpack.c.h.b16 %v419
  %v1908 = vunpack.c.l.b16 %v420
  %v1909 = vunpack.c.h.b16 %v420
  %v1910 = vunpack.c.l.b16 %v421
  %v1911 = vunpack.c.h.b16 %v421
  %v1912 = vunpack.c.l.b16 %v422
  %v1913 = vunpack.c.h.b16 %v422
  %v1914 = vunpack.c.l.b16 %v423
  %v1915 = vunpack.c.h.b16 %v423
  %v1916 = vunpack.c.l.b16 %v424
  %v1917 = vunpack.c.h.b16 %v424
  %v1918 = vunpack.c.l.b16 %v425
  %v1919 = vunpack.c.h.b16 %v425
  %v1920 = vunpack.c.l.b16 %v426
  %v1921 = vunpack.c.h.b16 %v426
  %v1922 = vunpack.c.l.b16 %v427
  %v1923 = vunpack.c.h.b16 %v427
  %v1924 = vunpack.c.l.b16 %v428
  %v1925 = vunpack.c.h.b16 %v428
  %v1926 = vunpack.c.l.b16 %v429
  %v1927 = vunpack.c.h.b16 %v429
  %v1928 = vunpack.c.l.b16 %v430
  %v1929 = vunpack.c.h.b16 %v430
  %v1930 = vunpack.c.l.b16 %v431
  %v1931 = vunpack.c.h.b16 %v431
  %v1932 = vunpack.c.l.b16 %v432
  %v1933 = vunpack.c.h.b16 %v432
  %v1934 = vunpack.c.l.b16 %v433
  %v1935 = vunpack.c.h.b16 %v433
  %v1936 = vunpack.c.l.b16 %v434
  %v1937 = vunpack.c.h.b16 %v434
  %v1938 = vunpack.c.l.b16 %v435
  %v1939 = vunpack.c.h.b16 %v435
  %v1940 = vunpack.c.l.b16 %v436
  %v1941 = vunpack.c.h.b16 %v436
  %v1942 = vunpack.c.l.b16 %v437
  %v1943 = vunpack.c.h.b16 %v437
  %v1944 = vunpack.c.l.b16 %v438
  %v1945 = vunpack.c.h.b16 %v438
  %v1946 = vunpack.c.l.b16 %v439
  %v1947 = vunpack.c.h.b16 %v439
  %v1948 = vunpack.c.l.b16 %v440
  %v1949 = vunpack.c.h.b16 %v440
  %v1950 = vunpack.c.l.b16 %v441
  %v1951 = vunpack.c.h.b16 %v441
  %v1952 = vunpack.c.l.b16 %v442
  %v1953 = vunpack.c.h.b16 %v442
  %v1954 = vunpack.c.l.b16 %v443
  %v1955 = vunpack.c.h.b16 %v443
  %v1956 = vunpack.c.l.b16 %v444
  %v1957 = vunpack.c.h.b16 %v444
  %v1958 = vunpack.c.l.b16 %v445
  %v1959 = vunpack.c.h.b16 %v445
  %v1960 = vunpack.c.l.b16 %v446
  %v1961 = vunpack.c.h.b16 %v446
  %v1962 = vunpack.c.l.b16 %v447
  %v1963 = vunpack.c.h.b16 %v447
  %v1964 = vunpack.c.l.b16 %v448
  %v1965 = vunpack.c.h.b16 %v448
  %v1966 = vunpack.c.l.b16 %v449
  %v1967 = vunpack.c.h.b16 %v449
  %v1968 = vunpack.c.l.b16 %v450
  %v1969 = vunpack.c.h.b16 %v450
  %v1970 = vunpack.c.l.b16 %v451
  %v1971 = vunpack.c.h.b16 %v451
  %v1972 = vunpack.c.l.b16 %v452
  %v1973 = vunpack.c.h.b16 %v452
  %v1974 = vunpack.c.l.b16 %v453
  %v1975 = vunpack.c.h.b16 %v453
  %v1976 = vunpack.c.l.b16 %v454
  %v1977 = vunpack.c.h.b16 %v454
  %v1978 = vunpack.c.l.b16 %v455
  %v1979 = vunpack.c.h.b16 %v455
  %v1980 = vunpack.c.l.b16 %v456
  %v1981 = vunpack.c.h.b16 %v456
  %v1982 = vunpack.c.l.b16 %v457
  %v1983 = vunpack.c.h.b16 %v457
  %v1984 = vunpack.c.l.b16 %v458
  %v1985 = vunpack.c.h.b16 %v458
  %v1986 = vunpack.c.l.b16 %v459
  %v1987 = vunpack.c.h.b16 %v459
  %v1988 = vunpack.c.l.b16 %v460
  %v1989 = vunpack.c.h.b16 %v460
  %v1990 = vunpack.c.l.b16 %v461
  %v1991 = vunpack.c.h.b16 %v461
  %v1992 = vunpack.c.l.b16 %v462
  %v1993 = vunpack.c.h.b16 %v462
  %v1994 = vunpack.c.l.b16 %v463
  %v1995 = vunpack.c.h.b16 %v463
  %v1996 = vunpack.c.l.b16 %v464
  %v1997 = vunpack.c.h.b16 %v464
  %v1998 = vunpack.c.l.b16 %v465
  %v1999 = vunpack.c.h.b16 %v465
  %v2000 = vunpack.c.l.b16 %v466
  %v2001 = vunpack.c.h.b16 %v466
  %v2002 = vunpack.c.l.b16 %v467
  %v2003 = vunpack.c.h.b16 %v467
  %v2004 = vunpack.c.l.b16 %v468
  %v2005 = vunpack.c.h.b16 %v468
  %v2006 = vunpack.c.l.b16 %v469
  %v2007 = vunpack.c.h.b16 %v469
  %v2008 = vunpack.c.l.b16 %v470
  %v2009 = vunpack.c.h.b16 %v470
  %v2010 = vunpack.c.l.b16 %v471
  %v2011 = vunpack.c.h.b16 %v471
  %v2012 = vunpack.c.l.b16 %v472
  %v2013 = vunpack.c.h.b16 %v472
  %v2014 = vunpack.c.l.b16 %v473
  %v2015 = vunpack.c.h.b16 %v473
  %v2016 = vunpack.c.l.b16 %v474
  %v2017 = vunpack.c.h.b16 %v474
  %v2018 = vunpack.c.l.b16 %v475
  %v2019 = vunpack.c.h.b16 %v475
  %v2020 = vunpack.c.l.b16 %v476
  %v2021 = vunpack.c.h.b16 %v476
  %v2022 = vunpack.c.l.b16 %v477
  %v2023 = vunpack.c.h.b16 %v477
  %v2024 = vunpack.c.l.b16 %v478
  %v2025 = vunpack.c.h.b16 %v478
  %v2026 = vunpack.c.l.b16 %v479
  %v2027 = vunpack.c.h.b16 %v479
  %v2028 = vunpack.c.l.b16 %v480
  %v2029 = vunpack.c.h.b16 %v480
  %v2030 = vunpack.c.l.b16 %v481
  %v2031 = vunpack.c.h.b16 %v481
  %v2032 = vunpack.c.l.b16 %v482
  %v2033 = vunpack.c.h.b16 %v482
  %v2034 = vunpack.c.l.b16 %v483
  %v2035 = vunpack.c.h.b16 %v483
  %v2036 = vunpack.c.l.b16 %v484
  %v2037 = vunpack.c.h.b16 %v484
  %v2038 = vunpack.c.l.b16 %v485
  %v2039 = vunpack.c.h.b16 %v485
  %v2040 = vunpack.c.l.b16 %v486
  %v2041 = vunpack.c.h.b16 %v486
  %v2042 = vunpack.c.l.b16 %v487
  %v2043 = vunpack.c.h.b16 %v487
  %v2044 = vunpack.c.l.b16 %v488
  %v2045 = vunpack.c.h.b16 %v488
  %v2046 = vunpack.c.l.b16 %v489
  %v2047 = vunpack.c.h.b16 %v489
  %v2048 = vunpack.c.l.b16 %v490
  %v2049 = vunpack.c.h.b16 %v490
  %v2050 = vunpack.c.l.b16 %v491
  %v2051 = vunpack.c.h.b16 %v491
  %v2052 = vunpack.c.l.b16 %v492
  %v2053 = vunpack.c.h.b16 %v492
  %v2054 = vunpack.c.l.b16 %v493
  %v2055 = vunpack.c.h.b16 %v493
  %v2056 = vunpack.c.l.b16 %v494
  %v2057 = vunpack.c.h.b16 %v494
  %v2058 = vunpack.c.l.b16 %v495
  %v2059 = vunpack.c.h.b16 %v495
  %v2060 = vunpack.c.l.b16 %v496
  %v2061 = vunpack.c.h.b16 %v496
  %v2062 = vunpack.c.l.b16 %v497
  %v2063 = vunpack.c.h.b16 %v497
  %v2064 = vunpack.c.l.b16 %v498
  %v2065 = vunpack.c.h.b16 %v498
  %v2066 = vunpack.c.l.b16 %v499
  %v2067 = vunpack.c.h.b16 %v499
  %v2068 = vunpack.c.l.b16 %v500
  %v2069 = vunpack.c.h.b16 %v500
  %v2070 = vunpack.c.l.b16 %v501
  %v2071 = vunpack.c.h.b16 %v501
  %v2072 = vunpack.c.l.b16 %v502
  %v2073 = vunpack.c.h.b16 %v502
  %v2074 = vunpack.c.l.b16 %v503
  %v2075 = vunpack.c.h.b16 %v503
  %v2076 = vunpack.c.l.b16 %v504
  %v2077 = vunpack.c.h.b16 %v504
  %v2078 = vunpack.c.l.b16 %v505
  %v2079 = vunpack.c.h.b16 %v505
  %v2080 = vunpack.c.l.b16 %v506
  %v2081 = vunpack.c.h.b16 %v506
  %v2082 = vunpack.c.l.b16 %v507
  %v2083 = vunpack.c.h.b16 %v507
  %v2084 = vunpack.c.l.b16 %v508
  %v2085 = vunpack.c.h.b16 %v508
  %v2086 = vunpack.c.l.b16 %v509
  %v2087 = vunpack.c.h.b16 %v509
  %v2088 = vunpack.c.l.b16 %v510
  %v2089 = vunpack.c.h.b16 %v510
  %v2090 = vunpack.c.l.b16 %v511
  %v2091 = vunpack.c.h.b16 %v511
  %v2092 = vunpack.c.l.b16 %v512
  %v2093 = vunpack.c.h.b16 %v512
  %v2094 = vunpack.c.l.b16 %v513
  %v2095 = vunpack.c.h.b16 %v513
  %v2096 = vunpack.c.l.b16 %v514
  %v2097 = vunpack.c.h.b16 %v514
  %v2098 = vunpack.c.l.b16 %v515
  %v2099 = vunpack.c.h.b16 %v515
  %v2100 = vunpack.c.l.b16 %v516
  %v2101 = vunpack.c.h.b16 %v516
  %v2102 = vunpack.c.l.b16 %v517
  %v2103 = vunpack.c.h.b16 %v517
  %v2104 = vunpack.c.l.b16 %v518
  %v2105 = vunpack.c.h.b16 %v518
  %v2106 = vunpack.c.l.b16 %v519
  %v2107 = vunpack.c.h.b16 %v519
  %v2108 = vunpack.c.l.b16 %v520
  %v2109 = vunpack.c.h.b16 %v520
  %v2110 = vunpack.c.l.b16 %v521
  %v2111 = vunpack.c.h.b16 %v521
  %v2112 = vunpack.c.l.b16 %v522
  %v2113 = vunpack.c.h.b16 %v522
  %v2114 = vunpack.c.l.b16 %v523
  %v2115 = vunpack.c.h.b16 %v523
  %v2116 = vunpack.c.l.b16 %v524
  %v2117 = vunpack.c.h.b16 %v524
  %v2118 = vunpack.c.l.b16 %v525
  %v2119 = vunpack.c.h.b16 %v525
  %v2120 = vunpack.c.l.b16 %v526
  %v2121 = vunpack.c.h.b16 %v526
  %v2122 = vunpack.c.l.b16 %v527
  %v2123 = vunpack.c.h.b16 %v527
  %v2124 = vunpack.c.l.b16 %v528
  %v2125 = vunpack.c.h.b16 %v528
  %v2126 = vunpack.c.l.b16 %v529
  %v2127 = vunpack.c.h.b16 %v529
  %v2128 = vunpack.c.l.b16 %v530
  %v2129 = vunpack.c.h.b16 %v530
  %v2130 = vunpack.c.l.b16 %v531
  %v2131 = vunpack.c.h.b16 %v531
  %v2132 = vunpack.c.l.b16 %v532
  %v2133 = vunpack.c.h.b16 %v532
  %v2134 = vunpack.c.l.b16 %v533
  %v2135 = vunpack.c.h.b16 %v533
  %v2136 = vunpack.c.l.b16 %v534
  %v2137 = vunpack.c.h.b16 %v534
  %v2138 = vunpack.c.l.b16 %v535
  %v2139 = vunpack.c.h.b16 %v535
  %v2140 = vunpack.c.l.b16 %v536
  %v2141 = vunpack.c.h.b16 %v536
  %v2142 = vunpack.c.l.b16 %v537
  %v2143 = vunpack.c.h.b16 %v537
  %v2144 = vpack.c.b16 %v1128, %v1120
  %v2145 = vpack.c.b16 %v1129, %v1121
  %v2146 = vpack.c.b16 %v1130, %v1122
  %v2147 = vpack.c.b16 %v1131, %v1123
  %v2148 = vpack.c.b16 %v1132, %v1124
  %v2149 = vpack.c.b16 %v1133, %v1125
  %v2150 = vpack.c.b16 %v1134, %v1126
  %v2151 = vpack.c.b16 %v1135, %v1127
  %v2152 = vpack.c.b16 %v1144, %v1136
  %v2153 = vpack.c.b16 %v1145, %v1137
  %v2154 = vpack.c.b16 %v1146, %v1138
  %v2155 = vpack.c.b16 %v1147, %v1139
  %v2156 = vpack.c.b16 %v1148, %v1140
  %v2157 = vpack.c.b16 %v1149, %v1141
  %v2158 = vpack.c.b16 %v1150, %v1142
  %v2159 = vpack.c.b16 %v1151, %v1143
  %v2160 = vpack.c.b16 %v1160, %v1152
  %v2161 = vpack.c.b16 %v1161, %v1153
  %v2162 = vpack.c.b16 %v1162, %v1154
  %v2163 = vpack.c.b16 %v1163, %v1155
  %v2164 = vpack.c.b16 %v1164, %v1156
  %v2165 = vpack.c.b16 %v1165, %v1157
  %v2166 = vpack.c.b16 %v1166, %v1158
  %v2167 = vpack.c.b16 %v1167, %v1159
  %v2168 = vpack.c.b16 %v1176, %v1168
  %v2169 = vpack.c.b16 %v1177, %v1169
  %v2170 = vpack.c.b16 %v1178, %v1170
  %v2171 = vpack.c.b16 %v1179, %v1171
  %v2172 = vpack.c.b16 %v1180, %v1172
  %v2173 = vpack.c.b16 %v1181, %v1173
  %v2174 = vpack.c.b16 %v1182, %v1174
  %v2175 = vpack.c.b16 %v1183, %v1175
  %v2176 = vpack.c.b16 %v1192, %v1184
  %v2177 = vpack.c.b16 %v1193, %v1185
  %v2178 = vpack.c.b16 %v1194, %v1186
  %v2179 = vpack.c.b16 %v1195, %v1187
  %v2180 = vpack.c.b16 %v1196, %v1188
  %v2181 = vpack.c.b16 %v1197, %v1189
  %v2182 = vpack.c.b16 %v1198, %v1190
  %v2183 = vpack.c.b16 %v1199, %v1191
  %v2184 = vpack.c.b16 %v1208, %v1200
  %v2185 = vpack.c.b16 %v1209, %v1201
  %v2186 = vpack.c.b16 %v1210, %v1202
  %v2187 = vpack.c.b16 %v1211, %v1203
  %v2188 = vpack.c.b16 %v1212, %v1204
  %v2189 = vpack.c.b16 %v1213, %v1205
  %v2190 = vpack.c.b16 %v1214, %v1206
  %v2191 = vpack.c.b16 %v1215, %v1207
  %v2192 = vpack.c.b16 %v1224, %v1216
  %v2193 = vpack.c.b16 %v1225, %v1217
  %v2194 = vpack.c.b16 %v1226, %v1218
  %v2195 = vpack.c.b16 %v1227, %v1219
  %v2196 = vpack.c.b16 %v1228, %v1220
  %v2197 = vpack.c.b16 %v1229, %v1221
  %v2198 = vpack.c.b16 %v1230, %v1222
  %v2199 = vpack.c.b16 %v1231, %v1223
  %v2200 = vpack.c.b16 %v1240, %v1232
  %v2201 = vpack.c.b16 %v1241, %v1233
  %v2202 = vpack.c.b16 %v1242, %v1234
  %v2203 = vpack.c.b16 %v1243, %v1235
  %v2204 = vpack.c.b16 %v1244, %v1236
  %v2205 = vpack.c.b16 %v1245, %v1237
  %v2206 = vpack.c.b16 %v1246, %v1238
  %v2207 = vpack.c.b16 %v1247, %v1239
  %v2208 = vpack.c.b16 %v1256, %v1248
  %v2209 = vpack.c.b16 %v1257, %v1249
  %v2210 = vpack.c.b16 %v1258, %v1250
  %v2211 = vpack.c.b16 %v1259, %v1251
  %v2212 = vpack.c.b16 %v1260, %v1252
  %v2213 = vpack.c.b16 %v1261, %v1253
  %v2214 = vpack.c.b16 %v1262, %v1254
  %v2215 = vpack.c.b16 %v1263, %v1255
  %v2216 = vpack.c.b16 %v1272, %v1264
  %v2217 = vpack.c.b16 %v1273, %v1265
  %v2218 = vpack.c.b16 %v1274, %v1266
  %v2219 = vpack.c.b16 %v1275, %v1267
  %v2220 = vpack.c.b16 %v1276, %v1268
  %v2221 = vpack.c.b16 %v1277, %v1269
  %v2222 = vpack.c.b16 %v1278, %v1270
  %v2223 = vpack.c.b16 %v1279, %v1271
  %v2224 = vpack.c.b16 %v1288, %v1280
  %v2225 = vpack.c.b16 %v1289, %v1281
  %v2226 = vpack.c.b16 %v1290, %v1282
  %v2227 = vpack.c.b16 %v1291, %v1283
  %v2228 = vpack.c.b16 %v1292, %v1284
  %v2229 = vpack.c.b16 %v1293, %v1285
  %v2230 = vpack.c.b16 %v1294, %v1286
  %v2231 = vpack.c.b16 %v1295, %v1287
  %v2232 = vpack.c.b16 %v1304, %v1296
  %v2233 = vpack.c.b16 %v1305, %v1297
  %v2234 = vpack.c.b16 %v1306, %v1298
  %v2235 = vpack.c.b16 %v1307, %v1299
  %v2236 = vpack.c.b16 %v1308, %v1300
  %v2237 = vpack.c.b16 %v1309, %v1301
  %v2238 = vpack.c.b16 %v1310, %v1302
  %v2239 = vpack.c.b16 %v1311, %v1303
  %v2240 = vpack.c.b16 %v1320, %v1312
  %v2241 = vpack.c.b16 %v1321, %v1313
  %v2242 = vpack.c.b16 %v1322, %v1314
  %v2243 = vpack.c.b16 %v1323, %v1315
  %v2244 = vpack.c.b16 %v1324, %v1316
  %v2245 = vpack.c.b16 %v1325, %v1317
  %v2246 = vpack.c.b16 %v1326, %v1318
  %v2247 = vpack.c.b16 %v1327, %v1319
  %v2248 = vpack.c.b16 %v1336, %v1328
  %v2249 = vpack.c.b16 %v1337, %v1329
  %v2250 = vpack.c.b16 %v1338, %v1330
  %v2251 = vpack.c.b16 %v1339, %v1331
  %v2252 = vpack.c.b16 %v1340, %v1332
  %v2253 = vpack.c.b16 %v1341, %v1333
  %v2254 = vpack.c.b16 %v1342, %v1334
  %v2255 = vpack.c.b16 %v1343, %v1335
  %v2256 = vpack.c.b16 %v1352, %v1344
  %v2257 = vpack.c.b16 %v1353, %v1345
  %v2258 = vpack.c.b16 %v1354, %v1346
  %v2259 = vpack.c.b16 %v1355, %v1347
  %v2260 = vpack.c.b16 %v1356, %v1348
  %v2261 = vpack.c.b16 %v1357, %v1349
  %v2262 = vpack.c.b16 %v1358, %v1350
  %v2263 = vpack.c.b16 %v1359, %v1351
  %v2264 = vpack.c.b16 %v1368, %v1360
  %v2265 = vpack.c.b16 %v1369, %v1361
  %v2266 = vpack.c.b16 %v1370, %v1362
  %v2267 = vpack.c.b16 %v1371, %v1363
  %v2268 = vpack.c.b16 %v1372, %v1364
  %v2269 = vpack.c.b16 %v1373, %v1365
  %v2270 = vpack.c.b16 %v1374, %v1366
  %v2271 = vpack.c.b16 %v1375, %v1367
  %v2272 = vpack.c.b16 %v1384, %v1376
  %v2273 = vpack.c.b16 %v1385, %v1377
  %v2274 = vpack.c.b16 %v1386, %v1378
  %v2275 = vpack.c.b16 %v1387, %v1379
  %v2276 = vpack.c.b16 %v1388, %v1380
  %v2277 = vpack.c.b16 %v1389, %v1381
  %v2278 = vpack.c.b16 %v1390, %v1382
  %v2279 = vpack.c.b16 %v1391, %v1383
  %v2280 = vpack.c.b16 %v1400, %v1392
  %v2281 = vpack.c.b16 %v1401, %v1393
  %v2282 = vpack.c.b16 %v1402, %v1394
  %v2283 = vpack.c.b16 %v1403, %v1395
  %v2284 = vpack.c.b16 %v1404, %v1396
  %v2285 = vpack.c.b16 %v1405, %v1397
  %v2286 = vpack.c.b16 %v1406, %v1398
  %v2287 = vpack.c.b16 %v1407, %v1399
  %v2288 = vpack.c.b16 %v1416, %v1408
  %v2289 = vpack.c.b16 %v1417, %v1409
  %v2290 = vpack.c.b16 %v1418, %v1410
  %v2291 = vpack.c.b16 %v1419, %v1411
  %v2292 = vpack.c.b16 %v1420, %v1412
  %v2293 = vpack.c.b16 %v1421, %v1413
  %v2294 = vpack.c.b16 %v1422, %v1414
  %v2295 = vpack.c.b16 %v1423, %v1415
  %v2296 = vpack.c.b16 %v1432, %v1424
  %v2297 = vpack.c.b16 %v1433, %v1425
  %v2298 = vpack.c.b16 %v1434, %v1426
  %v2299 = vpack.c.b16 %v1435, %v1427
  %v2300 = vpack.c.b16 %v1436, %v1428
  %v2301 = vpack.c.b16 %v1437, %v1429
  %v2302 = vpack.c.b16 %v1438, %v1430
  %v2303 = vpack.c.b16 %v1439, %v1431
  %v2304 = vpack.c.b16 %v1448, %v1440
  %v2305 = vpack.c.b16 %v1449, %v1441
  %v2306 = vpack.c.b16 %v1450, %v1442
  %v2307 = vpack.c.b16 %v1451, %v1443
  %v2308 = vpack.c.b16 %v1452, %v1444
  %v2309 = vpack.c.b16 %v1453, %v1445
  %v2310 = vpack.c.b16 %v1454, %v1446
  %v2311 = vpack.c.b16 %v1455, %v1447
  %v2312 = vpack.c.b16 %v1464, %v1456
  %v2313 = vpack.c.b16 %v1465, %v1457
  %v2314 = vpack.c.b16 %v1466, %v1458
  %v2315 = vpack.c.b16 %v1467, %v1459
  %v2316 = vpack.c.b16 %v1468, %v1460
  %v2317 = vpack.c.b16 %v1469, %v1461
  %v2318 = vpack.c.b16 %v1470, %v1462
  %v2319 = vpack.c.b16 %v1471, %v1463
  %v2320 = vpack.c.b16 %v1480, %v1472
  %v2321 = vpack.c.b16 %v1481, %v1473
  %v2322 = vpack.c.b16 %v1482, %v1474
  %v2323 = vpack.c.b16 %v1483, %v1475
  %v2324 = vpack.c.b16 %v1484, %v1476
  %v2325 = vpack.c.b16 %v1485, %v1477
  %v2326 = vpack.c.b16 %v1486, %v1478
  %v2327 = vpack.c.b16 %v1487, %v1479
  %v2328 = vpack.c.b16 %v1496, %v1488
  %v2329 = vpack.c.b16 %v1497, %v1489
  %v2330 = vpack.c.b16 %v1498, %v1490
  %v2331 = vpack.c.b16 %v1499, %v1491
  %v2332 = vpack.c.b16 %v1500, %v1492
  %v2333 = vpack.c.b16 %v1501, %v1493
  %v2334 = vpack.c.b16 %v1502, %v1494
  %v2335 = vpack.c.b16 %v1503, %v1495
  %v2336 = vpack.c.b16 %v1512, %v1504
  %v2337 = vpack.c.b16 %v1513, %v1505
  %v2338 = vpack.c.b16 %v1514, %v1506
  %v2339 = vpack.c.b16 %v1515, %v1507
  %v2340 = vpack.c.b16 %v1516, %v1508
  %v2341 = vpack.c.b16 %v1517, %v1509
  %v2342 = vpack.c.b16 %v1518, %v1510
  %v2343 = vpack.c.b16 %v1519, %v1511
  %v2344 = vpack.c.b16 %v1528, %v1520
  %v2345 = vpack.c.b16 %v1529, %v1521
  %v2346 = vpack.c.b16 %v1530, %v1522
  %v2347 = vpack.c.b16 %v1531, %v1523
  %v2348 = vpack.c.b16 %v1532, %v1524
  %v2349 = vpack.c.b16 %v1533, %v1525
  %v2350 = vpack.c.b16 %v1534, %v1526
  %v2351 = vpack.c.b16 %v1535, %v1527
  %v2352 = vpack.c.b16 %v1544, %v1536
  %v2353 = vpack.c.b16 %v1545, %v1537
  %v2354 = vpack.c.b16 %v1546, %v1538
  %v2355 = vpack.c.b16 %v1547, %v1539
  %v2356 = vpack.c.b16 %v1548, %v1540
  %v2357 = vpack.c.b16 %v1549, %v1541
  %v2358 = vpack.c.b16 %v1550, %v1542
  %v2359 = vpack.c.b16 %v1551, %v1543
  %v2360 = vpack.c.b16 %v1560, %v1552
  %v2361 = vpack.c.b16 %v1561, %v1553
  %v2362 = vpack.c.b16 %v1562, %v1554
  %v2363 = vpack.c.b16 %v1563, %v1555
  %v2364 = vpack.c.b16 %v1564, %v1556
  %v2365 = vpack.c.b16 %v1565, %v1557
  %v2366 = vpack.c.b16 %v1566, %v1558
  %v2367 = vpack.c.b16 %v1567, %v1559
  %v2368 = vpack.c.b16 %v1576, %v1568
  %v2369 = vpack.c.b16 %v1577, %v1569
  %v2370 = vpack.c.b16 %v1578, %v1570
  %v2371 = vpack.c.b16 %v1579, %v1571
  %v2372 = vpack.c.b16 %v1580, %v1572
  %v2373 = vpack.c.b16 %v1581, %v1573
  %v2374 = vpack.c.b16 %v1582, %v1574
  %v2375 = vpack.c.b16 %v1583, %v1575
  %v2376 = vpack.c.b16 %v1592, %v1584
  %v2377 = vpack.c.b16 %v1593, %v1585
  %v2378 = vpack.c.b16 %v1594, %v1586
  %v2379 = vpack.c.b16 %v1595, %v1587
  %v2380 = vpack.c.b16 %v1596, %v1588
  %v2381 = vpack.c.b16 %v1597, %v1589
  %v2382 = vpack.c.b16 %v1598, %v1590
  %v2383 = vpack.c.b16 %v1599, %v1591
  %v2384 = vpack.c.b16 %v1608, %v1600
  %v2385 = vpack.c.b16 %v1609, %v1601
  %v2386 = vpack.c.b16 %v1610, %v1602
  %v2387 = vpack.c.b16 %v1611, %v1603
  %v2388 = vpack.c.b16 %v1612, %v1604
  %v2389 = vpack.c.b16 %v1613, %v1605
  %v2390 = vpack.c.b16 %v1614, %v1606
  %v2391 = vpack.c.b16 %v1615, %v1607
  %v2392 = vpack.c.b16 %v1624, %v1616
  %v2393 = vpack.c.b16 %v1625, %v1617
  %v2394 = vpack.c.b16 %v1626, %v1618
  %v2395 = vpack.c.b16 %v1627, %v1619
  %v2396 = vpack.c.b16 %v1628, %v1620
  %v2397 = vpack.c.b16 %v1629, %v1621
  %v2398 = vpack.c.b16 %v1630, %v1622
  %v2399 = vpack.c.b16 %v1631, %v1623
  %v2400 = vpack.c.b16 %v1640, %v1632
  %v2401 = vpack.c.b16 %v1641, %v1633
  %v2402 = vpack.c.b16 %v1642, %v1634
  %v2403 = vpack.c.b16 %v1643, %v1635
  %v2404 = vpack.c.b16 %v1644, %v1636
  %v2405 = vpack.c.b16 %v1645, %v1637
  %v2406 = vpack.c.b16 %v1646, %v1638
  %v2407 = vpack.c.b16 %v1647, %v1639
  %v2408 = vpack.c.b16 %v1656, %v1648
  %v2409 = vpack.c.b16 %v1657, %v1649
  %v2410 = vpack.c.b16 %v1658, %v1650
  %v2411 = vpack.c.b16 %v1659, %v1651
  %v2412 = vpack.c.b16 %v1660, %v1652
  %v2413 = vpack.c.b16 %v1661, %v1653
  %v2414 = vpack.c.b16 %v1662, %v1654
  %v2415 = vpack.c.b16 %v1663, %v1655
  %v2416 = vpack.c.b16 %v1672, %v1664
  %v2417 = vpack.c.b16 %v1673, %v1665
  %v2418 = vpack.c.b16 %v1674, %v1666
  %v2419 = vpack.c.b16 %v1675, %v1667
  %v2420 = vpack.c.b16 %v1676, %v1668
  %v2421 = vpack.c.b16 %v1677, %v1669
  %v2422 = vpack.c.b16 %v1678, %v1670
  %v2423 = vpack.c.b16 %v1679, %v1671
  %v2424 = vpack.c.b16 %v1688, %v1680
  %v2425 = vpack.c.b16 %v1689, %v1681
  %v2426 = vpack.c.b16 %v1690, %v1682
  %v2427 = vpack.c.b16 %v1691, %v1683
  %v2428 = vpack.c.b16 %v1692, %v1684
  %v2429 = vpack.c.b16 %v1693, %v1685
  %v2430 = vpack.c.b16 %v1694, %v1686
  %v2431 = vpack.c.b16 %v1695, %v1687
  %v2432 = vpack.c.b16 %v1704, %v1696
  %v2433 = vpack.c.b16 %v1705, %v1697
  %v2434 = vpack.c.b16 %v1706, %v1698
  %v2435 = vpack.c.b16 %v1707, %v1699
  %v2436 = vpack.c.b16 %v1708, %v1700
  %v2437 = vpack.c.b16 %v1709, %v1701
  %v2438 = vpack.c.b16 %v1710, %v1702
  %v2439 = vpack.c.b16 %v1711, %v1703
  %v2440 = vpack.c.b16 %v1720, %v1712
  %v2441 = vpack.c.b16 %v1721, %v1713
  %v2442 = vpack.c.b16 %v1722, %v1714
  %v2443 = vpack.c.b16 %v1723, %v1715
  %v2444 = vpack.c.b16 %v1724, %v1716
  %v2445 = vpack.c.b16 %v1725, %v1717
  %v2446 = vpack.c.b16 %v1726, %v1718
  %v2447 = vpack.c.b16 %v1727, %v1719
  %v2448 = vpack.c.b16 %v1736, %v1728
  %v2449 = vpack.c.b16 %v1737, %v1729
  %v2450 = vpack.c.b16 %v1738, %v1730
  %v2451 = vpack.c.b16 %v1739, %v1731
  %v2452 = vpack.c.b16 %v1740, %v1732
  %v2453 = vpack.c.b16 %v1741, %v1733
  %v2454 = vpack.c.b16 %v1742, %v1734
  %v2455 = vpack.c.b16 %v1743, %v1735
  %v2456 = vpack.c.b16 %v1752, %v1744
  %v2457 = vpack.c.b16 %v1753, %v1745
  %v2458 = vpack.c.b16 %v1754, %v1746
  %v2459 = vpack.c.b16 %v1755, %v1747
  %v2460 = vpack.c.b16 %v1756, %v1748
  %v2461 = vpack.c.b16 %v1757, %v1749
  %v2462 = vpack.c.b16 %v1758, %v1750
  %v2463 = vpack.c.b16 %v1759, %v1751
  %v2464 = vpack.c.b16 %v1768, %v1760
  %v2465 = vpack.c.b16 %v1769, %v1761
  %v2466 = vpack.c.b16 %v1770, %v1762
  %v2467 = vpack.c.b16 %v1771, %v1763
  %v2468 = vpack.c.b16 %v1772, %v1764
  %v2469 = vpack.c.b16 %v1773, %v1765
  %v2470 = vpack.c.b16 %v1774, %v1766
  %v2471 = vpack.c.b16 %v1775, %v1767
  %v2472 = vpack.c.b16 %v1784, %v1776
  %v2473 = vpack.c.b16 %v1785, %v1777
  %v2474 = vpack.c.b16 %v1786, %v1778
  %v2475 = vpack.c.b16 %v1787, %v1779
  %v2476 = vpack.c.b16 %v1788, %v1780
  %v2477 = vpack.c.b16 %v1789, %v1781
  %v2478 = vpack.c.b16 %v1790, %v1782
  %v2479 = vpack.c.b16 %v1791, %v1783
  %v2480 = vpack.c.b16 %v1800, %v1792
  %v2481 = vpack.c.b16 %v1801, %v1793
  %v2482 = vpack.c.b16 %v1802, %v1794
  %v2483 = vpack.c.b16 %v1803, %v1795
  %v2484 = vpack.c.b16 %v1804, %v1796
  %v2485 = vpack.c.b16 %v1805, %v1797
  %v2486 = vpack.c.b16 %v1806, %v1798
  %v2487 = vpack.c.b16 %v1807, %v1799
  %v2488 = vpack.c.b16 %v1816, %v1808
  %v2489 = vpack.c.b16 %v1817, %v1809
  %v2490 = vpack.c.b16 %v1818, %v1810
  %v2491 = vpack.c.b16 %v1819, %v1811
  %v2492 = vpack.c.b16 %v1820, %v1812
  %v2493 = vpack.c.b16 %v1821, %v1813
  %v2494 = vpack.c.b16 %v1822, %v1814
  %v2495 = vpack.c.b16 %v1823, %v1815
  %v2496 = vpack.c.b16 %v1832, %v1824
  %v2497 = vpack.c.b16 %v1833, %v1825
  %v2498 = vpack.c.b16 %v1834, %v1826
  %v2499 = vpack.c.b16 %v1835, %v1827
  %v2500 = vpack.c.b16 %v1836, %v1828
  %v2501 = vpack.c.b16 %v1837, %v1829
  %v2502 = vpack.c.b16 %v1838, %v1830
  %v2503 = vpack.c.b16 %v1839, %v1831
  %v2504 = vpack.c.b16 %v1848, %v1840
  %v2505 = vpack.c.b16 %v1849, %v1841
  %v2506 = vpack.c.b16 %v1850, %v1842
  %v2507 = vpack.c.b16 %v1851, %v1843
  %v2508 = vpack.c.b16 %v1852, %v1844
  %v2509 = vpack.c.b16 %v1853, %v1845
  %v2510 = vpack.c.b16 %v1854, %v1846
  %v2511 = vpack.c.b16 %v1855, %v1847
  %v2512 = vpack.c.b16 %v1864, %v1856
  %v2513 = vpack.c.b16 %v1865, %v1857
  %v2514 = vpack.c.b16 %v1866, %v1858
  %v2515 = vpack.c.b16 %v1867, %v1859
  %v2516 = vpack.c.b16 %v1868, %v1860
  %v2517 = vpack.c.b16 %v1869, %v1861
  %v2518 = vpack.c.b16 %v1870, %v1862
  %v2519 = vpack.c.b16 %v1871, %v1863
  %v2520 = vpack.c.b16 %v1880, %v1872
  %v2521 = vpack.c.b16 %v1881, %v1873
  %v2522 = vpack.c.b16 %v1882, %v1874
  %v2523 = vpack.c.b16 %v1883, %v1875
  %v2524 = vpack.c.b16 %v1884, %v1876
  %v2525 = vpack.c.b16 %v1885, %v1877
  %v2526 = vpack.c.b16 %v1886, %v1878
  %v2527 = vpack.c.b16 %v1887, %v1879
  %v2528 = vpack.c.b16 %v1896, %v1888
  %v2529 = vpack.c.b16 %v1897, %v1889
  %v2530 = vpack.c.b16 %v1898, %v1890
  %v2531 = vpack.c.b16 %v1899, %v1891
  %v2532 = vpack.c.b16 %v1900, %v1892
  %v2533 = vpack.c.b16 %v1901, %v1893
  %v2534 = vpack.c.b16 %v1902, %v1894
  %v2535 = vpack.c.b16 %v1903, %v1895
  %v2536 = vpack.c.b16 %v1912, %v1904
  %v2537 = vpack.c.b16 %v1913, %v1905
  %v2538 = vpack.c.b16 %v1914, %v1906
  %v2539 = vpack.c.b16 %v1915, %v1907
  %v2540 = vpack.c.b16 %v1916, %v1908
  %v2541 = vpack.c.b16 %v1917, %v1909
  %v2542 = vpack.c.b16 %v1918, %v1910
  %v2543 = vpack.c.b16 %v1919, %v1911
  %v2544 = vpack.c.b16 %v1928, %v1920
  %v2545 = vpack.c.b16 %v1929, %v1921
  %v2546 = vpack.c.b16 %v1930, %v1922
  %v2547 = vpack.c.b16 %v1931, %v1923
  %v2548 = vpack.c.b16 %v1932, %v1924
  %v2549 = vpack.c.b16 %v1933, %v1925
  %v2550 = vpack.c.b16 %v1934, %v1926
  %v2551 = vpack.c.b16 %v1935, %v1927
  %v2552 = vpack.c.b16 %v1944, %v1936
  %v2553 = vpack.c.b16 %v1945, %v1937
  %v2554 = vpack.c.b16 %v1946, %v1938
  %v2555 = vpack.c.b16 %v1947, %v1939
  %v2556 = vpack.c.b16 %v1948, %v1940
  %v2557 = vpack.c.b16 %v1949, %v1941
  %v2558 = vpack.c.b16 %v1950, %v1942
  %v2559 = vpack.c.b16 %v1951, %v1943
  %v2560 = vpack.c.b16 %v1960, %v1952
  %v2561 = vpack.c.b16 %v1961, %v1953
  %v2562 = vpack.c.b16 %v1962, %v1954
  %v2563 = vpack.c.b16 %v1963, %v1955
  %v2564 = vpack.c.b16 %v1964, %v1956
  %v2565 = vpack.c.b16 %v1965, %v1957
  %v2566 = vpack.c.b16 %v1966, %v1958
  %v2567 = vpack.c.b16 %v1967, %v1959
  %v2568 = vpack.c.b16 %v1976, %v1968
  %v2569 = vpack.c.b16 %v1977, %v1969
  %v2570 = vpack.c.b16 %v1978, %v1970
  %v2571 = vpack.c.b16 %v1979, %v1971
  %v2572 = vpack.c.b16 %v1980, %v1972
  %v2573 = vpack.c.b16 %v1981, %v1973
  %v2574 = vpack.c.b16 %v1982, %v1974
  %v2575 = vpack.c.b16 %v1983, %v1975
  %v2576 = vpack.c.b16 %v1992, %v1984
  %v2577 = vpack.c.b16 %v1993, %v1985
  %v2578 = vpack.c.b16 %v1994, %v1986
  %v2579 = vpack.c.b16 %v1995, %v1987
  %v2580 = vpack.c.b16 %v1996, %v1988
  %v2581 = vpack.c.b16 %v1997, %v1989
  %v2582 = vpack.c.b16 %v1998, %v1990
  %v2583 = vpack.c.b16 %v1999, %v1991
  %v2584 = vpack.c.b16 %v2008, %v2000
  %v2585 = vpack.c.b16 %v2009, %v2001
  %v2586 = vpack.c.b16 %v2010, %v2002
  %v2587 = vpack.c.b16 %v2011, %v2003
  %v2588 = vpack.c.b16 %v2012, %v2004
  %v2589 = vpack.c.b16 %v2013, %v2005
  %v2590 = vpack.c.b16 %v2014, %v2006
  %v2591 = vpack.c.b16 %v2015, %v2007
  %v2592 = vpack.c.b16 %v2024, %v2016
  %v2593 = vpack.c.b16 %v2025, %v2017
  %v2594 = vpack.c.b16 %v2026, %v2018
  %v2595 = vpack.c.b16 %v2027, %v2019
  %v2596 = vpack.c.b16 %v2028, %v2020
  %v2597 = vpack.c.b16 %v2029, %v2021
  %v2598 = vpack.c.b16 %v2030, %v2022
  %v2599 = vpack.c.b16 %v2031, %v2023
  %v2600 = vpack.c.b16 %v2040, %v2032
  %v2601 = vpack.c.b16 %v2041, %v2033
  %v2602 = vpack.c.b16 %v2042, %v2034
  %v2603 = vpack.c.b16 %v2043, %v2035
  %v2604 = vpack.c.b16 %v2044, %v2036
  %v2605 = vpack.c.b16 %v2045, %v2037
  %v2606 = vpack.c.b16 %v2046, %v2038
  %v2607 = vpack.c.b16 %v2047, %v2039
  %v2608 = vpack.c.b16 %v2056, %v2048
  %v2609 = vpack.c.b16 %v2057, %v2049
  %v2610 = vpack.c.b16 %v2058, %v2050
  %v2611 = vpack.c.b16 %v2059, %v2051
  %v2612 = vpack.c.b16 %v2060, %v2052
  %v2613 = vpack.c.b16 %v2061, %v2053
  %v2614 = vpack.c.b16 %v2062, %v2054
  %v2615 = vpack.c.b16 %v2063, %v2055
  %v2616 = vpack.c.b16 %v2072, %v2064
  %v2617 = vpack.c.b16 %v2073, %v2065
  %v2618 = vpack.c.b16 %v2074, %v2066
  %v2619 = vpack.c.b16 %v2075, %v2067
  %v2620 = vpack.c.b16 %v2076, %v2068
  %v2621 = vpack.c.b16 %v2077, %v2069
  %v2622 = vpack.c.b16 %v2078, %v2070
  %v2623 = vpack.c.b16 %v2079, %v2071
  %v2624 = vpack.c.b16 %v2088, %v2080
  %v2625 = vpack.c.b16 %v2089, %v2081
  %v2626 = vpack.c.b16 %v2090, %v2082
  %v2627 = vpack.c.b16 %v2091, %v2083
  %v2628 = vpack.c.b16 %v2092, %v2084
  %v2629 = vpack.c.b16 %v2093, %v2085
  %v2630 = vpack.c.b16 %v2094, %v2086
  %v2631 = vpack.c.b16 %v2095, %v2087
  %v2632 = vpack.c.b16 %v2104, %v2096
  %v2633 = vpack.c.b16 %v2105, %v2097
  %v2634 = vpack.c.b16 %v2106, %v2098
  %v2635 = vpack.c.b16 %v2107, %v2099
  %v2636 = vpack.c.b16 %v2108, %v2100
  %v2637 = vpack.c.b16 %v2109, %v2101
  %v2638 = vpack.c.b16 %v2110, %v2102
  %v2639 = vpack.c.b16 %v2111, %v2103
  %v2640 = vpack.c.b16 %v2120, %v2112
  %v2641 = vpack.c.b16 %v2121, %v2113
  %v2642 = vpack.c.b16 %v2122, %v2114
  %v2643 = vpack.c.b16 %v2123, %v2115
  %v2644 = vpack.c.b16 %v2124, %v2116
  %v2645 = vpack.c.b16 %v2125, %v2117
  %v2646 = vpack.c.b16 %v2126, %v2118
  %v2647 = vpack.c.b16 %v2127, %v2119
  %v2648 = vpack.c.b16 %v2136, %v2128
  %v2649 = vpack.c.b16 %v2137, %v2129
  %v2650 = vpack.c.b16 %v2138, %v2130
  %v2651 = vpack.c.b16 %v2139, %v2131
  %v2652 = vpack.c.b16 %v2140, %v2132
  %v2653 = vpack.c.b16 %v2141, %v2133
  %v2654 = vpack.c.b16 %v2142, %v2134
  %v2655 = vpack.c.b16 %v2143, %v2135
  %3168 = vmatprep.subr.bf16.mxu0 %v2201
  %3169 = vmatpush1.bf16.msra.mxu0 %v2200
  %3170 = vmatprep.subr.bf16.mxu0 %v2193
  %3171 = vmatpush1.bf16.msra.mxu0 %v2192
  %3172 = vmatprep.subr.bf16.mxu0 %v2185
  %3173 = vmatpush1.bf16.msra.mxu0 %v2184
  %3174 = vmatprep.subr.bf16.mxu0 %v2177
  %3175 = vmatpush1.bf16.msra.mxu0 %v2176
  %3176 = vmatprep.subr.bf16.mxu0 %v2169
  %3177 = vmatpush1.bf16.msra.mxu0 %v2168
  %3178 = vmatprep.subr.bf16.mxu0 %v2161
  %3179 = vmatpush1.bf16.msra.mxu0 %v2160
  %3180 = vmatprep.subr.bf16.mxu0 %v2153
  %3181 = vmatpush1.bf16.msra.mxu0 %v2152
  %3182 = vmatprep.subr.bf16.mxu0 %v2145
  %3183 = vmatpush1.bf16.msra.mxu0 %v2144
  %3184 = vmatprep.subr.bf16.mxu0 %v2265
  %3185 = vmatpush2.bf16.msra.mxu0 %v2264
  %3186 = vmatprep.subr.bf16.mxu0 %v2257
  %3187 = vmatpush2.bf16.msra.mxu0 %v2256
  %3188 = vmatprep.subr.bf16.mxu0 %v2249
  %3189 = vmatpush2.bf16.msra.mxu0 %v2248
  %3190 = vmatprep.subr.bf16.mxu0 %v2241
  %3191 = vmatpush2.bf16.msra.mxu0 %v2240
  %3192 = vmatprep.subr.bf16.mxu0 %v2233
  %3193 = vmatpush2.bf16.msra.mxu0 %v2232
  %3194 = vmatprep.subr.bf16.mxu0 %v2225
  %3195 = vmatpush2.bf16.msra.mxu0 %v2224
  %3196 = vmatprep.subr.bf16.mxu0 %v2217
  %3197 = vmatpush2.bf16.msra.mxu0 %v2216
  %3198 = vmatprep.subr.bf16.mxu0 %v2209
  %3199 = vmatpush2.bf16.msra.mxu0 %v2208
  %3200 = vmatprep.mubr.bf16.mxu0 %v593
  %3201 = vmatmul.mubr.bf16.gmra.mxu0 %v592
  %v3202 = vpop.f32.mrf.mxu0
  %v3203 = vadd.f32 %v543, %v3202
  %v3204 = vpop.f32.mrf.mxu0
  %v3205 = vadd.f32 %v547, %v3204
  %v3206 = vpop.f32.mrf.mxu0
  %v3207 = vpop.f32.mrf.mxu0
  %3208 = vdwg.mxu0
  %3209 = vmatprep.subr.bf16.mxu0 %v2329
  %3210 = vmatpush1.bf16.msra.mxu0 %v2328
  %3211 = vmatprep.subr.bf16.mxu0 %v2321
  %3212 = vmatpush1.bf16.msra.mxu0 %v2320
  %3213 = vmatprep.subr.bf16.mxu0 %v2313
  %3214 = vmatpush1.bf16.msra.mxu0 %v2312
  %3215 = vmatprep.subr.bf16.mxu0 %v2305
  %3216 = vmatpush1.bf16.msra.mxu0 %v2304
  %3217 = vmatprep.subr.bf16.mxu0 %v2297
  %3218 = vmatpush1.bf16.msra.mxu0 %v2296
  %3219 = vmatprep.subr.bf16.mxu0 %v2289
  %3220 = vmatpush1.bf16.msra.mxu0 %v2288
  %3221 = vmatprep.subr.bf16.mxu0 %v2281
  %3222 = vmatpush1.bf16.msra.mxu0 %v2280
  %3223 = vmatprep.subr.bf16.mxu0 %v2273
  %3224 = vmatpush1.bf16.msra.mxu0 %v2272
  %3225 = vmatprep.subr.bf16.mxu0 %v2393
  %3226 = vmatpush2.bf16.msra.mxu0 %v2392
  %3227 = vmatprep.subr.bf16.mxu0 %v2385
  %3228 = vmatpush2.bf16.msra.mxu0 %v2384
  %3229 = vmatprep.subr.bf16.mxu0 %v2377
  %3230 = vmatpush2.bf16.msra.mxu0 %v2376
  %3231 = vmatprep.subr.bf16.mxu0 %v2369
  %3232 = vmatpush2.bf16.msra.mxu0 %v2368
  %3233 = vmatprep.subr.bf16.mxu0 %v2361
  %3234 = vmatpush2.bf16.msra.mxu0 %v2360
  %3235 = vmatprep.subr.bf16.mxu0 %v2353
  %3236 = vmatpush2.bf16.msra.mxu0 %v2352
  %3237 = vmatprep.subr.bf16.mxu0 %v2345
  %3238 = vmatpush2.bf16.msra.mxu0 %v2344
  %3239 = vmatprep.subr.bf16.mxu0 %v2337
  %3240 = vmatpush2.bf16.msra.mxu0 %v2336
  %3241 = vmatprep.mubr.bf16.mxu0 %v595
  %3242 = vmatmul.mubr.bf16.gmra.mxu0 %v594
  %v3243 = vpop.f32.mrf.mxu0
  %v3244 = vadd.f32 %v3203, %v3243
  %v3245 = vpop.f32.mrf.mxu0
  %v3246 = vadd.f32 %v3205, %v3245
  %v3247 = vpop.f32.mrf.mxu0
  %v3248 = vpop.f32.mrf.mxu0
  %3249 = vdwg.mxu0
  %3250 = vmatprep.subr.bf16.mxu0 %v2457
  %3251 = vmatpush1.bf16.msra.mxu0 %v2456
  %3252 = vmatprep.subr.bf16.mxu0 %v2449
  %3253 = vmatpush1.bf16.msra.mxu0 %v2448
  %3254 = vmatprep.subr.bf16.mxu0 %v2441
  %3255 = vmatpush1.bf16.msra.mxu0 %v2440
  %3256 = vmatprep.subr.bf16.mxu0 %v2433
  %3257 = vmatpush1.bf16.msra.mxu0 %v2432
  %3258 = vmatprep.subr.bf16.mxu0 %v2425
  %3259 = vmatpush1.bf16.msra.mxu0 %v2424
  %3260 = vmatprep.subr.bf16.mxu0 %v2417
  %3261 = vmatpush1.bf16.msra.mxu0 %v2416
  %3262 = vmatprep.subr.bf16.mxu0 %v2409
  %3263 = vmatpush1.bf16.msra.mxu0 %v2408
  %3264 = vmatprep.subr.bf16.mxu0 %v2401
  %3265 = vmatpush1.bf16.msra.mxu0 %v2400
  %3266 = vmatprep.subr.bf16.mxu0 %v2521
  %3267 = vmatpush2.bf16.msra.mxu0 %v2520
  %3268 = vmatprep.subr.bf16.mxu0 %v2513
  %3269 = vmatpush2.bf16.msra.mxu0 %v2512
  %3270 = vmatprep.subr.bf16.mxu0 %v2505
  %3271 = vmatpush2.bf16.msra.mxu0 %v2504
  %3272 = vmatprep.subr.bf16.mxu0 %v2497
  %3273 = vmatpush2.bf16.msra.mxu0 %v2496
  %3274 = vmatprep.subr.bf16.mxu0 %v2489
  %3275 = vmatpush2.bf16.msra.mxu0 %v2488
  %3276 = vmatprep.subr.bf16.mxu0 %v2481
  %3277 = vmatpush2.bf16.msra.mxu0 %v2480
  %3278 = vmatprep.subr.bf16.mxu0 %v2473
  %3279 = vmatpush2.bf16.msra.mxu0 %v2472
  %3280 = vmatprep.subr.bf16.mxu0 %v2465
  %3281 = vmatpush2.bf16.msra.mxu0 %v2464
  %3282 = vmatprep.mubr.bf16.mxu0 %v597
  %3283 = vmatmul.mubr.bf16.gmra.mxu0 %v596
  %v3284 = vpop.f32.mrf.mxu0
  %v3285 = vadd.f32 %v3244, %v3284
  %v3286 = vpop.f32.mrf.mxu0
  %v3287 = vadd.f32 %v3246, %v3286
  %v3288 = vpop.f32.mrf.mxu0
  %v3289 = vpop.f32.mrf.mxu0
  %3290 = vdwg.mxu0
  %3291 = vmatprep.subr.bf16.mxu0 %v2585
  %3292 = vmatpush1.bf16.msra.mxu0 %v2584
  %3293 = vmatprep.subr.bf16.mxu0 %v2577
  %3294 = vmatpush1.bf16.msra.mxu0 %v2576
  %3295 = vmatprep.subr.bf16.mxu0 %v2569
  %3296 = vmatpush1.bf16.msra.mxu0 %v2568
  %3297 = vmatprep.subr.bf16.mxu0 %v2561
  %3298 = vmatpush1.bf16.msra.mxu0 %v2560
  %3299 = vmatprep.subr.bf16.mxu0 %v2553
  %3300 = vmatpush1.bf16.msra.mxu0 %v2552
  %3301 = vmatprep.subr.bf16.mxu0 %v2545
  %3302 = vmatpush1.bf16.msra.mxu0 %v2544
  %3303 = vmatprep.subr.bf16.mxu0 %v2537
  %3304 = vmatpush1.bf16.msra.mxu0 %v2536
  %3305 = vmatprep.subr.bf16.mxu0 %v2529
  %3306 = vmatpush1.bf16.msra.mxu0 %v2528
  %3307 = vmatprep.subr.bf16.mxu0 %v2649
  %3308 = vmatpush2.bf16.msra.mxu0 %v2648
  %3309 = vmatprep.subr.bf16.mxu0 %v2641
  %3310 = vmatpush2.bf16.msra.mxu0 %v2640
  %3311 = vmatprep.subr.bf16.mxu0 %v2633
  %3312 = vmatpush2.bf16.msra.mxu0 %v2632
  %3313 = vmatprep.subr.bf16.mxu0 %v2625
  %3314 = vmatpush2.bf16.msra.mxu0 %v2624
  %3315 = vmatprep.subr.bf16.mxu0 %v2617
  %3316 = vmatpush2.bf16.msra.mxu0 %v2616
  %3317 = vmatprep.subr.bf16.mxu0 %v2609
  %3318 = vmatpush2.bf16.msra.mxu0 %v2608
  %3319 = vmatprep.subr.bf16.mxu0 %v2601
  %3320 = vmatpush2.bf16.msra.mxu0 %v2600
  %3321 = vmatprep.subr.bf16.mxu0 %v2593
  %3322 = vmatpush2.bf16.msra.mxu0 %v2592
  %3323 = vmatprep.mubr.bf16.mxu0 %v599
  %3324 = vmatmul.mubr.bf16.gmra.mxu0 %v598
  %v3325 = vpop.f32.mrf.mxu0
  %v3326 = vadd.f32 %v3285, %v3325
  %v3327 = vpop.f32.mrf.mxu0
  %v3328 = vadd.f32 %v3287, %v3327
  %v3329 = vpop.f32.mrf.mxu0
  %v3330 = vpop.f32.mrf.mxu0
  %3331 = vdwg.mxu0
  %3332 = vmatprep.subr.bf16.mxu0 %v2203
  %3333 = vmatpush1.bf16.msra.mxu0 %v2202
  %3334 = vmatprep.subr.bf16.mxu0 %v2195
  %3335 = vmatpush1.bf16.msra.mxu0 %v2194
  %3336 = vmatprep.subr.bf16.mxu0 %v2187
  %3337 = vmatpush1.bf16.msra.mxu0 %v2186
  %3338 = vmatprep.subr.bf16.mxu0 %v2179
  %3339 = vmatpush1.bf16.msra.mxu0 %v2178
  %3340 = vmatprep.subr.bf16.mxu0 %v2171
  %3341 = vmatpush1.bf16.msra.mxu0 %v2170
  %3342 = vmatprep.subr.bf16.mxu0 %v2163
  %3343 = vmatpush1.bf16.msra.mxu0 %v2162
  %3344 = vmatprep.subr.bf16.mxu0 %v2155
  %3345 = vmatpush1.bf16.msra.mxu0 %v2154
  %3346 = vmatprep.subr.bf16.mxu0 %v2147
  %3347 = vmatpush1.bf16.msra.mxu0 %v2146
  %3348 = vmatprep.subr.bf16.mxu0 %v2267
  %3349 = vmatpush2.bf16.msra.mxu0 %v2266
  %3350 = vmatprep.subr.bf16.mxu0 %v2259
  %3351 = vmatpush2.bf16.msra.mxu0 %v2258
  %3352 = vmatprep.subr.bf16.mxu0 %v2251
  %3353 = vmatpush2.bf16.msra.mxu0 %v2250
  %3354 = vmatprep.subr.bf16.mxu0 %v2243
  %3355 = vmatpush2.bf16.msra.mxu0 %v2242
  %3356 = vmatprep.subr.bf16.mxu0 %v2235
  %3357 = vmatpush2.bf16.msra.mxu0 %v2234
  %3358 = vmatprep.subr.bf16.mxu0 %v2227
  %3359 = vmatpush2.bf16.msra.mxu0 %v2226
  %3360 = vmatprep.subr.bf16.mxu0 %v2219
  %3361 = vmatpush2.bf16.msra.mxu0 %v2218
  %3362 = vmatprep.subr.bf16.mxu0 %v2211
  %3363 = vmatpush2.bf16.msra.mxu0 %v2210
  %3364 = vmatprep.mubr.bf16.mxu0 %v593
  %3365 = vmatmul.mubr.bf16.gmra.mxu0 %v592
  %v3366 = vpop.f32.mrf.mxu0
  %v3367 = vadd.f32 %v551, %v3366
  %v3368 = vpop.f32.mrf.mxu0
  %v3369 = vadd.f32 %v555, %v3368
  %v3370 = vpop.f32.mrf.mxu0
  %v3371 = vpop.f32.mrf.mxu0
  %3372 = vdwg.mxu0
  %3373 = vmatprep.subr.bf16.mxu0 %v2331
  %3374 = vmatpush1.bf16.msra.mxu0 %v2330
  %3375 = vmatprep.subr.bf16.mxu0 %v2323
  %3376 = vmatpush1.bf16.msra.mxu0 %v2322
  %3377 = vmatprep.subr.bf16.mxu0 %v2315
  %3378 = vmatpush1.bf16.msra.mxu0 %v2314
  %3379 = vmatprep.subr.bf16.mxu0 %v2307
  %3380 = vmatpush1.bf16.msra.mxu0 %v2306
  %3381 = vmatprep.subr.bf16.mxu0 %v2299
  %3382 = vmatpush1.bf16.msra.mxu0 %v2298
  %3383 = vmatprep.subr.bf16.mxu0 %v2291
  %3384 = vmatpush1.bf16.msra.mxu0 %v2290
  %3385 = vmatprep.subr.bf16.mxu0 %v2283
  %3386 = vmatpush1.bf16.msra.mxu0 %v2282
  %3387 = vmatprep.subr.bf16.mxu0 %v2275
  %3388 = vmatpush1.bf16.msra.mxu0 %v2274
  %3389 = vmatprep.subr.bf16.mxu0 %v2395
  %3390 = vmatpush2.bf16.msra.mxu0 %v2394
  %3391 = vmatprep.subr.bf16.mxu0 %v2387
  %3392 = vmatpush2.bf16.msra.mxu0 %v2386
  %3393 = vmatprep.subr.bf16.mxu0 %v2379
  %3394 = vmatpush2.bf16.msra.mxu0 %v2378
  %3395 = vmatprep.subr.bf16.mxu0 %v2371
  %3396 = vmatpush2.bf16.msra.mxu0 %v2370
  %3397 = vmatprep.subr.bf16.mxu0 %v2363
  %3398 = vmatpush2.bf16.msra.mxu0 %v2362
  %3399 = vmatprep.subr.bf16.mxu0 %v2355
  %3400 = vmatpush2.bf16.msra.mxu0 %v2354
  %3401 = vmatprep.subr.bf16.mxu0 %v2347
  %3402 = vmatpush2.bf16.msra.mxu0 %v2346
  %3403 = vmatprep.subr.bf16.mxu0 %v2339
  %3404 = vmatpush2.bf16.msra.mxu0 %v2338
  %3405 = vmatprep.mubr.bf16.mxu0 %v595
  %3406 = vmatmul.mubr.bf16.gmra.mxu0 %v594
  %v3407 = vpop.f32.mrf.mxu0
  %v3408 = vadd.f32 %v3367, %v3407
  %v3409 = vpop.f32.mrf.mxu0
  %v3410 = vadd.f32 %v3369, %v3409
  %v3411 = vpop.f32.mrf.mxu0
  %v3412 = vpop.f32.mrf.mxu0
  %3413 = vdwg.mxu0
  %3414 = vmatprep.subr.bf16.mxu0 %v2459
  %3415 = vmatpush1.bf16.msra.mxu0 %v2458
  %3416 = vmatprep.subr.bf16.mxu0 %v2451
  %3417 = vmatpush1.bf16.msra.mxu0 %v2450
  %3418 = vmatprep.subr.bf16.mxu0 %v2443
  %3419 = vmatpush1.bf16.msra.mxu0 %v2442
  %3420 = vmatprep.subr.bf16.mxu0 %v2435
  %3421 = vmatpush1.bf16.msra.mxu0 %v2434
  %3422 = vmatprep.subr.bf16.mxu0 %v2427
  %3423 = vmatpush1.bf16.msra.mxu0 %v2426
  %3424 = vmatprep.subr.bf16.mxu0 %v2419
  %3425 = vmatpush1.bf16.msra.mxu0 %v2418
  %3426 = vmatprep.subr.bf16.mxu0 %v2411
  %3427 = vmatpush1.bf16.msra.mxu0 %v2410
  %3428 = vmatprep.subr.bf16.mxu0 %v2403
  %3429 = vmatpush1.bf16.msra.mxu0 %v2402
  %3430 = vmatprep.subr.bf16.mxu0 %v2523
  %3431 = vmatpush2.bf16.msra.mxu0 %v2522
  %3432 = vmatprep.subr.bf16.mxu0 %v2515
  %3433 = vmatpush2.bf16.msra.mxu0 %v2514
  %3434 = vmatprep.subr.bf16.mxu0 %v2507
  %3435 = vmatpush2.bf16.msra.mxu0 %v2506
  %3436 = vmatprep.subr.bf16.mxu0 %v2499
  %3437 = vmatpush2.bf16.msra.mxu0 %v2498
  %3438 = vmatprep.subr.bf16.mxu0 %v2491
  %3439 = vmatpush2.bf16.msra.mxu0 %v2490
  %3440 = vmatprep.subr.bf16.mxu0 %v2483
  %3441 = vmatpush2.bf16.msra.mxu0 %v2482
  %3442 = vmatprep.subr.bf16.mxu0 %v2475
  %3443 = vmatpush2.bf16.msra.mxu0 %v2474
  %3444 = vmatprep.subr.bf16.mxu0 %v2467
  %3445 = vmatpush2.bf16.msra.mxu0 %v2466
  %3446 = vmatprep.mubr.bf16.mxu0 %v597
  %3447 = vmatmul.mubr.bf16.gmra.mxu0 %v596
  %v3448 = vpop.f32.mrf.mxu0
  %v3449 = vadd.f32 %v3408, %v3448
  %v3450 = vpop.f32.mrf.mxu0
  %v3451 = vadd.f32 %v3410, %v3450
  %v3452 = vpop.f32.mrf.mxu0
  %v3453 = vpop.f32.mrf.mxu0
  %3454 = vdwg.mxu0
  %3455 = vmatprep.subr.bf16.mxu0 %v2587
  %3456 = vmatpush1.bf16.msra.mxu0 %v2586
  %3457 = vmatprep.subr.bf16.mxu0 %v2579
  %3458 = vmatpush1.bf16.msra.mxu0 %v2578
  %3459 = vmatprep.subr.bf16.mxu0 %v2571
  %3460 = vmatpush1.bf16.msra.mxu0 %v2570
  %3461 = vmatprep.subr.bf16.mxu0 %v2563
  %3462 = vmatpush1.bf16.msra.mxu0 %v2562
  %3463 = vmatprep.subr.bf16.mxu0 %v2555
  %3464 = vmatpush1.bf16.msra.mxu0 %v2554
  %3465 = vmatprep.subr.bf16.mxu0 %v2547
  %3466 = vmatpush1.bf16.msra.mxu0 %v2546
  %3467 = vmatprep.subr.bf16.mxu0 %v2539
  %3468 = vmatpush1.bf16.msra.mxu0 %v2538
  %3469 = vmatprep.subr.bf16.mxu0 %v2531
  %3470 = vmatpush1.bf16.msra.mxu0 %v2530
  %3471 = vmatprep.subr.bf16.mxu0 %v2651
  %3472 = vmatpush2.bf16.msra.mxu0 %v2650
  %3473 = vmatprep.subr.bf16.mxu0 %v2643
  %3474 = vmatpush2.bf16.msra.mxu0 %v2642
  %3475 = vmatprep.subr.bf16.mxu0 %v2635
  %3476 = vmatpush2.bf16.msra.mxu0 %v2634
  %3477 = vmatprep.subr.bf16.mxu0 %v2627
  %3478 = vmatpush2.bf16.msra.mxu0 %v2626
  %3479 = vmatprep.subr.bf16.mxu0 %v2619
  %3480 = vmatpush2.bf16.msra.mxu0 %v2618
  %3481 = vmatprep.subr.bf16.mxu0 %v2611
  %3482 = vmatpush2.bf16.msra.mxu0 %v2610
  %3483 = vmatprep.subr.bf16.mxu0 %v2603
  %3484 = vmatpush2.bf16.msra.mxu0 %v2602
  %3485 = vmatprep.subr.bf16.mxu0 %v2595
  %3486 = vmatpush2.bf16.msra.mxu0 %v2594
  %3487 = vmatprep.mubr.bf16.mxu0 %v599
  %3488 = vmatmul.mubr.bf16.gmra.mxu0 %v598
  %v3489 = vpop.f32.mrf.mxu0
  %v3490 = vadd.f32 %v3449, %v3489
  %v3491 = vpop.f32.mrf.mxu0
  %v3492 = vadd.f32 %v3451, %v3491
  %v3493 = vpop.f32.mrf.mxu0
  %v3494 = vpop.f32.mrf.mxu0
  %3495 = vdwg.mxu0
  %3496 = vmatprep.subr.bf16.mxu0 %v2205
  %3497 = vmatpush1.bf16.msra.mxu0 %v2204
  %3498 = vmatprep.subr.bf16.mxu0 %v2197
  %3499 = vmatpush1.bf16.msra.mxu0 %v2196
  %3500 = vmatprep.subr.bf16.mxu0 %v2189
  %3501 = vmatpush1.bf16.msra.mxu0 %v2188
  %3502 = vmatprep.subr.bf16.mxu0 %v2181
  %3503 = vmatpush1.bf16.msra.mxu0 %v2180
  %3504 = vmatprep.subr.bf16.mxu0 %v2173
  %3505 = vmatpush1.bf16.msra.mxu0 %v2172
  %3506 = vmatprep.subr.bf16.mxu0 %v2165
  %3507 = vmatpush1.bf16.msra.mxu0 %v2164
  %3508 = vmatprep.subr.bf16.mxu0 %v2157
  %3509 = vmatpush1.bf16.msra.mxu0 %v2156
  %3510 = vmatprep.subr.bf16.mxu0 %v2149
  %3511 = vmatpush1.bf16.msra.mxu0 %v2148
  %3512 = vmatprep.subr.bf16.mxu0 %v2269
  %3513 = vmatpush2.bf16.msra.mxu0 %v2268
  %3514 = vmatprep.subr.bf16.mxu0 %v2261
  %3515 = vmatpush2.bf16.msra.mxu0 %v2260
  %3516 = vmatprep.subr.bf16.mxu0 %v2253
  %3517 = vmatpush2.bf16.msra.mxu0 %v2252
  %3518 = vmatprep.subr.bf16.mxu0 %v2245
  %3519 = vmatpush2.bf16.msra.mxu0 %v2244
  %3520 = vmatprep.subr.bf16.mxu0 %v2237
  %3521 = vmatpush2.bf16.msra.mxu0 %v2236
  %3522 = vmatprep.subr.bf16.mxu0 %v2229
  %3523 = vmatpush2.bf16.msra.mxu0 %v2228
  %3524 = vmatprep.subr.bf16.mxu0 %v2221
  %3525 = vmatpush2.bf16.msra.mxu0 %v2220
  %3526 = vmatprep.subr.bf16.mxu0 %v2213
  %3527 = vmatpush2.bf16.msra.mxu0 %v2212
  %3528 = vmatprep.mubr.bf16.mxu0 %v593
  %3529 = vmatmul.mubr.bf16.gmra.mxu0 %v592
  %v3530 = vpop.f32.mrf.mxu0
  %v3531 = vadd.f32 %v559, %v3530
  %v3532 = vpop.f32.mrf.mxu0
  %v3533 = vadd.f32 %v563, %v3532
  %v3534 = vpop.f32.mrf.mxu0
  %v3535 = vpop.f32.mrf.mxu0
  %3536 = vdwg.mxu0
  %3537 = vmatprep.subr.bf16.mxu0 %v2333
  %3538 = vmatpush1.bf16.msra.mxu0 %v2332
  %3539 = vmatprep.subr.bf16.mxu0 %v2325
  %3540 = vmatpush1.bf16.msra.mxu0 %v2324
  %3541 = vmatprep.subr.bf16.mxu0 %v2317
  %3542 = vmatpush1.bf16.msra.mxu0 %v2316
  %3543 = vmatprep.subr.bf16.mxu0 %v2309
  %3544 = vmatpush1.bf16.msra.mxu0 %v2308
  %3545 = vmatprep.subr.bf16.mxu0 %v2301
  %3546 = vmatpush1.bf16.msra.mxu0 %v2300
  %3547 = vmatprep.subr.bf16.mxu0 %v2293
  %3548 = vmatpush1.bf16.msra.mxu0 %v2292
  %3549 = vmatprep.subr.bf16.mxu0 %v2285
  %3550 = vmatpush1.bf16.msra.mxu0 %v2284
  %3551 = vmatprep.subr.bf16.mxu0 %v2277
  %3552 = vmatpush1.bf16.msra.mxu0 %v2276
  %3553 = vmatprep.subr.bf16.mxu0 %v2397
  %3554 = vmatpush2.bf16.msra.mxu0 %v2396
  %3555 = vmatprep.subr.bf16.mxu0 %v2389
  %3556 = vmatpush2.bf16.msra.mxu0 %v2388
  %3557 = vmatprep.subr.bf16.mxu0 %v2381
  %3558 = vmatpush2.bf16.msra.mxu0 %v2380
  %3559 = vmatprep.subr.bf16.mxu0 %v2373
  %3560 = vmatpush2.bf16.msra.mxu0 %v2372
  %3561 = vmatprep.subr.bf16.mxu0 %v2365
  %3562 = vmatpush2.bf16.msra.mxu0 %v2364
  %3563 = vmatprep.subr.bf16.mxu0 %v2357
  %3564 = vmatpush2.bf16.msra.mxu0 %v2356
  %3565 = vmatprep.subr.bf16.mxu0 %v2349
  %3566 = vmatpush2.bf16.msra.mxu0 %v2348
  %3567 = vmatprep.subr.bf16.mxu0 %v2341
  %3568 = vmatpush2.bf16.msra.mxu0 %v2340
  %3569 = vmatprep.mubr.bf16.mxu0 %v595
  %3570 = vmatmul.mubr.bf16.gmra.mxu0 %v594
  %v3571 = vpop.f32.mrf.mxu0
  %v3572 = vadd.f32 %v3531, %v3571
  %v3573 = vpop.f32.mrf.mxu0
  %v3574 = vadd.f32 %v3533, %v3573
  %v3575 = vpop.f32.mrf.mxu0
  %v3576 = vpop.f32.mrf.mxu0
  %3577 = vdwg.mxu0
  %3578 = vmatprep.subr.bf16.mxu0 %v2461
  %3579 = vmatpush1.bf16.msra.mxu0 %v2460
  %3580 = vmatprep.subr.bf16.mxu0 %v2453
  %3581 = vmatpush1.bf16.msra.mxu0 %v2452
  %3582 = vmatprep.subr.bf16.mxu0 %v2445
  %3583 = vmatpush1.bf16.msra.mxu0 %v2444
  %3584 = vmatprep.subr.bf16.mxu0 %v2437
  %3585 = vmatpush1.bf16.msra.mxu0 %v2436
  %3586 = vmatprep.subr.bf16.mxu0 %v2429
  %3587 = vmatpush1.bf16.msra.mxu0 %v2428
  %3588 = vmatprep.subr.bf16.mxu0 %v2421
  %3589 = vmatpush1.bf16.msra.mxu0 %v2420
  %3590 = vmatprep.subr.bf16.mxu0 %v2413
  %3591 = vmatpush1.bf16.msra.mxu0 %v2412
  %3592 = vmatprep.subr.bf16.mxu0 %v2405
  %3593 = vmatpush1.bf16.msra.mxu0 %v2404
  %3594 = vmatprep.subr.bf16.mxu0 %v2525
  %3595 = vmatpush2.bf16.msra.mxu0 %v2524
  %3596 = vmatprep.subr.bf16.mxu0 %v2517
  %3597 = vmatpush2.bf16.msra.mxu0 %v2516
  %3598 = vmatprep.subr.bf16.mxu0 %v2509
  %3599 = vmatpush2.bf16.msra.mxu0 %v2508
  %3600 = vmatprep.subr.bf16.mxu0 %v2501
  %3601 = vmatpush2.bf16.msra.mxu0 %v2500
  %3602 = vmatprep.subr.bf16.mxu0 %v2493
  %3603 = vmatpush2.bf16.msra.mxu0 %v2492
  %3604 = vmatprep.subr.bf16.mxu0 %v2485
  %3605 = vmatpush2.bf16.msra.mxu0 %v2484
  %3606 = vmatprep.subr.bf16.mxu0 %v2477
  %3607 = vmatpush2.bf16.msra.mxu0 %v2476
  %3608 = vmatprep.subr.bf16.mxu0 %v2469
  %3609 = vmatpush2.bf16.msra.mxu0 %v2468
  %3610 = vmatprep.mubr.bf16.mxu0 %v597
  %3611 = vmatmul.mubr.bf16.gmra.mxu0 %v596
  %v3612 = vpop.f32.mrf.mxu0
  %v3613 = vadd.f32 %v3572, %v3612
  %v3614 = vpop.f32.mrf.mxu0
  %v3615 = vadd.f32 %v3574, %v3614
  %v3616 = vpop.f32.mrf.mxu0
  %v3617 = vpop.f32.mrf.mxu0
  %3618 = vdwg.mxu0
  %3619 = vmatprep.subr.bf16.mxu0 %v2589
  %3620 = vmatpush1.bf16.msra.mxu0 %v2588
  %3621 = vmatprep.subr.bf16.mxu0 %v2581
  %3622 = vmatpush1.bf16.msra.mxu0 %v2580
  %3623 = vmatprep.subr.bf16.mxu0 %v2573
  %3624 = vmatpush1.bf16.msra.mxu0 %v2572
  %3625 = vmatprep.subr.bf16.mxu0 %v2565
  %3626 = vmatpush1.bf16.msra.mxu0 %v2564
  %3627 = vmatprep.subr.bf16.mxu0 %v2557
  %3628 = vmatpush1.bf16.msra.mxu0 %v2556
  %3629 = vmatprep.subr.bf16.mxu0 %v2549
  %3630 = vmatpush1.bf16.msra.mxu0 %v2548
  %3631 = vmatprep.subr.bf16.mxu0 %v2541
  %3632 = vmatpush1.bf16.msra.mxu0 %v2540
  %3633 = vmatprep.subr.bf16.mxu0 %v2533
  %3634 = vmatpush1.bf16.msra.mxu0 %v2532
  %3635 = vmatprep.subr.bf16.mxu0 %v2653
  %3636 = vmatpush2.bf16.msra.mxu0 %v2652
  %3637 = vmatprep.subr.bf16.mxu0 %v2645
  %3638 = vmatpush2.bf16.msra.mxu0 %v2644
  %3639 = vmatprep.subr.bf16.mxu0 %v2637
  %3640 = vmatpush2.bf16.msra.mxu0 %v2636
  %3641 = vmatprep.subr.bf16.mxu0 %v2629
  %3642 = vmatpush2.bf16.msra.mxu0 %v2628
  %3643 = vmatprep.subr.bf16.mxu0 %v2621
  %3644 = vmatpush2.bf16.msra.mxu0 %v2620
  %3645 = vmatprep.subr.bf16.mxu0 %v2613
  %3646 = vmatpush2.bf16.msra.mxu0 %v2612
  %3647 = vmatprep.subr.bf16.mxu0 %v2605
  %3648 = vmatpush2.bf16.msra.mxu0 %v2604
  %3649 = vmatprep.subr.bf16.mxu0 %v2597
  %3650 = vmatpush2.bf16.msra.mxu0 %v2596
  %3651 = vmatprep.mubr.bf16.mxu0 %v599
  %3652 = vmatmul.mubr.bf16.gmra.mxu0 %v598
  %v3653 = vpop.f32.mrf.mxu0
  %v3654 = vadd.f32 %v3613, %v3653
  %v3655 = vpop.f32.mrf.mxu0
  %v3656 = vadd.f32 %v3615, %v3655
  %v3657 = vpop.f32.mrf.mxu0
  %v3658 = vpop.f32.mrf.mxu0
  %3659 = vdwg.mxu0
  %3660 = vmatprep.subr.bf16.mxu0 %v2207
  %3661 = vmatpush1.bf16.msra.mxu0 %v2206
  %3662 = vmatprep.subr.bf16.mxu0 %v2199
  %3663 = vmatpush1.bf16.msra.mxu0 %v2198
  %3664 = vmatprep.subr.bf16.mxu0 %v2191
  %3665 = vmatpush1.bf16.msra.mxu0 %v2190
  %3666 = vmatprep.subr.bf16.mxu0 %v2183
  %3667 = vmatpush1.bf16.msra.mxu0 %v2182
  %3668 = vmatprep.subr.bf16.mxu0 %v2175
  %3669 = vmatpush1.bf16.msra.mxu0 %v2174
  %3670 = vmatprep.subr.bf16.mxu0 %v2167
  %3671 = vmatpush1.bf16.msra.mxu0 %v2166
  %3672 = vmatprep.subr.bf16.mxu0 %v2159
  %3673 = vmatpush1.bf16.msra.mxu0 %v2158
  %3674 = vmatprep.subr.bf16.mxu0 %v2151
  %3675 = vmatpush1.bf16.msra.mxu0 %v2150
  %3676 = vmatprep.subr.bf16.mxu0 %v2271
  %3677 = vmatpush2.bf16.msra.mxu0 %v2270
  %3678 = vmatprep.subr.bf16.mxu0 %v2263
  %3679 = vmatpush2.bf16.msra.mxu0 %v2262
  %3680 = vmatprep.subr.bf16.mxu0 %v2255
  %3681 = vmatpush2.bf16.msra.mxu0 %v2254
  %3682 = vmatprep.subr.bf16.mxu0 %v2247
  %3683 = vmatpush2.bf16.msra.mxu0 %v2246
  %3684 = vmatprep.subr.bf16.mxu0 %v2239
  %3685 = vmatpush2.bf16.msra.mxu0 %v2238
  %3686 = vmatprep.subr.bf16.mxu0 %v2231
  %3687 = vmatpush2.bf16.msra.mxu0 %v2230
  %3688 = vmatprep.subr.bf16.mxu0 %v2223
  %3689 = vmatpush2.bf16.msra.mxu0 %v2222
  %3690 = vmatprep.subr.bf16.mxu0 %v2215
  %3691 = vmatpush2.bf16.msra.mxu0 %v2214
  %3692 = vmatprep.mubr.bf16.mxu0 %v593
  %3693 = vmatmul.mubr.bf16.gmra.mxu0 %v592
  %v3694 = vpop.f32.mrf.mxu0
  %v3695 = vadd.f32 %v567, %v3694
  %v3696 = vpop.f32.mrf.mxu0
  %v3697 = vadd.f32 %v571, %v3696
  %v3698 = vpop.f32.mrf.mxu0
  %v3699 = vpop.f32.mrf.mxu0
  %3700 = vdwg.mxu0
  %3701 = vmatprep.subr.bf16.mxu0 %v2335
  %3702 = vmatpush1.bf16.msra.mxu0 %v2334
  %3703 = vmatprep.subr.bf16.mxu0 %v2327
  %3704 = vmatpush1.bf16.msra.mxu0 %v2326
  %3705 = vmatprep.subr.bf16.mxu0 %v2319
  %3706 = vmatpush1.bf16.msra.mxu0 %v2318
  %3707 = vmatprep.subr.bf16.mxu0 %v2311
  %3708 = vmatpush1.bf16.msra.mxu0 %v2310
  %3709 = vmatprep.subr.bf16.mxu0 %v2303
  %3710 = vmatpush1.bf16.msra.mxu0 %v2302
  %3711 = vmatprep.subr.bf16.mxu0 %v2295
  %3712 = vmatpush1.bf16.msra.mxu0 %v2294
  %3713 = vmatprep.subr.bf16.mxu0 %v2287
  %3714 = vmatpush1.bf16.msra.mxu0 %v2286
  %3715 = vmatprep.subr.bf16.mxu0 %v2279
  %3716 = vmatpush1.bf16.msra.mxu0 %v2278
  %3717 = vmatprep.subr.bf16.mxu0 %v2399
  %3718 = vmatpush2.bf16.msra.mxu0 %v2398
  %3719 = vmatprep.subr.bf16.mxu0 %v2391
  %3720 = vmatpush2.bf16.msra.mxu0 %v2390
  %3721 = vmatprep.subr.bf16.mxu0 %v2383
  %3722 = vmatpush2.bf16.msra.mxu0 %v2382
  %3723 = vmatprep.subr.bf16.mxu0 %v2375
  %3724 = vmatpush2.bf16.msra.mxu0 %v2374
  %3725 = vmatprep.subr.bf16.mxu0 %v2367
  %3726 = vmatpush2.bf16.msra.mxu0 %v2366
  %3727 = vmatprep.subr.bf16.mxu0 %v2359
  %3728 = vmatpush2.bf16.msra.mxu0 %v2358
  %3729 = vmatprep.subr.bf16.mxu0 %v2351
  %3730 = vmatpush2.bf16.msra.mxu0 %v2350
  %3731 = vmatprep.subr.bf16.mxu0 %v2343
  %3732 = vmatpush2.bf16.msra.mxu0 %v2342
  %3733 = vmatprep.mubr.bf16.mxu0 %v595
  %3734 = vmatmul.mubr.bf16.gmra.mxu0 %v594
  %v3735 = vpop.f32.mrf.mxu0
  %v3736 = vadd.f32 %v3695, %v3735
  %v3737 = vpop.f32.mrf.mxu0
  %v3738 = vadd.f32 %v3697, %v3737
  %v3739 = vpop.f32.mrf.mxu0
  %v3740 = vpop.f32.mrf.mxu0
  %3741 = vdwg.mxu0
  %3742 = vmatprep.subr.bf16.mxu0 %v2463
  %3743 = vmatpush1.bf16.msra.mxu0 %v2462
  %3744 = vmatprep.subr.bf16.mxu0 %v2455
  %3745 = vmatpush1.bf16.msra.mxu0 %v2454
  %3746 = vmatprep.subr.bf16.mxu0 %v2447
  %3747 = vmatpush1.bf16.msra.mxu0 %v2446
  %3748 = vmatprep.subr.bf16.mxu0 %v2439
  %3749 = vmatpush1.bf16.msra.mxu0 %v2438
  %3750 = vmatprep.subr.bf16.mxu0 %v2431
  %3751 = vmatpush1.bf16.msra.mxu0 %v2430
  %3752 = vmatprep.subr.bf16.mxu0 %v2423
  %3753 = vmatpush1.bf16.msra.mxu0 %v2422
  %3754 = vmatprep.subr.bf16.mxu0 %v2415
  %3755 = vmatpush1.bf16.msra.mxu0 %v2414
  %3756 = vmatprep.subr.bf16.mxu0 %v2407
  %3757 = vmatpush1.bf16.msra.mxu0 %v2406
  %3758 = vmatprep.subr.bf16.mxu0 %v2527
  %3759 = vmatpush2.bf16.msra.mxu0 %v2526
  %3760 = vmatprep.subr.bf16.mxu0 %v2519
  %3761 = vmatpush2.bf16.msra.mxu0 %v2518
  %3762 = vmatprep.subr.bf16.mxu0 %v2511
  %3763 = vmatpush2.bf16.msra.mxu0 %v2510
  %3764 = vmatprep.subr.bf16.mxu0 %v2503
  %3765 = vmatpush2.bf16.msra.mxu0 %v2502
  %3766 = vmatprep.subr.bf16.mxu0 %v2495
  %3767 = vmatpush2.bf16.msra.mxu0 %v2494
  %3768 = vmatprep.subr.bf16.mxu0 %v2487
  %3769 = vmatpush2.bf16.msra.mxu0 %v2486
  %3770 = vmatprep.subr.bf16.mxu0 %v2479
  %3771 = vmatpush2.bf16.msra.mxu0 %v2478
  %3772 = vmatprep.subr.bf16.mxu0 %v2471
  %3773 = vmatpush2.bf16.msra.mxu0 %v2470
  %3774 = vmatprep.mubr.bf16.mxu0 %v597
  %3775 = vmatmul.mubr.bf16.gmra.mxu0 %v596
  %v3776 = vpop.f32.mrf.mxu0
  %v3777 = vadd.f32 %v3736, %v3776
  %v3778 = vpop.f32.mrf.mxu0
  %v3779 = vadd.f32 %v3738, %v3778
  %v3780 = vpop.f32.mrf.mxu0
  %v3781 = vpop.f32.mrf.mxu0
  %3782 = vdwg.mxu0
  %3783 = vmatprep.subr.bf16.mxu0 %v2591
  %3784 = vmatpush1.bf16.msra.mxu0 %v2590
  %3785 = vmatprep.subr.bf16.mxu0 %v2583
  %3786 = vmatpush1.bf16.msra.mxu0 %v2582
  %3787 = vmatprep.subr.bf16.mxu0 %v2575
  %3788 = vmatpush1.bf16.msra.mxu0 %v2574
  %3789 = vmatprep.subr.bf16.mxu0 %v2567
  %3790 = vmatpush1.bf16.msra.mxu0 %v2566
  %3791 = vmatprep.subr.bf16.mxu0 %v2559
  %3792 = vmatpush1.bf16.msra.mxu0 %v2558
  %3793 = vmatprep.subr.bf16.mxu0 %v2551
  %3794 = vmatpush1.bf16.msra.mxu0 %v2550
  %3795 = vmatprep.subr.bf16.mxu0 %v2543
  %3796 = vmatpush1.bf16.msra.mxu0 %v2542
  %3797 = vmatprep.subr.bf16.mxu0 %v2535
  %3798 = vmatpush1.bf16.msra.mxu0 %v2534
  %3799 = vmatprep.subr.bf16.mxu0 %v2655
  %3800 = vmatpush2.bf16.msra.mxu0 %v2654
  %3801 = vmatprep.subr.bf16.mxu0 %v2647
  %3802 = vmatpush2.bf16.msra.mxu0 %v2646
  %3803 = vmatprep.subr.bf16.mxu0 %v2639
  %3804 = vmatpush2.bf16.msra.mxu0 %v2638
  %3805 = vmatprep.subr.bf16.mxu0 %v2631
  %3806 = vmatpush2.bf16.msra.mxu0 %v2630
  %3807 = vmatprep.subr.bf16.mxu0 %v2623
  %3808 = vmatpush2.bf16.msra.mxu0 %v2622
  %3809 = vmatprep.subr.bf16.mxu0 %v2615
  %3810 = vmatpush2.bf16.msra.mxu0 %v2614
  %3811 = vmatprep.subr.bf16.mxu0 %v2607
  %3812 = vmatpush2.bf16.msra.mxu0 %v2606
  %3813 = vmatprep.subr.bf16.mxu0 %v2599
  %3814 = vmatpush2.bf16.msra.mxu0 %v2598
  %3815 = vmatprep.mubr.bf16.mxu0 %v599
  %3816 = vmatmul.mubr.bf16.gmra.mxu0 %v598
  %v3817 = vpop.f32.mrf.mxu0
  %v3818 = vadd.f32 %v3777, %v3817
  %v3819 = vpop.f32.mrf.mxu0
  %v3820 = vadd.f32 %v3779, %v3819
  %v3821 = vpop.f32.mrf.mxu0
  %v3822 = vpop.f32.mrf.mxu0
  %3823 = vdwg.mxu0
  %vm3824 = vcmp.gt.f32.partialorder %v3326, 0.0
  %vm3825 = vcmp.gt.f32.partialorder %v3328, 0.0
  %vm3826 = vcmp.gt.f32.partialorder %v3490, 0.0
  %vm3827 = vcmp.gt.f32.partialorder %v3492, 0.0
  %vm3828 = vcmp.gt.f32.partialorder %v3654, 0.0
  %vm3829 = vcmp.gt.f32.partialorder %v3656, 0.0
  %vm3830 = vcmp.gt.f32.partialorder %v3818, 0.0
  %vm3831 = vcmp.gt.f32.partialorder %v3820, 0.0
  %v3832 = vmul.f32 %v3326, 0.01
  %v3833 = vmul.f32 %v3328, 0.01
  %v3834 = vmul.f32 %v3490, 0.01
  %v3835 = vmul.f32 %v3492, 0.01
  %v3836 = vmul.f32 %v3654, 0.01
  %v3837 = vmul.f32 %v3656, 0.01
  %v3838 = vmul.f32 %v3818, 0.01
  %v3839 = vmul.f32 %v3820, 0.01
  %v3840 = vsel %vm3824, %v3326, %v3832
  %v3841 = vsel %vm3825, %v3328, %v3833
  %v3842 = vsel %vm3826, %v3490, %v3834
  %v3843 = vsel %vm3827, %v3492, %v3835
  %v3844 = vsel %vm3828, %v3654, %v3836
  %v3845 = vsel %vm3829, %v3656, %v3837
  %v3846 = vsel %vm3830, %v3818, %v3838
  %v3847 = vsel %vm3831, %v3820, %v3839
  %v3848 = vld [vmem:[%s3] sm:$0xff]
  %v3850 = vlaneseq
  %v3851 = vshrl.u32 %v3850, 7
  %v3852 = vsub.s32 0, %v3851
  %v3853 = vrot.slane %v3848, %v3852
  %v3854 = vlaneseq
  %v3855 = vshrl.u32 %v3854, 7
  %v3856 = vsub.s32 1, %v3855
  %v3857 = vrot.slane %v3848, %v3856
  %v3858 = vlaneseq
  %v3859 = vshrl.u32 %v3858, 7
  %v3860 = vsub.s32 2, %v3859
  %v3861 = vrot.slane %v3848, %v3860
  %v3862 = vlaneseq
  %v3863 = vshrl.u32 %v3862, 7
  %v3864 = vsub.s32 3, %v3863
  %v3865 = vrot.slane %v3848, %v3864
  %v3866 = vlaneseq
  %v3867 = vshrl.u32 %v3866, 7
  %v3868 = vsub.s32 4, %v3867
  %v3869 = vrot.slane %v3848, %v3868
  %v3870 = vlaneseq
  %v3871 = vshrl.u32 %v3870, 7
  %v3872 = vsub.s32 5, %v3871
  %v3873 = vrot.slane %v3848, %v3872
  %v3874 = vlaneseq
  %v3875 = vshrl.u32 %v3874, 7
  %v3876 = vsub.s32 6, %v3875
  %v3877 = vrot.slane %v3848, %v3876
  %v3878 = vlaneseq
  %v3879 = vshrl.u32 %v3878, 7
  %v3880 = vsub.s32 7, %v3879
  %v3881 = vrot.slane %v3848, %v3880
  %v3890 = vmul.f32 %v3840, %v3853
  %v3891 = vmul.f32 %v3841, %v3857
  %v3892 = vmul.f32 %v3842, %v3861
  %v3893 = vmul.f32 %v3843, %v3865
  %v3894 = vmul.f32 %v3844, %v3869
  %v3895 = vmul.f32 %v3845, %v3873
  %v3896 = vmul.f32 %v3846, %v3877
  %v3897 = vmul.f32 %v3847, %v3881
  %v3898 = vadd.f32 %v3890, %v3891
  %v3899 = vadd.f32 %v3898, %v3892
  %v3900 = vadd.f32 %v3899, %v3893
  %v3901 = vadd.f32 %v3900, %v3894
  %v3902 = vadd.f32 %v3901, %v3895
  %v3903 = vadd.f32 %v3902, %v3896
  %v3904 = vadd.f32 %v3903, %v3897
  %3905 = vadd.xlane.f32.xlu0 %v3904
  %v3906 = vpop.xlane.xlu0 %3905
  %v3907 = vld [vmem:[#allocation2] sm:$0x1]
  %v3909 = vlaneseq
  %v3910 = vshrl.u32 %v3909, 7
  %v3911 = vsub.s32 0, %v3910
  %v3912 = vrot.slane %v3907, %v3911
  %v3914 = vadd.f32 %v3906, %v3912
  %vm3915 = vcmask 7168
  %3916 = vst.msk [vmem:[%s5] sm:$0xff] %vm3915, %v3914
  // Predicated region
  $region22: #{discriminator_forward.3} parent=0 // pred_check
    _
  $region23: #{discriminator_forward.3} parent=0 // pred_check_branch
    %3918 = sbr.rel (0) target = $region25
  $region24: #{discriminator_forward.3} parent=0 // pred_region
    _
  $region25: #{discriminator_forward.3} parent=0 // pred_fallthru
    _
  // Predicated region
  $region26: #{discriminator_forward.3} parent=0 // pred_check
    _
  $region27: #{discriminator_forward.3} parent=0 // pred_check_branch
    %3920 = sbr.rel (0) target = $region29
  $region28: #{discriminator_forward.3} parent=0 // pred_region
    _
  $region29: #{discriminator_forward.3} parent=0 // pred_fallthru
    _

// kernel: discriminator_forward.2
$region0: #{discriminator_forward.2}
  #allocation0 [shape = 'u32[]', space=smem, size = 0x4, offset = 0x4, fixed_abs, tag = 'smem constant byte address 0x4 - core index']
  #allocation1 [shape = 'u32[144,128]{1,0:T(1,128)}', space=vmem, size = 0x12000, scoped, tag = 'internal scratch']
  %s0 = inlined_call_operand.vmem [shape: bf16[8,2,12,140], index: 0, kind: input, shape index: {}]
  %s1 = inlined_call_operand.vmem [shape: f32[8,384], index: 1, kind: input, shape index: {}]
  %s2 = inlined_call_operand.hbm [shape: bf16[140,768], index: 2, kind: input, shape index: {}]
  %s3 = inlined_call_operand.hbm [shape: bf16[5,384,512], index: 3, kind: input, shape index: {}]
  %s4 = inlined_call_operand.hbm [shape: f32[1,256], index: 4, kind: input, shape index: {}]
  %s5 = inlined_call_operand.vmem [shape: bf16[8,4,256], index: 5, kind: output, shape index: {}]
  %s6 = sld [smem:[#allocation0]]
  $region42: #{discriminator_forward.2} parent=0
    _
  %s8 = ssub.s32 1, %s6
  %s9 = scalar_select 0, %s8, %s6
  $region1: #{discriminator_forward.2} parent=0
    #allocation2 [shape = 'u8[221184]{0}', space=vmem, size = 0x36000, scoped, tag = 'input window, operand 2, single buffered']
    #allocation3 [shape = 's32[1]{0}', space=sflag, size = 0x4, scoped, tag = 'scoped memory for discriminator_forward.2']
    #allocation4 [shape = 'u8[1966080]{0}', space=vmem, size = 0x1e0000, scoped, tag = 'input window, operand 3, single buffered']
    #allocation5 [shape = 's32[1]{0}', space=sflag, size = 0x4, scoped, tag = 'scoped memory for discriminator_forward.2']
    #allocation6 [shape = 'u8[1024]{0}', space=vmem, size = 0x400, scoped, tag = 'input window, operand 4, single buffered']
    %10 = vsyncpa [#allocation3], 0
    %11 = vsyncpa [#allocation5], 0
    // Predicated region
    $region2: #{discriminator_forward.2} parent=1 // pred_check
      _
    $region3: #{discriminator_forward.2} parent=1 // pred_check_branch
      %13 = sbr.rel (0) target = $region5
    $region4: #{discriminator_forward.2} parent=1 // pred_region
      _
    $region5: #{discriminator_forward.2} parent=1 // pred_fallthru
      _
    // Predicated region
    $region6: #{discriminator_forward.2} parent=1 // pred_check
      _
    $region7: #{discriminator_forward.2} parent=1 // pred_check_branch
      %15 = sbr.rel (0) target = $region9
    $region8: #{discriminator_forward.2} parent=1 // pred_region
      _
    $region9: #{discriminator_forward.2} parent=1 // pred_fallthru
      _
    // Predicated region
    $region10: #{discriminator_forward.2} parent=1 // pred_check
      _
    $region11: #{discriminator_forward.2} parent=1 // pred_check_branch
      %17 = sbr.rel (0) target = $region13
    $region12: #{discriminator_forward.2} parent=1 // pred_region
      %s19 = ssub.s32 6912, 6912
      %20 = vsyncadd [#allocation3], %s19
      %s21 = sshll.u32 [#allocation2], 4
      %s22 = int_to_ptr.vmem [resolvable:$true] %s21
      %27 = dma.hbm_to_vmem [thread:$0]  %s2, 6912, %s22, [#allocation3], 384, 384, 24
    $region13: #{discriminator_forward.2} parent=1 // pred_fallthru
      _
    // Predicated region
    $region14: #{discriminator_forward.2} parent=1 // pred_check
      _
    $region15: #{discriminator_forward.2} parent=1 // pred_check_branch
      %29 = sbr.rel (0) target = $region17
    $region16: #{discriminator_forward.2} parent=1 // pred_region
      %s31 = ssub.s32 61440, 61440
      %32 = vsyncadd [#allocation5], %s31
      %s33 = sshll.u32 [#allocation4], 4
      %s34 = int_to_ptr.vmem [resolvable:$true] %s33
      %39 = dma.hbm_to_vmem [thread:$0]  %s3, 61440, %s34, [#allocation5], 256, 256, 16
    $region17: #{discriminator_forward.2} parent=1 // pred_fallthru
      _
    // Predicated region
    $region18: #{discriminator_forward.2} parent=1 // pred_check
      _
    $region19: #{discriminator_forward.2} parent=1 // pred_check_branch
      %41 = sbr.rel (0) target = $region21
    $region20: #{discriminator_forward.2} parent=1 // pred_region
      %s43 = ssub.s32 32, 32
      %44 = vsyncadd [#allocation5], %s43
      %s46 = sshll.u32 [#allocation6], 4
      %s47 = int_to_ptr.vmem [resolvable:$true] %s46
      %49 = dma.hbm_to_vmem [thread:$0]  %s4, 32, %s47, [#allocation5]
    $region21: #{discriminator_forward.2} parent=1 // pred_fallthru
      _
    // Predicated region
    $region22: #{discriminator_forward.2} parent=1 // pred_check
      _
    $region23: #{discriminator_forward.2} parent=1 // pred_check_branch
      %51 = sbr.rel (0) target = $region25
    $region24: #{discriminator_forward.2} parent=1 // pred_region
      %52 = dma.done [#allocation3], 6912
    $region25: #{discriminator_forward.2} parent=1 // pred_fallthru
      _
    // Predicated region
    $region26: #{discriminator_forward.2} parent=1 // pred_check
      _
    $region27: #{discriminator_forward.2} parent=1 // pred_check_branch
      %54 = sbr.rel (0) target = $region29
    $region28: #{discriminator_forward.2} parent=1 // pred_region
      %55 = dma.done [#allocation5], 61440
    $region29: #{discriminator_forward.2} parent=1 // pred_fallthru
      _
    // Predicated region
    $region30: #{discriminator_forward.2} parent=1 // pred_check
      _
    $region31: #{discriminator_forward.2} parent=1 // pred_check_branch
      %57 = sbr.rel (0) target = $region33
    $region32: #{discriminator_forward.2} parent=1 // pred_region
      %58 = dma.done [#allocation5], 32
    $region33: #{discriminator_forward.2} parent=1 // pred_fallthru
      _
    %v60 = vld [vmem:[%s0] sm:$0xff]
    %v61 = vld [vmem:[%s0 + $0x8] sm:$0x33]
    %v62 = vld [vmem:[%s0 + $0x10] sm:$0xff]
    %v63 = vld [vmem:[%s0 + $0x18] sm:$0x33]
    %v64 = vld [vmem:[%s0 + $0x20] sm:$0xff]
    %v65 = vld [vmem:[%s0 + $0x28] sm:$0x33]
    %v66 = vld [vmem:[%s0 + $0x30] sm:$0xff]
    %v67 = vld [vmem:[%s0 + $0x38] sm:$0x33]
    %v68 = vld [vmem:[%s0 + $0x40] sm:$0xff]
    %v69 = vld [vmem:[%s0 + $0x48] sm:$0x33]
    %v70 = vld [vmem:[%s0 + $0x50] sm:$0xff]
    %v71 = vld [vmem:[%s0 + $0x58] sm:$0x33]
    %v72 = vld [vmem:[%s0 + $0x60] sm:$0xff]
    %v73 = vld [vmem:[%s0 + $0x68] sm:$0x33]
    %v74 = vld [vmem:[%s0 + $0x70] sm:$0xff]
    %v75 = vld [vmem:[%s0 + $0x78] sm:$0x33]
    %v76 = vld [vmem:[%s0 + $0x80] sm:$0xff]
    %v77 = vld [vmem:[%s0 + $0x88] sm:$0x33]
    %v78 = vld [vmem:[%s0 + $0x90] sm:$0xff]
    %v79 = vld [vmem:[%s0 + $0x98] sm:$0x33]
    %v80 = vld [vmem:[%s0 + $0xa0] sm:$0xff]
    %v81 = vld [vmem:[%s0 + $0xa8] sm:$0x33]
    %v82 = vld [vmem:[%s0 + $0xb0] sm:$0xff]
    %v83 = vld [vmem:[%s0 + $0xb8] sm:$0x33]
    %v84 = vld [vmem:[%s0 + $0xc0] sm:$0xff]
    %v85 = vld [vmem:[%s0 + $0xc8] sm:$0x33]
    %v86 = vld [vmem:[%s0 + $0xd0] sm:$0xff]
    %v87 = vld [vmem:[%s0 + $0xd8] sm:$0x33]
    %v88 = vld [vmem:[%s0 + $0xe0] sm:$0xff]
    %v89 = vld [vmem:[%s0 + $0xe8] sm:$0x33]
    %v90 = vld [vmem:[%s0 + $0xf0] sm:$0xff]
    %v91 = vld [vmem:[%s0 + $0xf8] sm:$0x33]
    %v92 = vld [vmem:[#allocation2] sm:$0xff]
    %v93 = vld [vmem:[#allocation2 + $0x8] sm:$0xff]
    %v94 = vld [vmem:[#allocation2 + $0x10] sm:$0xff]
    %v95 = vld [vmem:[#allocation2 + $0x18] sm:$0xff]
    %v96 = vld [vmem:[#allocation2 + $0x20] sm:$0xff]
    %v97 = vld [vmem:[#allocation2 + $0x28] sm:$0xff]
    %v98 = vld [vmem:[#allocation2 + $0x30] sm:$0xff]
    %v99 = vld [vmem:[#allocation2 + $0x38] sm:$0xff]
    %v100 = vld [vmem:[#allocation2 + $0x40] sm:$0xff]
    %v101 = vld [vmem:[#allocation2 + $0x48] sm:$0xff]
    %v102 = vld [vmem:[#allocation2 + $0x50] sm:$0xff]
    %v103 = vld [vmem:[#allocation2 + $0x58] sm:$0xff]
    %v104 = vld [vmem:[#allocation2 + $0x60] sm:$0xff]
    %v105 = vld [vmem:[#allocation2 + $0x68] sm:$0xff]
    %v106 = vld [vmem:[#allocation2 + $0x70] sm:$0xff]
    %v107 = vld [vmem:[#allocation2 + $0x78] sm:$0xff]
    %v108 = vld [vmem:[#allocation2 + $0x80] sm:$0xff]
    %v109 = vld [vmem:[#allocation2 + $0x88] sm:$0xff]
    %v110 = vld [vmem:[#allocation2 + $0x90] sm:$0xff]
    %v111 = vld [vmem:[#allocation2 + $0x98] sm:$0xff]
    %v112 = vld [vmem:[#allocation2 + $0xa0] sm:$0xff]
    %v113 = vld [vmem:[#allocation2 + $0xa8] sm:$0xff]
    %v114 = vld [vmem:[#allocation2 + $0xb0] sm:$0xff]
    %v115 = vld [vmem:[#allocation2 + $0xb8] sm:$0xff]
    %v116 = vld [vmem:[#allocation2 + $0xc0] sm:$0xff]
    %v117 = vld [vmem:[#allocation2 + $0xc8] sm:$0xff]
    %v118 = vld [vmem:[#allocation2 + $0xd0] sm:$0xff]
    %v119 = vld [vmem:[#allocation2 + $0xd8] sm:$0xff]
    %v120 = vld [vmem:[#allocation2 + $0xe0] sm:$0xff]
    %v121 = vld [vmem:[#allocation2 + $0xe8] sm:$0xff]
    %v122 = vld [vmem:[#allocation2 + $0xf0] sm:$0xff]
    %v123 = vld [vmem:[#allocation2 + $0xf8] sm:$0xff]
    %v124 = vld [vmem:[#allocation2 + $0x100] sm:$0xff]
    %v125 = vld [vmem:[#allocation2 + $0x108] sm:$0xff]
    %v126 = vld [vmem:[#allocation2 + $0x110] sm:$0xff]
    %v127 = vld [vmem:[#allocation2 + $0x118] sm:$0xff]
    %v128 = vld [vmem:[#allocation2 + $0x120] sm:$0xff]
    %v129 = vld [vmem:[#allocation2 + $0x128] sm:$0xff]
    %v130 = vld [vmem:[#allocation2 + $0x130] sm:$0xff]
    %v131 = vld [vmem:[#allocation2 + $0x138] sm:$0xff]
    %v132 = vld [vmem:[#allocation2 + $0x140] sm:$0xff]
    %v133 = vld [vmem:[#allocation2 + $0x148] sm:$0xff]
    %v134 = vld [vmem:[#allocation2 + $0x150] sm:$0xff]
    %v135 = vld [vmem:[#allocation2 + $0x158] sm:$0xff]
    %v136 = vld [vmem:[#allocation2 + $0x160] sm:$0xff]
    %v137 = vld [vmem:[#allocation2 + $0x168] sm:$0xff]
    %v138 = vld [vmem:[#allocation2 + $0x170] sm:$0xff]
    %v139 = vld [vmem:[#allocation2 + $0x178] sm:$0xff]
    %v140 = vld [vmem:[#allocation2 + $0x180] sm:$0xff]
    %v141 = vld [vmem:[#allocation2 + $0x188] sm:$0xff]
    %v142 = vld [vmem:[#allocation2 + $0x190] sm:$0xff]
    %v143 = vld [vmem:[#allocation2 + $0x198] sm:$0x33]
    %v144 = vld [vmem:[#allocation2 + $0x1a0] sm:$0x33]
    %v145 = vld [vmem:[#allocation2 + $0x1a8] sm:$0x33]
    %v179 = vunpack.c.l.s4 1983009808
    %v180 = vunpack.c.0.s8 %v179
    %v181 = vlaneseq
    %v182 = vshrl.u32 %v181, 7
    %v183 = vsub.s32 %v180, %v182
    %v184 = vrot.slane %v60, %v183
    %v185 = vcombine.high %v184, %v184
    %v187 = vunpack.c.l.s4 1983009808
    %v188 = vunpack.c.0.s8 %v187
    %v189 = vlaneseq
    %v190 = vshrl.u32 %v189, 7
    %v191 = vsub.s32 %v188, %v190
    %v192 = vrot.slane %v61, %v191
    %v194 = vunpack.c.l.s4 1983009808
    %v195 = vunpack.c.0.s8 %v194
    %v196 = vlaneseq
    %v197 = vshrl.u32 %v196, 7
    %v198 = vsub.s32 %v195, %v197
    %v199 = vrot.slane %v62, %v198
    %v200 = vcombine.high %v199, %v199
    %v202 = vunpack.c.l.s4 1983009808
    %v203 = vunpack.c.0.s8 %v202
    %v204 = vlaneseq
    %v205 = vshrl.u32 %v204, 7
    %v206 = vsub.s32 %v203, %v205
    %v207 = vrot.slane %v63, %v206
    %v209 = vunpack.c.l.s4 1983009808
    %v210 = vunpack.c.0.s8 %v209
    %v211 = vlaneseq
    %v212 = vshrl.u32 %v211, 7
    %v213 = vsub.s32 %v210, %v212
    %v214 = vrot.slane %v64, %v213
    %v215 = vcombine.high %v214, %v214
    %v217 = vunpack.c.l.s4 1983009808
    %v218 = vunpack.c.0.s8 %v217
    %v219 = vlaneseq
    %v220 = vshrl.u32 %v219, 7
    %v221 = vsub.s32 %v218, %v220
    %v222 = vrot.slane %v65, %v221
    %v224 = vunpack.c.l.s4 1983009808
    %v225 = vunpack.c.0.s8 %v224
    %v226 = vlaneseq
    %v227 = vshrl.u32 %v226, 7
    %v228 = vsub.s32 %v225, %v227
    %v229 = vrot.slane %v66, %v228
    %v230 = vcombine.high %v229, %v229
    %v232 = vunpack.c.l.s4 1983009808
    %v233 = vunpack.c.0.s8 %v232
    %v234 = vlaneseq
    %v235 = vshrl.u32 %v234, 7
    %v236 = vsub.s32 %v233, %v235
    %v237 = vrot.slane %v67, %v236
    %v239 = vunpack.c.l.s4 1983009808
    %v240 = vunpack.c.0.s8 %v239
    %v241 = vlaneseq
    %v242 = vshrl.u32 %v241, 7
    %v243 = vsub.s32 %v240, %v242
    %v244 = vrot.slane %v68, %v243
    %v245 = vcombine.high %v244, %v244
    %v247 = vunpack.c.l.s4 1983009808
    %v248 = vunpack.c.0.s8 %v247
    %v249 = vlaneseq
    %v250 = vshrl.u32 %v249, 7
    %v251 = vsub.s32 %v248, %v250
    %v252 = vrot.slane %v69, %v251
    %v254 = vunpack.c.l.s4 1983009808
    %v255 = vunpack.c.0.s8 %v254
    %v256 = vlaneseq
    %v257 = vshrl.u32 %v256, 7
    %v258 = vsub.s32 %v255, %v257
    %v259 = vrot.slane %v70, %v258
    %v260 = vcombine.high %v259, %v259
    %v262 = vunpack.c.l.s4 1983009808
    %v263 = vunpack.c.0.s8 %v262
    %v264 = vlaneseq
    %v265 = vshrl.u32 %v264, 7
    %v266 = vsub.s32 %v263, %v265
    %v267 = vrot.slane %v71, %v266
    %v269 = vunpack.c.l.s4 1983009808
    %v270 = vunpack.c.0.s8 %v269
    %v271 = vlaneseq
    %v272 = vshrl.u32 %v271, 7
    %v273 = vsub.s32 %v270, %v272
    %v274 = vrot.slane %v72, %v273
    %v275 = vcombine.high %v274, %v274
    %v277 = vunpack.c.l.s4 1983009808
    %v278 = vunpack.c.0.s8 %v277
    %v279 = vlaneseq
    %v280 = vshrl.u32 %v279, 7
    %v281 = vsub.s32 %v278, %v280
    %v282 = vrot.slane %v73, %v281
    %v284 = vunpack.c.l.s4 1983009808
    %v285 = vunpack.c.0.s8 %v284
    %v286 = vlaneseq
    %v287 = vshrl.u32 %v286, 7
    %v288 = vsub.s32 %v285, %v287
    %v289 = vrot.slane %v74, %v288
    %v290 = vcombine.high %v289, %v289
    %v292 = vunpack.c.l.s4 1983009808
    %v293 = vunpack.c.0.s8 %v292
    %v294 = vlaneseq
    %v295 = vshrl.u32 %v294, 7
    %v296 = vsub.s32 %v293, %v295
    %v297 = vrot.slane %v75, %v296
    %v299 = vunpack.c.l.s4 1983009808
    %v300 = vunpack.c.0.s8 %v299
    %v301 = vlaneseq
    %v302 = vshrl.u32 %v301, 7
    %v303 = vsub.s32 %v300, %v302
    %v304 = vrot.slane %v76, %v303
    %v305 = vcombine.high %v304, %v304
    %v307 = vunpack.c.l.s4 1983009808
    %v308 = vunpack.c.0.s8 %v307
    %v309 = vlaneseq
    %v310 = vshrl.u32 %v309, 7
    %v311 = vsub.s32 %v308, %v310
    %v312 = vrot.slane %v77, %v311
    %v314 = vunpack.c.l.s4 1983009808
    %v315 = vunpack.c.0.s8 %v314
    %v316 = vlaneseq
    %v317 = vshrl.u32 %v316, 7
    %v318 = vsub.s32 %v315, %v317
    %v319 = vrot.slane %v78, %v318
    %v320 = vcombine.high %v319, %v319
    %v322 = vunpack.c.l.s4 1983009808
    %v323 = vunpack.c.0.s8 %v322
    %v324 = vlaneseq
    %v325 = vshrl.u32 %v324, 7
    %v326 = vsub.s32 %v323, %v325
    %v327 = vrot.slane %v79, %v326
    %v329 = vunpack.c.l.s4 1983009808
    %v330 = vunpack.c.0.s8 %v329
    %v331 = vlaneseq
    %v332 = vshrl.u32 %v331, 7
    %v333 = vsub.s32 %v330, %v332
    %v334 = vrot.slane %v80, %v333
    %v335 = vcombine.high %v334, %v334
    %v337 = vunpack.c.l.s4 1983009808
    %v338 = vunpack.c.0.s8 %v337
    %v339 = vlaneseq
    %v340 = vshrl.u32 %v339, 7
    %v341 = vsub.s32 %v338, %v340
    %v342 = vrot.slane %v81, %v341
    %v344 = vunpack.c.l.s4 1983009808
    %v345 = vunpack.c.0.s8 %v344
    %v346 = vlaneseq
    %v347 = vshrl.u32 %v346, 7
    %v348 = vsub.s32 %v345, %v347
    %v349 = vrot.slane %v82, %v348
    %v350 = vcombine.high %v349, %v349
    %v352 = vunpack.c.l.s4 1983009808
    %v353 = vunpack.c.0.s8 %v352
    %v354 = vlaneseq
    %v355 = vshrl.u32 %v354, 7
    %v356 = vsub.s32 %v353, %v355
    %v357 = vrot.slane %v83, %v356
    %v359 = vunpack.c.l.s4 1983009808
    %v360 = vunpack.c.0.s8 %v359
    %v361 = vlaneseq
    %v362 = vshrl.u32 %v361, 7
    %v363 = vsub.s32 %v360, %v362
    %v364 = vrot.slane %v84, %v363
    %v365 = vcombine.high %v364, %v364
    %v367 = vunpack.c.l.s4 1983009808
    %v368 = vunpack.c.0.s8 %v367
    %v369 = vlaneseq
    %v370 = vshrl.u32 %v369, 7
    %v371 = vsub.s32 %v368, %v370
    %v372 = vrot.slane %v85, %v371
    %v374 = vunpack.c.l.s4 1983009808
    %v375 = vunpack.c.0.s8 %v374
    %v376 = vlaneseq
    %v377 = vshrl.u32 %v376, 7
    %v378 = vsub.s32 %v375, %v377
    %v379 = vrot.slane %v86, %v378
    %v380 = vcombine.high %v379, %v379
    %v382 = vunpack.c.l.s4 1983009808
    %v383 = vunpack.c.0.s8 %v382
    %v384 = vlaneseq
    %v385 = vshrl.u32 %v384, 7
    %v386 = vsub.s32 %v383, %v385
    %v387 = vrot.slane %v87, %v386
    %v389 = vunpack.c.l.s4 1983009808
    %v390 = vunpack.c.0.s8 %v389
    %v391 = vlaneseq
    %v392 = vshrl.u32 %v391, 7
    %v393 = vsub.s32 %v390, %v392
    %v394 = vrot.slane %v88, %v393
    %v395 = vcombine.high %v394, %v394
    %v397 = vunpack.c.l.s4 1983009808
    %v398 = vunpack.c.0.s8 %v397
    %v399 = vlaneseq
    %v400 = vshrl.u32 %v399, 7
    %v401 = vsub.s32 %v398, %v400
    %v402 = vrot.slane %v89, %v401
    %v404 = vunpack.c.l.s4 1983009808
    %v405 = vunpack.c.0.s8 %v404
    %v406 = vlaneseq
    %v407 = vshrl.u32 %v406, 7
    %v408 = vsub.s32 %v405, %v407
    %v409 = vrot.slane %v90, %v408
    %v410 = vcombine.high %v409, %v409
    %v412 = vunpack.c.l.s4 1983009808
    %v413 = vunpack.c.0.s8 %v412
    %v414 = vlaneseq
    %v415 = vshrl.u32 %v414, 7
    %v416 = vsub.s32 %v413, %v415
    %v417 = vrot.slane %v91, %v416
    %v418 = vcombine.low %v184, %v185
    %v419 = vcombine.low %v192, %v199
    %v421 = vunpack.c.l.s4 1983009808
    %v422 = vunpack.c.0.s8 %v421
    %v423 = vlaneseq
    %v424 = vshrl.u32 %v423, 7
    %v425 = vsub.s32 %v422, %v424
    %v426 = vrot.slane %v418, %v425
    %v428 = vunpack.c.l.s4 1983009808
    %v429 = vunpack.c.0.s8 %v428
    %v430 = vlaneseq
    %v431 = vshrl.u32 %v430, 7
    %v432 = vsub.s32 %v429, %v431
    %v433 = vrot.slane %v419, %v432
    %v434 = vcombine.low %v426, %v433
    %v435 = vcombine.high %v426, %v433
    %v436 = vcombine.low %v200, %v207
    %v437 = vcombine.low %v214, %v215
    %v439 = vunpack.c.l.s4 1983009808
    %v440 = vunpack.c.0.s8 %v439
    %v441 = vlaneseq
    %v442 = vshrl.u32 %v441, 7
    %v443 = vsub.s32 %v440, %v442
    %v444 = vrot.slane %v436, %v443
    %v446 = vunpack.c.l.s4 1983009808
    %v447 = vunpack.c.0.s8 %v446
    %v448 = vlaneseq
    %v449 = vshrl.u32 %v448, 7
    %v450 = vsub.s32 %v447, %v449
    %v451 = vrot.slane %v437, %v450
    %v452 = vcombine.low %v444, %v451
    %v453 = vcombine.high %v444, %v451
    %v454 = vcombine.low %v222, %v229
    %v455 = vcombine.low %v230, %v237
    %v457 = vunpack.c.l.s4 1983009808
    %v458 = vunpack.c.0.s8 %v457
    %v459 = vlaneseq
    %v460 = vshrl.u32 %v459, 7
    %v461 = vsub.s32 %v458, %v460
    %v462 = vrot.slane %v454, %v461
    %v464 = vunpack.c.l.s4 1983009808
    %v465 = vunpack.c.0.s8 %v464
    %v466 = vlaneseq
    %v467 = vshrl.u32 %v466, 7
    %v468 = vsub.s32 %v465, %v467
    %v469 = vrot.slane %v455, %v468
    %v470 = vcombine.low %v462, %v469
    %v471 = vcombine.high %v462, %v469
    %v472 = vcombine.low %v244, %v245
    %v473 = vcombine.low %v252, %v259
    %v475 = vunpack.c.l.s4 1983009808
    %v476 = vunpack.c.0.s8 %v475
    %v477 = vlaneseq
    %v478 = vshrl.u32 %v477, 7
    %v479 = vsub.s32 %v476, %v478
    %v480 = vrot.slane %v472, %v479
    %v482 = vunpack.c.l.s4 1983009808
    %v483 = vunpack.c.0.s8 %v482
    %v484 = vlaneseq
    %v485 = vshrl.u32 %v484, 7
    %v486 = vsub.s32 %v483, %v485
    %v487 = vrot.slane %v473, %v486
    %v488 = vcombine.low %v480, %v487
    %v489 = vcombine.high %v480, %v487
    %v490 = vcombine.low %v260, %v267
    %v491 = vcombine.low %v274, %v275
    %v493 = vunpack.c.l.s4 1983009808
    %v494 = vunpack.c.0.s8 %v493
    %v495 = vlaneseq
    %v496 = vshrl.u32 %v495, 7
    %v497 = vsub.s32 %v494, %v496
    %v498 = vrot.slane %v490, %v497
    %v500 = vunpack.c.l.s4 1983009808
    %v501 = vunpack.c.0.s8 %v500
    %v502 = vlaneseq
    %v503 = vshrl.u32 %v502, 7
    %v504 = vsub.s32 %v501, %v503
    %v505 = vrot.slane %v491, %v504
    %v506 = vcombine.low %v498, %v505
    %v507 = vcombine.high %v498, %v505
    %v508 = vcombine.low %v282, %v289
    %v509 = vcombine.low %v290, %v297
    %v511 = vunpack.c.l.s4 1983009808
    %v512 = vunpack.c.0.s8 %v511
    %v513 = vlaneseq
    %v514 = vshrl.u32 %v513, 7
    %v515 = vsub.s32 %v512, %v514
    %v516 = vrot.slane %v508, %v515
    %v518 = vunpack.c.l.s4 1983009808
    %v519 = vunpack.c.0.s8 %v518
    %v520 = vlaneseq
    %v521 = vshrl.u32 %v520, 7
    %v522 = vsub.s32 %v519, %v521
    %v523 = vrot.slane %v509, %v522
    %v524 = vcombine.low %v516, %v523
    %v525 = vcombine.high %v516, %v523
    %v526 = vcombine.low %v304, %v305
    %v527 = vcombine.low %v312, %v319
    %v529 = vunpack.c.l.s4 1983009808
    %v530 = vunpack.c.0.s8 %v529
    %v531 = vlaneseq
    %v532 = vshrl.u32 %v531, 7
    %v533 = vsub.s32 %v530, %v532
    %v534 = vrot.slane %v526, %v533
    %v536 = vunpack.c.l.s4 1983009808
    %v537 = vunpack.c.0.s8 %v536
    %v538 = vlaneseq
    %v539 = vshrl.u32 %v538, 7
    %v540 = vsub.s32 %v537, %v539
    %v541 = vrot.slane %v527, %v540
    %v542 = vcombine.low %v534, %v541
    %v543 = vcombine.high %v534, %v541
    %v544 = vcombine.low %v320, %v327
    %v545 = vcombine.low %v334, %v335
    %v547 = vunpack.c.l.s4 1983009808
    %v548 = vunpack.c.0.s8 %v547
    %v549 = vlaneseq
    %v550 = vshrl.u32 %v549, 7
    %v551 = vsub.s32 %v548, %v550
    %v552 = vrot.slane %v544, %v551
    %v554 = vunpack.c.l.s4 1983009808
    %v555 = vunpack.c.0.s8 %v554
    %v556 = vlaneseq
    %v557 = vshrl.u32 %v556, 7
    %v558 = vsub.s32 %v555, %v557
    %v559 = vrot.slane %v545, %v558
    %v560 = vcombine.low %v552, %v559
    %v561 = vcombine.high %v552, %v559
    %v562 = vcombine.low %v342, %v349
    %v563 = vcombine.low %v350, %v357
    %v565 = vunpack.c.l.s4 1983009808
    %v566 = vunpack.c.0.s8 %v565
    %v567 = vlaneseq
    %v568 = vshrl.u32 %v567, 7
    %v569 = vsub.s32 %v566, %v568
    %v570 = vrot.slane %v562, %v569
    %v572 = vunpack.c.l.s4 1983009808
    %v573 = vunpack.c.0.s8 %v572
    %v574 = vlaneseq
    %v575 = vshrl.u32 %v574, 7
    %v576 = vsub.s32 %v573, %v575
    %v577 = vrot.slane %v563, %v576
    %v578 = vcombine.low %v570, %v577
    %v579 = vcombine.high %v570, %v577
    %v580 = vcombine.low %v364, %v365
    %v581 = vcombine.low %v372, %v379
    %v583 = vunpack.c.l.s4 1983009808
    %v584 = vunpack.c.0.s8 %v583
    %v585 = vlaneseq
    %v586 = vshrl.u32 %v585, 7
    %v587 = vsub.s32 %v584, %v586
    %v588 = vrot.slane %v580, %v587
    %v590 = vunpack.c.l.s4 1983009808
    %v591 = vunpack.c.0.s8 %v590
    %v592 = vlaneseq
    %v593 = vshrl.u32 %v592, 7
    %v594 = vsub.s32 %v591, %v593
    %v595 = vrot.slane %v581, %v594
    %v596 = vcombine.low %v588, %v595
    %v597 = vcombine.high %v588, %v595
    %v598 = vcombine.low %v380, %v387
    %v599 = vcombine.low %v394, %v395
    %v601 = vunpack.c.l.s4 1983009808
    %v602 = vunpack.c.0.s8 %v601
    %v603 = vlaneseq
    %v604 = vshrl.u32 %v603, 7
    %v605 = vsub.s32 %v602, %v604
    %v606 = vrot.slane %v598, %v605
    %v608 = vunpack.c.l.s4 1983009808
    %v609 = vunpack.c.0.s8 %v608
    %v610 = vlaneseq
    %v611 = vshrl.u32 %v610, 7
    %v612 = vsub.s32 %v609, %v611
    %v613 = vrot.slane %v599, %v612
    %v614 = vcombine.low %v606, %v613
    %v615 = vcombine.high %v606, %v613
    %v616 = vcombine.low %v402, %v409
    %v617 = vcombine.low %v410, %v417
    %v619 = vunpack.c.l.s4 1983009808
    %v620 = vunpack.c.0.s8 %v619
    %v621 = vlaneseq
    %v622 = vshrl.u32 %v621, 7
    %v623 = vsub.s32 %v620, %v622
    %v624 = vrot.slane %v616, %v623
    %v626 = vunpack.c.l.s4 1983009808
    %v627 = vunpack.c.0.s8 %v626
    %v628 = vlaneseq
    %v629 = vshrl.u32 %v628, 7
    %v630 = vsub.s32 %v627, %v629
    %v631 = vrot.slane %v617, %v630
    %v632 = vcombine.low %v624, %v631
    %v633 = vcombine.high %v624, %v631
    %v700 = vunpack.c.l.b16 %v92
    %v701 = vunpack.c.h.b16 %v92
    %v702 = vunpack.c.l.b16 %v93
    %v703 = vunpack.c.h.b16 %v93
    %v704 = vunpack.c.l.b16 %v94
    %v705 = vunpack.c.h.b16 %v94
    %v706 = vunpack.c.l.b16 %v95
    %v707 = vunpack.c.h.b16 %v95
    %v708 = vunpack.c.l.b16 %v96
    %v709 = vunpack.c.h.b16 %v96
    %v710 = vunpack.c.l.b16 %v97
    %v711 = vunpack.c.h.b16 %v97
    %v712 = vunpack.c.l.b16 %v98
    %v713 = vunpack.c.h.b16 %v98
    %v714 = vunpack.c.l.b16 %v99
    %v715 = vunpack.c.h.b16 %v99
    %v716 = vunpack.c.l.b16 %v100
    %v717 = vunpack.c.h.b16 %v100
    %v718 = vunpack.c.l.b16 %v101
    %v719 = vunpack.c.h.b16 %v101
    %v720 = vunpack.c.l.b16 %v102
    %v721 = vunpack.c.h.b16 %v102
    %v722 = vunpack.c.l.b16 %v103
    %v723 = vunpack.c.h.b16 %v103
    %v724 = vunpack.c.l.b16 %v104
    %v725 = vunpack.c.h.b16 %v104
    %v726 = vunpack.c.l.b16 %v105
    %v727 = vunpack.c.h.b16 %v105
    %v728 = vunpack.c.l.b16 %v106
    %v729 = vunpack.c.h.b16 %v106
    %v730 = vunpack.c.l.b16 %v107
    %v731 = vunpack.c.h.b16 %v107
    %v732 = vunpack.c.l.b16 %v108
    %v733 = vunpack.c.h.b16 %v108
    %v734 = vunpack.c.l.b16 %v109
    %v735 = vunpack.c.h.b16 %v109
    %v736 = vunpack.c.l.b16 %v110
    %v737 = vunpack.c.h.b16 %v110
    %v738 = vunpack.c.l.b16 %v111
    %v739 = vunpack.c.h.b16 %v111
    %v740 = vunpack.c.l.b16 %v112
    %v741 = vunpack.c.h.b16 %v112
    %v742 = vunpack.c.l.b16 %v113
    %v743 = vunpack.c.h.b16 %v113
    %v744 = vunpack.c.l.b16 %v114
    %v745 = vunpack.c.h.b16 %v114
    %v746 = vunpack.c.l.b16 %v115
    %v747 = vunpack.c.h.b16 %v115
    %v748 = vunpack.c.l.b16 %v116
    %v749 = vunpack.c.h.b16 %v116
    %v750 = vunpack.c.l.b16 %v117
    %v751 = vunpack.c.h.b16 %v117
    %v752 = vunpack.c.l.b16 %v118
    %v753 = vunpack.c.h.b16 %v118
    %v754 = vunpack.c.l.b16 %v119
    %v755 = vunpack.c.h.b16 %v119
    %v756 = vunpack.c.l.b16 %v120
    %v757 = vunpack.c.h.b16 %v120
    %v758 = vunpack.c.l.b16 %v121
    %v759 = vunpack.c.h.b16 %v121
    %v760 = vunpack.c.l.b16 %v122
    %v761 = vunpack.c.h.b16 %v122
    %v762 = vunpack.c.l.b16 %v123
    %v763 = vunpack.c.h.b16 %v123
    %v764 = vunpack.c.l.b16 %v124
    %v765 = vunpack.c.h.b16 %v124
    %v766 = vunpack.c.l.b16 %v125
    %v767 = vunpack.c.h.b16 %v125
    %v768 = vunpack.c.l.b16 %v126
    %v769 = vunpack.c.h.b16 %v126
    %v770 = vunpack.c.l.b16 %v127
    %v771 = vunpack.c.h.b16 %v127
    %v772 = vunpack.c.l.b16 %v128
    %v773 = vunpack.c.h.b16 %v128
    %v774 = vunpack.c.l.b16 %v129
    %v775 = vunpack.c.h.b16 %v129
    %v776 = vunpack.c.l.b16 %v130
    %v777 = vunpack.c.h.b16 %v130
    %v778 = vunpack.c.l.b16 %v131
    %v779 = vunpack.c.h.b16 %v131
    %v780 = vunpack.c.l.b16 %v132
    %v781 = vunpack.c.h.b16 %v132
    %v782 = vunpack.c.l.b16 %v133
    %v783 = vunpack.c.h.b16 %v133
    %v784 = vunpack.c.l.b16 %v134
    %v785 = vunpack.c.h.b16 %v134
    %v786 = vunpack.c.l.b16 %v135
    %v787 = vunpack.c.h.b16 %v135
    %v788 = vunpack.c.l.b16 %v136
    %v789 = vunpack.c.h.b16 %v136
    %v790 = vunpack.c.l.b16 %v137
    %v791 = vunpack.c.h.b16 %v137
    %v792 = vunpack.c.l.b16 %v138
    %v793 = vunpack.c.h.b16 %v138
    %v794 = vunpack.c.l.b16 %v139
    %v795 = vunpack.c.h.b16 %v139
    %v796 = vunpack.c.l.b16 %v140
    %v797 = vunpack.c.h.b16 %v140
    %v798 = vunpack.c.l.b16 %v141
    %v799 = vunpack.c.h.b16 %v141
    %v800 = vunpack.c.l.b16 %v142
    %v801 = vunpack.c.h.b16 %v142
    %v802 = vunpack.c.l.b16 %v143
    %v803 = vunpack.c.h.b16 %v143
    %v804 = vunpack.c.l.b16 %v144
    %v805 = vunpack.c.h.b16 %v144
    %v806 = vunpack.c.l.b16 %v145
    %v807 = vunpack.c.h.b16 %v145
    %v808 = vpack.c.b16 %v706, %v700
    %v809 = vpack.c.b16 %v707, %v701
    %v810 = vpack.c.b16 %v708, %v702
    %v811 = vpack.c.b16 %v709, %v703
    %v812 = vpack.c.b16 %v710, %v704
    %v813 = vpack.c.b16 %v711, %v705
    %v814 = vpack.c.b16 %v718, %v712
    %v815 = vpack.c.b16 %v719, %v713
    %v816 = vpack.c.b16 %v720, %v714
    %v817 = vpack.c.b16 %v721, %v715
    %v818 = vpack.c.b16 %v722, %v716
    %v819 = vpack.c.b16 %v723, %v717
    %v820 = vpack.c.b16 %v730, %v724
    %v821 = vpack.c.b16 %v731, %v725
    %v822 = vpack.c.b16 %v732, %v726
    %v823 = vpack.c.b16 %v733, %v727
    %v824 = vpack.c.b16 %v734, %v728
    %v825 = vpack.c.b16 %v735, %v729
    %v826 = vpack.c.b16 %v742, %v736
    %v827 = vpack.c.b16 %v743, %v737
    %v828 = vpack.c.b16 %v744, %v738
    %v829 = vpack.c.b16 %v745, %v739
    %v830 = vpack.c.b16 %v746, %v740
    %v831 = vpack.c.b16 %v747, %v741
    %v832 = vpack.c.b16 %v754, %v748
    %v833 = vpack.c.b16 %v755, %v749
    %v834 = vpack.c.b16 %v756, %v750
    %v835 = vpack.c.b16 %v757, %v751
    %v836 = vpack.c.b16 %v758, %v752
    %v837 = vpack.c.b16 %v759, %v753
    %v838 = vpack.c.b16 %v766, %v760
    %v839 = vpack.c.b16 %v767, %v761
    %v840 = vpack.c.b16 %v768, %v762
    %v841 = vpack.c.b16 %v769, %v763
    %v842 = vpack.c.b16 %v770, %v764
    %v843 = vpack.c.b16 %v771, %v765
    %v844 = vpack.c.b16 %v778, %v772
    %v845 = vpack.c.b16 %v779, %v773
    %v846 = vpack.c.b16 %v780, %v774
    %v847 = vpack.c.b16 %v781, %v775
    %v848 = vpack.c.b16 %v782, %v776
    %v849 = vpack.c.b16 %v783, %v777
    %v850 = vpack.c.b16 %v790, %v784
    %v851 = vpack.c.b16 %v791, %v785
    %v852 = vpack.c.b16 %v792, %v786
    %v853 = vpack.c.b16 %v793, %v787
    %v854 = vpack.c.b16 %v794, %v788
    %v855 = vpack.c.b16 %v795, %v789
    %v856 = vpack.c.b16 %v802, %v796
    %v857 = vpack.c.b16 %v803, %v797
    %v858 = vpack.c.b16 %v804, %v798
    %v859 = vpack.c.b16 %v805, %v799
    %v860 = vpack.c.b16 %v806, %v800
    %v861 = vpack.c.b16 %v807, %v801
    %vm910 = vcmask 97280
    %v912 = vsel %vm910, %v435, 0
    %v915 = vsel %vm910, %v453, 0
    %v918 = vsel %vm910, %v471, 0
    %v921 = vsel %vm910, %v489, 0
    %v924 = vsel %vm910, %v507, 0
    %v927 = vsel %vm910, %v525, 0
    %v930 = vsel %vm910, %v543, 0
    %v933 = vsel %vm910, %v561, 0
    %v936 = vsel %vm910, %v579, 0
    %v939 = vsel %vm910, %v597, 0
    %v942 = vsel %vm910, %v615, 0
    %v945 = vsel %vm910, %v633, 0
    %vm947 = vcmask 1045504
    %v949 = vsel %vm947, %v856, 0
    %v952 = vsel %vm947, %v857, 0
    %v955 = vsel %vm947, %v858, 0
    %v958 = vsel %vm947, %v859, 0
    %v961 = vsel %vm947, %v860, 0
    %v964 = vsel %vm947, %v861, 0
    %966 = vmatprep.subr.bf16.mxu0 %v851
    %967 = vmatpush1.bf16.msra.mxu0 %v850
    %968 = vmatprep.subr.bf16.mxu0 %v845
    %969 = vmatpush1.bf16.msra.mxu0 %v844
    %970 = vmatprep.subr.bf16.mxu0 %v839
    %971 = vmatpush1.bf16.msra.mxu0 %v838
    %972 = vmatprep.subr.bf16.mxu0 %v833
    %973 = vmatpush1.bf16.msra.mxu0 %v832
    %974 = vmatprep.subr.bf16.mxu0 %v827
    %975 = vmatpush1.bf16.msra.mxu0 %v826
    %976 = vmatprep.subr.bf16.mxu0 %v821
    %977 = vmatpush1.bf16.msra.mxu0 %v820
    %978 = vmatprep.subr.bf16.mxu0 %v815
    %979 = vmatpush1.bf16.msra.mxu0 %v814
    %980 = vmatprep.subr.bf16.mxu0 %v809
    %981 = vmatpush1.bf16.msra.mxu0 %v808
    %982 = vmatprep.subr.bf16.mxu0 0
    %983 = vmatpush2.bf16.msra.mxu0 0
    %984 = vmatprep.subr.bf16.mxu0 0
    %985 = vmatpush2.bf16.msra.mxu0 0
    %986 = vmatprep.subr.bf16.mxu0 0
    %987 = vmatpush2.bf16.msra.mxu0 0
    %988 = vmatprep.subr.bf16.mxu0 0
    %989 = vmatpush2.bf16.msra.mxu0 0
    %990 = vmatprep.subr.bf16.mxu0 0
    %991 = vmatpush2.bf16.msra.mxu0 0
    %992 = vmatprep.subr.bf16.mxu0 0
    %993 = vmatpush2.bf16.msra.mxu0 0
    %994 = vmatprep.subr.bf16.mxu0 0
    %995 = vmatpush2.bf16.msra.mxu0 0
    %996 = vmatprep.subr.bf16.mxu0 %v952
    %997 = vmatpush2.bf16.msra.mxu0 %v949
    %998 = vmatprep.mubr.bf16.mxu0 %v912
    %999 = vmatmul.mubr.bf16.gmra.mxu0 %v434
    %v1000 = vpop.f32.mrf.mxu0
    %v1001 = vadd.f32 0.0, %v1000
    %v1002 = vpop.f32.mrf.mxu0
    %v1003 = vadd.f32 0.0, %v1002
    %v1004 = vpop.f32.mrf.mxu0
    %v1005 = vadd.f32 0.0, %v1004
    %v1006 = vpop.f32.mrf.mxu0
    %v1007 = vadd.f32 0.0, %v1006
    %1008 = vmatprep.mubr.bf16.mxu0 %v915
    %1009 = vmatmul.mubr.bf16.gmra.mxu0 %v452
    %v1010 = vpop.f32.mrf.mxu0
    %v1011 = vadd.f32 0.0, %v1010
    %v1012 = vpop.f32.mrf.mxu0
    %v1013 = vadd.f32 0.0, %v1012
    %v1014 = vpop.f32.mrf.mxu0
    %v1015 = vadd.f32 0.0, %v1014
    %v1016 = vpop.f32.mrf.mxu0
    %v1017 = vadd.f32 0.0, %v1016
    %1018 = vmatprep.mubr.bf16.mxu0 %v918
    %1019 = vmatmul.mubr.bf16.gmra.mxu0 %v470
    %v1020 = vpop.f32.mrf.mxu0
    %v1021 = vadd.f32 0.0, %v1020
    %v1022 = vpop.f32.mrf.mxu0
    %v1023 = vadd.f32 0.0, %v1022
    %v1024 = vpop.f32.mrf.mxu0
    %v1025 = vadd.f32 0.0, %v1024
    %v1026 = vpop.f32.mrf.mxu0
    %v1027 = vadd.f32 0.0, %v1026
    %1028 = vmatprep.mubr.bf16.mxu0 %v921
    %1029 = vmatmul.mubr.bf16.gmra.mxu0 %v488
    %v1030 = vpop.f32.mrf.mxu0
    %v1031 = vadd.f32 0.0, %v1030
    %v1032 = vpop.f32.mrf.mxu0
    %v1033 = vadd.f32 0.0, %v1032
    %v1034 = vpop.f32.mrf.mxu0
    %v1035 = vadd.f32 0.0, %v1034
    %v1036 = vpop.f32.mrf.mxu0
    %v1037 = vadd.f32 0.0, %v1036
    %1038 = vmatprep.mubr.bf16.mxu0 %v924
    %1039 = vmatmul.mubr.bf16.gmra.mxu0 %v506
    %v1040 = vpop.f32.mrf.mxu0
    %v1041 = vadd.f32 0.0, %v1040
    %v1042 = vpop.f32.mrf.mxu0
    %v1043 = vadd.f32 0.0, %v1042
    %v1044 = vpop.f32.mrf.mxu0
    %v1045 = vadd.f32 0.0, %v1044
    %v1046 = vpop.f32.mrf.mxu0
    %v1047 = vadd.f32 0.0, %v1046
    %1048 = vmatprep.mubr.bf16.mxu0 %v927
    %1049 = vmatmul.mubr.bf16.gmra.mxu0 %v524
    %v1050 = vpop.f32.mrf.mxu0
    %v1051 = vadd.f32 0.0, %v1050
    %v1052 = vpop.f32.mrf.mxu0
    %v1053 = vadd.f32 0.0, %v1052
    %v1054 = vpop.f32.mrf.mxu0
    %v1055 = vadd.f32 0.0, %v1054
    %v1056 = vpop.f32.mrf.mxu0
    %v1057 = vadd.f32 0.0, %v1056
    %1058 = vmatprep.mubr.bf16.mxu0 %v930
    %1059 = vmatmul.mubr.bf16.gmra.mxu0 %v542
    %v1060 = vpop.f32.mrf.mxu0
    %v1061 = vadd.f32 0.0, %v1060
    %v1062 = vpop.f32.mrf.mxu0
    %v1063 = vadd.f32 0.0, %v1062
    %v1064 = vpop.f32.mrf.mxu0
    %v1065 = vadd.f32 0.0, %v1064
    %v1066 = vpop.f32.mrf.mxu0
    %v1067 = vadd.f32 0.0, %v1066
    %1068 = vmatprep.mubr.bf16.mxu0 %v933
    %1069 = vmatmul.mubr.bf16.gmra.mxu0 %v560
    %v1070 = vpop.f32.mrf.mxu0
    %v1071 = vadd.f32 0.0, %v1070
    %v1072 = vpop.f32.mrf.mxu0
    %v1073 = vadd.f32 0.0, %v1072
    %v1074 = vpop.f32.mrf.mxu0
    %v1075 = vadd.f32 0.0, %v1074
    %v1076 = vpop.f32.mrf.mxu0
    %v1077 = vadd.f32 0.0, %v1076
    %1078 = vmatprep.mubr.bf16.mxu0 %v936
    %1079 = vmatmul.mubr.bf16.gmra.mxu0 %v578
    %v1080 = vpop.f32.mrf.mxu0
    %v1081 = vadd.f32 0.0, %v1080
    %v1082 = vpop.f32.mrf.mxu0
    %v1083 = vadd.f32 0.0, %v1082
    %v1084 = vpop.f32.mrf.mxu0
    %v1085 = vadd.f32 0.0, %v1084
    %v1086 = vpop.f32.mrf.mxu0
    %v1087 = vadd.f32 0.0, %v1086
    %1088 = vmatprep.mubr.bf16.mxu0 %v939
    %1089 = vmatmul.mubr.bf16.gmra.mxu0 %v596
    %v1090 = vpop.f32.mrf.mxu0
    %v1091 = vadd.f32 0.0, %v1090
    %v1092 = vpop.f32.mrf.mxu0
    %v1093 = vadd.f32 0.0, %v1092
    %v1094 = vpop.f32.mrf.mxu0
    %v1095 = vadd.f32 0.0, %v1094
    %v1096 = vpop.f32.mrf.mxu0
    %v1097 = vadd.f32 0.0, %v1096
    %1098 = vmatprep.mubr.bf16.mxu0 %v942
    %1099 = vmatmul.mubr.bf16.gmra.mxu0 %v614
    %v1100 = vpop.f32.mrf.mxu0
    %v1101 = vadd.f32 0.0, %v1100
    %v1102 = vpop.f32.mrf.mxu0
    %v1103 = vadd.f32 0.0, %v1102
    %v1104 = vpop.f32.mrf.mxu0
    %v1105 = vadd.f32 0.0, %v1104
    %v1106 = vpop.f32.mrf.mxu0
    %v1107 = vadd.f32 0.0, %v1106
    %1108 = vmatprep.mubr.bf16.mxu0 %v945
    %1109 = vmatmul.mubr.bf16.gmra.mxu0 %v632
    %v1110 = vpop.f32.mrf.mxu0
    %v1111 = vadd.f32 0.0, %v1110
    %v1112 = vpop.f32.mrf.mxu0
    %v1113 = vadd.f32 0.0, %v1112
    %v1114 = vpop.f32.mrf.mxu0
    %v1115 = vadd.f32 0.0, %v1114
    %v1116 = vpop.f32.mrf.mxu0
    %v1117 = vadd.f32 0.0, %v1116
    %1118 = vdwg.mxu0
    %1119 = vmatprep.subr.bf16.mxu0 %v853
    %1120 = vmatpush1.bf16.msra.mxu0 %v852
    %1121 = vmatprep.subr.bf16.mxu0 %v847
    %1122 = vmatpush1.bf16.msra.mxu0 %v846
    %1123 = vmatprep.subr.bf16.mxu0 %v841
    %1124 = vmatpush1.bf16.msra.mxu0 %v840
    %1125 = vmatprep.subr.bf16.mxu0 %v835
    %1126 = vmatpush1.bf16.msra.mxu0 %v834
    %1127 = vmatprep.subr.bf16.mxu0 %v829
    %1128 = vmatpush1.bf16.msra.mxu0 %v828
    %1129 = vmatprep.subr.bf16.mxu0 %v823
    %1130 = vmatpush1.bf16.msra.mxu0 %v822
    %1131 = vmatprep.subr.bf16.mxu0 %v817
    %1132 = vmatpush1.bf16.msra.mxu0 %v816
    %1133 = vmatprep.subr.bf16.mxu0 %v811
    %1134 = vmatpush1.bf16.msra.mxu0 %v810
    %1135 = vmatprep.subr.bf16.mxu0 0
    %1136 = vmatpush2.bf16.msra.mxu0 0
    %1137 = vmatprep.subr.bf16.mxu0 0
    %1138 = vmatpush2.bf16.msra.mxu0 0
    %1139 = vmatprep.subr.bf16.mxu0 0
    %1140 = vmatpush2.bf16.msra.mxu0 0
    %1141 = vmatprep.subr.bf16.mxu0 0
    %1142 = vmatpush2.bf16.msra.mxu0 0
    %1143 = vmatprep.subr.bf16.mxu0 0
    %1144 = vmatpush2.bf16.msra.mxu0 0
    %1145 = vmatprep.subr.bf16.mxu0 0
    %1146 = vmatpush2.bf16.msra.mxu0 0
    %1147 = vmatprep.subr.bf16.mxu0 0
    %1148 = vmatpush2.bf16.msra.mxu0 0
    %1149 = vmatprep.subr.bf16.mxu0 %v958
    %1150 = vmatpush2.bf16.msra.mxu0 %v955
    %1151 = vmatprep.mubr.bf16.mxu0 %v912
    %1152 = vmatmul.mubr.bf16.gmra.mxu0 %v434
    %v1153 = vpop.f32.mrf.mxu0
    %v1154 = vadd.f32 0.0, %v1153
    %v1155 = vpop.f32.mrf.mxu0
    %v1156 = vadd.f32 0.0, %v1155
    %v1157 = vpop.f32.mrf.mxu0
    %v1158 = vadd.f32 0.0, %v1157
    %v1159 = vpop.f32.mrf.mxu0
    %v1160 = vadd.f32 0.0, %v1159
    %1161 = vmatprep.mubr.bf16.mxu0 %v915
    %1162 = vmatmul.mubr.bf16.gmra.mxu0 %v452
    %v1163 = vpop.f32.mrf.mxu0
    %v1164 = vadd.f32 0.0, %v1163
    %v1165 = vpop.f32.mrf.mxu0
    %v1166 = vadd.f32 0.0, %v1165
    %v1167 = vpop.f32.mrf.mxu0
    %v1168 = vadd.f32 0.0, %v1167
    %v1169 = vpop.f32.mrf.mxu0
    %v1170 = vadd.f32 0.0, %v1169
    %1171 = vmatprep.mubr.bf16.mxu0 %v918
    %1172 = vmatmul.mubr.bf16.gmra.mxu0 %v470
    %v1173 = vpop.f32.mrf.mxu0
    %v1174 = vadd.f32 0.0, %v1173
    %v1175 = vpop.f32.mrf.mxu0
    %v1176 = vadd.f32 0.0, %v1175
    %v1177 = vpop.f32.mrf.mxu0
    %v1178 = vadd.f32 0.0, %v1177
    %v1179 = vpop.f32.mrf.mxu0
    %v1180 = vadd.f32 0.0, %v1179
    %1181 = vmatprep.mubr.bf16.mxu0 %v921
    %1182 = vmatmul.mubr.bf16.gmra.mxu0 %v488
    %v1183 = vpop.f32.mrf.mxu0
    %v1184 = vadd.f32 0.0, %v1183
    %v1185 = vpop.f32.mrf.mxu0
    %v1186 = vadd.f32 0.0, %v1185
    %v1187 = vpop.f32.mrf.mxu0
    %v1188 = vadd.f32 0.0, %v1187
    %v1189 = vpop.f32.mrf.mxu0
    %v1190 = vadd.f32 0.0, %v1189
    %1191 = vmatprep.mubr.bf16.mxu0 %v924
    %1192 = vmatmul.mubr.bf16.gmra.mxu0 %v506
    %v1193 = vpop.f32.mrf.mxu0
    %v1194 = vadd.f32 0.0, %v1193
    %v1195 = vpop.f32.mrf.mxu0
    %v1196 = vadd.f32 0.0, %v1195
    %v1197 = vpop.f32.mrf.mxu0
    %v1198 = vadd.f32 0.0, %v1197
    %v1199 = vpop.f32.mrf.mxu0
    %v1200 = vadd.f32 0.0, %v1199
    %1201 = vmatprep.mubr.bf16.mxu0 %v927
    %1202 = vmatmul.mubr.bf16.gmra.mxu0 %v524
    %v1203 = vpop.f32.mrf.mxu0
    %v1204 = vadd.f32 0.0, %v1203
    %v1205 = vpop.f32.mrf.mxu0
    %v1206 = vadd.f32 0.0, %v1205
    %v1207 = vpop.f32.mrf.mxu0
    %v1208 = vadd.f32 0.0, %v1207
    %v1209 = vpop.f32.mrf.mxu0
    %v1210 = vadd.f32 0.0, %v1209
    %1211 = vmatprep.mubr.bf16.mxu0 %v930
    %1212 = vmatmul.mubr.bf16.gmra.mxu0 %v542
    %v1213 = vpop.f32.mrf.mxu0
    %v1214 = vadd.f32 0.0, %v1213
    %v1215 = vpop.f32.mrf.mxu0
    %v1216 = vadd.f32 0.0, %v1215
    %v1217 = vpop.f32.mrf.mxu0
    %v1218 = vadd.f32 0.0, %v1217
    %v1219 = vpop.f32.mrf.mxu0
    %v1220 = vadd.f32 0.0, %v1219
    %1221 = vmatprep.mubr.bf16.mxu0 %v933
    %1222 = vmatmul.mubr.bf16.gmra.mxu0 %v560
    %v1223 = vpop.f32.mrf.mxu0
    %v1224 = vadd.f32 0.0, %v1223
    %v1225 = vpop.f32.mrf.mxu0
    %v1226 = vadd.f32 0.0, %v1225
    %v1227 = vpop.f32.mrf.mxu0
    %v1228 = vadd.f32 0.0, %v1227
    %v1229 = vpop.f32.mrf.mxu0
    %v1230 = vadd.f32 0.0, %v1229
    %1231 = vmatprep.mubr.bf16.mxu0 %v936
    %1232 = vmatmul.mubr.bf16.gmra.mxu0 %v578
    %v1233 = vpop.f32.mrf.mxu0
    %v1234 = vadd.f32 0.0, %v1233
    %v1235 = vpop.f32.mrf.mxu0
    %v1236 = vadd.f32 0.0, %v1235
    %v1237 = vpop.f32.mrf.mxu0
    %v1238 = vadd.f32 0.0, %v1237
    %v1239 = vpop.f32.mrf.mxu0
    %v1240 = vadd.f32 0.0, %v1239
    %1241 = vmatprep.mubr.bf16.mxu0 %v939
    %1242 = vmatmul.mubr.bf16.gmra.mxu0 %v596
    %v1243 = vpop.f32.mrf.mxu0
    %v1244 = vadd.f32 0.0, %v1243
    %v1245 = vpop.f32.mrf.mxu0
    %v1246 = vadd.f32 0.0, %v1245
    %v1247 = vpop.f32.mrf.mxu0
    %v1248 = vadd.f32 0.0, %v1247
    %v1249 = vpop.f32.mrf.mxu0
    %v1250 = vadd.f32 0.0, %v1249
    %1251 = vmatprep.mubr.bf16.mxu0 %v942
    %1252 = vmatmul.mubr.bf16.gmra.mxu0 %v614
    %v1253 = vpop.f32.mrf.mxu0
    %v1254 = vadd.f32 0.0, %v1253
    %v1255 = vpop.f32.mrf.mxu0
    %v1256 = vadd.f32 0.0, %v1255
    %v1257 = vpop.f32.mrf.mxu0
    %v1258 = vadd.f32 0.0, %v1257
    %v1259 = vpop.f32.mrf.mxu0
    %v1260 = vadd.f32 0.0, %v1259
    %1261 = vmatprep.mubr.bf16.mxu0 %v945
    %1262 = vmatmul.mubr.bf16.gmra.mxu0 %v632
    %v1263 = vpop.f32.mrf.mxu0
    %v1264 = vadd.f32 0.0, %v1263
    %v1265 = vpop.f32.mrf.mxu0
    %v1266 = vadd.f32 0.0, %v1265
    %v1267 = vpop.f32.mrf.mxu0
    %v1268 = vadd.f32 0.0, %v1267
    %v1269 = vpop.f32.mrf.mxu0
    %v1270 = vadd.f32 0.0, %v1269
    %1271 = vdwg.mxu0
    %1272 = vmatprep.subr.bf16.mxu0 %v855
    %1273 = vmatpush1.bf16.msra.mxu0 %v854
    %1274 = vmatprep.subr.bf16.mxu0 %v849
    %1275 = vmatpush1.bf16.msra.mxu0 %v848
    %1276 = vmatprep.subr.bf16.mxu0 %v843
    %1277 = vmatpush1.bf16.msra.mxu0 %v842
    %1278 = vmatprep.subr.bf16.mxu0 %v837
    %1279 = vmatpush1.bf16.msra.mxu0 %v836
    %1280 = vmatprep.subr.bf16.mxu0 %v831
    %1281 = vmatpush1.bf16.msra.mxu0 %v830
    %1282 = vmatprep.subr.bf16.mxu0 %v825
    %1283 = vmatpush1.bf16.msra.mxu0 %v824
    %1284 = vmatprep.subr.bf16.mxu0 %v819
    %1285 = vmatpush1.bf16.msra.mxu0 %v818
    %1286 = vmatprep.subr.bf16.mxu0 %v813
    %1287 = vmatpush1.bf16.msra.mxu0 %v812
    %1288 = vmatprep.subr.bf16.mxu0 0
    %1289 = vmatpush2.bf16.msra.mxu0 0
    %1290 = vmatprep.subr.bf16.mxu0 0
    %1291 = vmatpush2.bf16.msra.mxu0 0
    %1292 = vmatprep.subr.bf16.mxu0 0
    %1293 = vmatpush2.bf16.msra.mxu0 0
    %1294 = vmatprep.subr.bf16.mxu0 0
    %1295 = vmatpush2.bf16.msra.mxu0 0
    %1296 = vmatprep.subr.bf16.mxu0 0
    %1297 = vmatpush2.bf16.msra.mxu0 0
    %1298 = vmatprep.subr.bf16.mxu0 0
    %1299 = vmatpush2.bf16.msra.mxu0 0
    %1300 = vmatprep.subr.bf16.mxu0 0
    %1301 = vmatpush2.bf16.msra.mxu0 0
    %1302 = vmatprep.subr.bf16.mxu0 %v964
    %1303 = vmatpush2.bf16.msra.mxu0 %v961
    %1304 = vmatprep.mubr.bf16.mxu0 %v912
    %1305 = vmatmul.mubr.bf16.gmra.mxu0 %v434
    %v1306 = vpop.f32.mrf.mxu0
    %v1307 = vadd.f32 0.0, %v1306
    %v1308 = vpop.f32.mrf.mxu0
    %v1309 = vadd.f32 0.0, %v1308
    %v1310 = vpop.f32.mrf.mxu0
    %v1311 = vadd.f32 0.0, %v1310
    %v1312 = vpop.f32.mrf.mxu0
    %v1313 = vadd.f32 0.0, %v1312
    %1314 = vmatprep.mubr.bf16.mxu0 %v915
    %1315 = vmatmul.mubr.bf16.gmra.mxu0 %v452
    %v1316 = vpop.f32.mrf.mxu0
    %v1317 = vadd.f32 0.0, %v1316
    %v1318 = vpop.f32.mrf.mxu0
    %v1319 = vadd.f32 0.0, %v1318
    %v1320 = vpop.f32.mrf.mxu0
    %v1321 = vadd.f32 0.0, %v1320
    %v1322 = vpop.f32.mrf.mxu0
    %v1323 = vadd.f32 0.0, %v1322
    %1324 = vmatprep.mubr.bf16.mxu0 %v918
    %1325 = vmatmul.mubr.bf16.gmra.mxu0 %v470
    %v1326 = vpop.f32.mrf.mxu0
    %v1327 = vadd.f32 0.0, %v1326
    %v1328 = vpop.f32.mrf.mxu0
    %v1329 = vadd.f32 0.0, %v1328
    %v1330 = vpop.f32.mrf.mxu0
    %v1331 = vadd.f32 0.0, %v1330
    %v1332 = vpop.f32.mrf.mxu0
    %v1333 = vadd.f32 0.0, %v1332
    %1334 = vmatprep.mubr.bf16.mxu0 %v921
    %1335 = vmatmul.mubr.bf16.gmra.mxu0 %v488
    %v1336 = vpop.f32.mrf.mxu0
    %v1337 = vadd.f32 0.0, %v1336
    %v1338 = vpop.f32.mrf.mxu0
    %v1339 = vadd.f32 0.0, %v1338
    %v1340 = vpop.f32.mrf.mxu0
    %v1341 = vadd.f32 0.0, %v1340
    %v1342 = vpop.f32.mrf.mxu0
    %v1343 = vadd.f32 0.0, %v1342
    %1344 = vmatprep.mubr.bf16.mxu0 %v924
    %1345 = vmatmul.mubr.bf16.gmra.mxu0 %v506
    %v1346 = vpop.f32.mrf.mxu0
    %v1347 = vadd.f32 0.0, %v1346
    %v1348 = vpop.f32.mrf.mxu0
    %v1349 = vadd.f32 0.0, %v1348
    %v1350 = vpop.f32.mrf.mxu0
    %v1351 = vadd.f32 0.0, %v1350
    %v1352 = vpop.f32.mrf.mxu0
    %v1353 = vadd.f32 0.0, %v1352
    %1354 = vmatprep.mubr.bf16.mxu0 %v927
    %1355 = vmatmul.mubr.bf16.gmra.mxu0 %v524
    %v1356 = vpop.f32.mrf.mxu0
    %v1357 = vadd.f32 0.0, %v1356
    %v1358 = vpop.f32.mrf.mxu0
    %v1359 = vadd.f32 0.0, %v1358
    %v1360 = vpop.f32.mrf.mxu0
    %v1361 = vadd.f32 0.0, %v1360
    %v1362 = vpop.f32.mrf.mxu0
    %v1363 = vadd.f32 0.0, %v1362
    %1364 = vmatprep.mubr.bf16.mxu0 %v930
    %1365 = vmatmul.mubr.bf16.gmra.mxu0 %v542
    %v1366 = vpop.f32.mrf.mxu0
    %v1367 = vadd.f32 0.0, %v1366
    %v1368 = vpop.f32.mrf.mxu0
    %v1369 = vadd.f32 0.0, %v1368
    %v1370 = vpop.f32.mrf.mxu0
    %v1371 = vadd.f32 0.0, %v1370
    %v1372 = vpop.f32.mrf.mxu0
    %v1373 = vadd.f32 0.0, %v1372
    %1374 = vmatprep.mubr.bf16.mxu0 %v933
    %1375 = vmatmul.mubr.bf16.gmra.mxu0 %v560
    %v1376 = vpop.f32.mrf.mxu0
    %v1377 = vadd.f32 0.0, %v1376
    %v1378 = vpop.f32.mrf.mxu0
    %v1379 = vadd.f32 0.0, %v1378
    %v1380 = vpop.f32.mrf.mxu0
    %v1381 = vadd.f32 0.0, %v1380
    %v1382 = vpop.f32.mrf.mxu0
    %v1383 = vadd.f32 0.0, %v1382
    %1384 = vmatprep.mubr.bf16.mxu0 %v936
    %1385 = vmatmul.mubr.bf16.gmra.mxu0 %v578
    %v1386 = vpop.f32.mrf.mxu0
    %v1387 = vadd.f32 0.0, %v1386
    %v1388 = vpop.f32.mrf.mxu0
    %v1389 = vadd.f32 0.0, %v1388
    %v1390 = vpop.f32.mrf.mxu0
    %v1391 = vadd.f32 0.0, %v1390
    %v1392 = vpop.f32.mrf.mxu0
    %v1393 = vadd.f32 0.0, %v1392
    %1394 = vmatprep.mubr.bf16.mxu0 %v939
    %1395 = vmatmul.mubr.bf16.gmra.mxu0 %v596
    %v1396 = vpop.f32.mrf.mxu0
    %v1397 = vadd.f32 0.0, %v1396
    %v1398 = vpop.f32.mrf.mxu0
    %v1399 = vadd.f32 0.0, %v1398
    %v1400 = vpop.f32.mrf.mxu0
    %v1401 = vadd.f32 0.0, %v1400
    %v1402 = vpop.f32.mrf.mxu0
    %v1403 = vadd.f32 0.0, %v1402
    %1404 = vmatprep.mubr.bf16.mxu0 %v942
    %1405 = vmatmul.mubr.bf16.gmra.mxu0 %v614
    %v1406 = vpop.f32.mrf.mxu0
    %v1407 = vadd.f32 0.0, %v1406
    %v1408 = vpop.f32.mrf.mxu0
    %v1409 = vadd.f32 0.0, %v1408
    %v1410 = vpop.f32.mrf.mxu0
    %v1411 = vadd.f32 0.0, %v1410
    %v1412 = vpop.f32.mrf.mxu0
    %v1413 = vadd.f32 0.0, %v1412
    %1414 = vmatprep.mubr.bf16.mxu0 %v945
    %1415 = vmatmul.mubr.bf16.gmra.mxu0 %v632
    %v1416 = vpop.f32.mrf.mxu0
    %v1417 = vadd.f32 0.0, %v1416
    %v1418 = vpop.f32.mrf.mxu0
    %v1419 = vadd.f32 0.0, %v1418
    %v1420 = vpop.f32.mrf.mxu0
    %v1421 = vadd.f32 0.0, %v1420
    %v1422 = vpop.f32.mrf.mxu0
    %v1423 = vadd.f32 0.0, %v1422
    %1424 = vdwg.mxu0
    %v1569 = vcombine.low %v1001, %v1003
    %v1570 = vcombine.high %v1001, %v1003
    %v1571 = vcombine.low %v1154, %v1156
    %v1572 = vcombine.high %v1154, %v1156
    %v1573 = vcombine.low %v1307, %v1309
    %v1574 = vcombine.high %v1307, %v1309
    %v1575 = vcombine.low %v1005, %v1007
    %v1576 = vcombine.high %v1005, %v1007
    %v1577 = vcombine.low %v1158, %v1160
    %v1578 = vcombine.high %v1158, %v1160
    %v1579 = vcombine.low %v1311, %v1313
    %v1580 = vcombine.high %v1311, %v1313
    %v1581 = vcombine.low %v1011, %v1013
    %v1582 = vcombine.high %v1011, %v1013
    %v1583 = vcombine.low %v1164, %v1166
    %v1584 = vcombine.high %v1164, %v1166
    %v1585 = vcombine.low %v1317, %v1319
    %v1586 = vcombine.high %v1317, %v1319
    %v1587 = vcombine.low %v1015, %v1017
    %v1588 = vcombine.high %v1015, %v1017
    %v1589 = vcombine.low %v1168, %v1170
    %v1590 = vcombine.high %v1168, %v1170
    %v1591 = vcombine.low %v1321, %v1323
    %v1592 = vcombine.high %v1321, %v1323
    %v1593 = vcombine.low %v1021, %v1023
    %v1594 = vcombine.high %v1021, %v1023
    %v1595 = vcombine.low %v1174, %v1176
    %v1596 = vcombine.high %v1174, %v1176
    %v1597 = vcombine.low %v1327, %v1329
    %v1598 = vcombine.high %v1327, %v1329
    %v1599 = vcombine.low %v1025, %v1027
    %v1600 = vcombine.high %v1025, %v1027
    %v1601 = vcombine.low %v1178, %v1180
    %v1602 = vcombine.high %v1178, %v1180
    %v1603 = vcombine.low %v1331, %v1333
    %v1604 = vcombine.high %v1331, %v1333
    %v1605 = vcombine.low %v1031, %v1033
    %v1606 = vcombine.high %v1031, %v1033
    %v1607 = vcombine.low %v1184, %v1186
    %v1608 = vcombine.high %v1184, %v1186
    %v1609 = vcombine.low %v1337, %v1339
    %v1610 = vcombine.high %v1337, %v1339
    %v1611 = vcombine.low %v1035, %v1037
    %v1612 = vcombine.high %v1035, %v1037
    %v1613 = vcombine.low %v1188, %v1190
    %v1614 = vcombine.high %v1188, %v1190
    %v1615 = vcombine.low %v1341, %v1343
    %v1616 = vcombine.high %v1341, %v1343
    %v1617 = vcombine.low %v1041, %v1043
    %v1618 = vcombine.high %v1041, %v1043
    %v1619 = vcombine.low %v1194, %v1196
    %v1620 = vcombine.high %v1194, %v1196
    %v1621 = vcombine.low %v1347, %v1349
    %v1622 = vcombine.high %v1347, %v1349
    %v1623 = vcombine.low %v1045, %v1047
    %v1624 = vcombine.high %v1045, %v1047
    %v1625 = vcombine.low %v1198, %v1200
    %v1626 = vcombine.high %v1198, %v1200
    %v1627 = vcombine.low %v1351, %v1353
    %v1628 = vcombine.high %v1351, %v1353
    %v1629 = vcombine.low %v1051, %v1053
    %v1630 = vcombine.high %v1051, %v1053
    %v1631 = vcombine.low %v1204, %v1206
    %v1632 = vcombine.high %v1204, %v1206
    %v1633 = vcombine.low %v1357, %v1359
    %v1634 = vcombine.high %v1357, %v1359
    %v1635 = vcombine.low %v1055, %v1057
    %v1636 = vcombine.high %v1055, %v1057
    %v1637 = vcombine.low %v1208, %v1210
    %v1638 = vcombine.high %v1208, %v1210
    %v1639 = vcombine.low %v1361, %v1363
    %v1640 = vcombine.high %v1361, %v1363
    %v1641 = vcombine.low %v1061, %v1063
    %v1642 = vcombine.high %v1061, %v1063
    %v1643 = vcombine.low %v1214, %v1216
    %v1644 = vcombine.high %v1214, %v1216
    %v1645 = vcombine.low %v1367, %v1369
    %v1646 = vcombine.high %v1367, %v1369
    %v1647 = vcombine.low %v1065, %v1067
    %v1648 = vcombine.high %v1065, %v1067
    %v1649 = vcombine.low %v1218, %v1220
    %v1650 = vcombine.high %v1218, %v1220
    %v1651 = vcombine.low %v1371, %v1373
    %v1652 = vcombine.high %v1371, %v1373
    %v1653 = vcombine.low %v1071, %v1073
    %v1654 = vcombine.high %v1071, %v1073
    %v1655 = vcombine.low %v1224, %v1226
    %v1656 = vcombine.high %v1224, %v1226
    %v1657 = vcombine.low %v1377, %v1379
    %v1658 = vcombine.high %v1377, %v1379
    %v1659 = vcombine.low %v1075, %v1077
    %v1660 = vcombine.high %v1075, %v1077
    %v1661 = vcombine.low %v1228, %v1230
    %v1662 = vcombine.high %v1228, %v1230
    %v1663 = vcombine.low %v1381, %v1383
    %v1664 = vcombine.high %v1381, %v1383
    %v1665 = vcombine.low %v1081, %v1083
    %v1666 = vcombine.high %v1081, %v1083
    %v1667 = vcombine.low %v1234, %v1236
    %v1668 = vcombine.high %v1234, %v1236
    %v1669 = vcombine.low %v1387, %v1389
    %v1670 = vcombine.high %v1387, %v1389
    %v1671 = vcombine.low %v1085, %v1087
    %v1672 = vcombine.high %v1085, %v1087
    %v1673 = vcombine.low %v1238, %v1240
    %v1674 = vcombine.high %v1238, %v1240
    %v1675 = vcombine.low %v1391, %v1393
    %v1676 = vcombine.high %v1391, %v1393
    %v1677 = vcombine.low %v1091, %v1093
    %v1678 = vcombine.high %v1091, %v1093
    %v1679 = vcombine.low %v1244, %v1246
    %v1680 = vcombine.high %v1244, %v1246
    %v1681 = vcombine.low %v1397, %v1399
    %v1682 = vcombine.high %v1397, %v1399
    %v1683 = vcombine.low %v1095, %v1097
    %v1684 = vcombine.high %v1095, %v1097
    %v1685 = vcombine.low %v1248, %v1250
    %v1686 = vcombine.high %v1248, %v1250
    %v1687 = vcombine.low %v1401, %v1403
    %v1688 = vcombine.high %v1401, %v1403
    %v1689 = vcombine.low %v1101, %v1103
    %v1690 = vcombine.high %v1101, %v1103
    %v1691 = vcombine.low %v1254, %v1256
    %v1692 = vcombine.high %v1254, %v1256
    %v1693 = vcombine.low %v1407, %v1409
    %v1694 = vcombine.high %v1407, %v1409
    %v1695 = vcombine.low %v1105, %v1107
    %v1696 = vcombine.high %v1105, %v1107
    %v1697 = vcombine.low %v1258, %v1260
    %v1698 = vcombine.high %v1258, %v1260
    %v1699 = vcombine.low %v1411, %v1413
    %v1700 = vcombine.high %v1411, %v1413
    %v1701 = vcombine.low %v1111, %v1113
    %v1702 = vcombine.high %v1111, %v1113
    %v1703 = vcombine.low %v1264, %v1266
    %v1704 = vcombine.high %v1264, %v1266
    %v1705 = vcombine.low %v1417, %v1419
    %v1706 = vcombine.high %v1417, %v1419
    %v1707 = vcombine.low %v1115, %v1117
    %v1708 = vcombine.high %v1115, %v1117
    %v1709 = vcombine.low %v1268, %v1270
    %v1710 = vcombine.high %v1268, %v1270
    %v1711 = vcombine.low %v1421, %v1423
    %v1712 = vcombine.high %v1421, %v1423
    %v1857 = vmax.f32 %v1569, %v1576
    %v1858 = vmax.f32 %v1571, %v1578
    %v1859 = vmax.f32 %v1573, %v1580
    %v1860 = vmax.f32 %v1570, %v1581
    %v1861 = vmax.f32 %v1572, %v1583
    %v1862 = vmax.f32 %v1574, %v1585
    %v1863 = vmax.f32 %v1575, %v1582
    %v1864 = vmax.f32 %v1577, %v1584
    %v1865 = vmax.f32 %v1579, %v1586
    %v1866 = vmax.f32 %v1587, %v1594
    %v1867 = vmax.f32 %v1589, %v1596
    %v1868 = vmax.f32 %v1591, %v1598
    %v1869 = vmax.f32 %v1588, %v1599
    %v1870 = vmax.f32 %v1590, %v1601
    %v1871 = vmax.f32 %v1592, %v1603
    %v1872 = vmax.f32 %v1593, %v1600
    %v1873 = vmax.f32 %v1595, %v1602
    %v1874 = vmax.f32 %v1597, %v1604
    %v1875 = vmax.f32 %v1605, %v1612
    %v1876 = vmax.f32 %v1607, %v1614
    %v1877 = vmax.f32 %v1609, %v1616
    %v1878 = vmax.f32 %v1606, %v1617
    %v1879 = vmax.f32 %v1608, %v1619
    %v1880 = vmax.f32 %v1610, %v1621
    %v1881 = vmax.f32 %v1611, %v1618
    %v1882 = vmax.f32 %v1613, %v1620
    %v1883 = vmax.f32 %v1615, %v1622
    %v1884 = vmax.f32 %v1623, %v1630
    %v1885 = vmax.f32 %v1625, %v1632
    %v1886 = vmax.f32 %v1627, %v1634
    %v1887 = vmax.f32 %v1624, %v1635
    %v1888 = vmax.f32 %v1626, %v1637
    %v1889 = vmax.f32 %v1628, %v1639
    %v1890 = vmax.f32 %v1629, %v1636
    %v1891 = vmax.f32 %v1631, %v1638
    %v1892 = vmax.f32 %v1633, %v1640
    %v1893 = vmax.f32 %v1641, %v1648
    %v1894 = vmax.f32 %v1643, %v1650
    %v1895 = vmax.f32 %v1645, %v1652
    %v1896 = vmax.f32 %v1642, %v1653
    %v1897 = vmax.f32 %v1644, %v1655
    %v1898 = vmax.f32 %v1646, %v1657
    %v1899 = vmax.f32 %v1647, %v1654
    %v1900 = vmax.f32 %v1649, %v1656
    %v1901 = vmax.f32 %v1651, %v1658
    %v1902 = vmax.f32 %v1659, %v1666
    %v1903 = vmax.f32 %v1661, %v1668
    %v1904 = vmax.f32 %v1663, %v1670
    %v1905 = vmax.f32 %v1660, %v1671
    %v1906 = vmax.f32 %v1662, %v1673
    %v1907 = vmax.f32 %v1664, %v1675
    %v1908 = vmax.f32 %v1665, %v1672
    %v1909 = vmax.f32 %v1667, %v1674
    %v1910 = vmax.f32 %v1669, %v1676
    %v1911 = vmax.f32 %v1677, %v1684
    %v1912 = vmax.f32 %v1679, %v1686
    %v1913 = vmax.f32 %v1681, %v1688
    %v1914 = vmax.f32 %v1678, %v1689
    %v1915 = vmax.f32 %v1680, %v1691
    %v1916 = vmax.f32 %v1682, %v1693
    %v1917 = vmax.f32 %v1683, %v1690
    %v1918 = vmax.f32 %v1685, %v1692
    %v1919 = vmax.f32 %v1687, %v1694
    %v1920 = vmax.f32 %v1695, %v1702
    %v1921 = vmax.f32 %v1697, %v1704
    %v1922 = vmax.f32 %v1699, %v1706
    %v1923 = vmax.f32 %v1696, %v1707
    %v1924 = vmax.f32 %v1698, %v1709
    %v1925 = vmax.f32 %v1700, %v1711
    %v1926 = vmax.f32 %v1701, %v1708
    %v1927 = vmax.f32 %v1703, %v1710
    %v1928 = vmax.f32 %v1705, %v1712
    %v1977 = vrot.slane %v1858, 4
    %v1978 = vrot.slane %v1859, 4
    %v1979 = vrot.slane %v1861, 4
    %v1980 = vrot.slane %v1862, 4
    %v1981 = vrot.slane %v1864, 4
    %v1982 = vrot.slane %v1865, 4
    %v1983 = vrot.slane %v1867, 4
    %v1984 = vrot.slane %v1868, 4
    %v1985 = vrot.slane %v1870, 4
    %v1986 = vrot.slane %v1871, 4
    %v1987 = vrot.slane %v1873, 4
    %v1988 = vrot.slane %v1874, 4
    %v1989 = vrot.slane %v1876, 4
    %v1990 = vrot.slane %v1877, 4
    %v1991 = vrot.slane %v1879, 4
    %v1992 = vrot.slane %v1880, 4
    %v1993 = vrot.slane %v1882, 4
    %v1994 = vrot.slane %v1883, 4
    %v1995 = vrot.slane %v1885, 4
    %v1996 = vrot.slane %v1886, 4
    %v1997 = vrot.slane %v1888, 4
    %v1998 = vrot.slane %v1889, 4
    %v1999 = vrot.slane %v1891, 4
    %v2000 = vrot.slane %v1892, 4
    %v2001 = vrot.slane %v1894, 4
    %v2002 = vrot.slane %v1895, 4
    %v2003 = vrot.slane %v1897, 4
    %v2004 = vrot.slane %v1898, 4
    %v2005 = vrot.slane %v1900, 4
    %v2006 = vrot.slane %v1901, 4
    %v2007 = vrot.slane %v1903, 4
    %v2008 = vrot.slane %v1904, 4
    %v2009 = vrot.slane %v1906, 4
    %v2010 = vrot.slane %v1907, 4
    %v2011 = vrot.slane %v1909, 4
    %v2012 = vrot.slane %v1910, 4
    %v2013 = vrot.slane %v1912, 4
    %v2014 = vrot.slane %v1913, 4
    %v2015 = vrot.slane %v1915, 4
    %v2016 = vrot.slane %v1916, 4
    %v2017 = vrot.slane %v1918, 4
    %v2018 = vrot.slane %v1919, 4
    %v2019 = vrot.slane %v1921, 4
    %v2020 = vrot.slane %v1922, 4
    %v2021 = vrot.slane %v1924, 4
    %v2022 = vrot.slane %v1925, 4
    %v2023 = vrot.slane %v1927, 4
    %v2024 = vrot.slane %v1928, 4
    %vm2025 = vcmask 1043456
    %v2026 = vsel %vm2025, %v1977, %v1978
    %v2027 = vsel %vm2025, %v1979, %v1980
    %v2028 = vsel %vm2025, %v1981, %v1982
    %v2029 = vsel %vm2025, %v1983, %v1984
    %v2030 = vsel %vm2025, %v1985, %v1986
    %v2031 = vsel %vm2025, %v1987, %v1988
    %v2032 = vsel %vm2025, %v1989, %v1990
    %v2033 = vsel %vm2025, %v1991, %v1992
    %v2034 = vsel %vm2025, %v1993, %v1994
    %v2035 = vsel %vm2025, %v1995, %v1996
    %v2036 = vsel %vm2025, %v1997, %v1998
    %v2037 = vsel %vm2025, %v1999, %v2000
    %v2038 = vsel %vm2025, %v2001, %v2002
    %v2039 = vsel %vm2025, %v2003, %v2004
    %v2040 = vsel %vm2025, %v2005, %v2006
    %v2041 = vsel %vm2025, %v2007, %v2008
    %v2042 = vsel %vm2025, %v2009, %v2010
    %v2043 = vsel %vm2025, %v2011, %v2012
    %v2044 = vsel %vm2025, %v2013, %v2014
    %v2045 = vsel %vm2025, %v2015, %v2016
    %v2046 = vsel %vm2025, %v2017, %v2018
    %v2047 = vsel %vm2025, %v2019, %v2020
    %v2048 = vsel %vm2025, %v2021, %v2022
    %v2049 = vsel %vm2025, %v2023, %v2024
    %v2098 = vmax.f32 %v1857, %v2026
    %v2099 = vmax.f32 %v1858, %v1978
    %v2100 = vmax.f32 %v1860, %v2027
    %v2101 = vmax.f32 %v1861, %v1980
    %v2102 = vmax.f32 %v1863, %v2028
    %v2103 = vmax.f32 %v1864, %v1982
    %v2104 = vmax.f32 %v1866, %v2029
    %v2105 = vmax.f32 %v1867, %v1984
    %v2106 = vmax.f32 %v1869, %v2030
    %v2107 = vmax.f32 %v1870, %v1986
    %v2108 = vmax.f32 %v1872, %v2031
    %v2109 = vmax.f32 %v1873, %v1988
    %v2110 = vmax.f32 %v1875, %v2032
    %v2111 = vmax.f32 %v1876, %v1990
    %v2112 = vmax.f32 %v1878, %v2033
    %v2113 = vmax.f32 %v1879, %v1992
    %v2114 = vmax.f32 %v1881, %v2034
    %v2115 = vmax.f32 %v1882, %v1994
    %v2116 = vmax.f32 %v1884, %v2035
    %v2117 = vmax.f32 %v1885, %v1996
    %v2118 = vmax.f32 %v1887, %v2036
    %v2119 = vmax.f32 %v1888, %v1998
    %v2120 = vmax.f32 %v1890, %v2037
    %v2121 = vmax.f32 %v1891, %v2000
    %v2122 = vmax.f32 %v1893, %v2038
    %v2123 = vmax.f32 %v1894, %v2002
    %v2124 = vmax.f32 %v1896, %v2039
    %v2125 = vmax.f32 %v1897, %v2004
    %v2126 = vmax.f32 %v1899, %v2040
    %v2127 = vmax.f32 %v1900, %v2006
    %v2128 = vmax.f32 %v1902, %v2041
    %v2129 = vmax.f32 %v1903, %v2008
    %v2130 = vmax.f32 %v1905, %v2042
    %v2131 = vmax.f32 %v1906, %v2010
    %v2132 = vmax.f32 %v1908, %v2043
    %v2133 = vmax.f32 %v1909, %v2012
    %v2134 = vmax.f32 %v1911, %v2044
    %v2135 = vmax.f32 %v1912, %v2014
    %v2136 = vmax.f32 %v1914, %v2045
    %v2137 = vmax.f32 %v1915, %v2016
    %v2138 = vmax.f32 %v1917, %v2046
    %v2139 = vmax.f32 %v1918, %v2018
    %v2140 = vmax.f32 %v1920, %v2047
    %v2141 = vmax.f32 %v1921, %v2020
    %v2142 = vmax.f32 %v1923, %v2048
    %v2143 = vmax.f32 %v1924, %v2022
    %v2144 = vmax.f32 %v1926, %v2049
    %v2145 = vmax.f32 %v1927, %v2024
    %v2146 = vld [vmem:[%s1] sm:$0xff]
    %v2147 = vld [vmem:[%s1 + $0x8] sm:$0xff]
    %v2148 = vld [vmem:[%s1 + $0x10] sm:$0xff]
    %v2152 = vcombine.low %v2146, %v2147
    %v2153 = vcombine.high %v2146, %v2147
    %v2154 = vcombine.high %v2148, %v2148
    %v2156 = vunpack.c.l.s4 1966171168
    %v2157 = vunpack.c.0.s8 %v2156
    %v2158 = vlaneseq
    %v2159 = vshrl.u32 %v2158, 7
    %v2160 = vsub.s32 %v2157, %v2159
    %v2161 = vrot.slane %v2152, %v2160
    %v2163 = vunpack.c.l.s4 1966171168
    %v2164 = vunpack.c.0.s8 %v2163
    %v2165 = vlaneseq
    %v2166 = vshrl.u32 %v2165, 7
    %v2167 = vsub.s32 %v2164, %v2166
    %v2168 = vrot.slane %v2153, %v2167
    %v2170 = vunpack.c.l.s4 1966171168
    %v2171 = vunpack.c.0.s8 %v2170
    %v2172 = vlaneseq
    %v2173 = vshrl.u32 %v2172, 7
    %v2174 = vsub.s32 %v2171, %v2173
    %v2175 = vrot.slane %v2148, %v2174
    %v2177 = vunpack.c.l.s4 1966171168
    %v2178 = vunpack.c.0.s8 %v2177
    %v2179 = vlaneseq
    %v2180 = vshrl.u32 %v2179, 7
    %v2181 = vsub.s32 %v2178, %v2180
    %v2182 = vrot.slane %v2154, %v2181
    %v2183 = vcombine.low %v2161, %v2175
    %v2184 = vcombine.high %v2161, %v2175
    %v2185 = vcombine.low %v2168, %v2182
    %v2186 = vcombine.high %v2168, %v2182
    %v2188 = vunpack.c.l.s4 1966171168
    %v2189 = vunpack.c.0.s8 %v2188
    %v2190 = vlaneseq
    %v2191 = vshrl.u32 %v2190, 7
    %v2192 = vsub.s32 %v2189, %v2191
    %v2193 = vrot.slane %v2183, %v2192
    %v2195 = vunpack.c.l.s4 1966171168
    %v2196 = vunpack.c.0.s8 %v2195
    %v2197 = vlaneseq
    %v2198 = vshrl.u32 %v2197, 7
    %v2199 = vsub.s32 %v2196, %v2198
    %v2200 = vrot.slane %v2185, %v2199
    %v2202 = vunpack.c.l.s4 1966171168
    %v2203 = vunpack.c.0.s8 %v2202
    %v2204 = vlaneseq
    %v2205 = vshrl.u32 %v2204, 7
    %v2206 = vsub.s32 %v2203, %v2205
    %v2207 = vrot.slane %v2184, %v2206
    %v2209 = vunpack.c.l.s4 1966171168
    %v2210 = vunpack.c.0.s8 %v2209
    %v2211 = vlaneseq
    %v2212 = vshrl.u32 %v2211, 7
    %v2213 = vsub.s32 %v2210, %v2212
    %v2214 = vrot.slane %v2186, %v2213
    %v2215 = vcombine.high %v2193, %v2193
    %v2216 = vcombine.high %v2200, %v2200
    %v2217 = vcombine.high %v2207, %v2207
    %v2218 = vcombine.high %v2214, %v2214
    %v2219 = vlaneseq
    %v2220 = vshrl.u32 %v2219, 7
    %v2221 = vsub.s32 0, %v2220
    %v2222 = vrot.slane %v2193, %v2221
    %v2223 = vlaneseq
    %v2224 = vshrl.u32 %v2223, 7
    %v2225 = vsub.s32 1, %v2224
    %v2226 = vrot.slane %v2193, %v2225
    %v2227 = vlaneseq
    %v2228 = vshrl.u32 %v2227, 7
    %v2229 = vsub.s32 2, %v2228
    %v2230 = vrot.slane %v2193, %v2229
    %v2231 = vlaneseq
    %v2232 = vshrl.u32 %v2231, 7
    %v2233 = vsub.s32 0, %v2232
    %v2234 = vrot.slane %v2207, %v2233
    %v2235 = vlaneseq
    %v2236 = vshrl.u32 %v2235, 7
    %v2237 = vsub.s32 1, %v2236
    %v2238 = vrot.slane %v2207, %v2237
    %v2239 = vlaneseq
    %v2240 = vshrl.u32 %v2239, 7
    %v2241 = vsub.s32 2, %v2240
    %v2242 = vrot.slane %v2207, %v2241
    %v2243 = vlaneseq
    %v2244 = vshrl.u32 %v2243, 7
    %v2245 = vsub.s32 0, %v2244
    %v2246 = vrot.slane %v2215, %v2245
    %v2247 = vlaneseq
    %v2248 = vshrl.u32 %v2247, 7
    %v2249 = vsub.s32 1, %v2248
    %v2250 = vrot.slane %v2215, %v2249
    %v2251 = vlaneseq
    %v2252 = vshrl.u32 %v2251, 7
    %v2253 = vsub.s32 2, %v2252
    %v2254 = vrot.slane %v2215, %v2253
    %v2255 = vlaneseq
    %v2256 = vshrl.u32 %v2255, 7
    %v2257 = vsub.s32 0, %v2256
    %v2258 = vrot.slane %v2217, %v2257
    %v2259 = vlaneseq
    %v2260 = vshrl.u32 %v2259, 7
    %v2261 = vsub.s32 1, %v2260
    %v2262 = vrot.slane %v2217, %v2261
    %v2263 = vlaneseq
    %v2264 = vshrl.u32 %v2263, 7
    %v2265 = vsub.s32 2, %v2264
    %v2266 = vrot.slane %v2217, %v2265
    %v2267 = vlaneseq
    %v2268 = vshrl.u32 %v2267, 7
    %v2269 = vsub.s32 0, %v2268
    %v2270 = vrot.slane %v2200, %v2269
    %v2271 = vlaneseq
    %v2272 = vshrl.u32 %v2271, 7
    %v2273 = vsub.s32 1, %v2272
    %v2274 = vrot.slane %v2200, %v2273
    %v2275 = vlaneseq
    %v2276 = vshrl.u32 %v2275, 7
    %v2277 = vsub.s32 2, %v2276
    %v2278 = vrot.slane %v2200, %v2277
    %v2279 = vlaneseq
    %v2280 = vshrl.u32 %v2279, 7
    %v2281 = vsub.s32 0, %v2280
    %v2282 = vrot.slane %v2214, %v2281
    %v2283 = vlaneseq
    %v2284 = vshrl.u32 %v2283, 7
    %v2285 = vsub.s32 1, %v2284
    %v2286 = vrot.slane %v2214, %v2285
    %v2287 = vlaneseq
    %v2288 = vshrl.u32 %v2287, 7
    %v2289 = vsub.s32 2, %v2288
    %v2290 = vrot.slane %v2214, %v2289
    %v2291 = vlaneseq
    %v2292 = vshrl.u32 %v2291, 7
    %v2293 = vsub.s32 0, %v2292
    %v2294 = vrot.slane %v2216, %v2293
    %v2295 = vlaneseq
    %v2296 = vshrl.u32 %v2295, 7
    %v2297 = vsub.s32 1, %v2296
    %v2298 = vrot.slane %v2216, %v2297
    %v2299 = vlaneseq
    %v2300 = vshrl.u32 %v2299, 7
    %v2301 = vsub.s32 2, %v2300
    %v2302 = vrot.slane %v2216, %v2301
    %v2303 = vlaneseq
    %v2304 = vshrl.u32 %v2303, 7
    %v2305 = vsub.s32 0, %v2304
    %v2306 = vrot.slane %v2218, %v2305
    %v2307 = vlaneseq
    %v2308 = vshrl.u32 %v2307, 7
    %v2309 = vsub.s32 1, %v2308
    %v2310 = vrot.slane %v2218, %v2309
    %v2311 = vlaneseq
    %v2312 = vshrl.u32 %v2311, 7
    %v2313 = vsub.s32 2, %v2312
    %v2314 = vrot.slane %v2218, %v2313
    %v2323 = vcombine.low %v2222, %v2226
    %v2324 = vcombine.high %v2222, %v2226
    %v2325 = vcombine.high %v2230, %v2230
    %v2326 = vcombine.low %v2234, %v2238
    %v2327 = vcombine.high %v2234, %v2238
    %v2328 = vcombine.high %v2242, %v2242
    %v2329 = vcombine.low %v2246, %v2250
    %v2330 = vcombine.high %v2246, %v2250
    %v2331 = vcombine.high %v2254, %v2254
    %v2332 = vcombine.low %v2258, %v2262
    %v2333 = vcombine.high %v2258, %v2262
    %v2334 = vcombine.high %v2266, %v2266
    %v2335 = vcombine.low %v2270, %v2274
    %v2336 = vcombine.high %v2270, %v2274
    %v2337 = vcombine.high %v2278, %v2278
    %v2338 = vcombine.low %v2282, %v2286
    %v2339 = vcombine.high %v2282, %v2286
    %v2340 = vcombine.high %v2290, %v2290
    %v2341 = vcombine.low %v2294, %v2298
    %v2342 = vcombine.high %v2294, %v2298
    %v2343 = vcombine.high %v2302, %v2302
    %v2344 = vcombine.low %v2306, %v2310
    %v2345 = vcombine.high %v2306, %v2310
    %v2346 = vcombine.high %v2314, %v2314
    %v2371 = vadd.f32 %v2098, %v2323
    %v2372 = vadd.f32 %v2099, %v2230
    %v2373 = vadd.f32 %v2100, %v2324
    %v2374 = vadd.f32 %v2101, %v2325
    %v2375 = vadd.f32 %v2102, %v2323
    %v2376 = vadd.f32 %v2103, %v2230
    %v2377 = vadd.f32 %v2104, %v2326
    %v2378 = vadd.f32 %v2105, %v2242
    %v2379 = vadd.f32 %v2106, %v2327
    %v2380 = vadd.f32 %v2107, %v2328
    %v2381 = vadd.f32 %v2108, %v2326
    %v2382 = vadd.f32 %v2109, %v2242
    %v2383 = vadd.f32 %v2110, %v2329
    %v2384 = vadd.f32 %v2111, %v2254
    %v2385 = vadd.f32 %v2112, %v2330
    %v2386 = vadd.f32 %v2113, %v2331
    %v2387 = vadd.f32 %v2114, %v2329
    %v2388 = vadd.f32 %v2115, %v2254
    %v2389 = vadd.f32 %v2116, %v2332
    %v2390 = vadd.f32 %v2117, %v2266
    %v2391 = vadd.f32 %v2118, %v2333
    %v2392 = vadd.f32 %v2119, %v2334
    %v2393 = vadd.f32 %v2120, %v2332
    %v2394 = vadd.f32 %v2121, %v2266
    %v2395 = vadd.f32 %v2122, %v2335
    %v2396 = vadd.f32 %v2123, %v2278
    %v2397 = vadd.f32 %v2124, %v2336
    %v2398 = vadd.f32 %v2125, %v2337
    %v2399 = vadd.f32 %v2126, %v2335
    %v2400 = vadd.f32 %v2127, %v2278
    %v2401 = vadd.f32 %v2128, %v2338
    %v2402 = vadd.f32 %v2129, %v2290
    %v2403 = vadd.f32 %v2130, %v2339
    %v2404 = vadd.f32 %v2131, %v2340
    %v2405 = vadd.f32 %v2132, %v2338
    %v2406 = vadd.f32 %v2133, %v2290
    %v2407 = vadd.f32 %v2134, %v2341
    %v2408 = vadd.f32 %v2135, %v2302
    %v2409 = vadd.f32 %v2136, %v2342
    %v2410 = vadd.f32 %v2137, %v2343
    %v2411 = vadd.f32 %v2138, %v2341
    %v2412 = vadd.f32 %v2139, %v2302
    %v2413 = vadd.f32 %v2140, %v2344
    %v2414 = vadd.f32 %v2141, %v2314
    %v2415 = vadd.f32 %v2142, %v2345
    %v2416 = vadd.f32 %v2143, %v2346
    %v2417 = vadd.f32 %v2144, %v2344
    %v2418 = vadd.f32 %v2145, %v2314
    %vm2419 = vcmp.gt.f32.partialorder %v2371, 0.0
    %vm2420 = vcmp.gt.f32.partialorder %v2372, 0.0
    %vm2421 = vcmp.gt.f32.partialorder %v2373, 0.0
    %vm2422 = vcmp.gt.f32.partialorder %v2374, 0.0
    %vm2423 = vcmp.gt.f32.partialorder %v2375, 0.0
    %vm2424 = vcmp.gt.f32.partialorder %v2376, 0.0
    %vm2425 = vcmp.gt.f32.partialorder %v2377, 0.0
    %vm2426 = vcmp.gt.f32.partialorder %v2378, 0.0
    %vm2427 = vcmp.gt.f32.partialorder %v2379, 0.0
    %vm2428 = vcmp.gt.f32.partialorder %v2380, 0.0
    %vm2429 = vcmp.gt.f32.partialorder %v2381, 0.0
    %vm2430 = vcmp.gt.f32.partialorder %v2382, 0.0
    %vm2431 = vcmp.gt.f32.partialorder %v2383, 0.0
    %vm2432 = vcmp.gt.f32.partialorder %v2384, 0.0
    %vm2433 = vcmp.gt.f32.partialorder %v2385, 0.0
    %vm2434 = vcmp.gt.f32.partialorder %v2386, 0.0
    %vm2435 = vcmp.gt.f32.partialorder %v2387, 0.0
    %vm2436 = vcmp.gt.f32.partialorder %v2388, 0.0
    %vm2437 = vcmp.gt.f32.partialorder %v2389, 0.0
    %vm2438 = vcmp.gt.f32.partialorder %v2390, 0.0
    %vm2439 = vcmp.gt.f32.partialorder %v2391, 0.0
    %vm2440 = vcmp.gt.f32.partialorder %v2392, 0.0
    %vm2441 = vcmp.gt.f32.partialorder %v2393, 0.0
    %vm2442 = vcmp.gt.f32.partialorder %v2394, 0.0
    %vm2443 = vcmp.gt.f32.partialorder %v2395, 0.0
    %vm2444 = vcmp.gt.f32.partialorder %v2396, 0.0
    %vm2445 = vcmp.gt.f32.partialorder %v2397, 0.0
    %vm2446 = vcmp.gt.f32.partialorder %v2398, 0.0
    %vm2447 = vcmp.gt.f32.partialorder %v2399, 0.0
    %vm2448 = vcmp.gt.f32.partialorder %v2400, 0.0
    %vm2449 = vcmp.gt.f32.partialorder %v2401, 0.0
    %vm2450 = vcmp.gt.f32.partialorder %v2402, 0.0
    %vm2451 = vcmp.gt.f32.partialorder %v2403, 0.0
    %vm2452 = vcmp.gt.f32.partialorder %v2404, 0.0
    %vm2453 = vcmp.gt.f32.partialorder %v2405, 0.0
    %vm2454 = vcmp.gt.f32.partialorder %v2406, 0.0
    %vm2455 = vcmp.gt.f32.partialorder %v2407, 0.0
    %vm2456 = vcmp.gt.f32.partialorder %v2408, 0.0
    %vm2457 = vcmp.gt.f32.partialorder %v2409, 0.0
    %vm2458 = vcmp.gt.f32.partialorder %v2410, 0.0
    %vm2459 = vcmp.gt.f32.partialorder %v2411, 0.0
    %vm2460 = vcmp.gt.f32.partialorder %v2412, 0.0
    %vm2461 = vcmp.gt.f32.partialorder %v2413, 0.0
    %vm2462 = vcmp.gt.f32.partialorder %v2414, 0.0
    %vm2463 = vcmp.gt.f32.partialorder %v2415, 0.0
    %vm2464 = vcmp.gt.f32.partialorder %v2416, 0.0
    %vm2465 = vcmp.gt.f32.partialorder %v2417, 0.0
    %vm2466 = vcmp.gt.f32.partialorder %v2418, 0.0
    %v2467 = vmul.f32 %v2371, 0.01
    %v2468 = vmul.f32 %v2372, 0.01
    %v2469 = vmul.f32 %v2373, 0.01
    %v2470 = vmul.f32 %v2374, 0.01
    %v2471 = vmul.f32 %v2375, 0.01
    %v2472 = vmul.f32 %v2376, 0.01
    %v2473 = vmul.f32 %v2377, 0.01
    %v2474 = vmul.f32 %v2378, 0.01
    %v2475 = vmul.f32 %v2379, 0.01
    %v2476 = vmul.f32 %v2380, 0.01
    %v2477 = vmul.f32 %v2381, 0.01
    %v2478 = vmul.f32 %v2382, 0.01
    %v2479 = vmul.f32 %v2383, 0.01
    %v2480 = vmul.f32 %v2384, 0.01
    %v2481 = vmul.f32 %v2385, 0.01
    %v2482 = vmul.f32 %v2386, 0.01
    %v2483 = vmul.f32 %v2387, 0.01
    %v2484 = vmul.f32 %v2388, 0.01
    %v2485 = vmul.f32 %v2389, 0.01
    %v2486 = vmul.f32 %v2390, 0.01
    %v2487 = vmul.f32 %v2391, 0.01
    %v2488 = vmul.f32 %v2392, 0.01
    %v2489 = vmul.f32 %v2393, 0.01
    %v2490 = vmul.f32 %v2394, 0.01
    %v2491 = vmul.f32 %v2395, 0.01
    %v2492 = vmul.f32 %v2396, 0.01
    %v2493 = vmul.f32 %v2397, 0.01
    %v2494 = vmul.f32 %v2398, 0.01
    %v2495 = vmul.f32 %v2399, 0.01
    %v2496 = vmul.f32 %v2400, 0.01
    %v2497 = vmul.f32 %v2401, 0.01
    %v2498 = vmul.f32 %v2402, 0.01
    %v2499 = vmul.f32 %v2403, 0.01
    %v2500 = vmul.f32 %v2404, 0.01
    %v2501 = vmul.f32 %v2405, 0.01
    %v2502 = vmul.f32 %v2406, 0.01
    %v2503 = vmul.f32 %v2407, 0.01
    %v2504 = vmul.f32 %v2408, 0.01
    %v2505 = vmul.f32 %v2409, 0.01
    %v2506 = vmul.f32 %v2410, 0.01
    %v2507 = vmul.f32 %v2411, 0.01
    %v2508 = vmul.f32 %v2412, 0.01
    %v2509 = vmul.f32 %v2413, 0.01
    %v2510 = vmul.f32 %v2414, 0.01
    %v2511 = vmul.f32 %v2415, 0.01
    %v2512 = vmul.f32 %v2416, 0.01
    %v2513 = vmul.f32 %v2417, 0.01
    %v2514 = vmul.f32 %v2418, 0.01
    %v2515 = vsel %vm2419, %v2371, %v2467
    %v2516 = vsel %vm2420, %v2372, %v2468
    %v2517 = vsel %vm2421, %v2373, %v2469
    %v2518 = vsel %vm2422, %v2374, %v2470
    %v2519 = vsel %vm2423, %v2375, %v2471
    %v2520 = vsel %vm2424, %v2376, %v2472
    %v2521 = vsel %vm2425, %v2377, %v2473
    %v2522 = vsel %vm2426, %v2378, %v2474
    %v2523 = vsel %vm2427, %v2379, %v2475
    %v2524 = vsel %vm2428, %v2380, %v2476
    %v2525 = vsel %vm2429, %v2381, %v2477
    %v2526 = vsel %vm2430, %v2382, %v2478
    %v2527 = vsel %vm2431, %v2383, %v2479
    %v2528 = vsel %vm2432, %v2384, %v2480
    %v2529 = vsel %vm2433, %v2385, %v2481
    %v2530 = vsel %vm2434, %v2386, %v2482
    %v2531 = vsel %vm2435, %v2387, %v2483
    %v2532 = vsel %vm2436, %v2388, %v2484
    %v2533 = vsel %vm2437, %v2389, %v2485
    %v2534 = vsel %vm2438, %v2390, %v2486
    %v2535 = vsel %vm2439, %v2391, %v2487
    %v2536 = vsel %vm2440, %v2392, %v2488
    %v2537 = vsel %vm2441, %v2393, %v2489
    %v2538 = vsel %vm2442, %v2394, %v2490
    %v2539 = vsel %vm2443, %v2395, %v2491
    %v2540 = vsel %vm2444, %v2396, %v2492
    %v2541 = vsel %vm2445, %v2397, %v2493
    %v2542 = vsel %vm2446, %v2398, %v2494
    %v2543 = vsel %vm2447, %v2399, %v2495
    %v2544 = vsel %vm2448, %v2400, %v2496
    %v2545 = vsel %vm2449, %v2401, %v2497
    %v2546 = vsel %vm2450, %v2402, %v2498
    %v2547 = vsel %vm2451, %v2403, %v2499
    %v2548 = vsel %vm2452, %v2404, %v2500
    %v2549 = vsel %vm2453, %v2405, %v2501
    %v2550 = vsel %vm2454, %v2406, %v2502
    %v2551 = vsel %vm2455, %v2407, %v2503
    %v2552 = vsel %vm2456, %v2408, %v2504
    %v2553 = vsel %vm2457, %v2409, %v2505
    %v2554 = vsel %vm2458, %v2410, %v2506
    %v2555 = vsel %vm2459, %v2411, %v2507
    %v2556 = vsel %vm2460, %v2412, %v2508
    %v2557 = vsel %vm2461, %v2413, %v2509
    %v2558 = vsel %vm2462, %v2414, %v2510
    %v2559 = vsel %vm2463, %v2415, %v2511
    %v2560 = vsel %vm2464, %v2416, %v2512
    %v2561 = vsel %vm2465, %v2417, %v2513
    %v2562 = vsel %vm2466, %v2418, %v2514
    %v2603 = vcombine.low %v2515, %v2517
    %v2604 = vcombine.high %v2515, %v2517
    %v2605 = vcombine.low %v2516, %v2518
    %v2606 = vcombine.high %v2519, %v2519
    %v2607 = vcombine.low %v2521, %v2523
    %v2608 = vcombine.high %v2521, %v2523
    %v2609 = vcombine.low %v2522, %v2524
    %v2610 = vcombine.high %v2525, %v2525
    %v2611 = vcombine.low %v2527, %v2529
    %v2612 = vcombine.high %v2527, %v2529
    %v2613 = vcombine.low %v2528, %v2530
    %v2614 = vcombine.high %v2531, %v2531
    %v2615 = vcombine.low %v2533, %v2535
    %v2616 = vcombine.high %v2533, %v2535
    %v2617 = vcombine.low %v2534, %v2536
    %v2618 = vcombine.high %v2537, %v2537
    %v2619 = vcombine.low %v2539, %v2541
    %v2620 = vcombine.high %v2539, %v2541
    %v2621 = vcombine.low %v2540, %v2542
    %v2622 = vcombine.high %v2543, %v2543
    %v2623 = vcombine.low %v2545, %v2547
    %v2624 = vcombine.high %v2545, %v2547
    %v2625 = vcombine.low %v2546, %v2548
    %v2626 = vcombine.high %v2549, %v2549
    %v2627 = vcombine.low %v2551, %v2553
    %v2628 = vcombine.high %v2551, %v2553
    %v2629 = vcombine.low %v2552, %v2554
    %v2630 = vcombine.high %v2555, %v2555
    %v2631 = vcombine.low %v2557, %v2559
    %v2632 = vcombine.high %v2557, %v2559
    %v2633 = vcombine.low %v2558, %v2560
    %v2634 = vcombine.high %v2561, %v2561
    %v2667 = vpack.c.bf16 %v2519, %v2603
    %v2668 = vpack.c.bf16 %v2606, %v2604
    %v2669 = vpack.c.bf16 %v2520, %v2605
    %v2670 = vpack.c.bf16 %v2525, %v2607
    %v2671 = vpack.c.bf16 %v2610, %v2608
    %v2672 = vpack.c.bf16 %v2526, %v2609
    %v2673 = vpack.c.bf16 %v2531, %v2611
    %v2674 = vpack.c.bf16 %v2614, %v2612
    %v2675 = vpack.c.bf16 %v2532, %v2613
    %v2676 = vpack.c.bf16 %v2537, %v2615
    %v2677 = vpack.c.bf16 %v2618, %v2616
    %v2678 = vpack.c.bf16 %v2538, %v2617
    %v2679 = vpack.c.bf16 %v2543, %v2619
    %v2680 = vpack.c.bf16 %v2622, %v2620
    %v2681 = vpack.c.bf16 %v2544, %v2621
    %v2682 = vpack.c.bf16 %v2549, %v2623
    %v2683 = vpack.c.bf16 %v2626, %v2624
    %v2684 = vpack.c.bf16 %v2550, %v2625
    %v2685 = vpack.c.bf16 %v2555, %v2627
    %v2686 = vpack.c.bf16 %v2630, %v2628
    %v2687 = vpack.c.bf16 %v2556, %v2629
    %v2688 = vpack.c.bf16 %v2561, %v2631
    %v2689 = vpack.c.bf16 %v2634, %v2632
    %v2690 = vpack.c.bf16 %v2562, %v2633
    %v2691 = vld [vmem:[#allocation4] sm:$0xff]
    %v2692 = vld [vmem:[#allocation4 + $0x8] sm:$0xff]
    %v2693 = vld [vmem:[#allocation4 + $0x10] sm:$0xff]
    %v2694 = vld [vmem:[#allocation4 + $0x18] sm:$0xff]
    %v2695 = vld [vmem:[#allocation4 + $0x20] sm:$0xff]
    %v2696 = vld [vmem:[#allocation4 + $0x28] sm:$0xff]
    %v2697 = vld [vmem:[#allocation4 + $0x30] sm:$0xff]
    %v2698 = vld [vmem:[#allocation4 + $0x38] sm:$0xff]
    %v2699 = vld [vmem:[#allocation4 + $0x40] sm:$0xff]
    %v2700 = vld [vmem:[#allocation4 + $0x48] sm:$0xff]
    %v2701 = vld [vmem:[#allocation4 + $0x50] sm:$0xff]
    %v2702 = vld [vmem:[#allocation4 + $0x58] sm:$0xff]
    %v2703 = vld [vmem:[#allocation4 + $0x60] sm:$0xff]
    %v2704 = vld [vmem:[#allocation4 + $0x68] sm:$0xff]
    %v2705 = vld [vmem:[#allocation4 + $0x70] sm:$0xff]
    %v2706 = vld [vmem:[#allocation4 + $0x78] sm:$0xff]
    %v2707 = vld [vmem:[#allocation4 + $0x80] sm:$0xff]
    %v2708 = vld [vmem:[#allocation4 + $0x88] sm:$0xff]
    %v2709 = vld [vmem:[#allocation4 + $0x90] sm:$0xff]
    %v2710 = vld [vmem:[#allocation4 + $0x98] sm:$0xff]
    %v2711 = vld [vmem:[#allocation4 + $0xa0] sm:$0xff]
    %v2712 = vld [vmem:[#allocation4 + $0xa8] sm:$0xff]
    %v2713 = vld [vmem:[#allocation4 + $0xb0] sm:$0xff]
    %v2714 = vld [vmem:[#allocation4 + $0xb8] sm:$0xff]
    %v2715 = vld [vmem:[#allocation4 + $0xc0] sm:$0xff]
    %v2716 = vld [vmem:[#allocation4 + $0xc8] sm:$0xff]
    %v2717 = vld [vmem:[#allocation4 + $0xd0] sm:$0xff]
    %v2718 = vld [vmem:[#allocation4 + $0xd8] sm:$0xff]
    %v2719 = vld [vmem:[#allocation4 + $0xe0] sm:$0xff]
    %v2720 = vld [vmem:[#allocation4 + $0xe8] sm:$0xff]
    %v2721 = vld [vmem:[#allocation4 + $0xf0] sm:$0xff]
    %v2722 = vld [vmem:[#allocation4 + $0xf8] sm:$0xff]
    %v2723 = vld [vmem:[#allocation4 + $0x100] sm:$0xff]
    %v2724 = vld [vmem:[#allocation4 + $0x108] sm:$0xff]
    %v2725 = vld [vmem:[#allocation4 + $0x110] sm:$0xff]
    %v2726 = vld [vmem:[#allocation4 + $0x118] sm:$0xff]
    %v2727 = vld [vmem:[#allocation4 + $0x120] sm:$0xff]
    %v2728 = vld [vmem:[#allocation4 + $0x128] sm:$0xff]
    %v2729 = vld [vmem:[#allocation4 + $0x130] sm:$0xff]
    %v2730 = vld [vmem:[#allocation4 + $0x138] sm:$0xff]
    %v2731 = vld [vmem:[#allocation4 + $0x140] sm:$0xff]
    %v2732 = vld [vmem:[#allocation4 + $0x148] sm:$0xff]
    %v2733 = vld [vmem:[#allocation4 + $0x150] sm:$0xff]
    %v2734 = vld [vmem:[#allocation4 + $0x158] sm:$0xff]
    %v2735 = vld [vmem:[#allocation4 + $0x160] sm:$0xff]
    %v2736 = vld [vmem:[#allocation4 + $0x168] sm:$0xff]
    %v2737 = vld [vmem:[#allocation4 + $0x170] sm:$0xff]
    %v2738 = vld [vmem:[#allocation4 + $0x178] sm:$0xff]
    %v2739 = vld [vmem:[#allocation4 + $0x180] sm:$0xff]
    %v2740 = vld [vmem:[#allocation4 + $0x188] sm:$0xff]
    %v2741 = vld [vmem:[#allocation4 + $0x190] sm:$0xff]
    %v2742 = vld [vmem:[#allocation4 + $0x198] sm:$0xff]
    %v2743 = vld [vmem:[#allocation4 + $0x1a0] sm:$0xff]
    %v2744 = vld [vmem:[#allocation4 + $0x1a8] sm:$0xff]
    %v2745 = vld [vmem:[#allocation4 + $0x1b0] sm:$0xff]
    %v2746 = vld [vmem:[#allocation4 + $0x1b8] sm:$0xff]
    %v2747 = vld [vmem:[#allocation4 + $0x1c0] sm:$0xff]
    %v2748 = vld [vmem:[#allocation4 + $0x1c8] sm:$0xff]
    %v2749 = vld [vmem:[#allocation4 + $0x1d0] sm:$0xff]
    %v2750 = vld [vmem:[#allocation4 + $0x1d8] sm:$0xff]
    %v2751 = vld [vmem:[#allocation4 + $0x1e0] sm:$0xff]
    %v2752 = vld [vmem:[#allocation4 + $0x1e8] sm:$0xff]
    %v2753 = vld [vmem:[#allocation4 + $0x1f0] sm:$0xff]
    %v2754 = vld [vmem:[#allocation4 + $0x1f8] sm:$0xff]
    %v2755 = vld [vmem:[#allocation4 + $0x200] sm:$0xff]
    %v2756 = vld [vmem:[#allocation4 + $0x208] sm:$0xff]
    %v2757 = vld [vmem:[#allocation4 + $0x210] sm:$0xff]
    %v2758 = vld [vmem:[#allocation4 + $0x218] sm:$0xff]
    %v2759 = vld [vmem:[#allocation4 + $0x220] sm:$0xff]
    %v2760 = vld [vmem:[#allocation4 + $0x228] sm:$0xff]
    %v2761 = vld [vmem:[#allocation4 + $0x230] sm:$0xff]
    %v2762 = vld [vmem:[#allocation4 + $0x238] sm:$0xff]
    %v2763 = vld [vmem:[#allocation4 + $0x240] sm:$0xff]
    %v2764 = vld [vmem:[#allocation4 + $0x248] sm:$0xff]
    %v2765 = vld [vmem:[#allocation4 + $0x250] sm:$0xff]
    %v2766 = vld [vmem:[#allocation4 + $0x258] sm:$0xff]
    %v2767 = vld [vmem:[#allocation4 + $0x260] sm:$0xff]
    %v2768 = vld [vmem:[#allocation4 + $0x268] sm:$0xff]
    %v2769 = vld [vmem:[#allocation4 + $0x270] sm:$0xff]
    %v2770 = vld [vmem:[#allocation4 + $0x278] sm:$0xff]
    %v2771 = vld [vmem:[#allocation4 + $0x280] sm:$0xff]
    %v2772 = vld [vmem:[#allocation4 + $0x288] sm:$0xff]
    %v2773 = vld [vmem:[#allocation4 + $0x290] sm:$0xff]
    %v2774 = vld [vmem:[#allocation4 + $0x298] sm:$0xff]
    %v2775 = vld [vmem:[#allocation4 + $0x2a0] sm:$0xff]
    %v2776 = vld [vmem:[#allocation4 + $0x2a8] sm:$0xff]
    %v2777 = vld [vmem:[#allocation4 + $0x2b0] sm:$0xff]
    %v2778 = vld [vmem:[#allocation4 + $0x2b8] sm:$0xff]
    %v2779 = vld [vmem:[#allocation4 + $0x2c0] sm:$0xff]
    %v2780 = vld [vmem:[#allocation4 + $0x2c8] sm:$0xff]
    %v2781 = vld [vmem:[#allocation4 + $0x2d0] sm:$0xff]
    %v2782 = vld [vmem:[#allocation4 + $0x2d8] sm:$0xff]
    %v2783 = vld [vmem:[#allocation4 + $0x2e0] sm:$0xff]
    %v2784 = vld [vmem:[#allocation4 + $0x2e8] sm:$0xff]
    %v2785 = vld [vmem:[#allocation4 + $0x2f0] sm:$0xff]
    %v2786 = vld [vmem:[#allocation4 + $0x2f8] sm:$0xff]
    %s2787 = scalar_lea.vmem [#allocation4], 768
    %v2788 = vld [vmem:[%s2787] sm:$0xff]
    %v2789 = vld [vmem:[%s2787 + $0x8] sm:$0xff]
    %v2790 = vld [vmem:[%s2787 + $0x10] sm:$0xff]
    %v2791 = vld [vmem:[%s2787 + $0x18] sm:$0xff]
    %v2792 = vld [vmem:[%s2787 + $0x20] sm:$0xff]
    %v2793 = vld [vmem:[%s2787 + $0x28] sm:$0xff]
    %v2794 = vld [vmem:[%s2787 + $0x30] sm:$0xff]
    %v2795 = vld [vmem:[%s2787 + $0x38] sm:$0xff]
    %v2796 = vld [vmem:[%s2787 + $0x40] sm:$0xff]
    %v2797 = vld [vmem:[%s2787 + $0x48] sm:$0xff]
    %v2798 = vld [vmem:[%s2787 + $0x50] sm:$0xff]
    %v2799 = vld [vmem:[%s2787 + $0x58] sm:$0xff]
    %v2800 = vld [vmem:[%s2787 + $0x60] sm:$0xff]
    %v2801 = vld [vmem:[%s2787 + $0x68] sm:$0xff]
    %v2802 = vld [vmem:[%s2787 + $0x70] sm:$0xff]
    %v2803 = vld [vmem:[%s2787 + $0x78] sm:$0xff]
    %v2804 = vld [vmem:[%s2787 + $0x80] sm:$0xff]
    %v2805 = vld [vmem:[%s2787 + $0x88] sm:$0xff]
    %v2806 = vld [vmem:[%s2787 + $0x90] sm:$0xff]
    %v2807 = vld [vmem:[%s2787 + $0x98] sm:$0xff]
    %v2808 = vld [vmem:[%s2787 + $0xa0] sm:$0xff]
    %v2809 = vld [vmem:[%s2787 + $0xa8] sm:$0xff]
    %v2810 = vld [vmem:[%s2787 + $0xb0] sm:$0xff]
    %v2811 = vld [vmem:[%s2787 + $0xb8] sm:$0xff]
    %v2812 = vld [vmem:[%s2787 + $0xc0] sm:$0xff]
    %v2813 = vld [vmem:[%s2787 + $0xc8] sm:$0xff]
    %v2814 = vld [vmem:[%s2787 + $0xd0] sm:$0xff]
    %v2815 = vld [vmem:[%s2787 + $0xd8] sm:$0xff]
    %v2816 = vld [vmem:[%s2787 + $0xe0] sm:$0xff]
    %v2817 = vld [vmem:[%s2787 + $0xe8] sm:$0xff]
    %v2818 = vld [vmem:[%s2787 + $0xf0] sm:$0xff]
    %v2819 = vld [vmem:[%s2787 + $0xf8] sm:$0xff]
    %v2820 = vld [vmem:[%s2787 + $0x100] sm:$0xff]
    %v2821 = vld [vmem:[%s2787 + $0x108] sm:$0xff]
    %v2822 = vld [vmem:[%s2787 + $0x110] sm:$0xff]
    %v2823 = vld [vmem:[%s2787 + $0x118] sm:$0xff]
    %v2824 = vld [vmem:[%s2787 + $0x120] sm:$0xff]
    %v2825 = vld [vmem:[%s2787 + $0x128] sm:$0xff]
    %v2826 = vld [vmem:[%s2787 + $0x130] sm:$0xff]
    %v2827 = vld [vmem:[%s2787 + $0x138] sm:$0xff]
    %v2828 = vld [vmem:[%s2787 + $0x140] sm:$0xff]
    %v2829 = vld [vmem:[%s2787 + $0x148] sm:$0xff]
    %v2830 = vld [vmem:[%s2787 + $0x150] sm:$0xff]
    %v2831 = vld [vmem:[%s2787 + $0x158] sm:$0xff]
    %v2832 = vld [vmem:[%s2787 + $0x160] sm:$0xff]
    %v2833 = vld [vmem:[%s2787 + $0x168] sm:$0xff]
    %v2834 = vld [vmem:[%s2787 + $0x170] sm:$0xff]
    %v2835 = vld [vmem:[%s2787 + $0x178] sm:$0xff]
    %v2836 = vld [vmem:[%s2787 + $0x180] sm:$0xff]
    %v2837 = vld [vmem:[%s2787 + $0x188] sm:$0xff]
    %v2838 = vld [vmem:[%s2787 + $0x190] sm:$0xff]
    %v2839 = vld [vmem:[%s2787 + $0x198] sm:$0xff]
    %v2840 = vld [vmem:[%s2787 + $0x1a0] sm:$0xff]
    %v2841 = vld [vmem:[%s2787 + $0x1a8] sm:$0xff]
    %v2842 = vld [vmem:[%s2787 + $0x1b0] sm:$0xff]
    %v2843 = vld [vmem:[%s2787 + $0x1b8] sm:$0xff]
    %v2844 = vld [vmem:[%s2787 + $0x1c0] sm:$0xff]
    %v2845 = vld [vmem:[%s2787 + $0x1c8] sm:$0xff]
    %v2846 = vld [vmem:[%s2787 + $0x1d0] sm:$0xff]
    %v2847 = vld [vmem:[%s2787 + $0x1d8] sm:$0xff]
    %v2848 = vld [vmem:[%s2787 + $0x1e0] sm:$0xff]
    %v2849 = vld [vmem:[%s2787 + $0x1e8] sm:$0xff]
    %v2850 = vld [vmem:[%s2787 + $0x1f0] sm:$0xff]
    %v2851 = vld [vmem:[%s2787 + $0x1f8] sm:$0xff]
    %v2852 = vld [vmem:[%s2787 + $0x200] sm:$0xff]
    %v2853 = vld [vmem:[%s2787 + $0x208] sm:$0xff]
    %v2854 = vld [vmem:[%s2787 + $0x210] sm:$0xff]
    %v2855 = vld [vmem:[%s2787 + $0x218] sm:$0xff]
    %v2856 = vld [vmem:[%s2787 + $0x220] sm:$0xff]
    %v2857 = vld [vmem:[%s2787 + $0x228] sm:$0xff]
    %v2858 = vld [vmem:[%s2787 + $0x230] sm:$0xff]
    %v2859 = vld [vmem:[%s2787 + $0x238] sm:$0xff]
    %v2860 = vld [vmem:[%s2787 + $0x240] sm:$0xff]
    %v2861 = vld [vmem:[%s2787 + $0x248] sm:$0xff]
    %v2862 = vld [vmem:[%s2787 + $0x250] sm:$0xff]
    %v2863 = vld [vmem:[%s2787 + $0x258] sm:$0xff]
    %v2864 = vld [vmem:[%s2787 + $0x260] sm:$0xff]
    %v2865 = vld [vmem:[%s2787 + $0x268] sm:$0xff]
    %v2866 = vld [vmem:[%s2787 + $0x270] sm:$0xff]
    %v2867 = vld [vmem:[%s2787 + $0x278] sm:$0xff]
    %v2868 = vld [vmem:[%s2787 + $0x280] sm:$0xff]
    %v2869 = vld [vmem:[%s2787 + $0x288] sm:$0xff]
    %v2870 = vld [vmem:[%s2787 + $0x290] sm:$0xff]
    %v2871 = vld [vmem:[%s2787 + $0x298] sm:$0xff]
    %v2872 = vld [vmem:[%s2787 + $0x2a0] sm:$0xff]
    %v2873 = vld [vmem:[%s2787 + $0x2a8] sm:$0xff]
    %v2874 = vld [vmem:[%s2787 + $0x2b0] sm:$0xff]
    %v2875 = vld [vmem:[%s2787 + $0x2b8] sm:$0xff]
    %v2876 = vld [vmem:[%s2787 + $0x2c0] sm:$0xff]
    %v2877 = vld [vmem:[%s2787 + $0x2c8] sm:$0xff]
    %v2878 = vld [vmem:[%s2787 + $0x2d0] sm:$0xff]
    %v2879 = vld [vmem:[%s2787 + $0x2d8] sm:$0xff]
    %v2880 = vld [vmem:[%s2787 + $0x2e0] sm:$0xff]
    %v2881 = vld [vmem:[%s2787 + $0x2e8] sm:$0xff]
    %v2882 = vld [vmem:[%s2787 + $0x2f0] sm:$0xff]
    %v2883 = vld [vmem:[%s2787 + $0x2f8] sm:$0xff]
    %v2908 = vunpack.c.l.b16 %v2667
    %v2909 = vunpack.c.l.b16 %v2668
    %v2910 = vunpack.c.l.b16 %v2669
    %v2911 = vunpack.c.h.b16 %v2667
    %v2912 = vunpack.c.h.b16 %v2668
    %v2913 = vunpack.c.h.b16 %v2669
    %v2914 = vunpack.c.l.b16 %v2670
    %v2915 = vunpack.c.l.b16 %v2671
    %v2916 = vunpack.c.l.b16 %v2672
    %v2917 = vunpack.c.h.b16 %v2670
    %v2918 = vunpack.c.h.b16 %v2671
    %v2919 = vunpack.c.h.b16 %v2672
    %v2920 = vunpack.c.l.b16 %v2673
    %v2921 = vunpack.c.l.b16 %v2674
    %v2922 = vunpack.c.l.b16 %v2675
    %v2923 = vunpack.c.h.b16 %v2673
    %v2924 = vunpack.c.h.b16 %v2674
    %v2925 = vunpack.c.h.b16 %v2675
    %v2926 = vunpack.c.l.b16 %v2676
    %v2927 = vunpack.c.l.b16 %v2677
    %v2928 = vunpack.c.l.b16 %v2678
    %v2929 = vunpack.c.h.b16 %v2676
    %v2930 = vunpack.c.h.b16 %v2677
    %v2931 = vunpack.c.h.b16 %v2678
    %v2932 = vunpack.c.l.b16 %v2679
    %v2933 = vunpack.c.l.b16 %v2680
    %v2934 = vunpack.c.l.b16 %v2681
    %v2935 = vunpack.c.h.b16 %v2679
    %v2936 = vunpack.c.h.b16 %v2680
    %v2937 = vunpack.c.h.b16 %v2681
    %v2938 = vunpack.c.l.b16 %v2682
    %v2939 = vunpack.c.l.b16 %v2683
    %v2940 = vunpack.c.l.b16 %v2684
    %v2941 = vunpack.c.h.b16 %v2682
    %v2942 = vunpack.c.h.b16 %v2683
    %v2943 = vunpack.c.h.b16 %v2684
    %v2944 = vunpack.c.l.b16 %v2685
    %v2945 = vunpack.c.l.b16 %v2686
    %v2946 = vunpack.c.l.b16 %v2687
    %v2947 = vunpack.c.h.b16 %v2685
    %v2948 = vunpack.c.h.b16 %v2686
    %v2949 = vunpack.c.h.b16 %v2687
    %v2950 = vunpack.c.l.b16 %v2688
    %v2951 = vunpack.c.l.b16 %v2689
    %v2952 = vunpack.c.l.b16 %v2690
    %v2953 = vunpack.c.h.b16 %v2688
    %v2954 = vunpack.c.h.b16 %v2689
    %v2955 = vunpack.c.h.b16 %v2690
    %v2956 = vpack.c.b16 %v2909, %v2908
    %v2957 = vpack.c.b16 %v2910, %v2910
    %v2958 = vpack.c.b16 %v2912, %v2911
    %v2959 = vpack.c.b16 %v2913, %v2913
    %v2960 = vpack.c.b16 %v2915, %v2914
    %v2961 = vpack.c.b16 %v2916, %v2916
    %v2962 = vpack.c.b16 %v2918, %v2917
    %v2963 = vpack.c.b16 %v2919, %v2919
    %v2964 = vpack.c.b16 %v2921, %v2920
    %v2965 = vpack.c.b16 %v2922, %v2922
    %v2966 = vpack.c.b16 %v2924, %v2923
    %v2967 = vpack.c.b16 %v2925, %v2925
    %v2968 = vpack.c.b16 %v2927, %v2926
    %v2969 = vpack.c.b16 %v2928, %v2928
    %v2970 = vpack.c.b16 %v2930, %v2929
    %v2971 = vpack.c.b16 %v2931, %v2931
    %v2972 = vpack.c.b16 %v2933, %v2932
    %v2973 = vpack.c.b16 %v2934, %v2934
    %v2974 = vpack.c.b16 %v2936, %v2935
    %v2975 = vpack.c.b16 %v2937, %v2937
    %v2976 = vpack.c.b16 %v2939, %v2938
    %v2977 = vpack.c.b16 %v2940, %v2940
    %v2978 = vpack.c.b16 %v2942, %v2941
    %v2979 = vpack.c.b16 %v2943, %v2943
    %v2980 = vpack.c.b16 %v2945, %v2944
    %v2981 = vpack.c.b16 %v2946, %v2946
    %v2982 = vpack.c.b16 %v2948, %v2947
    %v2983 = vpack.c.b16 %v2949, %v2949
    %v2984 = vpack.c.b16 %v2951, %v2950
    %v2985 = vpack.c.b16 %v2952, %v2952
    %v2986 = vpack.c.b16 %v2954, %v2953
    %v2987 = vpack.c.b16 %v2955, %v2955
    %vm2988 = vsmask.f32 3328
    %vm2989 = vsmask.f32 7440
    %vm2990 = vmor %vm2988, %vm2989
    %v2992 = vshrl.u32 %v2956, 16
    %v2994 = vrot.slane %v2992, 4
    %v2995 = vshll.u32 %v2956, 16
    %v2997 = vrot.slane %v2995, 5
    %v2998 = vor.u32 %v2994, %v2997
    %v2999 = vrot.slane %v2998, 4
    %v3001 = vshll.u32 %v2958, 16
    %v3003 = vrot.slane %v3001, 5
    %v3004 = vsel %vm2990, %v2999, %v3003
    %v3006 = vshrl.u32 %v2957, 16
    %v3008 = vrot.slane %v3006, 4
    %v3009 = vshll.u32 %v2957, 16
    %v3011 = vrot.slane %v3009, 5
    %v3012 = vor.u32 %v3008, %v3011
    %v3013 = vrot.slane %v3012, 4
    %v3015 = vshll.u32 %v2959, 16
    %v3017 = vrot.slane %v3015, 5
    %v3018 = vsel %vm2990, %v3013, %v3017
    %v3020 = vshrl.u32 %v2960, 16
    %v3022 = vrot.slane %v3020, 4
    %v3023 = vshll.u32 %v2960, 16
    %v3025 = vrot.slane %v3023, 5
    %v3026 = vor.u32 %v3022, %v3025
    %v3027 = vrot.slane %v3026, 4
    %v3029 = vshll.u32 %v2962, 16
    %v3031 = vrot.slane %v3029, 5
    %v3032 = vsel %vm2990, %v3027, %v3031
    %v3034 = vshrl.u32 %v2961, 16
    %v3036 = vrot.slane %v3034, 4
    %v3037 = vshll.u32 %v2961, 16
    %v3039 = vrot.slane %v3037, 5
    %v3040 = vor.u32 %v3036, %v3039
    %v3041 = vrot.slane %v3040, 4
    %v3043 = vshll.u32 %v2963, 16
    %v3045 = vrot.slane %v3043, 5
    %v3046 = vsel %vm2990, %v3041, %v3045
    %v3048 = vshrl.u32 %v2964, 16
    %v3050 = vrot.slane %v3048, 4
    %v3051 = vshll.u32 %v2964, 16
    %v3053 = vrot.slane %v3051, 5
    %v3054 = vor.u32 %v3050, %v3053
    %v3055 = vrot.slane %v3054, 4
    %v3057 = vshll.u32 %v2966, 16
    %v3059 = vrot.slane %v3057, 5
    %v3060 = vsel %vm2990, %v3055, %v3059
    %v3062 = vshrl.u32 %v2965, 16
    %v3064 = vrot.slane %v3062, 4
    %v3065 = vshll.u32 %v2965, 16
    %v3067 = vrot.slane %v3065, 5
    %v3068 = vor.u32 %v3064, %v3067
    %v3069 = vrot.slane %v3068, 4
    %v3071 = vshll.u32 %v2967, 16
    %v3073 = vrot.slane %v3071, 5
    %v3074 = vsel %vm2990, %v3069, %v3073
    %v3076 = vshrl.u32 %v2968, 16
    %v3078 = vrot.slane %v3076, 4
    %v3079 = vshll.u32 %v2968, 16
    %v3081 = vrot.slane %v3079, 5
    %v3082 = vor.u32 %v3078, %v3081
    %v3083 = vrot.slane %v3082, 4
    %v3085 = vshll.u32 %v2970, 16
    %v3087 = vrot.slane %v3085, 5
    %v3088 = vsel %vm2990, %v3083, %v3087
    %v3090 = vshrl.u32 %v2969, 16
    %v3092 = vrot.slane %v3090, 4
    %v3093 = vshll.u32 %v2969, 16
    %v3095 = vrot.slane %v3093, 5
    %v3096 = vor.u32 %v3092, %v3095
    %v3097 = vrot.slane %v3096, 4
    %v3099 = vshll.u32 %v2971, 16
    %v3101 = vrot.slane %v3099, 5
    %v3102 = vsel %vm2990, %v3097, %v3101
    %v3104 = vshrl.u32 %v2972, 16
    %v3106 = vrot.slane %v3104, 4
    %v3107 = vshll.u32 %v2972, 16
    %v3109 = vrot.slane %v3107, 5
    %v3110 = vor.u32 %v3106, %v3109
    %v3111 = vrot.slane %v3110, 4
    %v3113 = vshll.u32 %v2974, 16
    %v3115 = vrot.slane %v3113, 5
    %v3116 = vsel %vm2990, %v3111, %v3115
    %v3118 = vshrl.u32 %v2973, 16
    %v3120 = vrot.slane %v3118, 4
    %v3121 = vshll.u32 %v2973, 16
    %v3123 = vrot.slane %v3121, 5
    %v3124 = vor.u32 %v3120, %v3123
    %v3125 = vrot.slane %v3124, 4
    %v3127 = vshll.u32 %v2975, 16
    %v3129 = vrot.slane %v3127, 5
    %v3130 = vsel %vm2990, %v3125, %v3129
    %v3132 = vshrl.u32 %v2976, 16
    %v3134 = vrot.slane %v3132, 4
    %v3135 = vshll.u32 %v2976, 16
    %v3137 = vrot.slane %v3135, 5
    %v3138 = vor.u32 %v3134, %v3137
    %v3139 = vrot.slane %v3138, 4
    %v3141 = vshll.u32 %v2978, 16
    %v3143 = vrot.slane %v3141, 5
    %v3144 = vsel %vm2990, %v3139, %v3143
    %v3146 = vshrl.u32 %v2977, 16
    %v3148 = vrot.slane %v3146, 4
    %v3149 = vshll.u32 %v2977, 16
    %v3151 = vrot.slane %v3149, 5
    %v3152 = vor.u32 %v3148, %v3151
    %v3153 = vrot.slane %v3152, 4
    %v3155 = vshll.u32 %v2979, 16
    %v3157 = vrot.slane %v3155, 5
    %v3158 = vsel %vm2990, %v3153, %v3157
    %v3160 = vshrl.u32 %v2980, 16
    %v3162 = vrot.slane %v3160, 4
    %v3163 = vshll.u32 %v2980, 16
    %v3165 = vrot.slane %v3163, 5
    %v3166 = vor.u32 %v3162, %v3165
    %v3167 = vrot.slane %v3166, 4
    %v3169 = vshll.u32 %v2982, 16
    %v3171 = vrot.slane %v3169, 5
    %v3172 = vsel %vm2990, %v3167, %v3171
    %v3174 = vshrl.u32 %v2981, 16
    %v3176 = vrot.slane %v3174, 4
    %v3177 = vshll.u32 %v2981, 16
    %v3179 = vrot.slane %v3177, 5
    %v3180 = vor.u32 %v3176, %v3179
    %v3181 = vrot.slane %v3180, 4
    %v3183 = vshll.u32 %v2983, 16
    %v3185 = vrot.slane %v3183, 5
    %v3186 = vsel %vm2990, %v3181, %v3185
    %v3188 = vshrl.u32 %v2984, 16
    %v3190 = vrot.slane %v3188, 4
    %v3191 = vshll.u32 %v2984, 16
    %v3193 = vrot.slane %v3191, 5
    %v3194 = vor.u32 %v3190, %v3193
    %v3195 = vrot.slane %v3194, 4
    %v3197 = vshll.u32 %v2986, 16
    %v3199 = vrot.slane %v3197, 5
    %v3200 = vsel %vm2990, %v3195, %v3199
    %v3202 = vshrl.u32 %v2985, 16
    %v3204 = vrot.slane %v3202, 4
    %v3205 = vshll.u32 %v2985, 16
    %v3207 = vrot.slane %v3205, 5
    %v3208 = vor.u32 %v3204, %v3207
    %v3209 = vrot.slane %v3208, 4
    %v3211 = vshll.u32 %v2987, 16
    %v3213 = vrot.slane %v3211, 5
    %v3214 = vsel %vm2990, %v3209, %v3213
    %v3215 = vunpack.c.l.b16 %v3004
    %v3216 = vunpack.c.h.b16 %v3004
    %v3217 = vunpack.c.l.b16 %v3018
    %v3218 = vunpack.c.l.b16 %v3032
    %v3219 = vunpack.c.h.b16 %v3032
    %v3220 = vunpack.c.l.b16 %v3046
    %v3221 = vunpack.c.l.b16 %v3060
    %v3222 = vunpack.c.h.b16 %v3060
    %v3223 = vunpack.c.l.b16 %v3074
    %v3224 = vunpack.c.l.b16 %v3088
    %v3225 = vunpack.c.h.b16 %v3088
    %v3226 = vunpack.c.l.b16 %v3102
    %v3227 = vunpack.c.l.b16 %v3116
    %v3228 = vunpack.c.h.b16 %v3116
    %v3229 = vunpack.c.l.b16 %v3130
    %v3230 = vunpack.c.l.b16 %v3144
    %v3231 = vunpack.c.h.b16 %v3144
    %v3232 = vunpack.c.l.b16 %v3158
    %v3233 = vunpack.c.l.b16 %v3172
    %v3234 = vunpack.c.h.b16 %v3172
    %v3235 = vunpack.c.l.b16 %v3186
    %v3236 = vunpack.c.l.b16 %v3200
    %v3237 = vunpack.c.h.b16 %v3200
    %v3238 = vunpack.c.l.b16 %v3214
    %v3239 = vpack.c.b16 %v3218, %v3215
    %v3240 = vpack.c.b16 %v3219, %v3216
    %v3241 = vpack.c.b16 %v3220, %v3217
    %v3242 = vpack.c.b16 %v3224, %v3221
    %v3243 = vpack.c.b16 %v3225, %v3222
    %v3244 = vpack.c.b16 %v3226, %v3223
    %v3245 = vpack.c.b16 %v3230, %v3227
    %v3246 = vpack.c.b16 %v3231, %v3228
    %v3247 = vpack.c.b16 %v3232, %v3229
    %v3248 = vpack.c.b16 %v3236, %v3233
    %v3249 = vpack.c.b16 %v3237, %v3234
    %v3250 = vpack.c.b16 %v3238, %v3235
    %v3359 = vunpack.c.l.b16 %v2788
    %v3360 = vunpack.c.h.b16 %v2788
    %v3361 = vunpack.c.l.b16 %v2789
    %v3362 = vunpack.c.h.b16 %v2789
    %v3363 = vunpack.c.l.b16 %v2790
    %v3364 = vunpack.c.h.b16 %v2790
    %v3365 = vunpack.c.l.b16 %v2791
    %v3366 = vunpack.c.h.b16 %v2791
    %v3367 = vunpack.c.l.b16 %v2792
    %v3368 = vunpack.c.h.b16 %v2792
    %v3369 = vunpack.c.l.b16 %v2793
    %v3370 = vunpack.c.h.b16 %v2793
    %v3371 = vunpack.c.l.b16 %v2794
    %v3372 = vunpack.c.h.b16 %v2794
    %v3373 = vunpack.c.l.b16 %v2795
    %v3374 = vunpack.c.h.b16 %v2795
    %v3375 = vunpack.c.l.b16 %v2796
    %v3376 = vunpack.c.h.b16 %v2796
    %v3377 = vunpack.c.l.b16 %v2797
    %v3378 = vunpack.c.h.b16 %v2797
    %v3379 = vunpack.c.l.b16 %v2798
    %v3380 = vunpack.c.h.b16 %v2798
    %v3381 = vunpack.c.l.b16 %v2799
    %v3382 = vunpack.c.h.b16 %v2799
    %v3383 = vunpack.c.l.b16 %v2800
    %v3384 = vunpack.c.h.b16 %v2800
    %v3385 = vunpack.c.l.b16 %v2801
    %v3386 = vunpack.c.h.b16 %v2801
    %v3387 = vunpack.c.l.b16 %v2802
    %v3388 = vunpack.c.h.b16 %v2802
    %v3389 = vunpack.c.l.b16 %v2803
    %v3390 = vunpack.c.h.b16 %v2803
    %v3391 = vunpack.c.l.b16 %v2804
    %v3392 = vunpack.c.h.b16 %v2804
    %v3393 = vunpack.c.l.b16 %v2805
    %v3394 = vunpack.c.h.b16 %v2805
    %v3395 = vunpack.c.l.b16 %v2806
    %v3396 = vunpack.c.h.b16 %v2806
    %v3397 = vunpack.c.l.b16 %v2807
    %v3398 = vunpack.c.h.b16 %v2807
    %v3399 = vunpack.c.l.b16 %v2808
    %v3400 = vunpack.c.h.b16 %v2808
    %v3401 = vunpack.c.l.b16 %v2809
    %v3402 = vunpack.c.h.b16 %v2809
    %v3403 = vunpack.c.l.b16 %v2810
    %v3404 = vunpack.c.h.b16 %v2810
    %v3405 = vunpack.c.l.b16 %v2811
    %v3406 = vunpack.c.h.b16 %v2811
    %v3407 = vunpack.c.l.b16 %v2812
    %v3408 = vunpack.c.h.b16 %v2812
    %v3409 = vunpack.c.l.b16 %v2813
    %v3410 = vunpack.c.h.b16 %v2813
    %v3411 = vunpack.c.l.b16 %v2814
    %v3412 = vunpack.c.h.b16 %v2814
    %v3413 = vunpack.c.l.b16 %v2815
    %v3414 = vunpack.c.h.b16 %v2815
    %v3415 = vunpack.c.l.b16 %v2816
    %v3416 = vunpack.c.h.b16 %v2816
    %v3417 = vunpack.c.l.b16 %v2817
    %v3418 = vunpack.c.h.b16 %v2817
    %v3419 = vunpack.c.l.b16 %v2818
    %v3420 = vunpack.c.h.b16 %v2818
    %v3421 = vunpack.c.l.b16 %v2819
    %v3422 = vunpack.c.h.b16 %v2819
    %v3423 = vunpack.c.l.b16 %v2820
    %v3424 = vunpack.c.h.b16 %v2820
    %v3425 = vunpack.c.l.b16 %v2821
    %v3426 = vunpack.c.h.b16 %v2821
    %v3427 = vunpack.c.l.b16 %v2822
    %v3428 = vunpack.c.h.b16 %v2822
    %v3429 = vunpack.c.l.b16 %v2823
    %v3430 = vunpack.c.h.b16 %v2823
    %v3431 = vunpack.c.l.b16 %v2824
    %v3432 = vunpack.c.h.b16 %v2824
    %v3433 = vunpack.c.l.b16 %v2825
    %v3434 = vunpack.c.h.b16 %v2825
    %v3435 = vunpack.c.l.b16 %v2826
    %v3436 = vunpack.c.h.b16 %v2826
    %v3437 = vunpack.c.l.b16 %v2827
    %v3438 = vunpack.c.h.b16 %v2827
    %v3439 = vunpack.c.l.b16 %v2828
    %v3440 = vunpack.c.h.b16 %v2828
    %v3441 = vunpack.c.l.b16 %v2829
    %v3442 = vunpack.c.h.b16 %v2829
    %v3443 = vunpack.c.l.b16 %v2830
    %v3444 = vunpack.c.h.b16 %v2830
    %v3445 = vunpack.c.l.b16 %v2831
    %v3446 = vunpack.c.h.b16 %v2831
    %v3447 = vunpack.c.l.b16 %v2832
    %v3448 = vunpack.c.h.b16 %v2832
    %v3449 = vunpack.c.l.b16 %v2833
    %v3450 = vunpack.c.h.b16 %v2833
    %v3451 = vunpack.c.l.b16 %v2834
    %v3452 = vunpack.c.h.b16 %v2834
    %v3453 = vunpack.c.l.b16 %v2835
    %v3454 = vunpack.c.h.b16 %v2835
    %v3455 = vunpack.c.l.b16 %v2836
    %v3456 = vunpack.c.h.b16 %v2836
    %v3457 = vunpack.c.l.b16 %v2837
    %v3458 = vunpack.c.h.b16 %v2837
    %v3459 = vunpack.c.l.b16 %v2838
    %v3460 = vunpack.c.h.b16 %v2838
    %v3461 = vunpack.c.l.b16 %v2839
    %v3462 = vunpack.c.h.b16 %v2839
    %v3463 = vunpack.c.l.b16 %v2840
    %v3464 = vunpack.c.h.b16 %v2840
    %v3465 = vunpack.c.l.b16 %v2841
    %v3466 = vunpack.c.h.b16 %v2841
    %v3467 = vunpack.c.l.b16 %v2842
    %v3468 = vunpack.c.h.b16 %v2842
    %v3469 = vunpack.c.l.b16 %v2843
    %v3470 = vunpack.c.h.b16 %v2843
    %v3471 = vunpack.c.l.b16 %v2844
    %v3472 = vunpack.c.h.b16 %v2844
    %v3473 = vunpack.c.l.b16 %v2845
    %v3474 = vunpack.c.h.b16 %v2845
    %v3475 = vunpack.c.l.b16 %v2846
    %v3476 = vunpack.c.h.b16 %v2846
    %v3477 = vunpack.c.l.b16 %v2847
    %v3478 = vunpack.c.h.b16 %v2847
    %v3479 = vunpack.c.l.b16 %v2848
    %v3480 = vunpack.c.h.b16 %v2848
    %v3481 = vunpack.c.l.b16 %v2849
    %v3482 = vunpack.c.h.b16 %v2849
    %v3483 = vunpack.c.l.b16 %v2850
    %v3484 = vunpack.c.h.b16 %v2850
    %v3485 = vunpack.c.l.b16 %v2851
    %v3486 = vunpack.c.h.b16 %v2851
    %v3487 = vunpack.c.l.b16 %v2852
    %v3488 = vunpack.c.h.b16 %v2852
    %v3489 = vunpack.c.l.b16 %v2853
    %v3490 = vunpack.c.h.b16 %v2853
    %v3491 = vunpack.c.l.b16 %v2854
    %v3492 = vunpack.c.h.b16 %v2854
    %v3493 = vunpack.c.l.b16 %v2855
    %v3494 = vunpack.c.h.b16 %v2855
    %v3495 = vunpack.c.l.b16 %v2856
    %v3496 = vunpack.c.h.b16 %v2856
    %v3497 = vunpack.c.l.b16 %v2857
    %v3498 = vunpack.c.h.b16 %v2857
    %v3499 = vunpack.c.l.b16 %v2858
    %v3500 = vunpack.c.h.b16 %v2858
    %v3501 = vunpack.c.l.b16 %v2859
    %v3502 = vunpack.c.h.b16 %v2859
    %v3503 = vunpack.c.l.b16 %v2860
    %v3504 = vunpack.c.h.b16 %v2860
    %v3505 = vunpack.c.l.b16 %v2861
    %v3506 = vunpack.c.h.b16 %v2861
    %v3507 = vunpack.c.l.b16 %v2862
    %v3508 = vunpack.c.h.b16 %v2862
    %v3509 = vunpack.c.l.b16 %v2863
    %v3510 = vunpack.c.h.b16 %v2863
    %v3511 = vunpack.c.l.b16 %v2864
    %v3512 = vunpack.c.h.b16 %v2864
    %v3513 = vunpack.c.l.b16 %v2865
    %v3514 = vunpack.c.h.b16 %v2865
    %v3515 = vunpack.c.l.b16 %v2866
    %v3516 = vunpack.c.h.b16 %v2866
    %v3517 = vunpack.c.l.b16 %v2867
    %v3518 = vunpack.c.h.b16 %v2867
    %v3519 = vunpack.c.l.b16 %v2868
    %v3520 = vunpack.c.h.b16 %v2868
    %v3521 = vunpack.c.l.b16 %v2869
    %v3522 = vunpack.c.h.b16 %v2869
    %v3523 = vunpack.c.l.b16 %v2870
    %v3524 = vunpack.c.h.b16 %v2870
    %v3525 = vunpack.c.l.b16 %v2871
    %v3526 = vunpack.c.h.b16 %v2871
    %v3527 = vunpack.c.l.b16 %v2872
    %v3528 = vunpack.c.h.b16 %v2872
    %v3529 = vunpack.c.l.b16 %v2873
    %v3530 = vunpack.c.h.b16 %v2873
    %v3531 = vunpack.c.l.b16 %v2874
    %v3532 = vunpack.c.h.b16 %v2874
    %v3533 = vunpack.c.l.b16 %v2875
    %v3534 = vunpack.c.h.b16 %v2875
    %v3535 = vunpack.c.l.b16 %v2876
    %v3536 = vunpack.c.h.b16 %v2876
    %v3537 = vunpack.c.l.b16 %v2877
    %v3538 = vunpack.c.h.b16 %v2877
    %v3539 = vunpack.c.l.b16 %v2878
    %v3540 = vunpack.c.h.b16 %v2878
    %v3541 = vunpack.c.l.b16 %v2879
    %v3542 = vunpack.c.h.b16 %v2879
    %v3543 = vunpack.c.l.b16 %v2880
    %v3544 = vunpack.c.h.b16 %v2880
    %v3545 = vunpack.c.l.b16 %v2881
    %v3546 = vunpack.c.h.b16 %v2881
    %v3547 = vunpack.c.l.b16 %v2882
    %v3548 = vunpack.c.h.b16 %v2882
    %v3549 = vunpack.c.l.b16 %v2883
    %v3550 = vunpack.c.h.b16 %v2883
    %v3551 = vpack.c.b16 %v3363, %v3359
    %v3552 = vpack.c.b16 %v3364, %v3360
    %v3553 = vpack.c.b16 %v3365, %v3361
    %v3554 = vpack.c.b16 %v3366, %v3362
    %v3555 = vpack.c.b16 %v3371, %v3367
    %v3556 = vpack.c.b16 %v3372, %v3368
    %v3557 = vpack.c.b16 %v3373, %v3369
    %v3558 = vpack.c.b16 %v3374, %v3370
    %v3559 = vpack.c.b16 %v3379, %v3375
    %v3560 = vpack.c.b16 %v3380, %v3376
    %v3561 = vpack.c.b16 %v3381, %v3377
    %v3562 = vpack.c.b16 %v3382, %v3378
    %v3563 = vpack.c.b16 %v3387, %v3383
    %v3564 = vpack.c.b16 %v3388, %v3384
    %v3565 = vpack.c.b16 %v3389, %v3385
    %v3566 = vpack.c.b16 %v3390, %v3386
    %v3567 = vpack.c.b16 %v3395, %v3391
    %v3568 = vpack.c.b16 %v3396, %v3392
    %v3569 = vpack.c.b16 %v3397, %v3393
    %v3570 = vpack.c.b16 %v3398, %v3394
    %v3571 = vpack.c.b16 %v3403, %v3399
    %v3572 = vpack.c.b16 %v3404, %v3400
    %v3573 = vpack.c.b16 %v3405, %v3401
    %v3574 = vpack.c.b16 %v3406, %v3402
    %v3575 = vpack.c.b16 %v3411, %v3407
    %v3576 = vpack.c.b16 %v3412, %v3408
    %v3577 = vpack.c.b16 %v3413, %v3409
    %v3578 = vpack.c.b16 %v3414, %v3410
    %v3579 = vpack.c.b16 %v3419, %v3415
    %v3580 = vpack.c.b16 %v3420, %v3416
    %v3581 = vpack.c.b16 %v3421, %v3417
    %v3582 = vpack.c.b16 %v3422, %v3418
    %v3583 = vpack.c.b16 %v3427, %v3423
    %v3584 = vpack.c.b16 %v3428, %v3424
    %v3585 = vpack.c.b16 %v3429, %v3425
    %v3586 = vpack.c.b16 %v3430, %v3426
    %v3587 = vpack.c.b16 %v3435, %v3431
    %v3588 = vpack.c.b16 %v3436, %v3432
    %v3589 = vpack.c.b16 %v3437, %v3433
    %v3590 = vpack.c.b16 %v3438, %v3434
    %v3591 = vpack.c.b16 %v3443, %v3439
    %v3592 = vpack.c.b16 %v3444, %v3440
    %v3593 = vpack.c.b16 %v3445, %v3441
    %v3594 = vpack.c.b16 %v3446, %v3442
    %v3595 = vpack.c.b16 %v3451, %v3447
    %v3596 = vpack.c.b16 %v3452, %v3448
    %v3597 = vpack.c.b16 %v3453, %v3449
    %v3598 = vpack.c.b16 %v3454, %v3450
    %v3599 = vpack.c.b16 %v3459, %v3455
    %v3600 = vpack.c.b16 %v3460, %v3456
    %v3601 = vpack.c.b16 %v3461, %v3457
    %v3602 = vpack.c.b16 %v3462, %v3458
    %v3603 = vpack.c.b16 %v3467, %v3463
    %v3604 = vpack.c.b16 %v3468, %v3464
    %v3605 = vpack.c.b16 %v3469, %v3465
    %v3606 = vpack.c.b16 %v3470, %v3466
    %v3607 = vpack.c.b16 %v3475, %v3471
    %v3608 = vpack.c.b16 %v3476, %v3472
    %v3609 = vpack.c.b16 %v3477, %v3473
    %v3610 = vpack.c.b16 %v3478, %v3474
    %v3611 = vpack.c.b16 %v3483, %v3479
    %v3612 = vpack.c.b16 %v3484, %v3480
    %v3613 = vpack.c.b16 %v3485, %v3481
    %v3614 = vpack.c.b16 %v3486, %v3482
    %v3615 = vpack.c.b16 %v3491, %v3487
    %v3616 = vpack.c.b16 %v3492, %v3488
    %v3617 = vpack.c.b16 %v3493, %v3489
    %v3618 = vpack.c.b16 %v3494, %v3490
    %v3619 = vpack.c.b16 %v3499, %v3495
    %v3620 = vpack.c.b16 %v3500, %v3496
    %v3621 = vpack.c.b16 %v3501, %v3497
    %v3622 = vpack.c.b16 %v3502, %v3498
    %v3623 = vpack.c.b16 %v3507, %v3503
    %v3624 = vpack.c.b16 %v3508, %v3504
    %v3625 = vpack.c.b16 %v3509, %v3505
    %v3626 = vpack.c.b16 %v3510, %v3506
    %v3627 = vpack.c.b16 %v3515, %v3511
    %v3628 = vpack.c.b16 %v3516, %v3512
    %v3629 = vpack.c.b16 %v3517, %v3513
    %v3630 = vpack.c.b16 %v3518, %v3514
    %v3631 = vpack.c.b16 %v3523, %v3519
    %v3632 = vpack.c.b16 %v3524, %v3520
    %v3633 = vpack.c.b16 %v3525, %v3521
    %v3634 = vpack.c.b16 %v3526, %v3522
    %v3635 = vpack.c.b16 %v3531, %v3527
    %v3636 = vpack.c.b16 %v3532, %v3528
    %v3637 = vpack.c.b16 %v3533, %v3529
    %v3638 = vpack.c.b16 %v3534, %v3530
    %v3639 = vpack.c.b16 %v3539, %v3535
    %v3640 = vpack.c.b16 %v3540, %v3536
    %v3641 = vpack.c.b16 %v3541, %v3537
    %v3642 = vpack.c.b16 %v3542, %v3538
    %v3643 = vpack.c.b16 %v3547, %v3543
    %v3644 = vpack.c.b16 %v3548, %v3544
    %v3645 = vpack.c.b16 %v3549, %v3545
    %v3646 = vpack.c.b16 %v3550, %v3546
    %3743 = vmatprep.subr.bf16.mxu0 %v3580
    %3744 = vmatpush1.bf16.msra.mxu0 %v3579
    %3745 = vmatprep.subr.bf16.mxu0 %v3576
    %3746 = vmatpush1.bf16.msra.mxu0 %v3575
    %3747 = vmatprep.subr.bf16.mxu0 %v3572
    %3748 = vmatpush1.bf16.msra.mxu0 %v3571
    %3749 = vmatprep.subr.bf16.mxu0 %v3568
    %3750 = vmatpush1.bf16.msra.mxu0 %v3567
    %3751 = vmatprep.subr.bf16.mxu0 %v3564
    %3752 = vmatpush1.bf16.msra.mxu0 %v3563
    %3753 = vmatprep.subr.bf16.mxu0 %v3560
    %3754 = vmatpush1.bf16.msra.mxu0 %v3559
    %3755 = vmatprep.subr.bf16.mxu0 %v3556
    %3756 = vmatpush1.bf16.msra.mxu0 %v3555
    %3757 = vmatprep.subr.bf16.mxu0 %v3552
    %3758 = vmatpush1.bf16.msra.mxu0 %v3551
    %3759 = vmatprep.subr.bf16.mxu0 %v3612
    %3760 = vmatpush2.bf16.msra.mxu0 %v3611
    %3761 = vmatprep.subr.bf16.mxu0 %v3608
    %3762 = vmatpush2.bf16.msra.mxu0 %v3607
    %3763 = vmatprep.subr.bf16.mxu0 %v3604
    %3764 = vmatpush2.bf16.msra.mxu0 %v3603
    %3765 = vmatprep.subr.bf16.mxu0 %v3600
    %3766 = vmatpush2.bf16.msra.mxu0 %v3599
    %3767 = vmatprep.subr.bf16.mxu0 %v3596
    %3768 = vmatpush2.bf16.msra.mxu0 %v3595
    %3769 = vmatprep.subr.bf16.mxu0 %v3592
    %3770 = vmatpush2.bf16.msra.mxu0 %v3591
    %3771 = vmatprep.subr.bf16.mxu0 %v3588
    %3772 = vmatpush2.bf16.msra.mxu0 %v3587
    %3773 = vmatprep.subr.bf16.mxu0 %v3584
    %3774 = vmatpush2.bf16.msra.mxu0 %v3583
    %3775 = vmatprep.mubr.bf16.mxu0 %v3240
    %3776 = vmatmul.mubr.bf16.gmra.mxu0 %v3239
    %v3777 = vpop.f32.mrf.mxu0
    %v3778 = vadd.f32 0.0, %v3777
    %v3779 = vpop.f32.mrf.mxu0
    %v3780 = vadd.f32 0.0, %v3779
    %v3781 = vpop.f32.mrf.mxu0
    %v3782 = vadd.f32 0.0, %v3781
    %v3783 = vpop.f32.mrf.mxu0
    %v3784 = vadd.f32 0.0, %v3783
    %3785 = vmatprep.mubr.bf16.mxu0 %v3243
    %3786 = vmatmul.mubr.bf16.gmra.mxu0 %v3242
    %v3787 = vpop.f32.mrf.mxu0
    %v3788 = vadd.f32 0.0, %v3787
    %v3789 = vpop.f32.mrf.mxu0
    %v3790 = vadd.f32 0.0, %v3789
    %v3791 = vpop.f32.mrf.mxu0
    %v3792 = vadd.f32 0.0, %v3791
    %v3793 = vpop.f32.mrf.mxu0
    %v3794 = vadd.f32 0.0, %v3793
    %3795 = vmatprep.mubr.bf16.mxu0 %v3246
    %3796 = vmatmul.mubr.bf16.gmra.mxu0 %v3245
    %v3797 = vpop.f32.mrf.mxu0
    %v3798 = vadd.f32 0.0, %v3797
    %v3799 = vpop.f32.mrf.mxu0
    %v3800 = vadd.f32 0.0, %v3799
    %v3801 = vpop.f32.mrf.mxu0
    %v3802 = vadd.f32 0.0, %v3801
    %v3803 = vpop.f32.mrf.mxu0
    %v3804 = vadd.f32 0.0, %v3803
    %3805 = vmatprep.mubr.bf16.mxu0 %v3249
    %3806 = vmatmul.mubr.bf16.gmra.mxu0 %v3248
    %v3807 = vpop.f32.mrf.mxu0
    %v3808 = vadd.f32 0.0, %v3807
    %v3809 = vpop.f32.mrf.mxu0
    %v3810 = vadd.f32 0.0, %v3809
    %v3811 = vpop.f32.mrf.mxu0
    %v3812 = vadd.f32 0.0, %v3811
    %v3813 = vpop.f32.mrf.mxu0
    %v3814 = vadd.f32 0.0, %v3813
    %3815 = vdwg.mxu0
    %3816 = vmatprep.subr.bf16.mxu0 %v3644
    %3817 = vmatpush1.bf16.msra.mxu0 %v3643
    %3818 = vmatprep.subr.bf16.mxu0 %v3640
    %3819 = vmatpush1.bf16.msra.mxu0 %v3639
    %3820 = vmatprep.subr.bf16.mxu0 %v3636
    %3821 = vmatpush1.bf16.msra.mxu0 %v3635
    %3822 = vmatprep.subr.bf16.mxu0 %v3632
    %3823 = vmatpush1.bf16.msra.mxu0 %v3631
    %3824 = vmatprep.subr.bf16.mxu0 %v3628
    %3825 = vmatpush1.bf16.msra.mxu0 %v3627
    %3826 = vmatprep.subr.bf16.mxu0 %v3624
    %3827 = vmatpush1.bf16.msra.mxu0 %v3623
    %3828 = vmatprep.subr.bf16.mxu0 %v3620
    %3829 = vmatpush1.bf16.msra.mxu0 %v3619
    %3830 = vmatprep.subr.bf16.mxu0 %v3616
    %3831 = vmatpush1.bf16.msra.mxu0 %v3615
    %3832 = vmatprep.subr.bf16.mxu0 0
    %3833 = vmatpush2.bf16.msra.mxu0 0
    %3834 = vmatprep.subr.bf16.mxu0 0
    %3835 = vmatpush2.bf16.msra.mxu0 0
    %3836 = vmatprep.subr.bf16.mxu0 0
    %3837 = vmatpush2.bf16.msra.mxu0 0
    %3838 = vmatprep.subr.bf16.mxu0 0
    %3839 = vmatpush2.bf16.msra.mxu0 0
    %3840 = vmatprep.subr.bf16.mxu0 0
    %3841 = vmatpush2.bf16.msra.mxu0 0
    %3842 = vmatprep.subr.bf16.mxu0 0
    %3843 = vmatpush2.bf16.msra.mxu0 0
    %3844 = vmatprep.subr.bf16.mxu0 0
    %3845 = vmatpush2.bf16.msra.mxu0 0
    %3846 = vmatprep.subr.bf16.mxu0 0
    %3847 = vmatpush2.bf16.msra.mxu0 0
    %3848 = vmatprep.mubr.bf16.mxu0 0
    %3849 = vmatmul.mubr.bf16.gmra.mxu0 %v3241
    %v3850 = vpop.f32.mrf.mxu0
    %v3851 = vadd.f32 %v3778, %v3850
    %v3852 = vpop.f32.mrf.mxu0
    %v3853 = vadd.f32 %v3780, %v3852
    %v3854 = vpop.f32.mrf.mxu0
    %v3855 = vadd.f32 %v3782, %v3854
    %v3856 = vpop.f32.mrf.mxu0
    %v3857 = vadd.f32 %v3784, %v3856
    %3858 = vmatprep.mubr.bf16.mxu0 0
    %3859 = vmatmul.mubr.bf16.gmra.mxu0 %v3244
    %v3860 = vpop.f32.mrf.mxu0
    %v3861 = vadd.f32 %v3788, %v3860
    %v3862 = vpop.f32.mrf.mxu0
    %v3863 = vadd.f32 %v3790, %v3862
    %v3864 = vpop.f32.mrf.mxu0
    %v3865 = vadd.f32 %v3792, %v3864
    %v3866 = vpop.f32.mrf.mxu0
    %v3867 = vadd.f32 %v3794, %v3866
    %3868 = vmatprep.mubr.bf16.mxu0 0
    %3869 = vmatmul.mubr.bf16.gmra.mxu0 %v3247
    %v3870 = vpop.f32.mrf.mxu0
    %v3871 = vadd.f32 %v3798, %v3870
    %v3872 = vpop.f32.mrf.mxu0
    %v3873 = vadd.f32 %v3800, %v3872
    %v3874 = vpop.f32.mrf.mxu0
    %v3875 = vadd.f32 %v3802, %v3874
    %v3876 = vpop.f32.mrf.mxu0
    %v3877 = vadd.f32 %v3804, %v3876
    %3878 = vmatprep.mubr.bf16.mxu0 0
    %3879 = vmatmul.mubr.bf16.gmra.mxu0 %v3250
    %v3880 = vpop.f32.mrf.mxu0
    %v3881 = vadd.f32 %v3808, %v3880
    %v3882 = vpop.f32.mrf.mxu0
    %v3883 = vadd.f32 %v3810, %v3882
    %v3884 = vpop.f32.mrf.mxu0
    %v3885 = vadd.f32 %v3812, %v3884
    %v3886 = vpop.f32.mrf.mxu0
    %v3887 = vadd.f32 %v3814, %v3886
    %3888 = vdwg.mxu0
    %3889 = vmatprep.subr.bf16.mxu0 %v3582
    %3890 = vmatpush1.bf16.msra.mxu0 %v3581
    %3891 = vmatprep.subr.bf16.mxu0 %v3578
    %3892 = vmatpush1.bf16.msra.mxu0 %v3577
    %3893 = vmatprep.subr.bf16.mxu0 %v3574
    %3894 = vmatpush1.bf16.msra.mxu0 %v3573
    %3895 = vmatprep.subr.bf16.mxu0 %v3570
    %3896 = vmatpush1.bf16.msra.mxu0 %v3569
    %3897 = vmatprep.subr.bf16.mxu0 %v3566
    %3898 = vmatpush1.bf16.msra.mxu0 %v3565
    %3899 = vmatprep.subr.bf16.mxu0 %v3562
    %3900 = vmatpush1.bf16.msra.mxu0 %v3561
    %3901 = vmatprep.subr.bf16.mxu0 %v3558
    %3902 = vmatpush1.bf16.msra.mxu0 %v3557
    %3903 = vmatprep.subr.bf16.mxu0 %v3554
    %3904 = vmatpush1.bf16.msra.mxu0 %v3553
    %3905 = vmatprep.subr.bf16.mxu0 %v3614
    %3906 = vmatpush2.bf16.msra.mxu0 %v3613
    %3907 = vmatprep.subr.bf16.mxu0 %v3610
    %3908 = vmatpush2.bf16.msra.mxu0 %v3609
    %3909 = vmatprep.subr.bf16.mxu0 %v3606
    %3910 = vmatpush2.bf16.msra.mxu0 %v3605
    %3911 = vmatprep.subr.bf16.mxu0 %v3602
    %3912 = vmatpush2.bf16.msra.mxu0 %v3601
    %3913 = vmatprep.subr.bf16.mxu0 %v3598
    %3914 = vmatpush2.bf16.msra.mxu0 %v3597
    %3915 = vmatprep.subr.bf16.mxu0 %v3594
    %3916 = vmatpush2.bf16.msra.mxu0 %v3593
    %3917 = vmatprep.subr.bf16.mxu0 %v3590
    %3918 = vmatpush2.bf16.msra.mxu0 %v3589
    %3919 = vmatprep.subr.bf16.mxu0 %v3586
    %3920 = vmatpush2.bf16.msra.mxu0 %v3585
    %3921 = vmatprep.mubr.bf16.mxu0 %v3240
    %3922 = vmatmul.mubr.bf16.gmra.mxu0 %v3239
    %v3923 = vpop.f32.mrf.mxu0
    %v3924 = vadd.f32 0.0, %v3923
    %v3925 = vpop.f32.mrf.mxu0
    %v3926 = vadd.f32 0.0, %v3925
    %v3927 = vpop.f32.mrf.mxu0
    %v3928 = vadd.f32 0.0, %v3927
    %v3929 = vpop.f32.mrf.mxu0
    %v3930 = vadd.f32 0.0, %v3929
    %3931 = vmatprep.mubr.bf16.mxu0 %v3243
    %3932 = vmatmul.mubr.bf16.gmra.mxu0 %v3242
    %v3933 = vpop.f32.mrf.mxu0
    %v3934 = vadd.f32 0.0, %v3933
    %v3935 = vpop.f32.mrf.mxu0
    %v3936 = vadd.f32 0.0, %v3935
    %v3937 = vpop.f32.mrf.mxu0
    %v3938 = vadd.f32 0.0, %v3937
    %v3939 = vpop.f32.mrf.mxu0
    %v3940 = vadd.f32 0.0, %v3939
    %3941 = vmatprep.mubr.bf16.mxu0 %v3246
    %3942 = vmatmul.mubr.bf16.gmra.mxu0 %v3245
    %v3943 = vpop.f32.mrf.mxu0
    %v3944 = vadd.f32 0.0, %v3943
    %v3945 = vpop.f32.mrf.mxu0
    %v3946 = vadd.f32 0.0, %v3945
    %v3947 = vpop.f32.mrf.mxu0
    %v3948 = vadd.f32 0.0, %v3947
    %v3949 = vpop.f32.mrf.mxu0
    %v3950 = vadd.f32 0.0, %v3949
    %3951 = vmatprep.mubr.bf16.mxu0 %v3249
    %3952 = vmatmul.mubr.bf16.gmra.mxu0 %v3248
    %v3953 = vpop.f32.mrf.mxu0
    %v3954 = vadd.f32 0.0, %v3953
    %v3955 = vpop.f32.mrf.mxu0
    %v3956 = vadd.f32 0.0, %v3955
    %v3957 = vpop.f32.mrf.mxu0
    %v3958 = vadd.f32 0.0, %v3957
    %v3959 = vpop.f32.mrf.mxu0
    %v3960 = vadd.f32 0.0, %v3959
    %3961 = vdwg.mxu0
    %3962 = vmatprep.subr.bf16.mxu0 %v3646
    %3963 = vmatpush1.bf16.msra.mxu0 %v3645
    %3964 = vmatprep.subr.bf16.mxu0 %v3642
    %3965 = vmatpush1.bf16.msra.mxu0 %v3641
    %3966 = vmatprep.subr.bf16.mxu0 %v3638
    %3967 = vmatpush1.bf16.msra.mxu0 %v3637
    %3968 = vmatprep.subr.bf16.mxu0 %v3634
    %3969 = vmatpush1.bf16.msra.mxu0 %v3633
    %3970 = vmatprep.subr.bf16.mxu0 %v3630
    %3971 = vmatpush1.bf16.msra.mxu0 %v3629
    %3972 = vmatprep.subr.bf16.mxu0 %v3626
    %3973 = vmatpush1.bf16.msra.mxu0 %v3625
    %3974 = vmatprep.subr.bf16.mxu0 %v3622
    %3975 = vmatpush1.bf16.msra.mxu0 %v3621
    %3976 = vmatprep.subr.bf16.mxu0 %v3618
    %3977 = vmatpush1.bf16.msra.mxu0 %v3617
    %3978 = vmatprep.subr.bf16.mxu0 0
    %3979 = vmatpush2.bf16.msra.mxu0 0
    %3980 = vmatprep.subr.bf16.mxu0 0
    %3981 = vmatpush2.bf16.msra.mxu0 0
    %3982 = vmatprep.subr.bf16.mxu0 0
    %3983 = vmatpush2.bf16.msra.mxu0 0
    %3984 = vmatprep.subr.bf16.mxu0 0
    %3985 = vmatpush2.bf16.msra.mxu0 0
    %3986 = vmatprep.subr.bf16.mxu0 0
    %3987 = vmatpush2.bf16.msra.mxu0 0
    %3988 = vmatprep.subr.bf16.mxu0 0
    %3989 = vmatpush2.bf16.msra.mxu0 0
    %3990 = vmatprep.subr.bf16.mxu0 0
    %3991 = vmatpush2.bf16.msra.mxu0 0
    %3992 = vmatprep.subr.bf16.mxu0 0
    %3993 = vmatpush2.bf16.msra.mxu0 0
    %3994 = vmatprep.mubr.bf16.mxu0 0
    %3995 = vmatmul.mubr.bf16.gmra.mxu0 %v3241
    %v3996 = vpop.f32.mrf.mxu0
    %v3997 = vadd.f32 %v3924, %v3996
    %v3998 = vpop.f32.mrf.mxu0
    %v3999 = vadd.f32 %v3926, %v3998
    %v4000 = vpop.f32.mrf.mxu0
    %v4001 = vadd.f32 %v3928, %v4000
    %v4002 = vpop.f32.mrf.mxu0
    %v4003 = vadd.f32 %v3930, %v4002
    %4004 = vmatprep.mubr.bf16.mxu0 0
    %4005 = vmatmul.mubr.bf16.gmra.mxu0 %v3244
    %v4006 = vpop.f32.mrf.mxu0
    %v4007 = vadd.f32 %v3934, %v4006
    %v4008 = vpop.f32.mrf.mxu0
    %v4009 = vadd.f32 %v3936, %v4008
    %v4010 = vpop.f32.mrf.mxu0
    %v4011 = vadd.f32 %v3938, %v4010
    %v4012 = vpop.f32.mrf.mxu0
    %v4013 = vadd.f32 %v3940, %v4012
    %4014 = vmatprep.mubr.bf16.mxu0 0
    %4015 = vmatmul.mubr.bf16.gmra.mxu0 %v3247
    %v4016 = vpop.f32.mrf.mxu0
    %v4017 = vadd.f32 %v3944, %v4016
    %v4018 = vpop.f32.mrf.mxu0
    %v4019 = vadd.f32 %v3946, %v4018
    %v4020 = vpop.f32.mrf.mxu0
    %v4021 = vadd.f32 %v3948, %v4020
    %v4022 = vpop.f32.mrf.mxu0
    %v4023 = vadd.f32 %v3950, %v4022
    %4024 = vmatprep.mubr.bf16.mxu0 0
    %4025 = vmatmul.mubr.bf16.gmra.mxu0 %v3250
    %v4026 = vpop.f32.mrf.mxu0
    %v4027 = vadd.f32 %v3954, %v4026
    %v4028 = vpop.f32.mrf.mxu0
    %v4029 = vadd.f32 %v3956, %v4028
    %v4030 = vpop.f32.mrf.mxu0
    %v4031 = vadd.f32 %v3958, %v4030
    %v4032 = vpop.f32.mrf.mxu0
    %v4033 = vadd.f32 %v3960, %v4032
    %4034 = vdwg.mxu0
    %v4035 = vpack.c.b16 %v2914, %v2908
    %v4036 = vpack.c.b16 %v2915, %v2909
    %v4037 = vpack.c.b16 %v2916, %v2910
    %v4038 = vpack.c.b16 %v2926, %v2920
    %v4039 = vpack.c.b16 %v2927, %v2921
    %v4040 = vpack.c.b16 %v2928, %v2922
    %v4041 = vpack.c.b16 %v2938, %v2932
    %v4042 = vpack.c.b16 %v2939, %v2933
    %v4043 = vpack.c.b16 %v2940, %v2934
    %v4044 = vpack.c.b16 %v2950, %v2944
    %v4045 = vpack.c.b16 %v2951, %v2945
    %v4046 = vpack.c.b16 %v2952, %v2946
    %v4155 = vunpack.c.l.b16 %v2691
    %v4156 = vunpack.c.h.b16 %v2691
    %v4157 = vunpack.c.l.b16 %v2692
    %v4158 = vunpack.c.h.b16 %v2692
    %v4159 = vunpack.c.l.b16 %v2693
    %v4160 = vunpack.c.h.b16 %v2693
    %v4161 = vunpack.c.l.b16 %v2694
    %v4162 = vunpack.c.h.b16 %v2694
    %v4163 = vunpack.c.l.b16 %v2695
    %v4164 = vunpack.c.h.b16 %v2695
    %v4165 = vunpack.c.l.b16 %v2696
    %v4166 = vunpack.c.h.b16 %v2696
    %v4167 = vunpack.c.l.b16 %v2697
    %v4168 = vunpack.c.h.b16 %v2697
    %v4169 = vunpack.c.l.b16 %v2698
    %v4170 = vunpack.c.h.b16 %v2698
    %v4171 = vunpack.c.l.b16 %v2699
    %v4172 = vunpack.c.h.b16 %v2699
    %v4173 = vunpack.c.l.b16 %v2700
    %v4174 = vunpack.c.h.b16 %v2700
    %v4175 = vunpack.c.l.b16 %v2701
    %v4176 = vunpack.c.h.b16 %v2701
    %v4177 = vunpack.c.l.b16 %v2702
    %v4178 = vunpack.c.h.b16 %v2702
    %v4179 = vunpack.c.l.b16 %v2703
    %v4180 = vunpack.c.h.b16 %v2703
    %v4181 = vunpack.c.l.b16 %v2704
    %v4182 = vunpack.c.h.b16 %v2704
    %v4183 = vunpack.c.l.b16 %v2705
    %v4184 = vunpack.c.h.b16 %v2705
    %v4185 = vunpack.c.l.b16 %v2706
    %v4186 = vunpack.c.h.b16 %v2706
    %v4187 = vunpack.c.l.b16 %v2707
    %v4188 = vunpack.c.h.b16 %v2707
    %v4189 = vunpack.c.l.b16 %v2708
    %v4190 = vunpack.c.h.b16 %v2708
    %v4191 = vunpack.c.l.b16 %v2709
    %v4192 = vunpack.c.h.b16 %v2709
    %v4193 = vunpack.c.l.b16 %v2710
    %v4194 = vunpack.c.h.b16 %v2710
    %v4195 = vunpack.c.l.b16 %v2711
    %v4196 = vunpack.c.h.b16 %v2711
    %v4197 = vunpack.c.l.b16 %v2712
    %v4198 = vunpack.c.h.b16 %v2712
    %v4199 = vunpack.c.l.b16 %v2713
    %v4200 = vunpack.c.h.b16 %v2713
    %v4201 = vunpack.c.l.b16 %v2714
    %v4202 = vunpack.c.h.b16 %v2714
    %v4203 = vunpack.c.l.b16 %v2715
    %v4204 = vunpack.c.h.b16 %v2715
    %v4205 = vunpack.c.l.b16 %v2716
    %v4206 = vunpack.c.h.b16 %v2716
    %v4207 = vunpack.c.l.b16 %v2717
    %v4208 = vunpack.c.h.b16 %v2717
    %v4209 = vunpack.c.l.b16 %v2718
    %v4210 = vunpack.c.h.b16 %v2718
    %v4211 = vunpack.c.l.b16 %v2719
    %v4212 = vunpack.c.h.b16 %v2719
    %v4213 = vunpack.c.l.b16 %v2720
    %v4214 = vunpack.c.h.b16 %v2720
    %v4215 = vunpack.c.l.b16 %v2721
    %v4216 = vunpack.c.h.b16 %v2721
    %v4217 = vunpack.c.l.b16 %v2722
    %v4218 = vunpack.c.h.b16 %v2722
    %v4219 = vunpack.c.l.b16 %v2723
    %v4220 = vunpack.c.h.b16 %v2723
    %v4221 = vunpack.c.l.b16 %v2724
    %v4222 = vunpack.c.h.b16 %v2724
    %v4223 = vunpack.c.l.b16 %v2725
    %v4224 = vunpack.c.h.b16 %v2725
    %v4225 = vunpack.c.l.b16 %v2726
    %v4226 = vunpack.c.h.b16 %v2726
    %v4227 = vunpack.c.l.b16 %v2727
    %v4228 = vunpack.c.h.b16 %v2727
    %v4229 = vunpack.c.l.b16 %v2728
    %v4230 = vunpack.c.h.b16 %v2728
    %v4231 = vunpack.c.l.b16 %v2729
    %v4232 = vunpack.c.h.b16 %v2729
    %v4233 = vunpack.c.l.b16 %v2730
    %v4234 = vunpack.c.h.b16 %v2730
    %v4235 = vunpack.c.l.b16 %v2731
    %v4236 = vunpack.c.h.b16 %v2731
    %v4237 = vunpack.c.l.b16 %v2732
    %v4238 = vunpack.c.h.b16 %v2732
    %v4239 = vunpack.c.l.b16 %v2733
    %v4240 = vunpack.c.h.b16 %v2733
    %v4241 = vunpack.c.l.b16 %v2734
    %v4242 = vunpack.c.h.b16 %v2734
    %v4243 = vunpack.c.l.b16 %v2735
    %v4244 = vunpack.c.h.b16 %v2735
    %v4245 = vunpack.c.l.b16 %v2736
    %v4246 = vunpack.c.h.b16 %v2736
    %v4247 = vunpack.c.l.b16 %v2737
    %v4248 = vunpack.c.h.b16 %v2737
    %v4249 = vunpack.c.l.b16 %v2738
    %v4250 = vunpack.c.h.b16 %v2738
    %v4251 = vunpack.c.l.b16 %v2739
    %v4252 = vunpack.c.h.b16 %v2739
    %v4253 = vunpack.c.l.b16 %v2740
    %v4254 = vunpack.c.h.b16 %v2740
    %v4255 = vunpack.c.l.b16 %v2741
    %v4256 = vunpack.c.h.b16 %v2741
    %v4257 = vunpack.c.l.b16 %v2742
    %v4258 = vunpack.c.h.b16 %v2742
    %v4259 = vunpack.c.l.b16 %v2743
    %v4260 = vunpack.c.h.b16 %v2743
    %v4261 = vunpack.c.l.b16 %v2744
    %v4262 = vunpack.c.h.b16 %v2744
    %v4263 = vunpack.c.l.b16 %v2745
    %v4264 = vunpack.c.h.b16 %v2745
    %v4265 = vunpack.c.l.b16 %v2746
    %v4266 = vunpack.c.h.b16 %v2746
    %v4267 = vunpack.c.l.b16 %v2747
    %v4268 = vunpack.c.h.b16 %v2747
    %v4269 = vunpack.c.l.b16 %v2748
    %v4270 = vunpack.c.h.b16 %v2748
    %v4271 = vunpack.c.l.b16 %v2749
    %v4272 = vunpack.c.h.b16 %v2749
    %v4273 = vunpack.c.l.b16 %v2750
    %v4274 = vunpack.c.h.b16 %v2750
    %v4275 = vunpack.c.l.b16 %v2751
    %v4276 = vunpack.c.h.b16 %v2751
    %v4277 = vunpack.c.l.b16 %v2752
    %v4278 = vunpack.c.h.b16 %v2752
    %v4279 = vunpack.c.l.b16 %v2753
    %v4280 = vunpack.c.h.b16 %v2753
    %v4281 = vunpack.c.l.b16 %v2754
    %v4282 = vunpack.c.h.b16 %v2754
    %v4283 = vunpack.c.l.b16 %v2755
    %v4284 = vunpack.c.h.b16 %v2755
    %v4285 = vunpack.c.l.b16 %v2756
    %v4286 = vunpack.c.h.b16 %v2756
    %v4287 = vunpack.c.l.b16 %v2757
    %v4288 = vunpack.c.h.b16 %v2757
    %v4289 = vunpack.c.l.b16 %v2758
    %v4290 = vunpack.c.h.b16 %v2758
    %v4291 = vunpack.c.l.b16 %v2759
    %v4292 = vunpack.c.h.b16 %v2759
    %v4293 = vunpack.c.l.b16 %v2760
    %v4294 = vunpack.c.h.b16 %v2760
    %v4295 = vunpack.c.l.b16 %v2761
    %v4296 = vunpack.c.h.b16 %v2761
    %v4297 = vunpack.c.l.b16 %v2762
    %v4298 = vunpack.c.h.b16 %v2762
    %v4299 = vunpack.c.l.b16 %v2763
    %v4300 = vunpack.c.h.b16 %v2763
    %v4301 = vunpack.c.l.b16 %v2764
    %v4302 = vunpack.c.h.b16 %v2764
    %v4303 = vunpack.c.l.b16 %v2765
    %v4304 = vunpack.c.h.b16 %v2765
    %v4305 = vunpack.c.l.b16 %v2766
    %v4306 = vunpack.c.h.b16 %v2766
    %v4307 = vunpack.c.l.b16 %v2767
    %v4308 = vunpack.c.h.b16 %v2767
    %v4309 = vunpack.c.l.b16 %v2768
    %v4310 = vunpack.c.h.b16 %v2768
    %v4311 = vunpack.c.l.b16 %v2769
    %v4312 = vunpack.c.h.b16 %v2769
    %v4313 = vunpack.c.l.b16 %v2770
    %v4314 = vunpack.c.h.b16 %v2770
    %v4315 = vunpack.c.l.b16 %v2771
    %v4316 = vunpack.c.h.b16 %v2771
    %v4317 = vunpack.c.l.b16 %v2772
    %v4318 = vunpack.c.h.b16 %v2772
    %v4319 = vunpack.c.l.b16 %v2773
    %v4320 = vunpack.c.h.b16 %v2773
    %v4321 = vunpack.c.l.b16 %v2774
    %v4322 = vunpack.c.h.b16 %v2774
    %v4323 = vunpack.c.l.b16 %v2775
    %v4324 = vunpack.c.h.b16 %v2775
    %v4325 = vunpack.c.l.b16 %v2776
    %v4326 = vunpack.c.h.b16 %v2776
    %v4327 = vunpack.c.l.b16 %v2777
    %v4328 = vunpack.c.h.b16 %v2777
    %v4329 = vunpack.c.l.b16 %v2778
    %v4330 = vunpack.c.h.b16 %v2778
    %v4331 = vunpack.c.l.b16 %v2779
    %v4332 = vunpack.c.h.b16 %v2779
    %v4333 = vunpack.c.l.b16 %v2780
    %v4334 = vunpack.c.h.b16 %v2780
    %v4335 = vunpack.c.l.b16 %v2781
    %v4336 = vunpack.c.h.b16 %v2781
    %v4337 = vunpack.c.l.b16 %v2782
    %v4338 = vunpack.c.h.b16 %v2782
    %v4339 = vunpack.c.l.b16 %v2783
    %v4340 = vunpack.c.h.b16 %v2783
    %v4341 = vunpack.c.l.b16 %v2784
    %v4342 = vunpack.c.h.b16 %v2784
    %v4343 = vunpack.c.l.b16 %v2785
    %v4344 = vunpack.c.h.b16 %v2785
    %v4345 = vunpack.c.l.b16 %v2786
    %v4346 = vunpack.c.h.b16 %v2786
    %v4347 = vpack.c.b16 %v4159, %v4155
    %v4348 = vpack.c.b16 %v4160, %v4156
    %v4349 = vpack.c.b16 %v4161, %v4157
    %v4350 = vpack.c.b16 %v4162, %v4158
    %v4351 = vpack.c.b16 %v4167, %v4163
    %v4352 = vpack.c.b16 %v4168, %v4164
    %v4353 = vpack.c.b16 %v4169, %v4165
    %v4354 = vpack.c.b16 %v4170, %v4166
    %v4355 = vpack.c.b16 %v4175, %v4171
    %v4356 = vpack.c.b16 %v4176, %v4172
    %v4357 = vpack.c.b16 %v4177, %v4173
    %v4358 = vpack.c.b16 %v4178, %v4174
    %v4359 = vpack.c.b16 %v4183, %v4179
    %v4360 = vpack.c.b16 %v4184, %v4180
    %v4361 = vpack.c.b16 %v4185, %v4181
    %v4362 = vpack.c.b16 %v4186, %v4182
    %v4363 = vpack.c.b16 %v4191, %v4187
    %v4364 = vpack.c.b16 %v4192, %v4188
    %v4365 = vpack.c.b16 %v4193, %v4189
    %v4366 = vpack.c.b16 %v4194, %v4190
    %v4367 = vpack.c.b16 %v4199, %v4195
    %v4368 = vpack.c.b16 %v4200, %v4196
    %v4369 = vpack.c.b16 %v4201, %v4197
    %v4370 = vpack.c.b16 %v4202, %v4198
    %v4371 = vpack.c.b16 %v4207, %v4203
    %v4372 = vpack.c.b16 %v4208, %v4204
    %v4373 = vpack.c.b16 %v4209, %v4205
    %v4374 = vpack.c.b16 %v4210, %v4206
    %v4375 = vpack.c.b16 %v4215, %v4211
    %v4376 = vpack.c.b16 %v4216, %v4212
    %v4377 = vpack.c.b16 %v4217, %v4213
    %v4378 = vpack.c.b16 %v4218, %v4214
    %v4379 = vpack.c.b16 %v4223, %v4219
    %v4380 = vpack.c.b16 %v4224, %v4220
    %v4381 = vpack.c.b16 %v4225, %v4221
    %v4382 = vpack.c.b16 %v4226, %v4222
    %v4383 = vpack.c.b16 %v4231, %v4227
    %v4384 = vpack.c.b16 %v4232, %v4228
    %v4385 = vpack.c.b16 %v4233, %v4229
    %v4386 = vpack.c.b16 %v4234, %v4230
    %v4387 = vpack.c.b16 %v4239, %v4235
    %v4388 = vpack.c.b16 %v4240, %v4236
    %v4389 = vpack.c.b16 %v4241, %v4237
    %v4390 = vpack.c.b16 %v4242, %v4238
    %v4391 = vpack.c.b16 %v4247, %v4243
    %v4392 = vpack.c.b16 %v4248, %v4244
    %v4393 = vpack.c.b16 %v4249, %v4245
    %v4394 = vpack.c.b16 %v4250, %v4246
    %v4395 = vpack.c.b16 %v4255, %v4251
    %v4396 = vpack.c.b16 %v4256, %v4252
    %v4397 = vpack.c.b16 %v4257, %v4253
    %v4398 = vpack.c.b16 %v4258, %v4254
    %v4399 = vpack.c.b16 %v4263, %v4259
    %v4400 = vpack.c.b16 %v4264, %v4260
    %v4401 = vpack.c.b16 %v4265, %v4261
    %v4402 = vpack.c.b16 %v4266, %v4262
    %v4403 = vpack.c.b16 %v4271, %v4267
    %v4404 = vpack.c.b16 %v4272, %v4268
    %v4405 = vpack.c.b16 %v4273, %v4269
    %v4406 = vpack.c.b16 %v4274, %v4270
    %v4407 = vpack.c.b16 %v4279, %v4275
    %v4408 = vpack.c.b16 %v4280, %v4276
    %v4409 = vpack.c.b16 %v4281, %v4277
    %v4410 = vpack.c.b16 %v4282, %v4278
    %v4411 = vpack.c.b16 %v4287, %v4283
    %v4412 = vpack.c.b16 %v4288, %v4284
    %v4413 = vpack.c.b16 %v4289, %v4285
    %v4414 = vpack.c.b16 %v4290, %v4286
    %v4415 = vpack.c.b16 %v4295, %v4291
    %v4416 = vpack.c.b16 %v4296, %v4292
    %v4417 = vpack.c.b16 %v4297, %v4293
    %v4418 = vpack.c.b16 %v4298, %v4294
    %v4419 = vpack.c.b16 %v4303, %v4299
    %v4420 = vpack.c.b16 %v4304, %v4300
    %v4421 = vpack.c.b16 %v4305, %v4301
    %v4422 = vpack.c.b16 %v4306, %v4302
    %v4423 = vpack.c.b16 %v4311, %v4307
    %v4424 = vpack.c.b16 %v4312, %v4308
    %v4425 = vpack.c.b16 %v4313, %v4309
    %v4426 = vpack.c.b16 %v4314, %v4310
    %v4427 = vpack.c.b16 %v4319, %v4315
    %v4428 = vpack.c.b16 %v4320, %v4316
    %v4429 = vpack.c.b16 %v4321, %v4317
    %v4430 = vpack.c.b16 %v4322, %v4318
    %v4431 = vpack.c.b16 %v4327, %v4323
    %v4432 = vpack.c.b16 %v4328, %v4324
    %v4433 = vpack.c.b16 %v4329, %v4325
    %v4434 = vpack.c.b16 %v4330, %v4326
    %v4435 = vpack.c.b16 %v4335, %v4331
    %v4436 = vpack.c.b16 %v4336, %v4332
    %v4437 = vpack.c.b16 %v4337, %v4333
    %v4438 = vpack.c.b16 %v4338, %v4334
    %v4439 = vpack.c.b16 %v4343, %v4339
    %v4440 = vpack.c.b16 %v4344, %v4340
    %v4441 = vpack.c.b16 %v4345, %v4341
    %v4442 = vpack.c.b16 %v4346, %v4342
    %4539 = vmatprep.subr.bf16.mxu0 %v4376
    %4540 = vmatpush1.bf16.msra.mxu0 %v4375
    %4541 = vmatprep.subr.bf16.mxu0 %v4372
    %4542 = vmatpush1.bf16.msra.mxu0 %v4371
    %4543 = vmatprep.subr.bf16.mxu0 %v4368
    %4544 = vmatpush1.bf16.msra.mxu0 %v4367
    %4545 = vmatprep.subr.bf16.mxu0 %v4364
    %4546 = vmatpush1.bf16.msra.mxu0 %v4363
    %4547 = vmatprep.subr.bf16.mxu0 %v4360
    %4548 = vmatpush1.bf16.msra.mxu0 %v4359
    %4549 = vmatprep.subr.bf16.mxu0 %v4356
    %4550 = vmatpush1.bf16.msra.mxu0 %v4355
    %4551 = vmatprep.subr.bf16.mxu0 %v4352
    %4552 = vmatpush1.bf16.msra.mxu0 %v4351
    %4553 = vmatprep.subr.bf16.mxu0 %v4348
    %4554 = vmatpush1.bf16.msra.mxu0 %v4347
    %4555 = vmatprep.subr.bf16.mxu0 %v4408
    %4556 = vmatpush2.bf16.msra.mxu0 %v4407
    %4557 = vmatprep.subr.bf16.mxu0 %v4404
    %4558 = vmatpush2.bf16.msra.mxu0 %v4403
    %4559 = vmatprep.subr.bf16.mxu0 %v4400
    %4560 = vmatpush2.bf16.msra.mxu0 %v4399
    %4561 = vmatprep.subr.bf16.mxu0 %v4396
    %4562 = vmatpush2.bf16.msra.mxu0 %v4395
    %4563 = vmatprep.subr.bf16.mxu0 %v4392
    %4564 = vmatpush2.bf16.msra.mxu0 %v4391
    %4565 = vmatprep.subr.bf16.mxu0 %v4388
    %4566 = vmatpush2.bf16.msra.mxu0 %v4387
    %4567 = vmatprep.subr.bf16.mxu0 %v4384
    %4568 = vmatpush2.bf16.msra.mxu0 %v4383
    %4569 = vmatprep.subr.bf16.mxu0 %v4380
    %4570 = vmatpush2.bf16.msra.mxu0 %v4379
    %4571 = vmatprep.mubr.bf16.mxu0 %v4036
    %4572 = vmatmul.mubr.bf16.gmra.mxu0 %v4035
    %v4573 = vpop.f32.mrf.mxu0
    %v4574 = vadd.f32 %v3851, %v4573
    %v4575 = vpop.f32.mrf.mxu0
    %v4576 = vadd.f32 %v3853, %v4575
    %v4577 = vpop.f32.mrf.mxu0
    %v4578 = vadd.f32 %v3855, %v4577
    %v4579 = vpop.f32.mrf.mxu0
    %v4580 = vadd.f32 %v3857, %v4579
    %4581 = vmatprep.mubr.bf16.mxu0 %v4039
    %4582 = vmatmul.mubr.bf16.gmra.mxu0 %v4038
    %v4583 = vpop.f32.mrf.mxu0
    %v4584 = vadd.f32 %v3861, %v4583
    %v4585 = vpop.f32.mrf.mxu0
    %v4586 = vadd.f32 %v3863, %v4585
    %v4587 = vpop.f32.mrf.mxu0
    %v4588 = vadd.f32 %v3865, %v4587
    %v4589 = vpop.f32.mrf.mxu0
    %v4590 = vadd.f32 %v3867, %v4589
    %4591 = vmatprep.mubr.bf16.mxu0 %v4042
    %4592 = vmatmul.mubr.bf16.gmra.mxu0 %v4041
    %v4593 = vpop.f32.mrf.mxu0
    %v4594 = vadd.f32 %v3871, %v4593
    %v4595 = vpop.f32.mrf.mxu0
    %v4596 = vadd.f32 %v3873, %v4595
    %v4597 = vpop.f32.mrf.mxu0
    %v4598 = vadd.f32 %v3875, %v4597
    %v4599 = vpop.f32.mrf.mxu0
    %v4600 = vadd.f32 %v3877, %v4599
    %4601 = vmatprep.mubr.bf16.mxu0 %v4045
    %4602 = vmatmul.mubr.bf16.gmra.mxu0 %v4044
    %v4603 = vpop.f32.mrf.mxu0
    %v4604 = vadd.f32 %v3881, %v4603
    %v4605 = vpop.f32.mrf.mxu0
    %v4606 = vadd.f32 %v3883, %v4605
    %v4607 = vpop.f32.mrf.mxu0
    %v4608 = vadd.f32 %v3885, %v4607
    %v4609 = vpop.f32.mrf.mxu0
    %v4610 = vadd.f32 %v3887, %v4609
    %4611 = vdwg.mxu0
    %4612 = vmatprep.subr.bf16.mxu0 %v4440
    %4613 = vmatpush1.bf16.msra.mxu0 %v4439
    %4614 = vmatprep.subr.bf16.mxu0 %v4436
    %4615 = vmatpush1.bf16.msra.mxu0 %v4435
    %4616 = vmatprep.subr.bf16.mxu0 %v4432
    %4617 = vmatpush1.bf16.msra.mxu0 %v4431
    %4618 = vmatprep.subr.bf16.mxu0 %v4428
    %4619 = vmatpush1.bf16.msra.mxu0 %v4427
    %4620 = vmatprep.subr.bf16.mxu0 %v4424
    %4621 = vmatpush1.bf16.msra.mxu0 %v4423
    %4622 = vmatprep.subr.bf16.mxu0 %v4420
    %4623 = vmatpush1.bf16.msra.mxu0 %v4419
    %4624 = vmatprep.subr.bf16.mxu0 %v4416
    %4625 = vmatpush1.bf16.msra.mxu0 %v4415
    %4626 = vmatprep.subr.bf16.mxu0 %v4412
    %4627 = vmatpush1.bf16.msra.mxu0 %v4411
    %4628 = vmatprep.subr.bf16.mxu0 0
    %4629 = vmatpush2.bf16.msra.mxu0 0
    %4630 = vmatprep.subr.bf16.mxu0 0
    %4631 = vmatpush2.bf16.msra.mxu0 0
    %4632 = vmatprep.subr.bf16.mxu0 0
    %4633 = vmatpush2.bf16.msra.mxu0 0
    %4634 = vmatprep.subr.bf16.mxu0 0
    %4635 = vmatpush2.bf16.msra.mxu0 0
    %4636 = vmatprep.subr.bf16.mxu0 0
    %4637 = vmatpush2.bf16.msra.mxu0 0
    %4638 = vmatprep.subr.bf16.mxu0 0
    %4639 = vmatpush2.bf16.msra.mxu0 0
    %4640 = vmatprep.subr.bf16.mxu0 0
    %4641 = vmatpush2.bf16.msra.mxu0 0
    %4642 = vmatprep.subr.bf16.mxu0 0
    %4643 = vmatpush2.bf16.msra.mxu0 0
    %4644 = vmatprep.mubr.bf16.mxu0 0
    %4645 = vmatmul.mubr.bf16.gmra.mxu0 %v4037
    %v4646 = vpop.f32.mrf.mxu0
    %v4647 = vadd.f32 %v4574, %v4646
    %v4648 = vpop.f32.mrf.mxu0
    %v4649 = vadd.f32 %v4576, %v4648
    %v4650 = vpop.f32.mrf.mxu0
    %v4651 = vadd.f32 %v4578, %v4650
    %v4652 = vpop.f32.mrf.mxu0
    %v4653 = vadd.f32 %v4580, %v4652
    %4654 = vmatprep.mubr.bf16.mxu0 0
    %4655 = vmatmul.mubr.bf16.gmra.mxu0 %v4040
    %v4656 = vpop.f32.mrf.mxu0
    %v4657 = vadd.f32 %v4584, %v4656
    %v4658 = vpop.f32.mrf.mxu0
    %v4659 = vadd.f32 %v4586, %v4658
    %v4660 = vpop.f32.mrf.mxu0
    %v4661 = vadd.f32 %v4588, %v4660
    %v4662 = vpop.f32.mrf.mxu0
    %v4663 = vadd.f32 %v4590, %v4662
    %4664 = vmatprep.mubr.bf16.mxu0 0
    %4665 = vmatmul.mubr.bf16.gmra.mxu0 %v4043
    %v4666 = vpop.f32.mrf.mxu0
    %v4667 = vadd.f32 %v4594, %v4666
    %v4668 = vpop.f32.mrf.mxu0
    %v4669 = vadd.f32 %v4596, %v4668
    %v4670 = vpop.f32.mrf.mxu0
    %v4671 = vadd.f32 %v4598, %v4670
    %v4672 = vpop.f32.mrf.mxu0
    %v4673 = vadd.f32 %v4600, %v4672
    %4674 = vmatprep.mubr.bf16.mxu0 0
    %4675 = vmatmul.mubr.bf16.gmra.mxu0 %v4046
    %v4676 = vpop.f32.mrf.mxu0
    %v4677 = vadd.f32 %v4604, %v4676
    %v4678 = vpop.f32.mrf.mxu0
    %v4679 = vadd.f32 %v4606, %v4678
    %v4680 = vpop.f32.mrf.mxu0
    %v4681 = vadd.f32 %v4608, %v4680
    %v4682 = vpop.f32.mrf.mxu0
    %v4683 = vadd.f32 %v4610, %v4682
    %4684 = vdwg.mxu0
    %4685 = vmatprep.subr.bf16.mxu0 %v4378
    %4686 = vmatpush1.bf16.msra.mxu0 %v4377
    %4687 = vmatprep.subr.bf16.mxu0 %v4374
    %4688 = vmatpush1.bf16.msra.mxu0 %v4373
    %4689 = vmatprep.subr.bf16.mxu0 %v4370
    %4690 = vmatpush1.bf16.msra.mxu0 %v4369
    %4691 = vmatprep.subr.bf16.mxu0 %v4366
    %4692 = vmatpush1.bf16.msra.mxu0 %v4365
    %4693 = vmatprep.subr.bf16.mxu0 %v4362
    %4694 = vmatpush1.bf16.msra.mxu0 %v4361
    %4695 = vmatprep.subr.bf16.mxu0 %v4358
    %4696 = vmatpush1.bf16.msra.mxu0 %v4357
    %4697 = vmatprep.subr.bf16.mxu0 %v4354
    %4698 = vmatpush1.bf16.msra.mxu0 %v4353
    %4699 = vmatprep.subr.bf16.mxu0 %v4350
    %4700 = vmatpush1.bf16.msra.mxu0 %v4349
    %4701 = vmatprep.subr.bf16.mxu0 %v4410
    %4702 = vmatpush2.bf16.msra.mxu0 %v4409
    %4703 = vmatprep.subr.bf16.mxu0 %v4406
    %4704 = vmatpush2.bf16.msra.mxu0 %v4405
    %4705 = vmatprep.subr.bf16.mxu0 %v4402
    %4706 = vmatpush2.bf16.msra.mxu0 %v4401
    %4707 = vmatprep.subr.bf16.mxu0 %v4398
    %4708 = vmatpush2.bf16.msra.mxu0 %v4397
    %4709 = vmatprep.subr.bf16.mxu0 %v4394
    %4710 = vmatpush2.bf16.msra.mxu0 %v4393
    %4711 = vmatprep.subr.bf16.mxu0 %v4390
    %4712 = vmatpush2.bf16.msra.mxu0 %v4389
    %4713 = vmatprep.subr.bf16.mxu0 %v4386
    %4714 = vmatpush2.bf16.msra.mxu0 %v4385
    %4715 = vmatprep.subr.bf16.mxu0 %v4382
    %4716 = vmatpush2.bf16.msra.mxu0 %v4381
    %4717 = vmatprep.mubr.bf16.mxu0 %v4036
    %4718 = vmatmul.mubr.bf16.gmra.mxu0 %v4035
    %v4719 = vpop.f32.mrf.mxu0
    %v4720 = vadd.f32 %v3997, %v4719
    %v4721 = vpop.f32.mrf.mxu0
    %v4722 = vadd.f32 %v3999, %v4721
    %v4723 = vpop.f32.mrf.mxu0
    %v4724 = vadd.f32 %v4001, %v4723
    %v4725 = vpop.f32.mrf.mxu0
    %v4726 = vadd.f32 %v4003, %v4725
    %4727 = vmatprep.mubr.bf16.mxu0 %v4039
    %4728 = vmatmul.mubr.bf16.gmra.mxu0 %v4038
    %v4729 = vpop.f32.mrf.mxu0
    %v4730 = vadd.f32 %v4007, %v4729
    %v4731 = vpop.f32.mrf.mxu0
    %v4732 = vadd.f32 %v4009, %v4731
    %v4733 = vpop.f32.mrf.mxu0
    %v4734 = vadd.f32 %v4011, %v4733
    %v4735 = vpop.f32.mrf.mxu0
    %v4736 = vadd.f32 %v4013, %v4735
    %4737 = vmatprep.mubr.bf16.mxu0 %v4042
    %4738 = vmatmul.mubr.bf16.gmra.mxu0 %v4041
    %v4739 = vpop.f32.mrf.mxu0
    %v4740 = vadd.f32 %v4017, %v4739
    %v4741 = vpop.f32.mrf.mxu0
    %v4742 = vadd.f32 %v4019, %v4741
    %v4743 = vpop.f32.mrf.mxu0
    %v4744 = vadd.f32 %v4021, %v4743
    %v4745 = vpop.f32.mrf.mxu0
    %v4746 = vadd.f32 %v4023, %v4745
    %4747 = vmatprep.mubr.bf16.mxu0 %v4045
    %4748 = vmatmul.mubr.bf16.gmra.mxu0 %v4044
    %v4749 = vpop.f32.mrf.mxu0
    %v4750 = vadd.f32 %v4027, %v4749
    %v4751 = vpop.f32.mrf.mxu0
    %v4752 = vadd.f32 %v4029, %v4751
    %v4753 = vpop.f32.mrf.mxu0
    %v4754 = vadd.f32 %v4031, %v4753
    %v4755 = vpop.f32.mrf.mxu0
    %v4756 = vadd.f32 %v4033, %v4755
    %4757 = vdwg.mxu0
    %4758 = vmatprep.subr.bf16.mxu0 %v4442
    %4759 = vmatpush1.bf16.msra.mxu0 %v4441
    %4760 = vmatprep.subr.bf16.mxu0 %v4438
    %4761 = vmatpush1.bf16.msra.mxu0 %v4437
    %4762 = vmatprep.subr.bf16.mxu0 %v4434
    %4763 = vmatpush1.bf16.msra.mxu0 %v4433
    %4764 = vmatprep.subr.bf16.mxu0 %v4430
    %4765 = vmatpush1.bf16.msra.mxu0 %v4429
    %4766 = vmatprep.subr.bf16.mxu0 %v4426
    %4767 = vmatpush1.bf16.msra.mxu0 %v4425
    %4768 = vmatprep.subr.bf16.mxu0 %v4422
    %4769 = vmatpush1.bf16.msra.mxu0 %v4421
    %4770 = vmatprep.subr.bf16.mxu0 %v4418
    %4771 = vmatpush1.bf16.msra.mxu0 %v4417
    %4772 = vmatprep.subr.bf16.mxu0 %v4414
    %4773 = vmatpush1.bf16.msra.mxu0 %v4413
    %4774 = vmatprep.subr.bf16.mxu0 0
    %4775 = vmatpush2.bf16.msra.mxu0 0
    %4776 = vmatprep.subr.bf16.mxu0 0
    %4777 = vmatpush2.bf16.msra.mxu0 0
    %4778 = vmatprep.subr.bf16.mxu0 0
    %4779 = vmatpush2.bf16.msra.mxu0 0
    %4780 = vmatprep.subr.bf16.mxu0 0
    %4781 = vmatpush2.bf16.msra.mxu0 0
    %4782 = vmatprep.subr.bf16.mxu0 0
    %4783 = vmatpush2.bf16.msra.mxu0 0
    %4784 = vmatprep.subr.bf16.mxu0 0
    %4785 = vmatpush2.bf16.msra.mxu0 0
    %4786 = vmatprep.subr.bf16.mxu0 0
    %4787 = vmatpush2.bf16.msra.mxu0 0
    %4788 = vmatprep.subr.bf16.mxu0 0
    %4789 = vmatpush2.bf16.msra.mxu0 0
    %4790 = vmatprep.mubr.bf16.mxu0 0
    %4791 = vmatmul.mubr.bf16.gmra.mxu0 %v4037
    %v4792 = vpop.f32.mrf.mxu0
    %v4793 = vadd.f32 %v4720, %v4792
    %v4794 = vpop.f32.mrf.mxu0
    %v4795 = vadd.f32 %v4722, %v4794
    %v4796 = vpop.f32.mrf.mxu0
    %v4797 = vadd.f32 %v4724, %v4796
    %v4798 = vpop.f32.mrf.mxu0
    %v4799 = vadd.f32 %v4726, %v4798
    %4800 = vmatprep.mubr.bf16.mxu0 0
    %4801 = vmatmul.mubr.bf16.gmra.mxu0 %v4040
    %v4802 = vpop.f32.mrf.mxu0
    %v4803 = vadd.f32 %v4730, %v4802
    %v4804 = vpop.f32.mrf.mxu0
    %v4805 = vadd.f32 %v4732, %v4804
    %v4806 = vpop.f32.mrf.mxu0
    %v4807 = vadd.f32 %v4734, %v4806
    %v4808 = vpop.f32.mrf.mxu0
    %v4809 = vadd.f32 %v4736, %v4808
    %4810 = vmatprep.mubr.bf16.mxu0 0
    %4811 = vmatmul.mubr.bf16.gmra.mxu0 %v4043
    %v4812 = vpop.f32.mrf.mxu0
    %v4813 = vadd.f32 %v4740, %v4812
    %v4814 = vpop.f32.mrf.mxu0
    %v4815 = vadd.f32 %v4742, %v4814
    %v4816 = vpop.f32.mrf.mxu0
    %v4817 = vadd.f32 %v4744, %v4816
    %v4818 = vpop.f32.mrf.mxu0
    %v4819 = vadd.f32 %v4746, %v4818
    %4820 = vmatprep.mubr.bf16.mxu0 0
    %4821 = vmatmul.mubr.bf16.gmra.mxu0 %v4046
    %v4822 = vpop.f32.mrf.mxu0
    %v4823 = vadd.f32 %v4750, %v4822
    %v4824 = vpop.f32.mrf.mxu0
    %v4825 = vadd.f32 %v4752, %v4824
    %v4826 = vpop.f32.mrf.mxu0
    %v4827 = vadd.f32 %v4754, %v4826
    %v4828 = vpop.f32.mrf.mxu0
    %v4829 = vadd.f32 %v4756, %v4828
    %4830 = vdwg.mxu0
    %s4831 = scalar_lea.vmem [#allocation4], 1536
    %v4832 = vld [vmem:[%s4831] sm:$0xff]
    %v4833 = vld [vmem:[%s4831 + $0x8] sm:$0xff]
    %v4834 = vld [vmem:[%s4831 + $0x10] sm:$0xff]
    %v4835 = vld [vmem:[%s4831 + $0x18] sm:$0xff]
    %v4836 = vld [vmem:[%s4831 + $0x20] sm:$0xff]
    %v4837 = vld [vmem:[%s4831 + $0x28] sm:$0xff]
    %v4838 = vld [vmem:[%s4831 + $0x30] sm:$0xff]
    %v4839 = vld [vmem:[%s4831 + $0x38] sm:$0xff]
    %v4840 = vld [vmem:[%s4831 + $0x40] sm:$0xff]
    %v4841 = vld [vmem:[%s4831 + $0x48] sm:$0xff]
    %v4842 = vld [vmem:[%s4831 + $0x50] sm:$0xff]
    %v4843 = vld [vmem:[%s4831 + $0x58] sm:$0xff]
    %v4844 = vld [vmem:[%s4831 + $0x60] sm:$0xff]
    %v4845 = vld [vmem:[%s4831 + $0x68] sm:$0xff]
    %v4846 = vld [vmem:[%s4831 + $0x70] sm:$0xff]
    %v4847 = vld [vmem:[%s4831 + $0x78] sm:$0xff]
    %v4848 = vld [vmem:[%s4831 + $0x80] sm:$0xff]
    %v4849 = vld [vmem:[%s4831 + $0x88] sm:$0xff]
    %v4850 = vld [vmem:[%s4831 + $0x90] sm:$0xff]
    %v4851 = vld [vmem:[%s4831 + $0x98] sm:$0xff]
    %v4852 = vld [vmem:[%s4831 + $0xa0] sm:$0xff]
    %v4853 = vld [vmem:[%s4831 + $0xa8] sm:$0xff]
    %v4854 = vld [vmem:[%s4831 + $0xb0] sm:$0xff]
    %v4855 = vld [vmem:[%s4831 + $0xb8] sm:$0xff]
    %v4856 = vld [vmem:[%s4831 + $0xc0] sm:$0xff]
    %v4857 = vld [vmem:[%s4831 + $0xc8] sm:$0xff]
    %v4858 = vld [vmem:[%s4831 + $0xd0] sm:$0xff]
    %v4859 = vld [vmem:[%s4831 + $0xd8] sm:$0xff]
    %v4860 = vld [vmem:[%s4831 + $0xe0] sm:$0xff]
    %v4861 = vld [vmem:[%s4831 + $0xe8] sm:$0xff]
    %v4862 = vld [vmem:[%s4831 + $0xf0] sm:$0xff]
    %v4863 = vld [vmem:[%s4831 + $0xf8] sm:$0xff]
    %v4864 = vld [vmem:[%s4831 + $0x100] sm:$0xff]
    %v4865 = vld [vmem:[%s4831 + $0x108] sm:$0xff]
    %v4866 = vld [vmem:[%s4831 + $0x110] sm:$0xff]
    %v4867 = vld [vmem:[%s4831 + $0x118] sm:$0xff]
    %v4868 = vld [vmem:[%s4831 + $0x120] sm:$0xff]
    %v4869 = vld [vmem:[%s4831 + $0x128] sm:$0xff]
    %v4870 = vld [vmem:[%s4831 + $0x130] sm:$0xff]
    %v4871 = vld [vmem:[%s4831 + $0x138] sm:$0xff]
    %v4872 = vld [vmem:[%s4831 + $0x140] sm:$0xff]
    %v4873 = vld [vmem:[%s4831 + $0x148] sm:$0xff]
    %v4874 = vld [vmem:[%s4831 + $0x150] sm:$0xff]
    %v4875 = vld [vmem:[%s4831 + $0x158] sm:$0xff]
    %v4876 = vld [vmem:[%s4831 + $0x160] sm:$0xff]
    %v4877 = vld [vmem:[%s4831 + $0x168] sm:$0xff]
    %v4878 = vld [vmem:[%s4831 + $0x170] sm:$0xff]
    %v4879 = vld [vmem:[%s4831 + $0x178] sm:$0xff]
    %v4880 = vld [vmem:[%s4831 + $0x180] sm:$0xff]
    %v4881 = vld [vmem:[%s4831 + $0x188] sm:$0xff]
    %v4882 = vld [vmem:[%s4831 + $0x190] sm:$0xff]
    %v4883 = vld [vmem:[%s4831 + $0x198] sm:$0xff]
    %v4884 = vld [vmem:[%s4831 + $0x1a0] sm:$0xff]
    %v4885 = vld [vmem:[%s4831 + $0x1a8] sm:$0xff]
    %v4886 = vld [vmem:[%s4831 + $0x1b0] sm:$0xff]
    %v4887 = vld [vmem:[%s4831 + $0x1b8] sm:$0xff]
    %v4888 = vld [vmem:[%s4831 + $0x1c0] sm:$0xff]
    %v4889 = vld [vmem:[%s4831 + $0x1c8] sm:$0xff]
    %v4890 = vld [vmem:[%s4831 + $0x1d0] sm:$0xff]
    %v4891 = vld [vmem:[%s4831 + $0x1d8] sm:$0xff]
    %v4892 = vld [vmem:[%s4831 + $0x1e0] sm:$0xff]
    %v4893 = vld [vmem:[%s4831 + $0x1e8] sm:$0xff]
    %v4894 = vld [vmem:[%s4831 + $0x1f0] sm:$0xff]
    %v4895 = vld [vmem:[%s4831 + $0x1f8] sm:$0xff]
    %v4896 = vld [vmem:[%s4831 + $0x200] sm:$0xff]
    %v4897 = vld [vmem:[%s4831 + $0x208] sm:$0xff]
    %v4898 = vld [vmem:[%s4831 + $0x210] sm:$0xff]
    %v4899 = vld [vmem:[%s4831 + $0x218] sm:$0xff]
    %v4900 = vld [vmem:[%s4831 + $0x220] sm:$0xff]
    %v4901 = vld [vmem:[%s4831 + $0x228] sm:$0xff]
    %v4902 = vld [vmem:[%s4831 + $0x230] sm:$0xff]
    %v4903 = vld [vmem:[%s4831 + $0x238] sm:$0xff]
    %v4904 = vld [vmem:[%s4831 + $0x240] sm:$0xff]
    %v4905 = vld [vmem:[%s4831 + $0x248] sm:$0xff]
    %v4906 = vld [vmem:[%s4831 + $0x250] sm:$0xff]
    %v4907 = vld [vmem:[%s4831 + $0x258] sm:$0xff]
    %v4908 = vld [vmem:[%s4831 + $0x260] sm:$0xff]
    %v4909 = vld [vmem:[%s4831 + $0x268] sm:$0xff]
    %v4910 = vld [vmem:[%s4831 + $0x270] sm:$0xff]
    %v4911 = vld [vmem:[%s4831 + $0x278] sm:$0xff]
    %v4912 = vld [vmem:[%s4831 + $0x280] sm:$0xff]
    %v4913 = vld [vmem:[%s4831 + $0x288] sm:$0xff]
    %v4914 = vld [vmem:[%s4831 + $0x290] sm:$0xff]
    %v4915 = vld [vmem:[%s4831 + $0x298] sm:$0xff]
    %v4916 = vld [vmem:[%s4831 + $0x2a0] sm:$0xff]
    %v4917 = vld [vmem:[%s4831 + $0x2a8] sm:$0xff]
    %v4918 = vld [vmem:[%s4831 + $0x2b0] sm:$0xff]
    %v4919 = vld [vmem:[%s4831 + $0x2b8] sm:$0xff]
    %v4920 = vld [vmem:[%s4831 + $0x2c0] sm:$0xff]
    %v4921 = vld [vmem:[%s4831 + $0x2c8] sm:$0xff]
    %v4922 = vld [vmem:[%s4831 + $0x2d0] sm:$0xff]
    %v4923 = vld [vmem:[%s4831 + $0x2d8] sm:$0xff]
    %v4924 = vld [vmem:[%s4831 + $0x2e0] sm:$0xff]
    %v4925 = vld [vmem:[%s4831 + $0x2e8] sm:$0xff]
    %v4926 = vld [vmem:[%s4831 + $0x2f0] sm:$0xff]
    %v4927 = vld [vmem:[%s4831 + $0x2f8] sm:$0xff]
    %vm4928 = vcmask 1042432
    %vm4929 = vcmask 1046532
    %vm4930 = vmor %vm4928, %vm4929
    %v4931 = vrot.slane %v2956, 5
    %v4932 = vrot.slane %v4931, 4
    %v4933 = vrot.slane %v2958, 5
    %v4934 = vsel %vm4930, %v4932, %v4933
    %v4935 = vrot.slane %v2957, 5
    %v4936 = vrot.slane %v4935, 4
    %v4937 = vrot.slane %v2959, 5
    %v4938 = vsel %vm4930, %v4936, %v4937
    %v4939 = vrot.slane %v2960, 5
    %v4940 = vrot.slane %v4939, 4
    %v4941 = vrot.slane %v2962, 5
    %v4942 = vsel %vm4930, %v4940, %v4941
    %v4943 = vrot.slane %v2961, 5
    %v4944 = vrot.slane %v4943, 4
    %v4945 = vrot.slane %v2963, 5
    %v4946 = vsel %vm4930, %v4944, %v4945
    %v4947 = vrot.slane %v2964, 5
    %v4948 = vrot.slane %v4947, 4
    %v4949 = vrot.slane %v2966, 5
    %v4950 = vsel %vm4930, %v4948, %v4949
    %v4951 = vrot.slane %v2965, 5
    %v4952 = vrot.slane %v4951, 4
    %v4953 = vrot.slane %v2967, 5
    %v4954 = vsel %vm4930, %v4952, %v4953
    %v4955 = vrot.slane %v2968, 5
    %v4956 = vrot.slane %v4955, 4
    %v4957 = vrot.slane %v2970, 5
    %v4958 = vsel %vm4930, %v4956, %v4957
    %v4959 = vrot.slane %v2969, 5
    %v4960 = vrot.slane %v4959, 4
    %v4961 = vrot.slane %v2971, 5
    %v4962 = vsel %vm4930, %v4960, %v4961
    %v4963 = vrot.slane %v2972, 5
    %v4964 = vrot.slane %v4963, 4
    %v4965 = vrot.slane %v2974, 5
    %v4966 = vsel %vm4930, %v4964, %v4965
    %v4967 = vrot.slane %v2973, 5
    %v4968 = vrot.slane %v4967, 4
    %v4969 = vrot.slane %v2975, 5
    %v4970 = vsel %vm4930, %v4968, %v4969
    %v4971 = vrot.slane %v2976, 5
    %v4972 = vrot.slane %v4971, 4
    %v4973 = vrot.slane %v2978, 5
    %v4974 = vsel %vm4930, %v4972, %v4973
    %v4975 = vrot.slane %v2977, 5
    %v4976 = vrot.slane %v4975, 4
    %v4977 = vrot.slane %v2979, 5
    %v4978 = vsel %vm4930, %v4976, %v4977
    %v4979 = vrot.slane %v2980, 5
    %v4980 = vrot.slane %v4979, 4
    %v4981 = vrot.slane %v2982, 5
    %v4982 = vsel %vm4930, %v4980, %v4981
    %v4983 = vrot.slane %v2981, 5
    %v4984 = vrot.slane %v4983, 4
    %v4985 = vrot.slane %v2983, 5
    %v4986 = vsel %vm4930, %v4984, %v4985
    %v4987 = vrot.slane %v2984, 5
    %v4988 = vrot.slane %v4987, 4
    %v4989 = vrot.slane %v2986, 5
    %v4990 = vsel %vm4930, %v4988, %v4989
    %v4991 = vrot.slane %v2985, 5
    %v4992 = vrot.slane %v4991, 4
    %v4993 = vrot.slane %v2987, 5
    %v4994 = vsel %vm4930, %v4992, %v4993
    %v4995 = vunpack.c.l.b16 %v4934
    %v4996 = vunpack.c.h.b16 %v4934
    %v4997 = vunpack.c.l.b16 %v4938
    %v4998 = vunpack.c.l.b16 %v4942
    %v4999 = vunpack.c.h.b16 %v4942
    %v5000 = vunpack.c.l.b16 %v4946
    %v5001 = vunpack.c.l.b16 %v4950
    %v5002 = vunpack.c.h.b16 %v4950
    %v5003 = vunpack.c.l.b16 %v4954
    %v5004 = vunpack.c.l.b16 %v4958
    %v5005 = vunpack.c.h.b16 %v4958
    %v5006 = vunpack.c.l.b16 %v4962
    %v5007 = vunpack.c.l.b16 %v4966
    %v5008 = vunpack.c.h.b16 %v4966
    %v5009 = vunpack.c.l.b16 %v4970
    %v5010 = vunpack.c.l.b16 %v4974
    %v5011 = vunpack.c.h.b16 %v4974
    %v5012 = vunpack.c.l.b16 %v4978
    %v5013 = vunpack.c.l.b16 %v4982
    %v5014 = vunpack.c.h.b16 %v4982
    %v5015 = vunpack.c.l.b16 %v4986
    %v5016 = vunpack.c.l.b16 %v4990
    %v5017 = vunpack.c.h.b16 %v4990
    %v5018 = vunpack.c.l.b16 %v4994
    %v5019 = vpack.c.b16 %v4998, %v4995
    %v5020 = vpack.c.b16 %v4999, %v4996
    %v5021 = vpack.c.b16 %v5000, %v4997
    %v5022 = vpack.c.b16 %v5004, %v5001
    %v5023 = vpack.c.b16 %v5005, %v5002
    %v5024 = vpack.c.b16 %v5006, %v5003
    %v5025 = vpack.c.b16 %v5010, %v5007
    %v5026 = vpack.c.b16 %v5011, %v5008
    %v5027 = vpack.c.b16 %v5012, %v5009
    %v5028 = vpack.c.b16 %v5016, %v5013
    %v5029 = vpack.c.b16 %v5017, %v5014
    %v5030 = vpack.c.b16 %v5018, %v5015
    %v5139 = vunpack.c.l.b16 %v4832
    %v5140 = vunpack.c.h.b16 %v4832
    %v5141 = vunpack.c.l.b16 %v4833
    %v5142 = vunpack.c.h.b16 %v4833
    %v5143 = vunpack.c.l.b16 %v4834
    %v5144 = vunpack.c.h.b16 %v4834
    %v5145 = vunpack.c.l.b16 %v4835
    %v5146 = vunpack.c.h.b16 %v4835
    %v5147 = vunpack.c.l.b16 %v4836
    %v5148 = vunpack.c.h.b16 %v4836
    %v5149 = vunpack.c.l.b16 %v4837
    %v5150 = vunpack.c.h.b16 %v4837
    %v5151 = vunpack.c.l.b16 %v4838
    %v5152 = vunpack.c.h.b16 %v4838
    %v5153 = vunpack.c.l.b16 %v4839
    %v5154 = vunpack.c.h.b16 %v4839
    %v5155 = vunpack.c.l.b16 %v4840
    %v5156 = vunpack.c.h.b16 %v4840
    %v5157 = vunpack.c.l.b16 %v4841
    %v5158 = vunpack.c.h.b16 %v4841
    %v5159 = vunpack.c.l.b16 %v4842
    %v5160 = vunpack.c.h.b16 %v4842
    %v5161 = vunpack.c.l.b16 %v4843
    %v5162 = vunpack.c.h.b16 %v4843
    %v5163 = vunpack.c.l.b16 %v4844
    %v5164 = vunpack.c.h.b16 %v4844
    %v5165 = vunpack.c.l.b16 %v4845
    %v5166 = vunpack.c.h.b16 %v4845
    %v5167 = vunpack.c.l.b16 %v4846
    %v5168 = vunpack.c.h.b16 %v4846
    %v5169 = vunpack.c.l.b16 %v4847
    %v5170 = vunpack.c.h.b16 %v4847
    %v5171 = vunpack.c.l.b16 %v4848
    %v5172 = vunpack.c.h.b16 %v4848
    %v5173 = vunpack.c.l.b16 %v4849
    %v5174 = vunpack.c.h.b16 %v4849
    %v5175 = vunpack.c.l.b16 %v4850
    %v5176 = vunpack.c.h.b16 %v4850
    %v5177 = vunpack.c.l.b16 %v4851
    %v5178 = vunpack.c.h.b16 %v4851
    %v5179 = vunpack.c.l.b16 %v4852
    %v5180 = vunpack.c.h.b16 %v4852
    %v5181 = vunpack.c.l.b16 %v4853
    %v5182 = vunpack.c.h.b16 %v4853
    %v5183 = vunpack.c.l.b16 %v4854
    %v5184 = vunpack.c.h.b16 %v4854
    %v5185 = vunpack.c.l.b16 %v4855
    %v5186 = vunpack.c.h.b16 %v4855
    %v5187 = vunpack.c.l.b16 %v4856
    %v5188 = vunpack.c.h.b16 %v4856
    %v5189 = vunpack.c.l.b16 %v4857
    %v5190 = vunpack.c.h.b16 %v4857
    %v5191 = vunpack.c.l.b16 %v4858
    %v5192 = vunpack.c.h.b16 %v4858
    %v5193 = vunpack.c.l.b16 %v4859
    %v5194 = vunpack.c.h.b16 %v4859
    %v5195 = vunpack.c.l.b16 %v4860
    %v5196 = vunpack.c.h.b16 %v4860
    %v5197 = vunpack.c.l.b16 %v4861
    %v5198 = vunpack.c.h.b16 %v4861
    %v5199 = vunpack.c.l.b16 %v4862
    %v5200 = vunpack.c.h.b16 %v4862
    %v5201 = vunpack.c.l.b16 %v4863
    %v5202 = vunpack.c.h.b16 %v4863
    %v5203 = vunpack.c.l.b16 %v4864
    %v5204 = vunpack.c.h.b16 %v4864
    %v5205 = vunpack.c.l.b16 %v4865
    %v5206 = vunpack.c.h.b16 %v4865
    %v5207 = vunpack.c.l.b16 %v4866
    %v5208 = vunpack.c.h.b16 %v4866
    %v5209 = vunpack.c.l.b16 %v4867
    %v5210 = vunpack.c.h.b16 %v4867
    %v5211 = vunpack.c.l.b16 %v4868
    %v5212 = vunpack.c.h.b16 %v4868
    %v5213 = vunpack.c.l.b16 %v4869
    %v5214 = vunpack.c.h.b16 %v4869
    %v5215 = vunpack.c.l.b16 %v4870
    %v5216 = vunpack.c.h.b16 %v4870
    %v5217 = vunpack.c.l.b16 %v4871
    %v5218 = vunpack.c.h.b16 %v4871
    %v5219 = vunpack.c.l.b16 %v4872
    %v5220 = vunpack.c.h.b16 %v4872
    %v5221 = vunpack.c.l.b16 %v4873
    %v5222 = vunpack.c.h.b16 %v4873
    %v5223 = vunpack.c.l.b16 %v4874
    %v5224 = vunpack.c.h.b16 %v4874
    %v5225 = vunpack.c.l.b16 %v4875
    %v5226 = vunpack.c.h.b16 %v4875
    %v5227 = vunpack.c.l.b16 %v4876
    %v5228 = vunpack.c.h.b16 %v4876
    %v5229 = vunpack.c.l.b16 %v4877
    %v5230 = vunpack.c.h.b16 %v4877
    %v5231 = vunpack.c.l.b16 %v4878
    %v5232 = vunpack.c.h.b16 %v4878
    %v5233 = vunpack.c.l.b16 %v4879
    %v5234 = vunpack.c.h.b16 %v4879
    %v5235 = vunpack.c.l.b16 %v4880
    %v5236 = vunpack.c.h.b16 %v4880
    %v5237 = vunpack.c.l.b16 %v4881
    %v5238 = vunpack.c.h.b16 %v4881
    %v5239 = vunpack.c.l.b16 %v4882
    %v5240 = vunpack.c.h.b16 %v4882
    %v5241 = vunpack.c.l.b16 %v4883
    %v5242 = vunpack.c.h.b16 %v4883
    %v5243 = vunpack.c.l.b16 %v4884
    %v5244 = vunpack.c.h.b16 %v4884
    %v5245 = vunpack.c.l.b16 %v4885
    %v5246 = vunpack.c.h.b16 %v4885
    %v5247 = vunpack.c.l.b16 %v4886
    %v5248 = vunpack.c.h.b16 %v4886
    %v5249 = vunpack.c.l.b16 %v4887
    %v5250 = vunpack.c.h.b16 %v4887
    %v5251 = vunpack.c.l.b16 %v4888
    %v5252 = vunpack.c.h.b16 %v4888
    %v5253 = vunpack.c.l.b16 %v4889
    %v5254 = vunpack.c.h.b16 %v4889
    %v5255 = vunpack.c.l.b16 %v4890
    %v5256 = vunpack.c.h.b16 %v4890
    %v5257 = vunpack.c.l.b16 %v4891
    %v5258 = vunpack.c.h.b16 %v4891
    %v5259 = vunpack.c.l.b16 %v4892
    %v5260 = vunpack.c.h.b16 %v4892
    %v5261 = vunpack.c.l.b16 %v4893
    %v5262 = vunpack.c.h.b16 %v4893
    %v5263 = vunpack.c.l.b16 %v4894
    %v5264 = vunpack.c.h.b16 %v4894
    %v5265 = vunpack.c.l.b16 %v4895
    %v5266 = vunpack.c.h.b16 %v4895
    %v5267 = vunpack.c.l.b16 %v4896
    %v5268 = vunpack.c.h.b16 %v4896
    %v5269 = vunpack.c.l.b16 %v4897
    %v5270 = vunpack.c.h.b16 %v4897
    %v5271 = vunpack.c.l.b16 %v4898
    %v5272 = vunpack.c.h.b16 %v4898
    %v5273 = vunpack.c.l.b16 %v4899
    %v5274 = vunpack.c.h.b16 %v4899
    %v5275 = vunpack.c.l.b16 %v4900
    %v5276 = vunpack.c.h.b16 %v4900
    %v5277 = vunpack.c.l.b16 %v4901
    %v5278 = vunpack.c.h.b16 %v4901
    %v5279 = vunpack.c.l.b16 %v4902
    %v5280 = vunpack.c.h.b16 %v4902
    %v5281 = vunpack.c.l.b16 %v4903
    %v5282 = vunpack.c.h.b16 %v4903
    %v5283 = vunpack.c.l.b16 %v4904
    %v5284 = vunpack.c.h.b16 %v4904
    %v5285 = vunpack.c.l.b16 %v4905
    %v5286 = vunpack.c.h.b16 %v4905
    %v5287 = vunpack.c.l.b16 %v4906
    %v5288 = vunpack.c.h.b16 %v4906
    %v5289 = vunpack.c.l.b16 %v4907
    %v5290 = vunpack.c.h.b16 %v4907
    %v5291 = vunpack.c.l.b16 %v4908
    %v5292 = vunpack.c.h.b16 %v4908
    %v5293 = vunpack.c.l.b16 %v4909
    %v5294 = vunpack.c.h.b16 %v4909
    %v5295 = vunpack.c.l.b16 %v4910
    %v5296 = vunpack.c.h.b16 %v4910
    %v5297 = vunpack.c.l.b16 %v4911
    %v5298 = vunpack.c.h.b16 %v4911
    %v5299 = vunpack.c.l.b16 %v4912
    %v5300 = vunpack.c.h.b16 %v4912
    %v5301 = vunpack.c.l.b16 %v4913
    %v5302 = vunpack.c.h.b16 %v4913
    %v5303 = vunpack.c.l.b16 %v4914
    %v5304 = vunpack.c.h.b16 %v4914
    %v5305 = vunpack.c.l.b16 %v4915
    %v5306 = vunpack.c.h.b16 %v4915
    %v5307 = vunpack.c.l.b16 %v4916
    %v5308 = vunpack.c.h.b16 %v4916
    %v5309 = vunpack.c.l.b16 %v4917
    %v5310 = vunpack.c.h.b16 %v4917
    %v5311 = vunpack.c.l.b16 %v4918
    %v5312 = vunpack.c.h.b16 %v4918
    %v5313 = vunpack.c.l.b16 %v4919
    %v5314 = vunpack.c.h.b16 %v4919
    %v5315 = vunpack.c.l.b16 %v4920
    %v5316 = vunpack.c.h.b16 %v4920
    %v5317 = vunpack.c.l.b16 %v4921
    %v5318 = vunpack.c.h.b16 %v4921
    %v5319 = vunpack.c.l.b16 %v4922
    %v5320 = vunpack.c.h.b16 %v4922
    %v5321 = vunpack.c.l.b16 %v4923
    %v5322 = vunpack.c.h.b16 %v4923
    %v5323 = vunpack.c.l.b16 %v4924
    %v5324 = vunpack.c.h.b16 %v4924
    %v5325 = vunpack.c.l.b16 %v4925
    %v5326 = vunpack.c.h.b16 %v4925
    %v5327 = vunpack.c.l.b16 %v4926
    %v5328 = vunpack.c.h.b16 %v4926
    %v5329 = vunpack.c.l.b16 %v4927
    %v5330 = vunpack.c.h.b16 %v4927
    %v5331 = vpack.c.b16 %v5143, %v5139
    %v5332 = vpack.c.b16 %v5144, %v5140
    %v5333 = vpack.c.b16 %v5145, %v5141
    %v5334 = vpack.c.b16 %v5146, %v5142
    %v5335 = vpack.c.b16 %v5151, %v5147
    %v5336 = vpack.c.b16 %v5152, %v5148
    %v5337 = vpack.c.b16 %v5153, %v5149
    %v5338 = vpack.c.b16 %v5154, %v5150
    %v5339 = vpack.c.b16 %v5159, %v5155
    %v5340 = vpack.c.b16 %v5160, %v5156
    %v5341 = vpack.c.b16 %v5161, %v5157
    %v5342 = vpack.c.b16 %v5162, %v5158
    %v5343 = vpack.c.b16 %v5167, %v5163
    %v5344 = vpack.c.b16 %v5168, %v5164
    %v5345 = vpack.c.b16 %v5169, %v5165
    %v5346 = vpack.c.b16 %v5170, %v5166
    %v5347 = vpack.c.b16 %v5175, %v5171
    %v5348 = vpack.c.b16 %v5176, %v5172
    %v5349 = vpack.c.b16 %v5177, %v5173
    %v5350 = vpack.c.b16 %v5178, %v5174
    %v5351 = vpack.c.b16 %v5183, %v5179
    %v5352 = vpack.c.b16 %v5184, %v5180
    %v5353 = vpack.c.b16 %v5185, %v5181
    %v5354 = vpack.c.b16 %v5186, %v5182
    %v5355 = vpack.c.b16 %v5191, %v5187
    %v5356 = vpack.c.b16 %v5192, %v5188
    %v5357 = vpack.c.b16 %v5193, %v5189
    %v5358 = vpack.c.b16 %v5194, %v5190
    %v5359 = vpack.c.b16 %v5199, %v5195
    %v5360 = vpack.c.b16 %v5200, %v5196
    %v5361 = vpack.c.b16 %v5201, %v5197
    %v5362 = vpack.c.b16 %v5202, %v5198
    %v5363 = vpack.c.b16 %v5207, %v5203
    %v5364 = vpack.c.b16 %v5208, %v5204
    %v5365 = vpack.c.b16 %v5209, %v5205
    %v5366 = vpack.c.b16 %v5210, %v5206
    %v5367 = vpack.c.b16 %v5215, %v5211
    %v5368 = vpack.c.b16 %v5216, %v5212
    %v5369 = vpack.c.b16 %v5217, %v5213
    %v5370 = vpack.c.b16 %v5218, %v5214
    %v5371 = vpack.c.b16 %v5223, %v5219
    %v5372 = vpack.c.b16 %v5224, %v5220
    %v5373 = vpack.c.b16 %v5225, %v5221
    %v5374 = vpack.c.b16 %v5226, %v5222
    %v5375 = vpack.c.b16 %v5231, %v5227
    %v5376 = vpack.c.b16 %v5232, %v5228
    %v5377 = vpack.c.b16 %v5233, %v5229
    %v5378 = vpack.c.b16 %v5234, %v5230
    %v5379 = vpack.c.b16 %v5239, %v5235
    %v5380 = vpack.c.b16 %v5240, %v5236
    %v5381 = vpack.c.b16 %v5241, %v5237
    %v5382 = vpack.c.b16 %v5242, %v5238
    %v5383 = vpack.c.b16 %v5247, %v5243
    %v5384 = vpack.c.b16 %v5248, %v5244
    %v5385 = vpack.c.b16 %v5249, %v5245
    %v5386 = vpack.c.b16 %v5250, %v5246
    %v5387 = vpack.c.b16 %v5255, %v5251
    %v5388 = vpack.c.b16 %v5256, %v5252
    %v5389 = vpack.c.b16 %v5257, %v5253
    %v5390 = vpack.c.b16 %v5258, %v5254
    %v5391 = vpack.c.b16 %v5263, %v5259
    %v5392 = vpack.c.b16 %v5264, %v5260
    %v5393 = vpack.c.b16 %v5265, %v5261
    %v5394 = vpack.c.b16 %v5266, %v5262
    %v5395 = vpack.c.b16 %v5271, %v5267
    %v5396 = vpack.c.b16 %v5272, %v5268
    %v5397 = vpack.c.b16 %v5273, %v5269
    %v5398 = vpack.c.b16 %v5274, %v5270
    %v5399 = vpack.c.b16 %v5279, %v5275
    %v5400 = vpack.c.b16 %v5280, %v5276
    %v5401 = vpack.c.b16 %v5281, %v5277
    %v5402 = vpack.c.b16 %v5282, %v5278
    %v5403 = vpack.c.b16 %v5287, %v5283
    %v5404 = vpack.c.b16 %v5288, %v5284
    %v5405 = vpack.c.b16 %v5289, %v5285
    %v5406 = vpack.c.b16 %v5290, %v5286
    %v5407 = vpack.c.b16 %v5295, %v5291
    %v5408 = vpack.c.b16 %v5296, %v5292
    %v5409 = vpack.c.b16 %v5297, %v5293
    %v5410 = vpack.c.b16 %v5298, %v5294
    %v5411 = vpack.c.b16 %v5303, %v5299
    %v5412 = vpack.c.b16 %v5304, %v5300
    %v5413 = vpack.c.b16 %v5305, %v5301
    %v5414 = vpack.c.b16 %v5306, %v5302
    %v5415 = vpack.c.b16 %v5311, %v5307
    %v5416 = vpack.c.b16 %v5312, %v5308
    %v5417 = vpack.c.b16 %v5313, %v5309
    %v5418 = vpack.c.b16 %v5314, %v5310
    %v5419 = vpack.c.b16 %v5319, %v5315
    %v5420 = vpack.c.b16 %v5320, %v5316
    %v5421 = vpack.c.b16 %v5321, %v5317
    %v5422 = vpack.c.b16 %v5322, %v5318
    %v5423 = vpack.c.b16 %v5327, %v5323
    %v5424 = vpack.c.b16 %v5328, %v5324
    %v5425 = vpack.c.b16 %v5329, %v5325
    %v5426 = vpack.c.b16 %v5330, %v5326
    %5523 = vmatprep.subr.bf16.mxu0 %v5360
    %5524 = vmatpush1.bf16.msra.mxu0 %v5359
    %5525 = vmatprep.subr.bf16.mxu0 %v5356
    %5526 = vmatpush1.bf16.msra.mxu0 %v5355
    %5527 = vmatprep.subr.bf16.mxu0 %v5352
    %5528 = vmatpush1.bf16.msra.mxu0 %v5351
    %5529 = vmatprep.subr.bf16.mxu0 %v5348
    %5530 = vmatpush1.bf16.msra.mxu0 %v5347
    %5531 = vmatprep.subr.bf16.mxu0 %v5344
    %5532 = vmatpush1.bf16.msra.mxu0 %v5343
    %5533 = vmatprep.subr.bf16.mxu0 %v5340
    %5534 = vmatpush1.bf16.msra.mxu0 %v5339
    %5535 = vmatprep.subr.bf16.mxu0 %v5336
    %5536 = vmatpush1.bf16.msra.mxu0 %v5335
    %5537 = vmatprep.subr.bf16.mxu0 %v5332
    %5538 = vmatpush1.bf16.msra.mxu0 %v5331
    %5539 = vmatprep.subr.bf16.mxu0 %v5392
    %5540 = vmatpush2.bf16.msra.mxu0 %v5391
    %5541 = vmatprep.subr.bf16.mxu0 %v5388
    %5542 = vmatpush2.bf16.msra.mxu0 %v5387
    %5543 = vmatprep.subr.bf16.mxu0 %v5384
    %5544 = vmatpush2.bf16.msra.mxu0 %v5383
    %5545 = vmatprep.subr.bf16.mxu0 %v5380
    %5546 = vmatpush2.bf16.msra.mxu0 %v5379
    %5547 = vmatprep.subr.bf16.mxu0 %v5376
    %5548 = vmatpush2.bf16.msra.mxu0 %v5375
    %5549 = vmatprep.subr.bf16.mxu0 %v5372
    %5550 = vmatpush2.bf16.msra.mxu0 %v5371
    %5551 = vmatprep.subr.bf16.mxu0 %v5368
    %5552 = vmatpush2.bf16.msra.mxu0 %v5367
    %5553 = vmatprep.subr.bf16.mxu0 %v5364
    %5554 = vmatpush2.bf16.msra.mxu0 %v5363
    %5555 = vmatprep.mubr.bf16.mxu0 %v5020
    %5556 = vmatmul.mubr.bf16.gmra.mxu0 %v5019
    %v5557 = vpop.f32.mrf.mxu0
    %v5558 = vadd.f32 0.0, %v5557
    %v5559 = vpop.f32.mrf.mxu0
    %v5560 = vadd.f32 0.0, %v5559
    %v5561 = vpop.f32.mrf.mxu0
    %v5562 = vadd.f32 0.0, %v5561
    %v5563 = vpop.f32.mrf.mxu0
    %v5564 = vadd.f32 0.0, %v5563
    %5565 = vmatprep.mubr.bf16.mxu0 %v5023
    %5566 = vmatmul.mubr.bf16.gmra.mxu0 %v5022
    %v5567 = vpop.f32.mrf.mxu0
    %v5568 = vadd.f32 0.0, %v5567
    %v5569 = vpop.f32.mrf.mxu0
    %v5570 = vadd.f32 0.0, %v5569
    %v5571 = vpop.f32.mrf.mxu0
    %v5572 = vadd.f32 0.0, %v5571
    %v5573 = vpop.f32.mrf.mxu0
    %v5574 = vadd.f32 0.0, %v5573
    %5575 = vmatprep.mubr.bf16.mxu0 %v5026
    %5576 = vmatmul.mubr.bf16.gmra.mxu0 %v5025
    %v5577 = vpop.f32.mrf.mxu0
    %v5578 = vadd.f32 0.0, %v5577
    %v5579 = vpop.f32.mrf.mxu0
    %v5580 = vadd.f32 0.0, %v5579
    %v5581 = vpop.f32.mrf.mxu0
    %v5582 = vadd.f32 0.0, %v5581
    %v5583 = vpop.f32.mrf.mxu0
    %v5584 = vadd.f32 0.0, %v5583
    %5585 = vmatprep.mubr.bf16.mxu0 %v5029
    %5586 = vmatmul.mubr.bf16.gmra.mxu0 %v5028
    %v5587 = vpop.f32.mrf.mxu0
    %v5588 = vadd.f32 0.0, %v5587
    %v5589 = vpop.f32.mrf.mxu0
    %v5590 = vadd.f32 0.0, %v5589
    %v5591 = vpop.f32.mrf.mxu0
    %v5592 = vadd.f32 0.0, %v5591
    %v5593 = vpop.f32.mrf.mxu0
    %v5594 = vadd.f32 0.0, %v5593
    %5595 = vdwg.mxu0
    %5596 = vmatprep.subr.bf16.mxu0 %v5424
    %5597 = vmatpush1.bf16.msra.mxu0 %v5423
    %5598 = vmatprep.subr.bf16.mxu0 %v5420
    %5599 = vmatpush1.bf16.msra.mxu0 %v5419
    %5600 = vmatprep.subr.bf16.mxu0 %v5416
    %5601 = vmatpush1.bf16.msra.mxu0 %v5415
    %5602 = vmatprep.subr.bf16.mxu0 %v5412
    %5603 = vmatpush1.bf16.msra.mxu0 %v5411
    %5604 = vmatprep.subr.bf16.mxu0 %v5408
    %5605 = vmatpush1.bf16.msra.mxu0 %v5407
    %5606 = vmatprep.subr.bf16.mxu0 %v5404
    %5607 = vmatpush1.bf16.msra.mxu0 %v5403
    %5608 = vmatprep.subr.bf16.mxu0 %v5400
    %5609 = vmatpush1.bf16.msra.mxu0 %v5399
    %5610 = vmatprep.subr.bf16.mxu0 %v5396
    %5611 = vmatpush1.bf16.msra.mxu0 %v5395
    %5612 = vmatprep.subr.bf16.mxu0 0
    %5613 = vmatpush2.bf16.msra.mxu0 0
    %5614 = vmatprep.subr.bf16.mxu0 0
    %5615 = vmatpush2.bf16.msra.mxu0 0
    %5616 = vmatprep.subr.bf16.mxu0 0
    %5617 = vmatpush2.bf16.msra.mxu0 0
    %5618 = vmatprep.subr.bf16.mxu0 0
    %5619 = vmatpush2.bf16.msra.mxu0 0
    %5620 = vmatprep.subr.bf16.mxu0 0
    %5621 = vmatpush2.bf16.msra.mxu0 0
    %5622 = vmatprep.subr.bf16.mxu0 0
    %5623 = vmatpush2.bf16.msra.mxu0 0
    %5624 = vmatprep.subr.bf16.mxu0 0
    %5625 = vmatpush2.bf16.msra.mxu0 0
    %5626 = vmatprep.subr.bf16.mxu0 0
    %5627 = vmatpush2.bf16.msra.mxu0 0
    %5628 = vmatprep.mubr.bf16.mxu0 0
    %5629 = vmatmul.mubr.bf16.gmra.mxu0 %v5021
    %v5630 = vpop.f32.mrf.mxu0
    %v5631 = vadd.f32 %v5558, %v5630
    %v5632 = vpop.f32.mrf.mxu0
    %v5633 = vadd.f32 %v5560, %v5632
    %v5634 = vpop.f32.mrf.mxu0
    %v5635 = vadd.f32 %v5562, %v5634
    %v5636 = vpop.f32.mrf.mxu0
    %v5637 = vadd.f32 %v5564, %v5636
    %5638 = vmatprep.mubr.bf16.mxu0 0
    %5639 = vmatmul.mubr.bf16.gmra.mxu0 %v5024
    %v5640 = vpop.f32.mrf.mxu0
    %v5641 = vadd.f32 %v5568, %v5640
    %v5642 = vpop.f32.mrf.mxu0
    %v5643 = vadd.f32 %v5570, %v5642
    %v5644 = vpop.f32.mrf.mxu0
    %v5645 = vadd.f32 %v5572, %v5644
    %v5646 = vpop.f32.mrf.mxu0
    %v5647 = vadd.f32 %v5574, %v5646
    %5648 = vmatprep.mubr.bf16.mxu0 0
    %5649 = vmatmul.mubr.bf16.gmra.mxu0 %v5027
    %v5650 = vpop.f32.mrf.mxu0
    %v5651 = vadd.f32 %v5578, %v5650
    %v5652 = vpop.f32.mrf.mxu0
    %v5653 = vadd.f32 %v5580, %v5652
    %v5654 = vpop.f32.mrf.mxu0
    %v5655 = vadd.f32 %v5582, %v5654
    %v5656 = vpop.f32.mrf.mxu0
    %v5657 = vadd.f32 %v5584, %v5656
    %5658 = vmatprep.mubr.bf16.mxu0 0
    %5659 = vmatmul.mubr.bf16.gmra.mxu0 %v5030
    %v5660 = vpop.f32.mrf.mxu0
    %v5661 = vadd.f32 %v5588, %v5660
    %v5662 = vpop.f32.mrf.mxu0
    %v5663 = vadd.f32 %v5590, %v5662
    %v5664 = vpop.f32.mrf.mxu0
    %v5665 = vadd.f32 %v5592, %v5664
    %v5666 = vpop.f32.mrf.mxu0
    %v5667 = vadd.f32 %v5594, %v5666
    %5668 = vdwg.mxu0
    %5669 = vmatprep.subr.bf16.mxu0 %v5362
    %5670 = vmatpush1.bf16.msra.mxu0 %v5361
    %5671 = vmatprep.subr.bf16.mxu0 %v5358
    %5672 = vmatpush1.bf16.msra.mxu0 %v5357
    %5673 = vmatprep.subr.bf16.mxu0 %v5354
    %5674 = vmatpush1.bf16.msra.mxu0 %v5353
    %5675 = vmatprep.subr.bf16.mxu0 %v5350
    %5676 = vmatpush1.bf16.msra.mxu0 %v5349
    %5677 = vmatprep.subr.bf16.mxu0 %v5346
    %5678 = vmatpush1.bf16.msra.mxu0 %v5345
    %5679 = vmatprep.subr.bf16.mxu0 %v5342
    %5680 = vmatpush1.bf16.msra.mxu0 %v5341
    %5681 = vmatprep.subr.bf16.mxu0 %v5338
    %5682 = vmatpush1.bf16.msra.mxu0 %v5337
    %5683 = vmatprep.subr.bf16.mxu0 %v5334
    %5684 = vmatpush1.bf16.msra.mxu0 %v5333
    %5685 = vmatprep.subr.bf16.mxu0 %v5394
    %5686 = vmatpush2.bf16.msra.mxu0 %v5393
    %5687 = vmatprep.subr.bf16.mxu0 %v5390
    %5688 = vmatpush2.bf16.msra.mxu0 %v5389
    %5689 = vmatprep.subr.bf16.mxu0 %v5386
    %5690 = vmatpush2.bf16.msra.mxu0 %v5385
    %5691 = vmatprep.subr.bf16.mxu0 %v5382
    %5692 = vmatpush2.bf16.msra.mxu0 %v5381
    %5693 = vmatprep.subr.bf16.mxu0 %v5378
    %5694 = vmatpush2.bf16.msra.mxu0 %v5377
    %5695 = vmatprep.subr.bf16.mxu0 %v5374
    %5696 = vmatpush2.bf16.msra.mxu0 %v5373
    %5697 = vmatprep.subr.bf16.mxu0 %v5370
    %5698 = vmatpush2.bf16.msra.mxu0 %v5369
    %5699 = vmatprep.subr.bf16.mxu0 %v5366
    %5700 = vmatpush2.bf16.msra.mxu0 %v5365
    %5701 = vmatprep.mubr.bf16.mxu0 %v5020
    %5702 = vmatmul.mubr.bf16.gmra.mxu0 %v5019
    %v5703 = vpop.f32.mrf.mxu0
    %v5704 = vadd.f32 0.0, %v5703
    %v5705 = vpop.f32.mrf.mxu0
    %v5706 = vadd.f32 0.0, %v5705
    %v5707 = vpop.f32.mrf.mxu0
    %v5708 = vadd.f32 0.0, %v5707
    %v5709 = vpop.f32.mrf.mxu0
    %v5710 = vadd.f32 0.0, %v5709
    %5711 = vmatprep.mubr.bf16.mxu0 %v5023
    %5712 = vmatmul.mubr.bf16.gmra.mxu0 %v5022
    %v5713 = vpop.f32.mrf.mxu0
    %v5714 = vadd.f32 0.0, %v5713
    %v5715 = vpop.f32.mrf.mxu0
    %v5716 = vadd.f32 0.0, %v5715
    %v5717 = vpop.f32.mrf.mxu0
    %v5718 = vadd.f32 0.0, %v5717
    %v5719 = vpop.f32.mrf.mxu0
    %v5720 = vadd.f32 0.0, %v5719
    %5721 = vmatprep.mubr.bf16.mxu0 %v5026
    %5722 = vmatmul.mubr.bf16.gmra.mxu0 %v5025
    %v5723 = vpop.f32.mrf.mxu0
    %v5724 = vadd.f32 0.0, %v5723
    %v5725 = vpop.f32.mrf.mxu0
    %v5726 = vadd.f32 0.0, %v5725
    %v5727 = vpop.f32.mrf.mxu0
    %v5728 = vadd.f32 0.0, %v5727
    %v5729 = vpop.f32.mrf.mxu0
    %v5730 = vadd.f32 0.0, %v5729
    %5731 = vmatprep.mubr.bf16.mxu0 %v5029
    %5732 = vmatmul.mubr.bf16.gmra.mxu0 %v5028
    %v5733 = vpop.f32.mrf.mxu0
    %v5734 = vadd.f32 0.0, %v5733
    %v5735 = vpop.f32.mrf.mxu0
    %v5736 = vadd.f32 0.0, %v5735
    %v5737 = vpop.f32.mrf.mxu0
    %v5738 = vadd.f32 0.0, %v5737
    %v5739 = vpop.f32.mrf.mxu0
    %v5740 = vadd.f32 0.0, %v5739
    %5741 = vdwg.mxu0
    %5742 = vmatprep.subr.bf16.mxu0 %v5426
    %5743 = vmatpush1.bf16.msra.mxu0 %v5425
    %5744 = vmatprep.subr.bf16.mxu0 %v5422
    %5745 = vmatpush1.bf16.msra.mxu0 %v5421
    %5746 = vmatprep.subr.bf16.mxu0 %v5418
    %5747 = vmatpush1.bf16.msra.mxu0 %v5417
    %5748 = vmatprep.subr.bf16.mxu0 %v5414
    %5749 = vmatpush1.bf16.msra.mxu0 %v5413
    %5750 = vmatprep.subr.bf16.mxu0 %v5410
    %5751 = vmatpush1.bf16.msra.mxu0 %v5409
    %5752 = vmatprep.subr.bf16.mxu0 %v5406
    %5753 = vmatpush1.bf16.msra.mxu0 %v5405
    %5754 = vmatprep.subr.bf16.mxu0 %v5402
    %5755 = vmatpush1.bf16.msra.mxu0 %v5401
    %5756 = vmatprep.subr.bf16.mxu0 %v5398
    %5757 = vmatpush1.bf16.msra.mxu0 %v5397
    %5758 = vmatprep.subr.bf16.mxu0 0
    %5759 = vmatpush2.bf16.msra.mxu0 0
    %5760 = vmatprep.subr.bf16.mxu0 0
    %5761 = vmatpush2.bf16.msra.mxu0 0
    %5762 = vmatprep.subr.bf16.mxu0 0
    %5763 = vmatpush2.bf16.msra.mxu0 0
    %5764 = vmatprep.subr.bf16.mxu0 0
    %5765 = vmatpush2.bf16.msra.mxu0 0
    %5766 = vmatprep.subr.bf16.mxu0 0
    %5767 = vmatpush2.bf16.msra.mxu0 0
    %5768 = vmatprep.subr.bf16.mxu0 0
    %5769 = vmatpush2.bf16.msra.mxu0 0
    %5770 = vmatprep.subr.bf16.mxu0 0
    %5771 = vmatpush2.bf16.msra.mxu0 0
    %5772 = vmatprep.subr.bf16.mxu0 0
    %5773 = vmatpush2.bf16.msra.mxu0 0
    %5774 = vmatprep.mubr.bf16.mxu0 0
    %5775 = vmatmul.mubr.bf16.gmra.mxu0 %v5021
    %v5776 = vpop.f32.mrf.mxu0
    %v5777 = vadd.f32 %v5704, %v5776
    %v5778 = vpop.f32.mrf.mxu0
    %v5779 = vadd.f32 %v5706, %v5778
    %v5780 = vpop.f32.mrf.mxu0
    %v5781 = vadd.f32 %v5708, %v5780
    %v5782 = vpop.f32.mrf.mxu0
    %v5783 = vadd.f32 %v5710, %v5782
    %5784 = vmatprep.mubr.bf16.mxu0 0
    %5785 = vmatmul.mubr.bf16.gmra.mxu0 %v5024
    %v5786 = vpop.f32.mrf.mxu0
    %v5787 = vadd.f32 %v5714, %v5786
    %v5788 = vpop.f32.mrf.mxu0
    %v5789 = vadd.f32 %v5716, %v5788
    %v5790 = vpop.f32.mrf.mxu0
    %v5791 = vadd.f32 %v5718, %v5790
    %v5792 = vpop.f32.mrf.mxu0
    %v5793 = vadd.f32 %v5720, %v5792
    %5794 = vmatprep.mubr.bf16.mxu0 0
    %5795 = vmatmul.mubr.bf16.gmra.mxu0 %v5027
    %v5796 = vpop.f32.mrf.mxu0
    %v5797 = vadd.f32 %v5724, %v5796
    %v5798 = vpop.f32.mrf.mxu0
    %v5799 = vadd.f32 %v5726, %v5798
    %v5800 = vpop.f32.mrf.mxu0
    %v5801 = vadd.f32 %v5728, %v5800
    %v5802 = vpop.f32.mrf.mxu0
    %v5803 = vadd.f32 %v5730, %v5802
    %5804 = vmatprep.mubr.bf16.mxu0 0
    %5805 = vmatmul.mubr.bf16.gmra.mxu0 %v5030
    %v5806 = vpop.f32.mrf.mxu0
    %v5807 = vadd.f32 %v5734, %v5806
    %v5808 = vpop.f32.mrf.mxu0
    %v5809 = vadd.f32 %v5736, %v5808
    %v5810 = vpop.f32.mrf.mxu0
    %v5811 = vadd.f32 %v5738, %v5810
    %v5812 = vpop.f32.mrf.mxu0
    %v5813 = vadd.f32 %v5740, %v5812
    %5814 = vdwg.mxu0
    %v5815 = vadd.f32 %v4647, %v5631
    %v5816 = vadd.f32 %v4649, %v5633
    %v5817 = vadd.f32 %v4793, %v5777
    %v5818 = vadd.f32 %v4795, %v5779
    %v5819 = vadd.f32 %v4651, %v5635
    %v5820 = vadd.f32 %v4653, %v5637
    %v5821 = vadd.f32 %v4797, %v5781
    %v5822 = vadd.f32 %v4799, %v5783
    %v5823 = vadd.f32 %v4657, %v5641
    %v5824 = vadd.f32 %v4659, %v5643
    %v5825 = vadd.f32 %v4803, %v5787
    %v5826 = vadd.f32 %v4805, %v5789
    %v5827 = vadd.f32 %v4661, %v5645
    %v5828 = vadd.f32 %v4663, %v5647
    %v5829 = vadd.f32 %v4807, %v5791
    %v5830 = vadd.f32 %v4809, %v5793
    %v5831 = vadd.f32 %v4667, %v5651
    %v5832 = vadd.f32 %v4669, %v5653
    %v5833 = vadd.f32 %v4813, %v5797
    %v5834 = vadd.f32 %v4815, %v5799
    %v5835 = vadd.f32 %v4671, %v5655
    %v5836 = vadd.f32 %v4673, %v5657
    %v5837 = vadd.f32 %v4817, %v5801
    %v5838 = vadd.f32 %v4819, %v5803
    %v5839 = vadd.f32 %v4677, %v5661
    %v5840 = vadd.f32 %v4679, %v5663
    %v5841 = vadd.f32 %v4823, %v5807
    %v5842 = vadd.f32 %v4825, %v5809
    %v5843 = vadd.f32 %v4681, %v5665
    %v5844 = vadd.f32 %v4683, %v5667
    %v5845 = vadd.f32 %v4827, %v5811
    %v5846 = vadd.f32 %v4829, %v5813
    %s5847 = scalar_lea.vmem [#allocation4], 2304
    %v5848 = vld [vmem:[%s5847] sm:$0xff]
    %v5849 = vld [vmem:[%s5847 + $0x8] sm:$0xff]
    %v5850 = vld [vmem:[%s5847 + $0x10] sm:$0xff]
    %v5851 = vld [vmem:[%s5847 + $0x18] sm:$0xff]
    %v5852 = vld [vmem:[%s5847 + $0x20] sm:$0xff]
    %v5853 = vld [vmem:[%s5847 + $0x28] sm:$0xff]
    %v5854 = vld [vmem:[%s5847 + $0x30] sm:$0xff]
    %v5855 = vld [vmem:[%s5847 + $0x38] sm:$0xff]
    %v5856 = vld [vmem:[%s5847 + $0x40] sm:$0xff]
    %v5857 = vld [vmem:[%s5847 + $0x48] sm:$0xff]
    %v5858 = vld [vmem:[%s5847 + $0x50] sm:$0xff]
    %v5859 = vld [vmem:[%s5847 + $0x58] sm:$0xff]
    %v5860 = vld [vmem:[%s5847 + $0x60] sm:$0xff]
    %v5861 = vld [vmem:[%s5847 + $0x68] sm:$0xff]
    %v5862 = vld [vmem:[%s5847 + $0x70] sm:$0xff]
    %v5863 = vld [vmem:[%s5847 + $0x78] sm:$0xff]
    %v5864 = vld [vmem:[%s5847 + $0x80] sm:$0xff]
    %v5865 = vld [vmem:[%s5847 + $0x88] sm:$0xff]
    %v5866 = vld [vmem:[%s5847 + $0x90] sm:$0xff]
    %v5867 = vld [vmem:[%s5847 + $0x98] sm:$0xff]
    %v5868 = vld [vmem:[%s5847 + $0xa0] sm:$0xff]
    %v5869 = vld [vmem:[%s5847 + $0xa8] sm:$0xff]
    %v5870 = vld [vmem:[%s5847 + $0xb0] sm:$0xff]
    %v5871 = vld [vmem:[%s5847 + $0xb8] sm:$0xff]
    %v5872 = vld [vmem:[%s5847 + $0xc0] sm:$0xff]
    %v5873 = vld [vmem:[%s5847 + $0xc8] sm:$0xff]
    %v5874 = vld [vmem:[%s5847 + $0xd0] sm:$0xff]
    %v5875 = vld [vmem:[%s5847 + $0xd8] sm:$0xff]
    %v5876 = vld [vmem:[%s5847 + $0xe0] sm:$0xff]
    %v5877 = vld [vmem:[%s5847 + $0xe8] sm:$0xff]
    %v5878 = vld [vmem:[%s5847 + $0xf0] sm:$0xff]
    %v5879 = vld [vmem:[%s5847 + $0xf8] sm:$0xff]
    %v5880 = vld [vmem:[%s5847 + $0x100] sm:$0xff]
    %v5881 = vld [vmem:[%s5847 + $0x108] sm:$0xff]
    %v5882 = vld [vmem:[%s5847 + $0x110] sm:$0xff]
    %v5883 = vld [vmem:[%s5847 + $0x118] sm:$0xff]
    %v5884 = vld [vmem:[%s5847 + $0x120] sm:$0xff]
    %v5885 = vld [vmem:[%s5847 + $0x128] sm:$0xff]
    %v5886 = vld [vmem:[%s5847 + $0x130] sm:$0xff]
    %v5887 = vld [vmem:[%s5847 + $0x138] sm:$0xff]
    %v5888 = vld [vmem:[%s5847 + $0x140] sm:$0xff]
    %v5889 = vld [vmem:[%s5847 + $0x148] sm:$0xff]
    %v5890 = vld [vmem:[%s5847 + $0x150] sm:$0xff]
    %v5891 = vld [vmem:[%s5847 + $0x158] sm:$0xff]
    %v5892 = vld [vmem:[%s5847 + $0x160] sm:$0xff]
    %v5893 = vld [vmem:[%s5847 + $0x168] sm:$0xff]
    %v5894 = vld [vmem:[%s5847 + $0x170] sm:$0xff]
    %v5895 = vld [vmem:[%s5847 + $0x178] sm:$0xff]
    %v5896 = vld [vmem:[%s5847 + $0x180] sm:$0xff]
    %v5897 = vld [vmem:[%s5847 + $0x188] sm:$0xff]
    %v5898 = vld [vmem:[%s5847 + $0x190] sm:$0xff]
    %v5899 = vld [vmem:[%s5847 + $0x198] sm:$0xff]
    %v5900 = vld [vmem:[%s5847 + $0x1a0] sm:$0xff]
    %v5901 = vld [vmem:[%s5847 + $0x1a8] sm:$0xff]
    %v5902 = vld [vmem:[%s5847 + $0x1b0] sm:$0xff]
    %v5903 = vld [vmem:[%s5847 + $0x1b8] sm:$0xff]
    %v5904 = vld [vmem:[%s5847 + $0x1c0] sm:$0xff]
    %v5905 = vld [vmem:[%s5847 + $0x1c8] sm:$0xff]
    %v5906 = vld [vmem:[%s5847 + $0x1d0] sm:$0xff]
    %v5907 = vld [vmem:[%s5847 + $0x1d8] sm:$0xff]
    %v5908 = vld [vmem:[%s5847 + $0x1e0] sm:$0xff]
    %v5909 = vld [vmem:[%s5847 + $0x1e8] sm:$0xff]
    %v5910 = vld [vmem:[%s5847 + $0x1f0] sm:$0xff]
    %v5911 = vld [vmem:[%s5847 + $0x1f8] sm:$0xff]
    %v5912 = vld [vmem:[%s5847 + $0x200] sm:$0xff]
    %v5913 = vld [vmem:[%s5847 + $0x208] sm:$0xff]
    %v5914 = vld [vmem:[%s5847 + $0x210] sm:$0xff]
    %v5915 = vld [vmem:[%s5847 + $0x218] sm:$0xff]
    %v5916 = vld [vmem:[%s5847 + $0x220] sm:$0xff]
    %v5917 = vld [vmem:[%s5847 + $0x228] sm:$0xff]
    %v5918 = vld [vmem:[%s5847 + $0x230] sm:$0xff]
    %v5919 = vld [vmem:[%s5847 + $0x238] sm:$0xff]
    %v5920 = vld [vmem:[%s5847 + $0x240] sm:$0xff]
    %v5921 = vld [vmem:[%s5847 + $0x248] sm:$0xff]
    %v5922 = vld [vmem:[%s5847 + $0x250] sm:$0xff]
    %v5923 = vld [vmem:[%s5847 + $0x258] sm:$0xff]
    %v5924 = vld [vmem:[%s5847 + $0x260] sm:$0xff]
    %v5925 = vld [vmem:[%s5847 + $0x268] sm:$0xff]
    %v5926 = vld [vmem:[%s5847 + $0x270] sm:$0xff]
    %v5927 = vld [vmem:[%s5847 + $0x278] sm:$0xff]
    %v5928 = vld [vmem:[%s5847 + $0x280] sm:$0xff]
    %v5929 = vld [vmem:[%s5847 + $0x288] sm:$0xff]
    %v5930 = vld [vmem:[%s5847 + $0x290] sm:$0xff]
    %v5931 = vld [vmem:[%s5847 + $0x298] sm:$0xff]
    %v5932 = vld [vmem:[%s5847 + $0x2a0] sm:$0xff]
    %v5933 = vld [vmem:[%s5847 + $0x2a8] sm:$0xff]
    %v5934 = vld [vmem:[%s5847 + $0x2b0] sm:$0xff]
    %v5935 = vld [vmem:[%s5847 + $0x2b8] sm:$0xff]
    %v5936 = vld [vmem:[%s5847 + $0x2c0] sm:$0xff]
    %v5937 = vld [vmem:[%s5847 + $0x2c8] sm:$0xff]
    %v5938 = vld [vmem:[%s5847 + $0x2d0] sm:$0xff]
    %v5939 = vld [vmem:[%s5847 + $0x2d8] sm:$0xff]
    %v5940 = vld [vmem:[%s5847 + $0x2e0] sm:$0xff]
    %v5941 = vld [vmem:[%s5847 + $0x2e8] sm:$0xff]
    %v5942 = vld [vmem:[%s5847 + $0x2f0] sm:$0xff]
    %v5943 = vld [vmem:[%s5847 + $0x2f8] sm:$0xff]
    %vm5944 = vsmask.f32 2304
    %vm5945 = vsmask.f32 6416
    %vm5946 = vmor %vm5944, %vm5945
    %v5947 = vrot.slane %v2992, 5
    %v5948 = vrot.slane %v2995, 6
    %v5949 = vor.u32 %v5947, %v5948
    %v5950 = vrot.slane %v5949, 4
    %v5951 = vshrl.u32 %v2958, 16
    %v5953 = vrot.slane %v5951, 5
    %v5954 = vrot.slane %v3001, 6
    %v5955 = vor.u32 %v5953, %v5954
    %v5956 = vsel %vm5946, %v5950, %v5955
    %v5957 = vrot.slane %v3006, 5
    %v5958 = vrot.slane %v3009, 6
    %v5959 = vor.u32 %v5957, %v5958
    %v5960 = vrot.slane %v5959, 4
    %v5961 = vshrl.u32 %v2959, 16
    %v5963 = vrot.slane %v5961, 5
    %v5964 = vrot.slane %v3015, 6
    %v5965 = vor.u32 %v5963, %v5964
    %v5966 = vsel %vm5946, %v5960, %v5965
    %v5967 = vrot.slane %v3020, 5
    %v5968 = vrot.slane %v3023, 6
    %v5969 = vor.u32 %v5967, %v5968
    %v5970 = vrot.slane %v5969, 4
    %v5971 = vshrl.u32 %v2962, 16
    %v5973 = vrot.slane %v5971, 5
    %v5974 = vrot.slane %v3029, 6
    %v5975 = vor.u32 %v5973, %v5974
    %v5976 = vsel %vm5946, %v5970, %v5975
    %v5977 = vrot.slane %v3034, 5
    %v5978 = vrot.slane %v3037, 6
    %v5979 = vor.u32 %v5977, %v5978
    %v5980 = vrot.slane %v5979, 4
    %v5981 = vshrl.u32 %v2963, 16
    %v5983 = vrot.slane %v5981, 5
    %v5984 = vrot.slane %v3043, 6
    %v5985 = vor.u32 %v5983, %v5984
    %v5986 = vsel %vm5946, %v5980, %v5985
    %v5987 = vrot.slane %v3048, 5
    %v5988 = vrot.slane %v3051, 6
    %v5989 = vor.u32 %v5987, %v5988
    %v5990 = vrot.slane %v5989, 4
    %v5991 = vshrl.u32 %v2966, 16
    %v5993 = vrot.slane %v5991, 5
    %v5994 = vrot.slane %v3057, 6
    %v5995 = vor.u32 %v5993, %v5994
    %v5996 = vsel %vm5946, %v5990, %v5995
    %v5997 = vrot.slane %v3062, 5
    %v5998 = vrot.slane %v3065, 6
    %v5999 = vor.u32 %v5997, %v5998
    %v6000 = vrot.slane %v5999, 4
    %v6001 = vshrl.u32 %v2967, 16
    %v6003 = vrot.slane %v6001, 5
    %v6004 = vrot.slane %v3071, 6
    %v6005 = vor.u32 %v6003, %v6004
    %v6006 = vsel %vm5946, %v6000, %v6005
    %v6007 = vrot.slane %v3076, 5
    %v6008 = vrot.slane %v3079, 6
    %v6009 = vor.u32 %v6007, %v6008
    %v6010 = vrot.slane %v6009, 4
    %v6011 = vshrl.u32 %v2970, 16
    %v6013 = vrot.slane %v6011, 5
    %v6014 = vrot.slane %v3085, 6
    %v6015 = vor.u32 %v6013, %v6014
    %v6016 = vsel %vm5946, %v6010, %v6015
    %v6017 = vrot.slane %v3090, 5
    %v6018 = vrot.slane %v3093, 6
    %v6019 = vor.u32 %v6017, %v6018
    %v6020 = vrot.slane %v6019, 4
    %v6021 = vshrl.u32 %v2971, 16
    %v6023 = vrot.slane %v6021, 5
    %v6024 = vrot.slane %v3099, 6
    %v6025 = vor.u32 %v6023, %v6024
    %v6026 = vsel %vm5946, %v6020, %v6025
    %v6027 = vrot.slane %v3104, 5
    %v6028 = vrot.slane %v3107, 6
    %v6029 = vor.u32 %v6027, %v6028
    %v6030 = vrot.slane %v6029, 4
    %v6031 = vshrl.u32 %v2974, 16
    %v6033 = vrot.slane %v6031, 5
    %v6034 = vrot.slane %v3113, 6
    %v6035 = vor.u32 %v6033, %v6034
    %v6036 = vsel %vm5946, %v6030, %v6035
    %v6037 = vrot.slane %v3118, 5
    %v6038 = vrot.slane %v3121, 6
    %v6039 = vor.u32 %v6037, %v6038
    %v6040 = vrot.slane %v6039, 4
    %v6041 = vshrl.u32 %v2975, 16
    %v6043 = vrot.slane %v6041, 5
    %v6044 = vrot.slane %v3127, 6
    %v6045 = vor.u32 %v6043, %v6044
    %v6046 = vsel %vm5946, %v6040, %v6045
    %v6047 = vrot.slane %v3132, 5
    %v6048 = vrot.slane %v3135, 6
    %v6049 = vor.u32 %v6047, %v6048
    %v6050 = vrot.slane %v6049, 4
    %v6051 = vshrl.u32 %v2978, 16
    %v6053 = vrot.slane %v6051, 5
    %v6054 = vrot.slane %v3141, 6
    %v6055 = vor.u32 %v6053, %v6054
    %v6056 = vsel %vm5946, %v6050, %v6055
    %v6057 = vrot.slane %v3146, 5
    %v6058 = vrot.slane %v3149, 6
    %v6059 = vor.u32 %v6057, %v6058
    %v6060 = vrot.slane %v6059, 4
    %v6061 = vshrl.u32 %v2979, 16
    %v6063 = vrot.slane %v6061, 5
    %v6064 = vrot.slane %v3155, 6
    %v6065 = vor.u32 %v6063, %v6064
    %v6066 = vsel %vm5946, %v6060, %v6065
    %v6067 = vrot.slane %v3160, 5
    %v6068 = vrot.slane %v3163, 6
    %v6069 = vor.u32 %v6067, %v6068
    %v6070 = vrot.slane %v6069, 4
    %v6071 = vshrl.u32 %v2982, 16
    %v6073 = vrot.slane %v6071, 5
    %v6074 = vrot.slane %v3169, 6
    %v6075 = vor.u32 %v6073, %v6074
    %v6076 = vsel %vm5946, %v6070, %v6075
    %v6077 = vrot.slane %v3174, 5
    %v6078 = vrot.slane %v3177, 6
    %v6079 = vor.u32 %v6077, %v6078
    %v6080 = vrot.slane %v6079, 4
    %v6081 = vshrl.u32 %v2983, 16
    %v6083 = vrot.slane %v6081, 5
    %v6084 = vrot.slane %v3183, 6
    %v6085 = vor.u32 %v6083, %v6084
    %v6086 = vsel %vm5946, %v6080, %v6085
    %v6087 = vrot.slane %v3188, 5
    %v6088 = vrot.slane %v3191, 6
    %v6089 = vor.u32 %v6087, %v6088
    %v6090 = vrot.slane %v6089, 4
    %v6091 = vshrl.u32 %v2986, 16
    %v6093 = vrot.slane %v6091, 5
    %v6094 = vrot.slane %v3197, 6
    %v6095 = vor.u32 %v6093, %v6094
    %v6096 = vsel %vm5946, %v6090, %v6095
    %v6097 = vrot.slane %v3202, 5
    %v6098 = vrot.slane %v3205, 6
    %v6099 = vor.u32 %v6097, %v6098
    %v6100 = vrot.slane %v6099, 4
    %v6101 = vshrl.u32 %v2987, 16
    %v6103 = vrot.slane %v6101, 5
    %v6104 = vrot.slane %v3211, 6
    %v6105 = vor.u32 %v6103, %v6104
    %v6106 = vsel %vm5946, %v6100, %v6105
    %v6107 = vunpack.c.l.b16 %v5956
    %v6108 = vunpack.c.h.b16 %v5956
    %v6109 = vunpack.c.l.b16 %v5966
    %v6110 = vunpack.c.l.b16 %v5976
    %v6111 = vunpack.c.h.b16 %v5976
    %v6112 = vunpack.c.l.b16 %v5986
    %v6113 = vunpack.c.l.b16 %v5996
    %v6114 = vunpack.c.h.b16 %v5996
    %v6115 = vunpack.c.l.b16 %v6006
    %v6116 = vunpack.c.l.b16 %v6016
    %v6117 = vunpack.c.h.b16 %v6016
    %v6118 = vunpack.c.l.b16 %v6026
    %v6119 = vunpack.c.l.b16 %v6036
    %v6120 = vunpack.c.h.b16 %v6036
    %v6121 = vunpack.c.l.b16 %v6046
    %v6122 = vunpack.c.l.b16 %v6056
    %v6123 = vunpack.c.h.b16 %v6056
    %v6124 = vunpack.c.l.b16 %v6066
    %v6125 = vunpack.c.l.b16 %v6076
    %v6126 = vunpack.c.h.b16 %v6076
    %v6127 = vunpack.c.l.b16 %v6086
    %v6128 = vunpack.c.l.b16 %v6096
    %v6129 = vunpack.c.h.b16 %v6096
    %v6130 = vunpack.c.l.b16 %v6106
    %v6131 = vpack.c.b16 %v6110, %v6107
    %v6132 = vpack.c.b16 %v6111, %v6108
    %v6133 = vpack.c.b16 %v6112, %v6109
    %v6134 = vpack.c.b16 %v6116, %v6113
    %v6135 = vpack.c.b16 %v6117, %v6114
    %v6136 = vpack.c.b16 %v6118, %v6115
    %v6137 = vpack.c.b16 %v6122, %v6119
    %v6138 = vpack.c.b16 %v6123, %v6120
    %v6139 = vpack.c.b16 %v6124, %v6121
    %v6140 = vpack.c.b16 %v6128, %v6125
    %v6141 = vpack.c.b16 %v6129, %v6126
    %v6142 = vpack.c.b16 %v6130, %v6127
    %v6251 = vunpack.c.l.b16 %v5848
    %v6252 = vunpack.c.h.b16 %v5848
    %v6253 = vunpack.c.l.b16 %v5849
    %v6254 = vunpack.c.h.b16 %v5849
    %v6255 = vunpack.c.l.b16 %v5850
    %v6256 = vunpack.c.h.b16 %v5850
    %v6257 = vunpack.c.l.b16 %v5851
    %v6258 = vunpack.c.h.b16 %v5851
    %v6259 = vunpack.c.l.b16 %v5852
    %v6260 = vunpack.c.h.b16 %v5852
    %v6261 = vunpack.c.l.b16 %v5853
    %v6262 = vunpack.c.h.b16 %v5853
    %v6263 = vunpack.c.l.b16 %v5854
    %v6264 = vunpack.c.h.b16 %v5854
    %v6265 = vunpack.c.l.b16 %v5855
    %v6266 = vunpack.c.h.b16 %v5855
    %v6267 = vunpack.c.l.b16 %v5856
    %v6268 = vunpack.c.h.b16 %v5856
    %v6269 = vunpack.c.l.b16 %v5857
    %v6270 = vunpack.c.h.b16 %v5857
    %v6271 = vunpack.c.l.b16 %v5858
    %v6272 = vunpack.c.h.b16 %v5858
    %v6273 = vunpack.c.l.b16 %v5859
    %v6274 = vunpack.c.h.b16 %v5859
    %v6275 = vunpack.c.l.b16 %v5860
    %v6276 = vunpack.c.h.b16 %v5860
    %v6277 = vunpack.c.l.b16 %v5861
    %v6278 = vunpack.c.h.b16 %v5861
    %v6279 = vunpack.c.l.b16 %v5862
    %v6280 = vunpack.c.h.b16 %v5862
    %v6281 = vunpack.c.l.b16 %v5863
    %v6282 = vunpack.c.h.b16 %v5863
    %v6283 = vunpack.c.l.b16 %v5864
    %v6284 = vunpack.c.h.b16 %v5864
    %v6285 = vunpack.c.l.b16 %v5865
    %v6286 = vunpack.c.h.b16 %v5865
    %v6287 = vunpack.c.l.b16 %v5866
    %v6288 = vunpack.c.h.b16 %v5866
    %v6289 = vunpack.c.l.b16 %v5867
    %v6290 = vunpack.c.h.b16 %v5867
    %v6291 = vunpack.c.l.b16 %v5868
    %v6292 = vunpack.c.h.b16 %v5868
    %v6293 = vunpack.c.l.b16 %v5869
    %v6294 = vunpack.c.h.b16 %v5869
    %v6295 = vunpack.c.l.b16 %v5870
    %v6296 = vunpack.c.h.b16 %v5870
    %v6297 = vunpack.c.l.b16 %v5871
    %v6298 = vunpack.c.h.b16 %v5871
    %v6299 = vunpack.c.l.b16 %v5872
    %v6300 = vunpack.c.h.b16 %v5872
    %v6301 = vunpack.c.l.b16 %v5873
    %v6302 = vunpack.c.h.b16 %v5873
    %v6303 = vunpack.c.l.b16 %v5874
    %v6304 = vunpack.c.h.b16 %v5874
    %v6305 = vunpack.c.l.b16 %v5875
    %v6306 = vunpack.c.h.b16 %v5875
    %v6307 = vunpack.c.l.b16 %v5876
    %v6308 = vunpack.c.h.b16 %v5876
    %v6309 = vunpack.c.l.b16 %v5877
    %v6310 = vunpack.c.h.b16 %v5877
    %v6311 = vunpack.c.l.b16 %v5878
    %v6312 = vunpack.c.h.b16 %v5878
    %v6313 = vunpack.c.l.b16 %v5879
    %v6314 = vunpack.c.h.b16 %v5879
    %v6315 = vunpack.c.l.b16 %v5880
    %v6316 = vunpack.c.h.b16 %v5880
    %v6317 = vunpack.c.l.b16 %v5881
    %v6318 = vunpack.c.h.b16 %v5881
    %v6319 = vunpack.c.l.b16 %v5882
    %v6320 = vunpack.c.h.b16 %v5882
    %v6321 = vunpack.c.l.b16 %v5883
    %v6322 = vunpack.c.h.b16 %v5883
    %v6323 = vunpack.c.l.b16 %v5884
    %v6324 = vunpack.c.h.b16 %v5884
    %v6325 = vunpack.c.l.b16 %v5885
    %v6326 = vunpack.c.h.b16 %v5885
    %v6327 = vunpack.c.l.b16 %v5886
    %v6328 = vunpack.c.h.b16 %v5886
    %v6329 = vunpack.c.l.b16 %v5887
    %v6330 = vunpack.c.h.b16 %v5887
    %v6331 = vunpack.c.l.b16 %v5888
    %v6332 = vunpack.c.h.b16 %v5888
    %v6333 = vunpack.c.l.b16 %v5889
    %v6334 = vunpack.c.h.b16 %v5889
    %v6335 = vunpack.c.l.b16 %v5890
    %v6336 = vunpack.c.h.b16 %v5890
    %v6337 = vunpack.c.l.b16 %v5891
    %v6338 = vunpack.c.h.b16 %v5891
    %v6339 = vunpack.c.l.b16 %v5892
    %v6340 = vunpack.c.h.b16 %v5892
    %v6341 = vunpack.c.l.b16 %v5893
    %v6342 = vunpack.c.h.b16 %v5893
    %v6343 = vunpack.c.l.b16 %v5894
    %v6344 = vunpack.c.h.b16 %v5894
    %v6345 = vunpack.c.l.b16 %v5895
    %v6346 = vunpack.c.h.b16 %v5895
    %v6347 = vunpack.c.l.b16 %v5896
    %v6348 = vunpack.c.h.b16 %v5896
    %v6349 = vunpack.c.l.b16 %v5897
    %v6350 = vunpack.c.h.b16 %v5897
    %v6351 = vunpack.c.l.b16 %v5898
    %v6352 = vunpack.c.h.b16 %v5898
    %v6353 = vunpack.c.l.b16 %v5899
    %v6354 = vunpack.c.h.b16 %v5899
    %v6355 = vunpack.c.l.b16 %v5900
    %v6356 = vunpack.c.h.b16 %v5900
    %v6357 = vunpack.c.l.b16 %v5901
    %v6358 = vunpack.c.h.b16 %v5901
    %v6359 = vunpack.c.l.b16 %v5902
    %v6360 = vunpack.c.h.b16 %v5902
    %v6361 = vunpack.c.l.b16 %v5903
    %v6362 = vunpack.c.h.b16 %v5903
    %v6363 = vunpack.c.l.b16 %v5904
    %v6364 = vunpack.c.h.b16 %v5904
    %v6365 = vunpack.c.l.b16 %v5905
    %v6366 = vunpack.c.h.b16 %v5905
    %v6367 = vunpack.c.l.b16 %v5906
    %v6368 = vunpack.c.h.b16 %v5906
    %v6369 = vunpack.c.l.b16 %v5907
    %v6370 = vunpack.c.h.b16 %v5907
    %v6371 = vunpack.c.l.b16 %v5908
    %v6372 = vunpack.c.h.b16 %v5908
    %v6373 = vunpack.c.l.b16 %v5909
    %v6374 = vunpack.c.h.b16 %v5909
    %v6375 = vunpack.c.l.b16 %v5910
    %v6376 = vunpack.c.h.b16 %v5910
    %v6377 = vunpack.c.l.b16 %v5911
    %v6378 = vunpack.c.h.b16 %v5911
    %v6379 = vunpack.c.l.b16 %v5912
    %v6380 = vunpack.c.h.b16 %v5912
    %v6381 = vunpack.c.l.b16 %v5913
    %v6382 = vunpack.c.h.b16 %v5913
    %v6383 = vunpack.c.l.b16 %v5914
    %v6384 = vunpack.c.h.b16 %v5914
    %v6385 = vunpack.c.l.b16 %v5915
    %v6386 = vunpack.c.h.b16 %v5915
    %v6387 = vunpack.c.l.b16 %v5916
    %v6388 = vunpack.c.h.b16 %v5916
    %v6389 = vunpack.c.l.b16 %v5917
    %v6390 = vunpack.c.h.b16 %v5917
    %v6391 = vunpack.c.l.b16 %v5918
    %v6392 = vunpack.c.h.b16 %v5918
    %v6393 = vunpack.c.l.b16 %v5919
    %v6394 = vunpack.c.h.b16 %v5919
    %v6395 = vunpack.c.l.b16 %v5920
    %v6396 = vunpack.c.h.b16 %v5920
    %v6397 = vunpack.c.l.b16 %v5921
    %v6398 = vunpack.c.h.b16 %v5921
    %v6399 = vunpack.c.l.b16 %v5922
    %v6400 = vunpack.c.h.b16 %v5922
    %v6401 = vunpack.c.l.b16 %v5923
    %v6402 = vunpack.c.h.b16 %v5923
    %v6403 = vunpack.c.l.b16 %v5924
    %v6404 = vunpack.c.h.b16 %v5924
    %v6405 = vunpack.c.l.b16 %v5925
    %v6406 = vunpack.c.h.b16 %v5925
    %v6407 = vunpack.c.l.b16 %v5926
    %v6408 = vunpack.c.h.b16 %v5926
    %v6409 = vunpack.c.l.b16 %v5927
    %v6410 = vunpack.c.h.b16 %v5927
    %v6411 = vunpack.c.l.b16 %v5928
    %v6412 = vunpack.c.h.b16 %v5928
    %v6413 = vunpack.c.l.b16 %v5929
    %v6414 = vunpack.c.h.b16 %v5929
    %v6415 = vunpack.c.l.b16 %v5930
    %v6416 = vunpack.c.h.b16 %v5930
    %v6417 = vunpack.c.l.b16 %v5931
    %v6418 = vunpack.c.h.b16 %v5931
    %v6419 = vunpack.c.l.b16 %v5932
    %v6420 = vunpack.c.h.b16 %v5932
    %v6421 = vunpack.c.l.b16 %v5933
    %v6422 = vunpack.c.h.b16 %v5933
    %v6423 = vunpack.c.l.b16 %v5934
    %v6424 = vunpack.c.h.b16 %v5934
    %v6425 = vunpack.c.l.b16 %v5935
    %v6426 = vunpack.c.h.b16 %v5935
    %v6427 = vunpack.c.l.b16 %v5936
    %v6428 = vunpack.c.h.b16 %v5936
    %v6429 = vunpack.c.l.b16 %v5937
    %v6430 = vunpack.c.h.b16 %v5937
    %v6431 = vunpack.c.l.b16 %v5938
    %v6432 = vunpack.c.h.b16 %v5938
    %v6433 = vunpack.c.l.b16 %v5939
    %v6434 = vunpack.c.h.b16 %v5939
    %v6435 = vunpack.c.l.b16 %v5940
    %v6436 = vunpack.c.h.b16 %v5940
    %v6437 = vunpack.c.l.b16 %v5941
    %v6438 = vunpack.c.h.b16 %v5941
    %v6439 = vunpack.c.l.b16 %v5942
    %v6440 = vunpack.c.h.b16 %v5942
    %v6441 = vunpack.c.l.b16 %v5943
    %v6442 = vunpack.c.h.b16 %v5943
    %v6443 = vpack.c.b16 %v6255, %v6251
    %v6444 = vpack.c.b16 %v6256, %v6252
    %v6445 = vpack.c.b16 %v6257, %v6253
    %v6446 = vpack.c.b16 %v6258, %v6254
    %v6447 = vpack.c.b16 %v6263, %v6259
    %v6448 = vpack.c.b16 %v6264, %v6260
    %v6449 = vpack.c.b16 %v6265, %v6261
    %v6450 = vpack.c.b16 %v6266, %v6262
    %v6451 = vpack.c.b16 %v6271, %v6267
    %v6452 = vpack.c.b16 %v6272, %v6268
    %v6453 = vpack.c.b16 %v6273, %v6269
    %v6454 = vpack.c.b16 %v6274, %v6270
    %v6455 = vpack.c.b16 %v6279, %v6275
    %v6456 = vpack.c.b16 %v6280, %v6276
    %v6457 = vpack.c.b16 %v6281, %v6277
    %v6458 = vpack.c.b16 %v6282, %v6278
    %v6459 = vpack.c.b16 %v6287, %v6283
    %v6460 = vpack.c.b16 %v6288, %v6284
    %v6461 = vpack.c.b16 %v6289, %v6285
    %v6462 = vpack.c.b16 %v6290, %v6286
    %v6463 = vpack.c.b16 %v6295, %v6291
    %v6464 = vpack.c.b16 %v6296, %v6292
    %v6465 = vpack.c.b16 %v6297, %v6293
    %v6466 = vpack.c.b16 %v6298, %v6294
    %v6467 = vpack.c.b16 %v6303, %v6299
    %v6468 = vpack.c.b16 %v6304, %v6300
    %v6469 = vpack.c.b16 %v6305, %v6301
    %v6470 = vpack.c.b16 %v6306, %v6302
    %v6471 = vpack.c.b16 %v6311, %v6307
    %v6472 = vpack.c.b16 %v6312, %v6308
    %v6473 = vpack.c.b16 %v6313, %v6309
    %v6474 = vpack.c.b16 %v6314, %v6310
    %v6475 = vpack.c.b16 %v6319, %v6315
    %v6476 = vpack.c.b16 %v6320, %v6316
    %v6477 = vpack.c.b16 %v6321, %v6317
    %v6478 = vpack.c.b16 %v6322, %v6318
    %v6479 = vpack.c.b16 %v6327, %v6323
    %v6480 = vpack.c.b16 %v6328, %v6324
    %v6481 = vpack.c.b16 %v6329, %v6325
    %v6482 = vpack.c.b16 %v6330, %v6326
    %v6483 = vpack.c.b16 %v6335, %v6331
    %v6484 = vpack.c.b16 %v6336, %v6332
    %v6485 = vpack.c.b16 %v6337, %v6333
    %v6486 = vpack.c.b16 %v6338, %v6334
    %v6487 = vpack.c.b16 %v6343, %v6339
    %v6488 = vpack.c.b16 %v6344, %v6340
    %v6489 = vpack.c.b16 %v6345, %v6341
    %v6490 = vpack.c.b16 %v6346, %v6342
    %v6491 = vpack.c.b16 %v6351, %v6347
    %v6492 = vpack.c.b16 %v6352, %v6348
    %v6493 = vpack.c.b16 %v6353, %v6349
    %v6494 = vpack.c.b16 %v6354, %v6350
    %v6495 = vpack.c.b16 %v6359, %v6355
    %v6496 = vpack.c.b16 %v6360, %v6356
    %v6497 = vpack.c.b16 %v6361, %v6357
    %v6498 = vpack.c.b16 %v6362, %v6358
    %v6499 = vpack.c.b16 %v6367, %v6363
    %v6500 = vpack.c.b16 %v6368, %v6364
    %v6501 = vpack.c.b16 %v6369, %v6365
    %v6502 = vpack.c.b16 %v6370, %v6366
    %v6503 = vpack.c.b16 %v6375, %v6371
    %v6504 = vpack.c.b16 %v6376, %v6372
    %v6505 = vpack.c.b16 %v6377, %v6373
    %v6506 = vpack.c.b16 %v6378, %v6374
    %v6507 = vpack.c.b16 %v6383, %v6379
    %v6508 = vpack.c.b16 %v6384, %v6380
    %v6509 = vpack.c.b16 %v6385, %v6381
    %v6510 = vpack.c.b16 %v6386, %v6382
    %v6511 = vpack.c.b16 %v6391, %v6387
    %v6512 = vpack.c.b16 %v6392, %v6388
    %v6513 = vpack.c.b16 %v6393, %v6389
    %v6514 = vpack.c.b16 %v6394, %v6390
    %v6515 = vpack.c.b16 %v6399, %v6395
    %v6516 = vpack.c.b16 %v6400, %v6396
    %v6517 = vpack.c.b16 %v6401, %v6397
    %v6518 = vpack.c.b16 %v6402, %v6398
    %v6519 = vpack.c.b16 %v6407, %v6403
    %v6520 = vpack.c.b16 %v6408, %v6404
    %v6521 = vpack.c.b16 %v6409, %v6405
    %v6522 = vpack.c.b16 %v6410, %v6406
    %v6523 = vpack.c.b16 %v6415, %v6411
    %v6524 = vpack.c.b16 %v6416, %v6412
    %v6525 = vpack.c.b16 %v6417, %v6413
    %v6526 = vpack.c.b16 %v6418, %v6414
    %v6527 = vpack.c.b16 %v6423, %v6419
    %v6528 = vpack.c.b16 %v6424, %v6420
    %v6529 = vpack.c.b16 %v6425, %v6421
    %v6530 = vpack.c.b16 %v6426, %v6422
    %v6531 = vpack.c.b16 %v6431, %v6427
    %v6532 = vpack.c.b16 %v6432, %v6428
    %v6533 = vpack.c.b16 %v6433, %v6429
    %v6534 = vpack.c.b16 %v6434, %v6430
    %v6535 = vpack.c.b16 %v6439, %v6435
    %v6536 = vpack.c.b16 %v6440, %v6436
    %v6537 = vpack.c.b16 %v6441, %v6437
    %v6538 = vpack.c.b16 %v6442, %v6438
    %6635 = vmatprep.subr.bf16.mxu0 %v6472
    %6636 = vmatpush1.bf16.msra.mxu0 %v6471
    %6637 = vmatprep.subr.bf16.mxu0 %v6468
    %6638 = vmatpush1.bf16.msra.mxu0 %v6467
    %6639 = vmatprep.subr.bf16.mxu0 %v6464
    %6640 = vmatpush1.bf16.msra.mxu0 %v6463
    %6641 = vmatprep.subr.bf16.mxu0 %v6460
    %6642 = vmatpush1.bf16.msra.mxu0 %v6459
    %6643 = vmatprep.subr.bf16.mxu0 %v6456
    %6644 = vmatpush1.bf16.msra.mxu0 %v6455
    %6645 = vmatprep.subr.bf16.mxu0 %v6452
    %6646 = vmatpush1.bf16.msra.mxu0 %v6451
    %6647 = vmatprep.subr.bf16.mxu0 %v6448
    %6648 = vmatpush1.bf16.msra.mxu0 %v6447
    %6649 = vmatprep.subr.bf16.mxu0 %v6444
    %6650 = vmatpush1.bf16.msra.mxu0 %v6443
    %6651 = vmatprep.subr.bf16.mxu0 %v6504
    %6652 = vmatpush2.bf16.msra.mxu0 %v6503
    %6653 = vmatprep.subr.bf16.mxu0 %v6500
    %6654 = vmatpush2.bf16.msra.mxu0 %v6499
    %6655 = vmatprep.subr.bf16.mxu0 %v6496
    %6656 = vmatpush2.bf16.msra.mxu0 %v6495
    %6657 = vmatprep.subr.bf16.mxu0 %v6492
    %6658 = vmatpush2.bf16.msra.mxu0 %v6491
    %6659 = vmatprep.subr.bf16.mxu0 %v6488
    %6660 = vmatpush2.bf16.msra.mxu0 %v6487
    %6661 = vmatprep.subr.bf16.mxu0 %v6484
    %6662 = vmatpush2.bf16.msra.mxu0 %v6483
    %6663 = vmatprep.subr.bf16.mxu0 %v6480
    %6664 = vmatpush2.bf16.msra.mxu0 %v6479
    %6665 = vmatprep.subr.bf16.mxu0 %v6476
    %6666 = vmatpush2.bf16.msra.mxu0 %v6475
    %6667 = vmatprep.mubr.bf16.mxu0 %v6132
    %6668 = vmatmul.mubr.bf16.gmra.mxu0 %v6131
    %v6669 = vpop.f32.mrf.mxu0
    %v6670 = vadd.f32 0.0, %v6669
    %v6671 = vpop.f32.mrf.mxu0
    %v6672 = vadd.f32 0.0, %v6671
    %v6673 = vpop.f32.mrf.mxu0
    %v6674 = vadd.f32 0.0, %v6673
    %v6675 = vpop.f32.mrf.mxu0
    %v6676 = vadd.f32 0.0, %v6675
    %6677 = vmatprep.mubr.bf16.mxu0 %v6135
    %6678 = vmatmul.mubr.bf16.gmra.mxu0 %v6134
    %v6679 = vpop.f32.mrf.mxu0
    %v6680 = vadd.f32 0.0, %v6679
    %v6681 = vpop.f32.mrf.mxu0
    %v6682 = vadd.f32 0.0, %v6681
    %v6683 = vpop.f32.mrf.mxu0
    %v6684 = vadd.f32 0.0, %v6683
    %v6685 = vpop.f32.mrf.mxu0
    %v6686 = vadd.f32 0.0, %v6685
    %6687 = vmatprep.mubr.bf16.mxu0 %v6138
    %6688 = vmatmul.mubr.bf16.gmra.mxu0 %v6137
    %v6689 = vpop.f32.mrf.mxu0
    %v6690 = vadd.f32 0.0, %v6689
    %v6691 = vpop.f32.mrf.mxu0
    %v6692 = vadd.f32 0.0, %v6691
    %v6693 = vpop.f32.mrf.mxu0
    %v6694 = vadd.f32 0.0, %v6693
    %v6695 = vpop.f32.mrf.mxu0
    %v6696 = vadd.f32 0.0, %v6695
    %6697 = vmatprep.mubr.bf16.mxu0 %v6141
    %6698 = vmatmul.mubr.bf16.gmra.mxu0 %v6140
    %v6699 = vpop.f32.mrf.mxu0
    %v6700 = vadd.f32 0.0, %v6699
    %v6701 = vpop.f32.mrf.mxu0
    %v6702 = vadd.f32 0.0, %v6701
    %v6703 = vpop.f32.mrf.mxu0
    %v6704 = vadd.f32 0.0, %v6703
    %v6705 = vpop.f32.mrf.mxu0
    %v6706 = vadd.f32 0.0, %v6705
    %6707 = vdwg.mxu0
    %6708 = vmatprep.subr.bf16.mxu0 %v6536
    %6709 = vmatpush1.bf16.msra.mxu0 %v6535
    %6710 = vmatprep.subr.bf16.mxu0 %v6532
    %6711 = vmatpush1.bf16.msra.mxu0 %v6531
    %6712 = vmatprep.subr.bf16.mxu0 %v6528
    %6713 = vmatpush1.bf16.msra.mxu0 %v6527
    %6714 = vmatprep.subr.bf16.mxu0 %v6524
    %6715 = vmatpush1.bf16.msra.mxu0 %v6523
    %6716 = vmatprep.subr.bf16.mxu0 %v6520
    %6717 = vmatpush1.bf16.msra.mxu0 %v6519
    %6718 = vmatprep.subr.bf16.mxu0 %v6516
    %6719 = vmatpush1.bf16.msra.mxu0 %v6515
    %6720 = vmatprep.subr.bf16.mxu0 %v6512
    %6721 = vmatpush1.bf16.msra.mxu0 %v6511
    %6722 = vmatprep.subr.bf16.mxu0 %v6508
    %6723 = vmatpush1.bf16.msra.mxu0 %v6507
    %6724 = vmatprep.subr.bf16.mxu0 0
    %6725 = vmatpush2.bf16.msra.mxu0 0
    %6726 = vmatprep.subr.bf16.mxu0 0
    %6727 = vmatpush2.bf16.msra.mxu0 0
    %6728 = vmatprep.subr.bf16.mxu0 0
    %6729 = vmatpush2.bf16.msra.mxu0 0
    %6730 = vmatprep.subr.bf16.mxu0 0
    %6731 = vmatpush2.bf16.msra.mxu0 0
    %6732 = vmatprep.subr.bf16.mxu0 0
    %6733 = vmatpush2.bf16.msra.mxu0 0
    %6734 = vmatprep.subr.bf16.mxu0 0
    %6735 = vmatpush2.bf16.msra.mxu0 0
    %6736 = vmatprep.subr.bf16.mxu0 0
    %6737 = vmatpush2.bf16.msra.mxu0 0
    %6738 = vmatprep.subr.bf16.mxu0 0
    %6739 = vmatpush2.bf16.msra.mxu0 0
    %6740 = vmatprep.mubr.bf16.mxu0 0
    %6741 = vmatmul.mubr.bf16.gmra.mxu0 %v6133
    %v6742 = vpop.f32.mrf.mxu0
    %v6743 = vadd.f32 %v6670, %v6742
    %v6744 = vpop.f32.mrf.mxu0
    %v6745 = vadd.f32 %v6672, %v6744
    %v6746 = vpop.f32.mrf.mxu0
    %v6747 = vadd.f32 %v6674, %v6746
    %v6748 = vpop.f32.mrf.mxu0
    %v6749 = vadd.f32 %v6676, %v6748
    %6750 = vmatprep.mubr.bf16.mxu0 0
    %6751 = vmatmul.mubr.bf16.gmra.mxu0 %v6136
    %v6752 = vpop.f32.mrf.mxu0
    %v6753 = vadd.f32 %v6680, %v6752
    %v6754 = vpop.f32.mrf.mxu0
    %v6755 = vadd.f32 %v6682, %v6754
    %v6756 = vpop.f32.mrf.mxu0
    %v6757 = vadd.f32 %v6684, %v6756
    %v6758 = vpop.f32.mrf.mxu0
    %v6759 = vadd.f32 %v6686, %v6758
    %6760 = vmatprep.mubr.bf16.mxu0 0
    %6761 = vmatmul.mubr.bf16.gmra.mxu0 %v6139
    %v6762 = vpop.f32.mrf.mxu0
    %v6763 = vadd.f32 %v6690, %v6762
    %v6764 = vpop.f32.mrf.mxu0
    %v6765 = vadd.f32 %v6692, %v6764
    %v6766 = vpop.f32.mrf.mxu0
    %v6767 = vadd.f32 %v6694, %v6766
    %v6768 = vpop.f32.mrf.mxu0
    %v6769 = vadd.f32 %v6696, %v6768
    %6770 = vmatprep.mubr.bf16.mxu0 0
    %6771 = vmatmul.mubr.bf16.gmra.mxu0 %v6142
    %v6772 = vpop.f32.mrf.mxu0
    %v6773 = vadd.f32 %v6700, %v6772
    %v6774 = vpop.f32.mrf.mxu0
    %v6775 = vadd.f32 %v6702, %v6774
    %v6776 = vpop.f32.mrf.mxu0
    %v6777 = vadd.f32 %v6704, %v6776
    %v6778 = vpop.f32.mrf.mxu0
    %v6779 = vadd.f32 %v6706, %v6778
    %6780 = vdwg.mxu0
    %6781 = vmatprep.subr.bf16.mxu0 %v6474
    %6782 = vmatpush1.bf16.msra.mxu0 %v6473
    %6783 = vmatprep.subr.bf16.mxu0 %v6470
    %6784 = vmatpush1.bf16.msra.mxu0 %v6469
    %6785 = vmatprep.subr.bf16.mxu0 %v6466
    %6786 = vmatpush1.bf16.msra.mxu0 %v6465
    %6787 = vmatprep.subr.bf16.mxu0 %v6462
    %6788 = vmatpush1.bf16.msra.mxu0 %v6461
    %6789 = vmatprep.subr.bf16.mxu0 %v6458
    %6790 = vmatpush1.bf16.msra.mxu0 %v6457
    %6791 = vmatprep.subr.bf16.mxu0 %v6454
    %6792 = vmatpush1.bf16.msra.mxu0 %v6453
    %6793 = vmatprep.subr.bf16.mxu0 %v6450
    %6794 = vmatpush1.bf16.msra.mxu0 %v6449
    %6795 = vmatprep.subr.bf16.mxu0 %v6446
    %6796 = vmatpush1.bf16.msra.mxu0 %v6445
    %6797 = vmatprep.subr.bf16.mxu0 %v6506
    %6798 = vmatpush2.bf16.msra.mxu0 %v6505
    %6799 = vmatprep.subr.bf16.mxu0 %v6502
    %6800 = vmatpush2.bf16.msra.mxu0 %v6501
    %6801 = vmatprep.subr.bf16.mxu0 %v6498
    %6802 = vmatpush2.bf16.msra.mxu0 %v6497
    %6803 = vmatprep.subr.bf16.mxu0 %v6494
    %6804 = vmatpush2.bf16.msra.mxu0 %v6493
    %6805 = vmatprep.subr.bf16.mxu0 %v6490
    %6806 = vmatpush2.bf16.msra.mxu0 %v6489
    %6807 = vmatprep.subr.bf16.mxu0 %v6486
    %6808 = vmatpush2.bf16.msra.mxu0 %v6485
    %6809 = vmatprep.subr.bf16.mxu0 %v6482
    %6810 = vmatpush2.bf16.msra.mxu0 %v6481
    %6811 = vmatprep.subr.bf16.mxu0 %v6478
    %6812 = vmatpush2.bf16.msra.mxu0 %v6477
    %6813 = vmatprep.mubr.bf16.mxu0 %v6132
    %6814 = vmatmul.mubr.bf16.gmra.mxu0 %v6131
    %v6815 = vpop.f32.mrf.mxu0
    %v6816 = vadd.f32 0.0, %v6815
    %v6817 = vpop.f32.mrf.mxu0
    %v6818 = vadd.f32 0.0, %v6817
    %v6819 = vpop.f32.mrf.mxu0
    %v6820 = vadd.f32 0.0, %v6819
    %v6821 = vpop.f32.mrf.mxu0
    %v6822 = vadd.f32 0.0, %v6821
    %6823 = vmatprep.mubr.bf16.mxu0 %v6135
    %6824 = vmatmul.mubr.bf16.gmra.mxu0 %v6134
    %v6825 = vpop.f32.mrf.mxu0
    %v6826 = vadd.f32 0.0, %v6825
    %v6827 = vpop.f32.mrf.mxu0
    %v6828 = vadd.f32 0.0, %v6827
    %v6829 = vpop.f32.mrf.mxu0
    %v6830 = vadd.f32 0.0, %v6829
    %v6831 = vpop.f32.mrf.mxu0
    %v6832 = vadd.f32 0.0, %v6831
    %6833 = vmatprep.mubr.bf16.mxu0 %v6138
    %6834 = vmatmul.mubr.bf16.gmra.mxu0 %v6137
    %v6835 = vpop.f32.mrf.mxu0
    %v6836 = vadd.f32 0.0, %v6835
    %v6837 = vpop.f32.mrf.mxu0
    %v6838 = vadd.f32 0.0, %v6837
    %v6839 = vpop.f32.mrf.mxu0
    %v6840 = vadd.f32 0.0, %v6839
    %v6841 = vpop.f32.mrf.mxu0
    %v6842 = vadd.f32 0.0, %v6841
    %6843 = vmatprep.mubr.bf16.mxu0 %v6141
    %6844 = vmatmul.mubr.bf16.gmra.mxu0 %v6140
    %v6845 = vpop.f32.mrf.mxu0
    %v6846 = vadd.f32 0.0, %v6845
    %v6847 = vpop.f32.mrf.mxu0
    %v6848 = vadd.f32 0.0, %v6847
    %v6849 = vpop.f32.mrf.mxu0
    %v6850 = vadd.f32 0.0, %v6849
    %v6851 = vpop.f32.mrf.mxu0
    %v6852 = vadd.f32 0.0, %v6851
    %6853 = vdwg.mxu0
    %6854 = vmatprep.subr.bf16.mxu0 %v6538
    %6855 = vmatpush1.bf16.msra.mxu0 %v6537
    %6856 = vmatprep.subr.bf16.mxu0 %v6534
    %6857 = vmatpush1.bf16.msra.mxu0 %v6533
    %6858 = vmatprep.subr.bf16.mxu0 %v6530
    %6859 = vmatpush1.bf16.msra.mxu0 %v6529
    %6860 = vmatprep.subr.bf16.mxu0 %v6526
    %6861 = vmatpush1.bf16.msra.mxu0 %v6525
    %6862 = vmatprep.subr.bf16.mxu0 %v6522
    %6863 = vmatpush1.bf16.msra.mxu0 %v6521
    %6864 = vmatprep.subr.bf16.mxu0 %v6518
    %6865 = vmatpush1.bf16.msra.mxu0 %v6517
    %6866 = vmatprep.subr.bf16.mxu0 %v6514
    %6867 = vmatpush1.bf16.msra.mxu0 %v6513
    %6868 = vmatprep.subr.bf16.mxu0 %v6510
    %6869 = vmatpush1.bf16.msra.mxu0 %v6509
    %6870 = vmatprep.subr.bf16.mxu0 0
    %6871 = vmatpush2.bf16.msra.mxu0 0
    %6872 = vmatprep.subr.bf16.mxu0 0
    %6873 = vmatpush2.bf16.msra.mxu0 0
    %6874 = vmatprep.subr.bf16.mxu0 0
    %6875 = vmatpush2.bf16.msra.mxu0 0
    %6876 = vmatprep.subr.bf16.mxu0 0
    %6877 = vmatpush2.bf16.msra.mxu0 0
    %6878 = vmatprep.subr.bf16.mxu0 0
    %6879 = vmatpush2.bf16.msra.mxu0 0
    %6880 = vmatprep.subr.bf16.mxu0 0
    %6881 = vmatpush2.bf16.msra.mxu0 0
    %6882 = vmatprep.subr.bf16.mxu0 0
    %6883 = vmatpush2.bf16.msra.mxu0 0
    %6884 = vmatprep.subr.bf16.mxu0 0
    %6885 = vmatpush2.bf16.msra.mxu0 0
    %6886 = vmatprep.mubr.bf16.mxu0 0
    %6887 = vmatmul.mubr.bf16.gmra.mxu0 %v6133
    %v6888 = vpop.f32.mrf.mxu0
    %v6889 = vadd.f32 %v6816, %v6888
    %v6890 = vpop.f32.mrf.mxu0
    %v6891 = vadd.f32 %v6818, %v6890
    %v6892 = vpop.f32.mrf.mxu0
    %v6893 = vadd.f32 %v6820, %v6892
    %v6894 = vpop.f32.mrf.mxu0
    %v6895 = vadd.f32 %v6822, %v6894
    %6896 = vmatprep.mubr.bf16.mxu0 0
    %6897 = vmatmul.mubr.bf16.gmra.mxu0 %v6136
    %v6898 = vpop.f32.mrf.mxu0
    %v6899 = vadd.f32 %v6826, %v6898
    %v6900 = vpop.f32.mrf.mxu0
    %v6901 = vadd.f32 %v6828, %v6900
    %v6902 = vpop.f32.mrf.mxu0
    %v6903 = vadd.f32 %v6830, %v6902
    %v6904 = vpop.f32.mrf.mxu0
    %v6905 = vadd.f32 %v6832, %v6904
    %6906 = vmatprep.mubr.bf16.mxu0 0
    %6907 = vmatmul.mubr.bf16.gmra.mxu0 %v6139
    %v6908 = vpop.f32.mrf.mxu0
    %v6909 = vadd.f32 %v6836, %v6908
    %v6910 = vpop.f32.mrf.mxu0
    %v6911 = vadd.f32 %v6838, %v6910
    %v6912 = vpop.f32.mrf.mxu0
    %v6913 = vadd.f32 %v6840, %v6912
    %v6914 = vpop.f32.mrf.mxu0
    %v6915 = vadd.f32 %v6842, %v6914
    %6916 = vmatprep.mubr.bf16.mxu0 0
    %6917 = vmatmul.mubr.bf16.gmra.mxu0 %v6142
    %v6918 = vpop.f32.mrf.mxu0
    %v6919 = vadd.f32 %v6846, %v6918
    %v6920 = vpop.f32.mrf.mxu0
    %v6921 = vadd.f32 %v6848, %v6920
    %v6922 = vpop.f32.mrf.mxu0
    %v6923 = vadd.f32 %v6850, %v6922
    %v6924 = vpop.f32.mrf.mxu0
    %v6925 = vadd.f32 %v6852, %v6924
    %6926 = vdwg.mxu0
    %v6927 = vadd.f32 %v5815, %v6743
    %v6928 = vadd.f32 %v5816, %v6745
    %v6929 = vadd.f32 %v5817, %v6889
    %v6930 = vadd.f32 %v5818, %v6891
    %v6931 = vadd.f32 %v5819, %v6747
    %v6932 = vadd.f32 %v5820, %v6749
    %v6933 = vadd.f32 %v5821, %v6893
    %v6934 = vadd.f32 %v5822, %v6895
    %v6935 = vadd.f32 %v5823, %v6753
    %v6936 = vadd.f32 %v5824, %v6755
    %v6937 = vadd.f32 %v5825, %v6899
    %v6938 = vadd.f32 %v5826, %v6901
    %v6939 = vadd.f32 %v5827, %v6757
    %v6940 = vadd.f32 %v5828, %v6759
    %v6941 = vadd.f32 %v5829, %v6903
    %v6942 = vadd.f32 %v5830, %v6905
    %v6943 = vadd.f32 %v5831, %v6763
    %v6944 = vadd.f32 %v5832, %v6765
    %v6945 = vadd.f32 %v5833, %v6909
    %v6946 = vadd.f32 %v5834, %v6911
    %v6947 = vadd.f32 %v5835, %v6767
    %v6948 = vadd.f32 %v5836, %v6769
    %v6949 = vadd.f32 %v5837, %v6913
    %v6950 = vadd.f32 %v5838, %v6915
    %v6951 = vadd.f32 %v5839, %v6773
    %v6952 = vadd.f32 %v5840, %v6775
    %v6953 = vadd.f32 %v5841, %v6919
    %v6954 = vadd.f32 %v5842, %v6921
    %v6955 = vadd.f32 %v5843, %v6777
    %v6956 = vadd.f32 %v5844, %v6779
    %v6957 = vadd.f32 %v5845, %v6923
    %v6958 = vadd.f32 %v5846, %v6925
    %s6959 = scalar_lea.vmem [#allocation4], 3072
    %v6960 = vld [vmem:[%s6959] sm:$0xff]
    %v6961 = vld [vmem:[%s6959 + $0x8] sm:$0xff]
    %v6962 = vld [vmem:[%s6959 + $0x10] sm:$0xff]
    %v6963 = vld [vmem:[%s6959 + $0x18] sm:$0xff]
    %v6964 = vld [vmem:[%s6959 + $0x20] sm:$0xff]
    %v6965 = vld [vmem:[%s6959 + $0x28] sm:$0xff]
    %v6966 = vld [vmem:[%s6959 + $0x30] sm:$0xff]
    %v6967 = vld [vmem:[%s6959 + $0x38] sm:$0xff]
    %v6968 = vld [vmem:[%s6959 + $0x40] sm:$0xff]
    %v6969 = vld [vmem:[%s6959 + $0x48] sm:$0xff]
    %v6970 = vld [vmem:[%s6959 + $0x50] sm:$0xff]
    %v6971 = vld [vmem:[%s6959 + $0x58] sm:$0xff]
    %v6972 = vld [vmem:[%s6959 + $0x60] sm:$0xff]
    %v6973 = vld [vmem:[%s6959 + $0x68] sm:$0xff]
    %v6974 = vld [vmem:[%s6959 + $0x70] sm:$0xff]
    %v6975 = vld [vmem:[%s6959 + $0x78] sm:$0xff]
    %v6976 = vld [vmem:[%s6959 + $0x80] sm:$0xff]
    %v6977 = vld [vmem:[%s6959 + $0x88] sm:$0xff]
    %v6978 = vld [vmem:[%s6959 + $0x90] sm:$0xff]
    %v6979 = vld [vmem:[%s6959 + $0x98] sm:$0xff]
    %v6980 = vld [vmem:[%s6959 + $0xa0] sm:$0xff]
    %v6981 = vld [vmem:[%s6959 + $0xa8] sm:$0xff]
    %v6982 = vld [vmem:[%s6959 + $0xb0] sm:$0xff]
    %v6983 = vld [vmem:[%s6959 + $0xb8] sm:$0xff]
    %v6984 = vld [vmem:[%s6959 + $0xc0] sm:$0xff]
    %v6985 = vld [vmem:[%s6959 + $0xc8] sm:$0xff]
    %v6986 = vld [vmem:[%s6959 + $0xd0] sm:$0xff]
    %v6987 = vld [vmem:[%s6959 + $0xd8] sm:$0xff]
    %v6988 = vld [vmem:[%s6959 + $0xe0] sm:$0xff]
    %v6989 = vld [vmem:[%s6959 + $0xe8] sm:$0xff]
    %v6990 = vld [vmem:[%s6959 + $0xf0] sm:$0xff]
    %v6991 = vld [vmem:[%s6959 + $0xf8] sm:$0xff]
    %v6992 = vld [vmem:[%s6959 + $0x100] sm:$0xff]
    %v6993 = vld [vmem:[%s6959 + $0x108] sm:$0xff]
    %v6994 = vld [vmem:[%s6959 + $0x110] sm:$0xff]
    %v6995 = vld [vmem:[%s6959 + $0x118] sm:$0xff]
    %v6996 = vld [vmem:[%s6959 + $0x120] sm:$0xff]
    %v6997 = vld [vmem:[%s6959 + $0x128] sm:$0xff]
    %v6998 = vld [vmem:[%s6959 + $0x130] sm:$0xff]
    %v6999 = vld [vmem:[%s6959 + $0x138] sm:$0xff]
    %v7000 = vld [vmem:[%s6959 + $0x140] sm:$0xff]
    %v7001 = vld [vmem:[%s6959 + $0x148] sm:$0xff]
    %v7002 = vld [vmem:[%s6959 + $0x150] sm:$0xff]
    %v7003 = vld [vmem:[%s6959 + $0x158] sm:$0xff]
    %v7004 = vld [vmem:[%s6959 + $0x160] sm:$0xff]
    %v7005 = vld [vmem:[%s6959 + $0x168] sm:$0xff]
    %v7006 = vld [vmem:[%s6959 + $0x170] sm:$0xff]
    %v7007 = vld [vmem:[%s6959 + $0x178] sm:$0xff]
    %v7008 = vld [vmem:[%s6959 + $0x180] sm:$0xff]
    %v7009 = vld [vmem:[%s6959 + $0x188] sm:$0xff]
    %v7010 = vld [vmem:[%s6959 + $0x190] sm:$0xff]
    %v7011 = vld [vmem:[%s6959 + $0x198] sm:$0xff]
    %v7012 = vld [vmem:[%s6959 + $0x1a0] sm:$0xff]
    %v7013 = vld [vmem:[%s6959 + $0x1a8] sm:$0xff]
    %v7014 = vld [vmem:[%s6959 + $0x1b0] sm:$0xff]
    %v7015 = vld [vmem:[%s6959 + $0x1b8] sm:$0xff]
    %v7016 = vld [vmem:[%s6959 + $0x1c0] sm:$0xff]
    %v7017 = vld [vmem:[%s6959 + $0x1c8] sm:$0xff]
    %v7018 = vld [vmem:[%s6959 + $0x1d0] sm:$0xff]
    %v7019 = vld [vmem:[%s6959 + $0x1d8] sm:$0xff]
    %v7020 = vld [vmem:[%s6959 + $0x1e0] sm:$0xff]
    %v7021 = vld [vmem:[%s6959 + $0x1e8] sm:$0xff]
    %v7022 = vld [vmem:[%s6959 + $0x1f0] sm:$0xff]
    %v7023 = vld [vmem:[%s6959 + $0x1f8] sm:$0xff]
    %v7024 = vld [vmem:[%s6959 + $0x200] sm:$0xff]
    %v7025 = vld [vmem:[%s6959 + $0x208] sm:$0xff]
    %v7026 = vld [vmem:[%s6959 + $0x210] sm:$0xff]
    %v7027 = vld [vmem:[%s6959 + $0x218] sm:$0xff]
    %v7028 = vld [vmem:[%s6959 + $0x220] sm:$0xff]
    %v7029 = vld [vmem:[%s6959 + $0x228] sm:$0xff]
    %v7030 = vld [vmem:[%s6959 + $0x230] sm:$0xff]
    %v7031 = vld [vmem:[%s6959 + $0x238] sm:$0xff]
    %v7032 = vld [vmem:[%s6959 + $0x240] sm:$0xff]
    %v7033 = vld [vmem:[%s6959 + $0x248] sm:$0xff]
    %v7034 = vld [vmem:[%s6959 + $0x250] sm:$0xff]
    %v7035 = vld [vmem:[%s6959 + $0x258] sm:$0xff]
    %v7036 = vld [vmem:[%s6959 + $0x260] sm:$0xff]
    %v7037 = vld [vmem:[%s6959 + $0x268] sm:$0xff]
    %v7038 = vld [vmem:[%s6959 + $0x270] sm:$0xff]
    %v7039 = vld [vmem:[%s6959 + $0x278] sm:$0xff]
    %v7040 = vld [vmem:[%s6959 + $0x280] sm:$0xff]
    %v7041 = vld [vmem:[%s6959 + $0x288] sm:$0xff]
    %v7042 = vld [vmem:[%s6959 + $0x290] sm:$0xff]
    %v7043 = vld [vmem:[%s6959 + $0x298] sm:$0xff]
    %v7044 = vld [vmem:[%s6959 + $0x2a0] sm:$0xff]
    %v7045 = vld [vmem:[%s6959 + $0x2a8] sm:$0xff]
    %v7046 = vld [vmem:[%s6959 + $0x2b0] sm:$0xff]
    %v7047 = vld [vmem:[%s6959 + $0x2b8] sm:$0xff]
    %v7048 = vld [vmem:[%s6959 + $0x2c0] sm:$0xff]
    %v7049 = vld [vmem:[%s6959 + $0x2c8] sm:$0xff]
    %v7050 = vld [vmem:[%s6959 + $0x2d0] sm:$0xff]
    %v7051 = vld [vmem:[%s6959 + $0x2d8] sm:$0xff]
    %v7052 = vld [vmem:[%s6959 + $0x2e0] sm:$0xff]
    %v7053 = vld [vmem:[%s6959 + $0x2e8] sm:$0xff]
    %v7054 = vld [vmem:[%s6959 + $0x2f0] sm:$0xff]
    %v7055 = vld [vmem:[%s6959 + $0x2f8] sm:$0xff]
    %vm7056 = vcmask 1041408
    %vm7057 = vcmask 1045508
    %vm7058 = vmor %vm7056, %vm7057
    %v7059 = vrot.slane %v2956, 6
    %v7060 = vrot.slane %v7059, 4
    %v7061 = vrot.slane %v2958, 6
    %v7062 = vsel %vm7058, %v7060, %v7061
    %v7063 = vrot.slane %v2957, 6
    %v7064 = vrot.slane %v7063, 4
    %v7065 = vrot.slane %v2959, 6
    %v7066 = vsel %vm7058, %v7064, %v7065
    %v7067 = vrot.slane %v2960, 6
    %v7068 = vrot.slane %v7067, 4
    %v7069 = vrot.slane %v2962, 6
    %v7070 = vsel %vm7058, %v7068, %v7069
    %v7071 = vrot.slane %v2961, 6
    %v7072 = vrot.slane %v7071, 4
    %v7073 = vrot.slane %v2963, 6
    %v7074 = vsel %vm7058, %v7072, %v7073
    %v7075 = vrot.slane %v2964, 6
    %v7076 = vrot.slane %v7075, 4
    %v7077 = vrot.slane %v2966, 6
    %v7078 = vsel %vm7058, %v7076, %v7077
    %v7079 = vrot.slane %v2965, 6
    %v7080 = vrot.slane %v7079, 4
    %v7081 = vrot.slane %v2967, 6
    %v7082 = vsel %vm7058, %v7080, %v7081
    %v7083 = vrot.slane %v2968, 6
    %v7084 = vrot.slane %v7083, 4
    %v7085 = vrot.slane %v2970, 6
    %v7086 = vsel %vm7058, %v7084, %v7085
    %v7087 = vrot.slane %v2969, 6
    %v7088 = vrot.slane %v7087, 4
    %v7089 = vrot.slane %v2971, 6
    %v7090 = vsel %vm7058, %v7088, %v7089
    %v7091 = vrot.slane %v2972, 6
    %v7092 = vrot.slane %v7091, 4
    %v7093 = vrot.slane %v2974, 6
    %v7094 = vsel %vm7058, %v7092, %v7093
    %v7095 = vrot.slane %v2973, 6
    %v7096 = vrot.slane %v7095, 4
    %v7097 = vrot.slane %v2975, 6
    %v7098 = vsel %vm7058, %v7096, %v7097
    %v7099 = vrot.slane %v2976, 6
    %v7100 = vrot.slane %v7099, 4
    %v7101 = vrot.slane %v2978, 6
    %v7102 = vsel %vm7058, %v7100, %v7101
    %v7103 = vrot.slane %v2977, 6
    %v7104 = vrot.slane %v7103, 4
    %v7105 = vrot.slane %v2979, 6
    %v7106 = vsel %vm7058, %v7104, %v7105
    %v7107 = vrot.slane %v2980, 6
    %v7108 = vrot.slane %v7107, 4
    %v7109 = vrot.slane %v2982, 6
    %v7110 = vsel %vm7058, %v7108, %v7109
    %v7111 = vrot.slane %v2981, 6
    %v7112 = vrot.slane %v7111, 4
    %v7113 = vrot.slane %v2983, 6
    %v7114 = vsel %vm7058, %v7112, %v7113
    %v7115 = vrot.slane %v2984, 6
    %v7116 = vrot.slane %v7115, 4
    %v7117 = vrot.slane %v2986, 6
    %v7118 = vsel %vm7058, %v7116, %v7117
    %v7119 = vrot.slane %v2985, 6
    %v7120 = vrot.slane %v7119, 4
    %v7121 = vrot.slane %v2987, 6
    %v7122 = vsel %vm7058, %v7120, %v7121
    %v7123 = vunpack.c.l.b16 %v7062
    %v7124 = vunpack.c.h.b16 %v7062
    %v7125 = vunpack.c.l.b16 %v7066
    %v7126 = vunpack.c.l.b16 %v7070
    %v7127 = vunpack.c.h.b16 %v7070
    %v7128 = vunpack.c.l.b16 %v7074
    %v7129 = vunpack.c.l.b16 %v7078
    %v7130 = vunpack.c.h.b16 %v7078
    %v7131 = vunpack.c.l.b16 %v7082
    %v7132 = vunpack.c.l.b16 %v7086
    %v7133 = vunpack.c.h.b16 %v7086
    %v7134 = vunpack.c.l.b16 %v7090
    %v7135 = vunpack.c.l.b16 %v7094
    %v7136 = vunpack.c.h.b16 %v7094
    %v7137 = vunpack.c.l.b16 %v7098
    %v7138 = vunpack.c.l.b16 %v7102
    %v7139 = vunpack.c.h.b16 %v7102
    %v7140 = vunpack.c.l.b16 %v7106
    %v7141 = vunpack.c.l.b16 %v7110
    %v7142 = vunpack.c.h.b16 %v7110
    %v7143 = vunpack.c.l.b16 %v7114
    %v7144 = vunpack.c.l.b16 %v7118
    %v7145 = vunpack.c.h.b16 %v7118
    %v7146 = vunpack.c.l.b16 %v7122
    %v7147 = vpack.c.b16 %v7126, %v7123
    %v7148 = vpack.c.b16 %v7127, %v7124
    %v7149 = vpack.c.b16 %v7128, %v7125
    %v7150 = vpack.c.b16 %v7132, %v7129
    %v7151 = vpack.c.b16 %v7133, %v7130
    %v7152 = vpack.c.b16 %v7134, %v7131
    %v7153 = vpack.c.b16 %v7138, %v7135
    %v7154 = vpack.c.b16 %v7139, %v7136
    %v7155 = vpack.c.b16 %v7140, %v7137
    %v7156 = vpack.c.b16 %v7144, %v7141
    %v7157 = vpack.c.b16 %v7145, %v7142
    %v7158 = vpack.c.b16 %v7146, %v7143
    %v7267 = vunpack.c.l.b16 %v6960
    %v7268 = vunpack.c.h.b16 %v6960
    %v7269 = vunpack.c.l.b16 %v6961
    %v7270 = vunpack.c.h.b16 %v6961
    %v7271 = vunpack.c.l.b16 %v6962
    %v7272 = vunpack.c.h.b16 %v6962
    %v7273 = vunpack.c.l.b16 %v6963
    %v7274 = vunpack.c.h.b16 %v6963
    %v7275 = vunpack.c.l.b16 %v6964
    %v7276 = vunpack.c.h.b16 %v6964
    %v7277 = vunpack.c.l.b16 %v6965
    %v7278 = vunpack.c.h.b16 %v6965
    %v7279 = vunpack.c.l.b16 %v6966
    %v7280 = vunpack.c.h.b16 %v6966
    %v7281 = vunpack.c.l.b16 %v6967
    %v7282 = vunpack.c.h.b16 %v6967
    %v7283 = vunpack.c.l.b16 %v6968
    %v7284 = vunpack.c.h.b16 %v6968
    %v7285 = vunpack.c.l.b16 %v6969
    %v7286 = vunpack.c.h.b16 %v6969
    %v7287 = vunpack.c.l.b16 %v6970
    %v7288 = vunpack.c.h.b16 %v6970
    %v7289 = vunpack.c.l.b16 %v6971
    %v7290 = vunpack.c.h.b16 %v6971
    %v7291 = vunpack.c.l.b16 %v6972
    %v7292 = vunpack.c.h.b16 %v6972
    %v7293 = vunpack.c.l.b16 %v6973
    %v7294 = vunpack.c.h.b16 %v6973
    %v7295 = vunpack.c.l.b16 %v6974
    %v7296 = vunpack.c.h.b16 %v6974
    %v7297 = vunpack.c.l.b16 %v6975
    %v7298 = vunpack.c.h.b16 %v6975
    %v7299 = vunpack.c.l.b16 %v6976
    %v7300 = vunpack.c.h.b16 %v6976
    %v7301 = vunpack.c.l.b16 %v6977
    %v7302 = vunpack.c.h.b16 %v6977
    %v7303 = vunpack.c.l.b16 %v6978
    %v7304 = vunpack.c.h.b16 %v6978
    %v7305 = vunpack.c.l.b16 %v6979
    %v7306 = vunpack.c.h.b16 %v6979
    %v7307 = vunpack.c.l.b16 %v6980
    %v7308 = vunpack.c.h.b16 %v6980
    %v7309 = vunpack.c.l.b16 %v6981
    %v7310 = vunpack.c.h.b16 %v6981
    %v7311 = vunpack.c.l.b16 %v6982
    %v7312 = vunpack.c.h.b16 %v6982
    %v7313 = vunpack.c.l.b16 %v6983
    %v7314 = vunpack.c.h.b16 %v6983
    %v7315 = vunpack.c.l.b16 %v6984
    %v7316 = vunpack.c.h.b16 %v6984
    %v7317 = vunpack.c.l.b16 %v6985
    %v7318 = vunpack.c.h.b16 %v6985
    %v7319 = vunpack.c.l.b16 %v6986
    %v7320 = vunpack.c.h.b16 %v6986
    %v7321 = vunpack.c.l.b16 %v6987
    %v7322 = vunpack.c.h.b16 %v6987
    %v7323 = vunpack.c.l.b16 %v6988
    %v7324 = vunpack.c.h.b16 %v6988
    %v7325 = vunpack.c.l.b16 %v6989
    %v7326 = vunpack.c.h.b16 %v6989
    %v7327 = vunpack.c.l.b16 %v6990
    %v7328 = vunpack.c.h.b16 %v6990
    %v7329 = vunpack.c.l.b16 %v6991
    %v7330 = vunpack.c.h.b16 %v6991
    %v7331 = vunpack.c.l.b16 %v6992
    %v7332 = vunpack.c.h.b16 %v6992
    %v7333 = vunpack.c.l.b16 %v6993
    %v7334 = vunpack.c.h.b16 %v6993
    %v7335 = vunpack.c.l.b16 %v6994
    %v7336 = vunpack.c.h.b16 %v6994
    %v7337 = vunpack.c.l.b16 %v6995
    %v7338 = vunpack.c.h.b16 %v6995
    %v7339 = vunpack.c.l.b16 %v6996
    %v7340 = vunpack.c.h.b16 %v6996
    %v7341 = vunpack.c.l.b16 %v6997
    %v7342 = vunpack.c.h.b16 %v6997
    %v7343 = vunpack.c.l.b16 %v6998
    %v7344 = vunpack.c.h.b16 %v6998
    %v7345 = vunpack.c.l.b16 %v6999
    %v7346 = vunpack.c.h.b16 %v6999
    %v7347 = vunpack.c.l.b16 %v7000
    %v7348 = vunpack.c.h.b16 %v7000
    %v7349 = vunpack.c.l.b16 %v7001
    %v7350 = vunpack.c.h.b16 %v7001
    %v7351 = vunpack.c.l.b16 %v7002
    %v7352 = vunpack.c.h.b16 %v7002
    %v7353 = vunpack.c.l.b16 %v7003
    %v7354 = vunpack.c.h.b16 %v7003
    %v7355 = vunpack.c.l.b16 %v7004
    %v7356 = vunpack.c.h.b16 %v7004
    %v7357 = vunpack.c.l.b16 %v7005
    %v7358 = vunpack.c.h.b16 %v7005
    %v7359 = vunpack.c.l.b16 %v7006
    %v7360 = vunpack.c.h.b16 %v7006
    %v7361 = vunpack.c.l.b16 %v7007
    %v7362 = vunpack.c.h.b16 %v7007
    %v7363 = vunpack.c.l.b16 %v7008
    %v7364 = vunpack.c.h.b16 %v7008
    %v7365 = vunpack.c.l.b16 %v7009
    %v7366 = vunpack.c.h.b16 %v7009
    %v7367 = vunpack.c.l.b16 %v7010
    %v7368 = vunpack.c.h.b16 %v7010
    %v7369 = vunpack.c.l.b16 %v7011
    %v7370 = vunpack.c.h.b16 %v7011
    %v7371 = vunpack.c.l.b16 %v7012
    %v7372 = vunpack.c.h.b16 %v7012
    %v7373 = vunpack.c.l.b16 %v7013
    %v7374 = vunpack.c.h.b16 %v7013
    %v7375 = vunpack.c.l.b16 %v7014
    %v7376 = vunpack.c.h.b16 %v7014
    %v7377 = vunpack.c.l.b16 %v7015
    %v7378 = vunpack.c.h.b16 %v7015
    %v7379 = vunpack.c.l.b16 %v7016
    %v7380 = vunpack.c.h.b16 %v7016
    %v7381 = vunpack.c.l.b16 %v7017
    %v7382 = vunpack.c.h.b16 %v7017
    %v7383 = vunpack.c.l.b16 %v7018
    %v7384 = vunpack.c.h.b16 %v7018
    %v7385 = vunpack.c.l.b16 %v7019
    %v7386 = vunpack.c.h.b16 %v7019
    %v7387 = vunpack.c.l.b16 %v7020
    %v7388 = vunpack.c.h.b16 %v7020
    %v7389 = vunpack.c.l.b16 %v7021
    %v7390 = vunpack.c.h.b16 %v7021
    %v7391 = vunpack.c.l.b16 %v7022
    %v7392 = vunpack.c.h.b16 %v7022
    %v7393 = vunpack.c.l.b16 %v7023
    %v7394 = vunpack.c.h.b16 %v7023
    %v7395 = vunpack.c.l.b16 %v7024
    %v7396 = vunpack.c.h.b16 %v7024
    %v7397 = vunpack.c.l.b16 %v7025
    %v7398 = vunpack.c.h.b16 %v7025
    %v7399 = vunpack.c.l.b16 %v7026
    %v7400 = vunpack.c.h.b16 %v7026
    %v7401 = vunpack.c.l.b16 %v7027
    %v7402 = vunpack.c.h.b16 %v7027
    %v7403 = vunpack.c.l.b16 %v7028
    %v7404 = vunpack.c.h.b16 %v7028
    %v7405 = vunpack.c.l.b16 %v7029
    %v7406 = vunpack.c.h.b16 %v7029
    %v7407 = vunpack.c.l.b16 %v7030
    %v7408 = vunpack.c.h.b16 %v7030
    %v7409 = vunpack.c.l.b16 %v7031
    %v7410 = vunpack.c.h.b16 %v7031
    %v7411 = vunpack.c.l.b16 %v7032
    %v7412 = vunpack.c.h.b16 %v7032
    %v7413 = vunpack.c.l.b16 %v7033
    %v7414 = vunpack.c.h.b16 %v7033
    %v7415 = vunpack.c.l.b16 %v7034
    %v7416 = vunpack.c.h.b16 %v7034
    %v7417 = vunpack.c.l.b16 %v7035
    %v7418 = vunpack.c.h.b16 %v7035
    %v7419 = vunpack.c.l.b16 %v7036
    %v7420 = vunpack.c.h.b16 %v7036
    %v7421 = vunpack.c.l.b16 %v7037
    %v7422 = vunpack.c.h.b16 %v7037
    %v7423 = vunpack.c.l.b16 %v7038
    %v7424 = vunpack.c.h.b16 %v7038
    %v7425 = vunpack.c.l.b16 %v7039
    %v7426 = vunpack.c.h.b16 %v7039
    %v7427 = vunpack.c.l.b16 %v7040
    %v7428 = vunpack.c.h.b16 %v7040
    %v7429 = vunpack.c.l.b16 %v7041
    %v7430 = vunpack.c.h.b16 %v7041
    %v7431 = vunpack.c.l.b16 %v7042
    %v7432 = vunpack.c.h.b16 %v7042
    %v7433 = vunpack.c.l.b16 %v7043
    %v7434 = vunpack.c.h.b16 %v7043
    %v7435 = vunpack.c.l.b16 %v7044
    %v7436 = vunpack.c.h.b16 %v7044
    %v7437 = vunpack.c.l.b16 %v7045
    %v7438 = vunpack.c.h.b16 %v7045
    %v7439 = vunpack.c.l.b16 %v7046
    %v7440 = vunpack.c.h.b16 %v7046
    %v7441 = vunpack.c.l.b16 %v7047
    %v7442 = vunpack.c.h.b16 %v7047
    %v7443 = vunpack.c.l.b16 %v7048
    %v7444 = vunpack.c.h.b16 %v7048
    %v7445 = vunpack.c.l.b16 %v7049
    %v7446 = vunpack.c.h.b16 %v7049
    %v7447 = vunpack.c.l.b16 %v7050
    %v7448 = vunpack.c.h.b16 %v7050
    %v7449 = vunpack.c.l.b16 %v7051
    %v7450 = vunpack.c.h.b16 %v7051
    %v7451 = vunpack.c.l.b16 %v7052
    %v7452 = vunpack.c.h.b16 %v7052
    %v7453 = vunpack.c.l.b16 %v7053
    %v7454 = vunpack.c.h.b16 %v7053
    %v7455 = vunpack.c.l.b16 %v7054
    %v7456 = vunpack.c.h.b16 %v7054
    %v7457 = vunpack.c.l.b16 %v7055
    %v7458 = vunpack.c.h.b16 %v7055
    %v7459 = vpack.c.b16 %v7271, %v7267
    %v7460 = vpack.c.b16 %v7272, %v7268
    %v7461 = vpack.c.b16 %v7273, %v7269
    %v7462 = vpack.c.b16 %v7274, %v7270
    %v7463 = vpack.c.b16 %v7279, %v7275
    %v7464 = vpack.c.b16 %v7280, %v7276
    %v7465 = vpack.c.b16 %v7281, %v7277
    %v7466 = vpack.c.b16 %v7282, %v7278
    %v7467 = vpack.c.b16 %v7287, %v7283
    %v7468 = vpack.c.b16 %v7288, %v7284
    %v7469 = vpack.c.b16 %v7289, %v7285
    %v7470 = vpack.c.b16 %v7290, %v7286
    %v7471 = vpack.c.b16 %v7295, %v7291
    %v7472 = vpack.c.b16 %v7296, %v7292
    %v7473 = vpack.c.b16 %v7297, %v7293
    %v7474 = vpack.c.b16 %v7298, %v7294
    %v7475 = vpack.c.b16 %v7303, %v7299
    %v7476 = vpack.c.b16 %v7304, %v7300
    %v7477 = vpack.c.b16 %v7305, %v7301
    %v7478 = vpack.c.b16 %v7306, %v7302
    %v7479 = vpack.c.b16 %v7311, %v7307
    %v7480 = vpack.c.b16 %v7312, %v7308
    %v7481 = vpack.c.b16 %v7313, %v7309
    %v7482 = vpack.c.b16 %v7314, %v7310
    %v7483 = vpack.c.b16 %v7319, %v7315
    %v7484 = vpack.c.b16 %v7320, %v7316
    %v7485 = vpack.c.b16 %v7321, %v7317
    %v7486 = vpack.c.b16 %v7322, %v7318
    %v7487 = vpack.c.b16 %v7327, %v7323
    %v7488 = vpack.c.b16 %v7328, %v7324
    %v7489 = vpack.c.b16 %v7329, %v7325
    %v7490 = vpack.c.b16 %v7330, %v7326
    %v7491 = vpack.c.b16 %v7335, %v7331
    %v7492 = vpack.c.b16 %v7336, %v7332
    %v7493 = vpack.c.b16 %v7337, %v7333
    %v7494 = vpack.c.b16 %v7338, %v7334
    %v7495 = vpack.c.b16 %v7343, %v7339
    %v7496 = vpack.c.b16 %v7344, %v7340
    %v7497 = vpack.c.b16 %v7345, %v7341
    %v7498 = vpack.c.b16 %v7346, %v7342
    %v7499 = vpack.c.b16 %v7351, %v7347
    %v7500 = vpack.c.b16 %v7352, %v7348
    %v7501 = vpack.c.b16 %v7353, %v7349
    %v7502 = vpack.c.b16 %v7354, %v7350
    %v7503 = vpack.c.b16 %v7359, %v7355
    %v7504 = vpack.c.b16 %v7360, %v7356
    %v7505 = vpack.c.b16 %v7361, %v7357
    %v7506 = vpack.c.b16 %v7362, %v7358
    %v7507 = vpack.c.b16 %v7367, %v7363
    %v7508 = vpack.c.b16 %v7368, %v7364
    %v7509 = vpack.c.b16 %v7369, %v7365
    %v7510 = vpack.c.b16 %v7370, %v7366
    %v7511 = vpack.c.b16 %v7375, %v7371
    %v7512 = vpack.c.b16 %v7376, %v7372
    %v7513 = vpack.c.b16 %v7377, %v7373
    %v7514 = vpack.c.b16 %v7378, %v7374
    %v7515 = vpack.c.b16 %v7383, %v7379
    %v7516 = vpack.c.b16 %v7384, %v7380
    %v7517 = vpack.c.b16 %v7385, %v7381
    %v7518 = vpack.c.b16 %v7386, %v7382
    %v7519 = vpack.c.b16 %v7391, %v7387
    %v7520 = vpack.c.b16 %v7392, %v7388
    %v7521 = vpack.c.b16 %v7393, %v7389
    %v7522 = vpack.c.b16 %v7394, %v7390
    %v7523 = vpack.c.b16 %v7399, %v7395
    %v7524 = vpack.c.b16 %v7400, %v7396
    %v7525 = vpack.c.b16 %v7401, %v7397
    %v7526 = vpack.c.b16 %v7402, %v7398
    %v7527 = vpack.c.b16 %v7407, %v7403
    %v7528 = vpack.c.b16 %v7408, %v7404
    %v7529 = vpack.c.b16 %v7409, %v7405
    %v7530 = vpack.c.b16 %v7410, %v7406
    %v7531 = vpack.c.b16 %v7415, %v7411
    %v7532 = vpack.c.b16 %v7416, %v7412
    %v7533 = vpack.c.b16 %v7417, %v7413
    %v7534 = vpack.c.b16 %v7418, %v7414
    %v7535 = vpack.c.b16 %v7423, %v7419
    %v7536 = vpack.c.b16 %v7424, %v7420
    %v7537 = vpack.c.b16 %v7425, %v7421
    %v7538 = vpack.c.b16 %v7426, %v7422
    %v7539 = vpack.c.b16 %v7431, %v7427
    %v7540 = vpack.c.b16 %v7432, %v7428
    %v7541 = vpack.c.b16 %v7433, %v7429
    %v7542 = vpack.c.b16 %v7434, %v7430
    %v7543 = vpack.c.b16 %v7439, %v7435
    %v7544 = vpack.c.b16 %v7440, %v7436
    %v7545 = vpack.c.b16 %v7441, %v7437
    %v7546 = vpack.c.b16 %v7442, %v7438
    %v7547 = vpack.c.b16 %v7447, %v7443
    %v7548 = vpack.c.b16 %v7448, %v7444
    %v7549 = vpack.c.b16 %v7449, %v7445
    %v7550 = vpack.c.b16 %v7450, %v7446
    %v7551 = vpack.c.b16 %v7455, %v7451
    %v7552 = vpack.c.b16 %v7456, %v7452
    %v7553 = vpack.c.b16 %v7457, %v7453
    %v7554 = vpack.c.b16 %v7458, %v7454
    %7651 = vmatprep.subr.bf16.mxu0 %v7488
    %7652 = vmatpush1.bf16.msra.mxu0 %v7487
    %7653 = vmatprep.subr.bf16.mxu0 %v7484
    %7654 = vmatpush1.bf16.msra.mxu0 %v7483
    %7655 = vmatprep.subr.bf16.mxu0 %v7480
    %7656 = vmatpush1.bf16.msra.mxu0 %v7479
    %7657 = vmatprep.subr.bf16.mxu0 %v7476
    %7658 = vmatpush1.bf16.msra.mxu0 %v7475
    %7659 = vmatprep.subr.bf16.mxu0 %v7472
    %7660 = vmatpush1.bf16.msra.mxu0 %v7471
    %7661 = vmatprep.subr.bf16.mxu0 %v7468
    %7662 = vmatpush1.bf16.msra.mxu0 %v7467
    %7663 = vmatprep.subr.bf16.mxu0 %v7464
    %7664 = vmatpush1.bf16.msra.mxu0 %v7463
    %7665 = vmatprep.subr.bf16.mxu0 %v7460
    %7666 = vmatpush1.bf16.msra.mxu0 %v7459
    %7667 = vmatprep.subr.bf16.mxu0 %v7520
    %7668 = vmatpush2.bf16.msra.mxu0 %v7519
    %7669 = vmatprep.subr.bf16.mxu0 %v7516
    %7670 = vmatpush2.bf16.msra.mxu0 %v7515
    %7671 = vmatprep.subr.bf16.mxu0 %v7512
    %7672 = vmatpush2.bf16.msra.mxu0 %v7511
    %7673 = vmatprep.subr.bf16.mxu0 %v7508
    %7674 = vmatpush2.bf16.msra.mxu0 %v7507
    %7675 = vmatprep.subr.bf16.mxu0 %v7504
    %7676 = vmatpush2.bf16.msra.mxu0 %v7503
    %7677 = vmatprep.subr.bf16.mxu0 %v7500
    %7678 = vmatpush2.bf16.msra.mxu0 %v7499
    %7679 = vmatprep.subr.bf16.mxu0 %v7496
    %7680 = vmatpush2.bf16.msra.mxu0 %v7495
    %7681 = vmatprep.subr.bf16.mxu0 %v7492
    %7682 = vmatpush2.bf16.msra.mxu0 %v7491
    %7683 = vmatprep.mubr.bf16.mxu0 %v7148
    %7684 = vmatmul.mubr.bf16.gmra.mxu0 %v7147
    %v7685 = vpop.f32.mrf.mxu0
    %v7686 = vadd.f32 0.0, %v7685
    %v7687 = vpop.f32.mrf.mxu0
    %v7688 = vadd.f32 0.0, %v7687
    %v7689 = vpop.f32.mrf.mxu0
    %v7690 = vadd.f32 0.0, %v7689
    %v7691 = vpop.f32.mrf.mxu0
    %v7692 = vadd.f32 0.0, %v7691
    %7693 = vmatprep.mubr.bf16.mxu0 %v7151
    %7694 = vmatmul.mubr.bf16.gmra.mxu0 %v7150
    %v7695 = vpop.f32.mrf.mxu0
    %v7696 = vadd.f32 0.0, %v7695
    %v7697 = vpop.f32.mrf.mxu0
    %v7698 = vadd.f32 0.0, %v7697
    %v7699 = vpop.f32.mrf.mxu0
    %v7700 = vadd.f32 0.0, %v7699
    %v7701 = vpop.f32.mrf.mxu0
    %v7702 = vadd.f32 0.0, %v7701
    %7703 = vmatprep.mubr.bf16.mxu0 %v7154
    %7704 = vmatmul.mubr.bf16.gmra.mxu0 %v7153
    %v7705 = vpop.f32.mrf.mxu0
    %v7706 = vadd.f32 0.0, %v7705
    %v7707 = vpop.f32.mrf.mxu0
    %v7708 = vadd.f32 0.0, %v7707
    %v7709 = vpop.f32.mrf.mxu0
    %v7710 = vadd.f32 0.0, %v7709
    %v7711 = vpop.f32.mrf.mxu0
    %v7712 = vadd.f32 0.0, %v7711
    %7713 = vmatprep.mubr.bf16.mxu0 %v7157
    %7714 = vmatmul.mubr.bf16.gmra.mxu0 %v7156
    %v7715 = vpop.f32.mrf.mxu0
    %v7716 = vadd.f32 0.0, %v7715
    %v7717 = vpop.f32.mrf.mxu0
    %v7718 = vadd.f32 0.0, %v7717
    %v7719 = vpop.f32.mrf.mxu0
    %v7720 = vadd.f32 0.0, %v7719
    %v7721 = vpop.f32.mrf.mxu0
    %v7722 = vadd.f32 0.0, %v7721
    %7723 = vdwg.mxu0
    %7724 = vmatprep.subr.bf16.mxu0 %v7552
    %7725 = vmatpush1.bf16.msra.mxu0 %v7551
    %7726 = vmatprep.subr.bf16.mxu0 %v7548
    %7727 = vmatpush1.bf16.msra.mxu0 %v7547
    %7728 = vmatprep.subr.bf16.mxu0 %v7544
    %7729 = vmatpush1.bf16.msra.mxu0 %v7543
    %7730 = vmatprep.subr.bf16.mxu0 %v7540
    %7731 = vmatpush1.bf16.msra.mxu0 %v7539
    %7732 = vmatprep.subr.bf16.mxu0 %v7536
    %7733 = vmatpush1.bf16.msra.mxu0 %v7535
    %7734 = vmatprep.subr.bf16.mxu0 %v7532
    %7735 = vmatpush1.bf16.msra.mxu0 %v7531
    %7736 = vmatprep.subr.bf16.mxu0 %v7528
    %7737 = vmatpush1.bf16.msra.mxu0 %v7527
    %7738 = vmatprep.subr.bf16.mxu0 %v7524
    %7739 = vmatpush1.bf16.msra.mxu0 %v7523
    %7740 = vmatprep.subr.bf16.mxu0 0
    %7741 = vmatpush2.bf16.msra.mxu0 0
    %7742 = vmatprep.subr.bf16.mxu0 0
    %7743 = vmatpush2.bf16.msra.mxu0 0
    %7744 = vmatprep.subr.bf16.mxu0 0
    %7745 = vmatpush2.bf16.msra.mxu0 0
    %7746 = vmatprep.subr.bf16.mxu0 0
    %7747 = vmatpush2.bf16.msra.mxu0 0
    %7748 = vmatprep.subr.bf16.mxu0 0
    %7749 = vmatpush2.bf16.msra.mxu0 0
    %7750 = vmatprep.subr.bf16.mxu0 0
    %7751 = vmatpush2.bf16.msra.mxu0 0
    %7752 = vmatprep.subr.bf16.mxu0 0
    %7753 = vmatpush2.bf16.msra.mxu0 0
    %7754 = vmatprep.subr.bf16.mxu0 0
    %7755 = vmatpush2.bf16.msra.mxu0 0
    %7756 = vmatprep.mubr.bf16.mxu0 0
    %7757 = vmatmul.mubr.bf16.gmra.mxu0 %v7149
    %v7758 = vpop.f32.mrf.mxu0
    %v7759 = vadd.f32 %v7686, %v7758
    %v7760 = vpop.f32.mrf.mxu0
    %v7761 = vadd.f32 %v7688, %v7760
    %v7762 = vpop.f32.mrf.mxu0
    %v7763 = vadd.f32 %v7690, %v7762
    %v7764 = vpop.f32.mrf.mxu0
    %v7765 = vadd.f32 %v7692, %v7764
    %7766 = vmatprep.mubr.bf16.mxu0 0
    %7767 = vmatmul.mubr.bf16.gmra.mxu0 %v7152
    %v7768 = vpop.f32.mrf.mxu0
    %v7769 = vadd.f32 %v7696, %v7768
    %v7770 = vpop.f32.mrf.mxu0
    %v7771 = vadd.f32 %v7698, %v7770
    %v7772 = vpop.f32.mrf.mxu0
    %v7773 = vadd.f32 %v7700, %v7772
    %v7774 = vpop.f32.mrf.mxu0
    %v7775 = vadd.f32 %v7702, %v7774
    %7776 = vmatprep.mubr.bf16.mxu0 0
    %7777 = vmatmul.mubr.bf16.gmra.mxu0 %v7155
    %v7778 = vpop.f32.mrf.mxu0
    %v7779 = vadd.f32 %v7706, %v7778
    %v7780 = vpop.f32.mrf.mxu0
    %v7781 = vadd.f32 %v7708, %v7780
    %v7782 = vpop.f32.mrf.mxu0
    %v7783 = vadd.f32 %v7710, %v7782
    %v7784 = vpop.f32.mrf.mxu0
    %v7785 = vadd.f32 %v7712, %v7784
    %7786 = vmatprep.mubr.bf16.mxu0 0
    %7787 = vmatmul.mubr.bf16.gmra.mxu0 %v7158
    %v7788 = vpop.f32.mrf.mxu0
    %v7789 = vadd.f32 %v7716, %v7788
    %v7790 = vpop.f32.mrf.mxu0
    %v7791 = vadd.f32 %v7718, %v7790
    %v7792 = vpop.f32.mrf.mxu0
    %v7793 = vadd.f32 %v7720, %v7792
    %v7794 = vpop.f32.mrf.mxu0
    %v7795 = vadd.f32 %v7722, %v7794
    %7796 = vdwg.mxu0
    %7797 = vmatprep.subr.bf16.mxu0 %v7490
    %7798 = vmatpush1.bf16.msra.mxu0 %v7489
    %7799 = vmatprep.subr.bf16.mxu0 %v7486
    %7800 = vmatpush1.bf16.msra.mxu0 %v7485
    %7801 = vmatprep.subr.bf16.mxu0 %v7482
    %7802 = vmatpush1.bf16.msra.mxu0 %v7481
    %7803 = vmatprep.subr.bf16.mxu0 %v7478
    %7804 = vmatpush1.bf16.msra.mxu0 %v7477
    %7805 = vmatprep.subr.bf16.mxu0 %v7474
    %7806 = vmatpush1.bf16.msra.mxu0 %v7473
    %7807 = vmatprep.subr.bf16.mxu0 %v7470
    %7808 = vmatpush1.bf16.msra.mxu0 %v7469
    %7809 = vmatprep.subr.bf16.mxu0 %v7466
    %7810 = vmatpush1.bf16.msra.mxu0 %v7465
    %7811 = vmatprep.subr.bf16.mxu0 %v7462
    %7812 = vmatpush1.bf16.msra.mxu0 %v7461
    %7813 = vmatprep.subr.bf16.mxu0 %v7522
    %7814 = vmatpush2.bf16.msra.mxu0 %v7521
    %7815 = vmatprep.subr.bf16.mxu0 %v7518
    %7816 = vmatpush2.bf16.msra.mxu0 %v7517
    %7817 = vmatprep.subr.bf16.mxu0 %v7514
    %7818 = vmatpush2.bf16.msra.mxu0 %v7513
    %7819 = vmatprep.subr.bf16.mxu0 %v7510
    %7820 = vmatpush2.bf16.msra.mxu0 %v7509
    %7821 = vmatprep.subr.bf16.mxu0 %v7506
    %7822 = vmatpush2.bf16.msra.mxu0 %v7505
    %7823 = vmatprep.subr.bf16.mxu0 %v7502
    %7824 = vmatpush2.bf16.msra.mxu0 %v7501
    %7825 = vmatprep.subr.bf16.mxu0 %v7498
    %7826 = vmatpush2.bf16.msra.mxu0 %v7497
    %7827 = vmatprep.subr.bf16.mxu0 %v7494
    %7828 = vmatpush2.bf16.msra.mxu0 %v7493
    %7829 = vmatprep.mubr.bf16.mxu0 %v7148
    %7830 = vmatmul.mubr.bf16.gmra.mxu0 %v7147
    %v7831 = vpop.f32.mrf.mxu0
    %v7832 = vadd.f32 0.0, %v7831
    %v7833 = vpop.f32.mrf.mxu0
    %v7834 = vadd.f32 0.0, %v7833
    %v7835 = vpop.f32.mrf.mxu0
    %v7836 = vadd.f32 0.0, %v7835
    %v7837 = vpop.f32.mrf.mxu0
    %v7838 = vadd.f32 0.0, %v7837
    %7839 = vmatprep.mubr.bf16.mxu0 %v7151
    %7840 = vmatmul.mubr.bf16.gmra.mxu0 %v7150
    %v7841 = vpop.f32.mrf.mxu0
    %v7842 = vadd.f32 0.0, %v7841
    %v7843 = vpop.f32.mrf.mxu0
    %v7844 = vadd.f32 0.0, %v7843
    %v7845 = vpop.f32.mrf.mxu0
    %v7846 = vadd.f32 0.0, %v7845
    %v7847 = vpop.f32.mrf.mxu0
    %v7848 = vadd.f32 0.0, %v7847
    %7849 = vmatprep.mubr.bf16.mxu0 %v7154
    %7850 = vmatmul.mubr.bf16.gmra.mxu0 %v7153
    %v7851 = vpop.f32.mrf.mxu0
    %v7852 = vadd.f32 0.0, %v7851
    %v7853 = vpop.f32.mrf.mxu0
    %v7854 = vadd.f32 0.0, %v7853
    %v7855 = vpop.f32.mrf.mxu0
    %v7856 = vadd.f32 0.0, %v7855
    %v7857 = vpop.f32.mrf.mxu0
    %v7858 = vadd.f32 0.0, %v7857
    %7859 = vmatprep.mubr.bf16.mxu0 %v7157
    %7860 = vmatmul.mubr.bf16.gmra.mxu0 %v7156
    %v7861 = vpop.f32.mrf.mxu0
    %v7862 = vadd.f32 0.0, %v7861
    %v7863 = vpop.f32.mrf.mxu0
    %v7864 = vadd.f32 0.0, %v7863
    %v7865 = vpop.f32.mrf.mxu0
    %v7866 = vadd.f32 0.0, %v7865
    %v7867 = vpop.f32.mrf.mxu0
    %v7868 = vadd.f32 0.0, %v7867
    %7869 = vdwg.mxu0
    %7870 = vmatprep.subr.bf16.mxu0 %v7554
    %7871 = vmatpush1.bf16.msra.mxu0 %v7553
    %7872 = vmatprep.subr.bf16.mxu0 %v7550
    %7873 = vmatpush1.bf16.msra.mxu0 %v7549
    %7874 = vmatprep.subr.bf16.mxu0 %v7546
    %7875 = vmatpush1.bf16.msra.mxu0 %v7545
    %7876 = vmatprep.subr.bf16.mxu0 %v7542
    %7877 = vmatpush1.bf16.msra.mxu0 %v7541
    %7878 = vmatprep.subr.bf16.mxu0 %v7538
    %7879 = vmatpush1.bf16.msra.mxu0 %v7537
    %7880 = vmatprep.subr.bf16.mxu0 %v7534
    %7881 = vmatpush1.bf16.msra.mxu0 %v7533
    %7882 = vmatprep.subr.bf16.mxu0 %v7530
    %7883 = vmatpush1.bf16.msra.mxu0 %v7529
    %7884 = vmatprep.subr.bf16.mxu0 %v7526
    %7885 = vmatpush1.bf16.msra.mxu0 %v7525
    %7886 = vmatprep.subr.bf16.mxu0 0
    %7887 = vmatpush2.bf16.msra.mxu0 0
    %7888 = vmatprep.subr.bf16.mxu0 0
    %7889 = vmatpush2.bf16.msra.mxu0 0
    %7890 = vmatprep.subr.bf16.mxu0 0
    %7891 = vmatpush2.bf16.msra.mxu0 0
    %7892 = vmatprep.subr.bf16.mxu0 0
    %7893 = vmatpush2.bf16.msra.mxu0 0
    %7894 = vmatprep.subr.bf16.mxu0 0
    %7895 = vmatpush2.bf16.msra.mxu0 0
    %7896 = vmatprep.subr.bf16.mxu0 0
    %7897 = vmatpush2.bf16.msra.mxu0 0
    %7898 = vmatprep.subr.bf16.mxu0 0
    %7899 = vmatpush2.bf16.msra.mxu0 0
    %7900 = vmatprep.subr.bf16.mxu0 0
    %7901 = vmatpush2.bf16.msra.mxu0 0
    %7902 = vmatprep.mubr.bf16.mxu0 0
    %7903 = vmatmul.mubr.bf16.gmra.mxu0 %v7149
    %v7904 = vpop.f32.mrf.mxu0
    %v7905 = vadd.f32 %v7832, %v7904
    %v7906 = vpop.f32.mrf.mxu0
    %v7907 = vadd.f32 %v7834, %v7906
    %v7908 = vpop.f32.mrf.mxu0
    %v7909 = vadd.f32 %v7836, %v7908
    %v7910 = vpop.f32.mrf.mxu0
    %v7911 = vadd.f32 %v7838, %v7910
    %7912 = vmatprep.mubr.bf16.mxu0 0
    %7913 = vmatmul.mubr.bf16.gmra.mxu0 %v7152
    %v7914 = vpop.f32.mrf.mxu0
    %v7915 = vadd.f32 %v7842, %v7914
    %v7916 = vpop.f32.mrf.mxu0
    %v7917 = vadd.f32 %v7844, %v7916
    %v7918 = vpop.f32.mrf.mxu0
    %v7919 = vadd.f32 %v7846, %v7918
    %v7920 = vpop.f32.mrf.mxu0
    %v7921 = vadd.f32 %v7848, %v7920
    %7922 = vmatprep.mubr.bf16.mxu0 0
    %7923 = vmatmul.mubr.bf16.gmra.mxu0 %v7155
    %v7924 = vpop.f32.mrf.mxu0
    %v7925 = vadd.f32 %v7852, %v7924
    %v7926 = vpop.f32.mrf.mxu0
    %v7927 = vadd.f32 %v7854, %v7926
    %v7928 = vpop.f32.mrf.mxu0
    %v7929 = vadd.f32 %v7856, %v7928
    %v7930 = vpop.f32.mrf.mxu0
    %v7931 = vadd.f32 %v7858, %v7930
    %7932 = vmatprep.mubr.bf16.mxu0 0
    %7933 = vmatmul.mubr.bf16.gmra.mxu0 %v7158
    %v7934 = vpop.f32.mrf.mxu0
    %v7935 = vadd.f32 %v7862, %v7934
    %v7936 = vpop.f32.mrf.mxu0
    %v7937 = vadd.f32 %v7864, %v7936
    %v7938 = vpop.f32.mrf.mxu0
    %v7939 = vadd.f32 %v7866, %v7938
    %v7940 = vpop.f32.mrf.mxu0
    %v7941 = vadd.f32 %v7868, %v7940
    %7942 = vdwg.mxu0
    %v7943 = vadd.f32 %v6927, %v7759
    %v7944 = vadd.f32 %v6928, %v7761
    %v7945 = vadd.f32 %v6929, %v7905
    %v7946 = vadd.f32 %v6930, %v7907
    %v7947 = vadd.f32 %v6931, %v7763
    %v7948 = vadd.f32 %v6932, %v7765
    %v7949 = vadd.f32 %v6933, %v7909
    %v7950 = vadd.f32 %v6934, %v7911
    %v7951 = vadd.f32 %v6935, %v7769
    %v7952 = vadd.f32 %v6936, %v7771
    %v7953 = vadd.f32 %v6937, %v7915
    %v7954 = vadd.f32 %v6938, %v7917
    %v7955 = vadd.f32 %v6939, %v7773
    %v7956 = vadd.f32 %v6940, %v7775
    %v7957 = vadd.f32 %v6941, %v7919
    %v7958 = vadd.f32 %v6942, %v7921
    %v7959 = vadd.f32 %v6943, %v7779
    %v7960 = vadd.f32 %v6944, %v7781
    %v7961 = vadd.f32 %v6945, %v7925
    %v7962 = vadd.f32 %v6946, %v7927
    %v7963 = vadd.f32 %v6947, %v7783
    %v7964 = vadd.f32 %v6948, %v7785
    %v7965 = vadd.f32 %v6949, %v7929
    %v7966 = vadd.f32 %v6950, %v7931
    %v7967 = vadd.f32 %v6951, %v7789
    %v7968 = vadd.f32 %v6952, %v7791
    %v7969 = vadd.f32 %v6953, %v7935
    %v7970 = vadd.f32 %v6954, %v7937
    %v7971 = vadd.f32 %v6955, %v7793
    %v7972 = vadd.f32 %v6956, %v7795
    %v7973 = vadd.f32 %v6957, %v7939
    %v7974 = vadd.f32 %v6958, %v7941
    %v7975 = vmax.f32 %v7943, %v7945
    %v7976 = vmax.f32 %v7944, %v7946
    %v7977 = vmax.f32 %v7947, %v7949
    %v7978 = vmax.f32 %v7948, %v7950
    %v7979 = vmax.f32 %v7951, %v7953
    %v7980 = vmax.f32 %v7952, %v7954
    %v7981 = vmax.f32 %v7955, %v7957
    %v7982 = vmax.f32 %v7956, %v7958
    %v7983 = vmax.f32 %v7959, %v7961
    %v7984 = vmax.f32 %v7960, %v7962
    %v7985 = vmax.f32 %v7963, %v7965
    %v7986 = vmax.f32 %v7964, %v7966
    %v7987 = vmax.f32 %v7967, %v7969
    %v7988 = vmax.f32 %v7968, %v7970
    %v7989 = vmax.f32 %v7971, %v7973
    %v7990 = vmax.f32 %v7972, %v7974
    %v8007 = vcombine.low %v7975, %v7976
    %v8008 = vcombine.high %v7975, %v7976
    %v8010 = vunpack.c.l.s4 1983009808
    %v8011 = vunpack.c.0.s8 %v8010
    %v8012 = vlaneseq
    %v8013 = vshrl.u32 %v8012, 7
    %v8014 = vsub.s32 %v8011, %v8013
    %v8015 = vrot.slane %v8007, %v8014
    %v8017 = vunpack.c.l.s4 1983009808
    %v8018 = vunpack.c.0.s8 %v8017
    %v8019 = vlaneseq
    %v8020 = vshrl.u32 %v8019, 7
    %v8021 = vsub.s32 %v8018, %v8020
    %v8022 = vrot.slane %v8008, %v8021
    %v8023 = vcombine.high %v8015, %v8015
    %v8024 = vcombine.high %v8022, %v8022
    %v8025 = vcombine.low %v7977, %v7978
    %v8026 = vcombine.high %v7977, %v7978
    %v8028 = vunpack.c.l.s4 1983009808
    %v8029 = vunpack.c.0.s8 %v8028
    %v8030 = vlaneseq
    %v8031 = vshrl.u32 %v8030, 7
    %v8032 = vsub.s32 %v8029, %v8031
    %v8033 = vrot.slane %v8025, %v8032
    %v8035 = vunpack.c.l.s4 1983009808
    %v8036 = vunpack.c.0.s8 %v8035
    %v8037 = vlaneseq
    %v8038 = vshrl.u32 %v8037, 7
    %v8039 = vsub.s32 %v8036, %v8038
    %v8040 = vrot.slane %v8026, %v8039
    %v8041 = vcombine.high %v8033, %v8033
    %v8042 = vcombine.high %v8040, %v8040
    %v8043 = vcombine.low %v7979, %v7980
    %v8044 = vcombine.high %v7979, %v7980
    %v8046 = vunpack.c.l.s4 1983009808
    %v8047 = vunpack.c.0.s8 %v8046
    %v8048 = vlaneseq
    %v8049 = vshrl.u32 %v8048, 7
    %v8050 = vsub.s32 %v8047, %v8049
    %v8051 = vrot.slane %v8043, %v8050
    %v8053 = vunpack.c.l.s4 1983009808
    %v8054 = vunpack.c.0.s8 %v8053
    %v8055 = vlaneseq
    %v8056 = vshrl.u32 %v8055, 7
    %v8057 = vsub.s32 %v8054, %v8056
    %v8058 = vrot.slane %v8044, %v8057
    %v8059 = vcombine.high %v8051, %v8051
    %v8060 = vcombine.high %v8058, %v8058
    %v8061 = vcombine.low %v7981, %v7982
    %v8062 = vcombine.high %v7981, %v7982
    %v8064 = vunpack.c.l.s4 1983009808
    %v8065 = vunpack.c.0.s8 %v8064
    %v8066 = vlaneseq
    %v8067 = vshrl.u32 %v8066, 7
    %v8068 = vsub.s32 %v8065, %v8067
    %v8069 = vrot.slane %v8061, %v8068
    %v8071 = vunpack.c.l.s4 1983009808
    %v8072 = vunpack.c.0.s8 %v8071
    %v8073 = vlaneseq
    %v8074 = vshrl.u32 %v8073, 7
    %v8075 = vsub.s32 %v8072, %v8074
    %v8076 = vrot.slane %v8062, %v8075
    %v8077 = vcombine.high %v8069, %v8069
    %v8078 = vcombine.high %v8076, %v8076
    %v8079 = vcombine.low %v7983, %v7984
    %v8080 = vcombine.high %v7983, %v7984
    %v8082 = vunpack.c.l.s4 1983009808
    %v8083 = vunpack.c.0.s8 %v8082
    %v8084 = vlaneseq
    %v8085 = vshrl.u32 %v8084, 7
    %v8086 = vsub.s32 %v8083, %v8085
    %v8087 = vrot.slane %v8079, %v8086
    %v8089 = vunpack.c.l.s4 1983009808
    %v8090 = vunpack.c.0.s8 %v8089
    %v8091 = vlaneseq
    %v8092 = vshrl.u32 %v8091, 7
    %v8093 = vsub.s32 %v8090, %v8092
    %v8094 = vrot.slane %v8080, %v8093
    %v8095 = vcombine.high %v8087, %v8087
    %v8096 = vcombine.high %v8094, %v8094
    %v8097 = vcombine.low %v7985, %v7986
    %v8098 = vcombine.high %v7985, %v7986
    %v8100 = vunpack.c.l.s4 1983009808
    %v8101 = vunpack.c.0.s8 %v8100
    %v8102 = vlaneseq
    %v8103 = vshrl.u32 %v8102, 7
    %v8104 = vsub.s32 %v8101, %v8103
    %v8105 = vrot.slane %v8097, %v8104
    %v8107 = vunpack.c.l.s4 1983009808
    %v8108 = vunpack.c.0.s8 %v8107
    %v8109 = vlaneseq
    %v8110 = vshrl.u32 %v8109, 7
    %v8111 = vsub.s32 %v8108, %v8110
    %v8112 = vrot.slane %v8098, %v8111
    %v8113 = vcombine.high %v8105, %v8105
    %v8114 = vcombine.high %v8112, %v8112
    %v8115 = vcombine.low %v7987, %v7988
    %v8116 = vcombine.high %v7987, %v7988
    %v8118 = vunpack.c.l.s4 1983009808
    %v8119 = vunpack.c.0.s8 %v8118
    %v8120 = vlaneseq
    %v8121 = vshrl.u32 %v8120, 7
    %v8122 = vsub.s32 %v8119, %v8121
    %v8123 = vrot.slane %v8115, %v8122
    %v8125 = vunpack.c.l.s4 1983009808
    %v8126 = vunpack.c.0.s8 %v8125
    %v8127 = vlaneseq
    %v8128 = vshrl.u32 %v8127, 7
    %v8129 = vsub.s32 %v8126, %v8128
    %v8130 = vrot.slane %v8116, %v8129
    %v8131 = vcombine.high %v8123, %v8123
    %v8132 = vcombine.high %v8130, %v8130
    %v8133 = vcombine.low %v7989, %v7990
    %v8134 = vcombine.high %v7989, %v7990
    %v8136 = vunpack.c.l.s4 1983009808
    %v8137 = vunpack.c.0.s8 %v8136
    %v8138 = vlaneseq
    %v8139 = vshrl.u32 %v8138, 7
    %v8140 = vsub.s32 %v8137, %v8139
    %v8141 = vrot.slane %v8133, %v8140
    %v8143 = vunpack.c.l.s4 1983009808
    %v8144 = vunpack.c.0.s8 %v8143
    %v8145 = vlaneseq
    %v8146 = vshrl.u32 %v8145, 7
    %v8147 = vsub.s32 %v8144, %v8146
    %v8148 = vrot.slane %v8134, %v8147
    %v8149 = vcombine.high %v8141, %v8141
    %v8150 = vcombine.high %v8148, %v8148
    %v8152 = vunpack.c.l.s4 1983009808
    %v8153 = vunpack.c.0.s8 %v8152
    %v8154 = vlaneseq
    %v8155 = vshrl.u32 %v8154, 7
    %v8156 = vsub.s32 %v8153, %v8155
    %v8157 = vrot.slane %v8015, %v8156
    %v8158 = vcombine.high %v8157, %v8157
    %v8160 = vunpack.c.l.s4 1983009808
    %v8161 = vunpack.c.0.s8 %v8160
    %v8162 = vlaneseq
    %v8163 = vshrl.u32 %v8162, 7
    %v8164 = vsub.s32 %v8161, %v8163
    %v8165 = vrot.slane %v8023, %v8164
    %v8166 = vcombine.high %v8165, %v8165
    %v8168 = vunpack.c.l.s4 1983009808
    %v8169 = vunpack.c.0.s8 %v8168
    %v8170 = vlaneseq
    %v8171 = vshrl.u32 %v8170, 7
    %v8172 = vsub.s32 %v8169, %v8171
    %v8173 = vrot.slane %v8022, %v8172
    %v8174 = vcombine.high %v8173, %v8173
    %v8176 = vunpack.c.l.s4 1983009808
    %v8177 = vunpack.c.0.s8 %v8176
    %v8178 = vlaneseq
    %v8179 = vshrl.u32 %v8178, 7
    %v8180 = vsub.s32 %v8177, %v8179
    %v8181 = vrot.slane %v8024, %v8180
    %v8182 = vcombine.high %v8181, %v8181
    %v8184 = vunpack.c.l.s4 1983009808
    %v8185 = vunpack.c.0.s8 %v8184
    %v8186 = vlaneseq
    %v8187 = vshrl.u32 %v8186, 7
    %v8188 = vsub.s32 %v8185, %v8187
    %v8189 = vrot.slane %v8033, %v8188
    %v8190 = vcombine.high %v8189, %v8189
    %v8192 = vunpack.c.l.s4 1983009808
    %v8193 = vunpack.c.0.s8 %v8192
    %v8194 = vlaneseq
    %v8195 = vshrl.u32 %v8194, 7
    %v8196 = vsub.s32 %v8193, %v8195
    %v8197 = vrot.slane %v8041, %v8196
    %v8198 = vcombine.high %v8197, %v8197
    %v8200 = vunpack.c.l.s4 1983009808
    %v8201 = vunpack.c.0.s8 %v8200
    %v8202 = vlaneseq
    %v8203 = vshrl.u32 %v8202, 7
    %v8204 = vsub.s32 %v8201, %v8203
    %v8205 = vrot.slane %v8040, %v8204
    %v8206 = vcombine.high %v8205, %v8205
    %v8208 = vunpack.c.l.s4 1983009808
    %v8209 = vunpack.c.0.s8 %v8208
    %v8210 = vlaneseq
    %v8211 = vshrl.u32 %v8210, 7
    %v8212 = vsub.s32 %v8209, %v8211
    %v8213 = vrot.slane %v8042, %v8212
    %v8214 = vcombine.high %v8213, %v8213
    %v8216 = vunpack.c.l.s4 1983009808
    %v8217 = vunpack.c.0.s8 %v8216
    %v8218 = vlaneseq
    %v8219 = vshrl.u32 %v8218, 7
    %v8220 = vsub.s32 %v8217, %v8219
    %v8221 = vrot.slane %v8051, %v8220
    %v8222 = vcombine.high %v8221, %v8221
    %v8224 = vunpack.c.l.s4 1983009808
    %v8225 = vunpack.c.0.s8 %v8224
    %v8226 = vlaneseq
    %v8227 = vshrl.u32 %v8226, 7
    %v8228 = vsub.s32 %v8225, %v8227
    %v8229 = vrot.slane %v8059, %v8228
    %v8230 = vcombine.high %v8229, %v8229
    %v8232 = vunpack.c.l.s4 1983009808
    %v8233 = vunpack.c.0.s8 %v8232
    %v8234 = vlaneseq
    %v8235 = vshrl.u32 %v8234, 7
    %v8236 = vsub.s32 %v8233, %v8235
    %v8237 = vrot.slane %v8058, %v8236
    %v8238 = vcombine.high %v8237, %v8237
    %v8240 = vunpack.c.l.s4 1983009808
    %v8241 = vunpack.c.0.s8 %v8240
    %v8242 = vlaneseq
    %v8243 = vshrl.u32 %v8242, 7
    %v8244 = vsub.s32 %v8241, %v8243
    %v8245 = vrot.slane %v8060, %v8244
    %v8246 = vcombine.high %v8245, %v8245
    %v8248 = vunpack.c.l.s4 1983009808
    %v8249 = vunpack.c.0.s8 %v8248
    %v8250 = vlaneseq
    %v8251 = vshrl.u32 %v8250, 7
    %v8252 = vsub.s32 %v8249, %v8251
    %v8253 = vrot.slane %v8069, %v8252
    %v8254 = vcombine.high %v8253, %v8253
    %v8256 = vunpack.c.l.s4 1983009808
    %v8257 = vunpack.c.0.s8 %v8256
    %v8258 = vlaneseq
    %v8259 = vshrl.u32 %v8258, 7
    %v8260 = vsub.s32 %v8257, %v8259
    %v8261 = vrot.slane %v8077, %v8260
    %v8262 = vcombine.high %v8261, %v8261
    %v8264 = vunpack.c.l.s4 1983009808
    %v8265 = vunpack.c.0.s8 %v8264
    %v8266 = vlaneseq
    %v8267 = vshrl.u32 %v8266, 7
    %v8268 = vsub.s32 %v8265, %v8267
    %v8269 = vrot.slane %v8076, %v8268
    %v8270 = vcombine.high %v8269, %v8269
    %v8272 = vunpack.c.l.s4 1983009808
    %v8273 = vunpack.c.0.s8 %v8272
    %v8274 = vlaneseq
    %v8275 = vshrl.u32 %v8274, 7
    %v8276 = vsub.s32 %v8273, %v8275
    %v8277 = vrot.slane %v8078, %v8276
    %v8278 = vcombine.high %v8277, %v8277
    %v8280 = vunpack.c.l.s4 1983009808
    %v8281 = vunpack.c.0.s8 %v8280
    %v8282 = vlaneseq
    %v8283 = vshrl.u32 %v8282, 7
    %v8284 = vsub.s32 %v8281, %v8283
    %v8285 = vrot.slane %v8087, %v8284
    %v8286 = vcombine.high %v8285, %v8285
    %v8288 = vunpack.c.l.s4 1983009808
    %v8289 = vunpack.c.0.s8 %v8288
    %v8290 = vlaneseq
    %v8291 = vshrl.u32 %v8290, 7
    %v8292 = vsub.s32 %v8289, %v8291
    %v8293 = vrot.slane %v8095, %v8292
    %v8294 = vcombine.high %v8293, %v8293
    %v8296 = vunpack.c.l.s4 1983009808
    %v8297 = vunpack.c.0.s8 %v8296
    %v8298 = vlaneseq
    %v8299 = vshrl.u32 %v8298, 7
    %v8300 = vsub.s32 %v8297, %v8299
    %v8301 = vrot.slane %v8094, %v8300
    %v8302 = vcombine.high %v8301, %v8301
    %v8304 = vunpack.c.l.s4 1983009808
    %v8305 = vunpack.c.0.s8 %v8304
    %v8306 = vlaneseq
    %v8307 = vshrl.u32 %v8306, 7
    %v8308 = vsub.s32 %v8305, %v8307
    %v8309 = vrot.slane %v8096, %v8308
    %v8310 = vcombine.high %v8309, %v8309
    %v8312 = vunpack.c.l.s4 1983009808
    %v8313 = vunpack.c.0.s8 %v8312
    %v8314 = vlaneseq
    %v8315 = vshrl.u32 %v8314, 7
    %v8316 = vsub.s32 %v8313, %v8315
    %v8317 = vrot.slane %v8105, %v8316
    %v8318 = vcombine.high %v8317, %v8317
    %v8320 = vunpack.c.l.s4 1983009808
    %v8321 = vunpack.c.0.s8 %v8320
    %v8322 = vlaneseq
    %v8323 = vshrl.u32 %v8322, 7
    %v8324 = vsub.s32 %v8321, %v8323
    %v8325 = vrot.slane %v8113, %v8324
    %v8326 = vcombine.high %v8325, %v8325
    %v8328 = vunpack.c.l.s4 1983009808
    %v8329 = vunpack.c.0.s8 %v8328
    %v8330 = vlaneseq
    %v8331 = vshrl.u32 %v8330, 7
    %v8332 = vsub.s32 %v8329, %v8331
    %v8333 = vrot.slane %v8112, %v8332
    %v8334 = vcombine.high %v8333, %v8333
    %v8336 = vunpack.c.l.s4 1983009808
    %v8337 = vunpack.c.0.s8 %v8336
    %v8338 = vlaneseq
    %v8339 = vshrl.u32 %v8338, 7
    %v8340 = vsub.s32 %v8337, %v8339
    %v8341 = vrot.slane %v8114, %v8340
    %v8342 = vcombine.high %v8341, %v8341
    %v8344 = vunpack.c.l.s4 1983009808
    %v8345 = vunpack.c.0.s8 %v8344
    %v8346 = vlaneseq
    %v8347 = vshrl.u32 %v8346, 7
    %v8348 = vsub.s32 %v8345, %v8347
    %v8349 = vrot.slane %v8123, %v8348
    %v8350 = vcombine.high %v8349, %v8349
    %v8352 = vunpack.c.l.s4 1983009808
    %v8353 = vunpack.c.0.s8 %v8352
    %v8354 = vlaneseq
    %v8355 = vshrl.u32 %v8354, 7
    %v8356 = vsub.s32 %v8353, %v8355
    %v8357 = vrot.slane %v8131, %v8356
    %v8358 = vcombine.high %v8357, %v8357
    %v8360 = vunpack.c.l.s4 1983009808
    %v8361 = vunpack.c.0.s8 %v8360
    %v8362 = vlaneseq
    %v8363 = vshrl.u32 %v8362, 7
    %v8364 = vsub.s32 %v8361, %v8363
    %v8365 = vrot.slane %v8130, %v8364
    %v8366 = vcombine.high %v8365, %v8365
    %v8368 = vunpack.c.l.s4 1983009808
    %v8369 = vunpack.c.0.s8 %v8368
    %v8370 = vlaneseq
    %v8371 = vshrl.u32 %v8370, 7
    %v8372 = vsub.s32 %v8369, %v8371
    %v8373 = vrot.slane %v8132, %v8372
    %v8374 = vcombine.high %v8373, %v8373
    %v8376 = vunpack.c.l.s4 1983009808
    %v8377 = vunpack.c.0.s8 %v8376
    %v8378 = vlaneseq
    %v8379 = vshrl.u32 %v8378, 7
    %v8380 = vsub.s32 %v8377, %v8379
    %v8381 = vrot.slane %v8141, %v8380
    %v8382 = vcombine.high %v8381, %v8381
    %v8384 = vunpack.c.l.s4 1983009808
    %v8385 = vunpack.c.0.s8 %v8384
    %v8386 = vlaneseq
    %v8387 = vshrl.u32 %v8386, 7
    %v8388 = vsub.s32 %v8385, %v8387
    %v8389 = vrot.slane %v8149, %v8388
    %v8390 = vcombine.high %v8389, %v8389
    %v8392 = vunpack.c.l.s4 1983009808
    %v8393 = vunpack.c.0.s8 %v8392
    %v8394 = vlaneseq
    %v8395 = vshrl.u32 %v8394, 7
    %v8396 = vsub.s32 %v8393, %v8395
    %v8397 = vrot.slane %v8148, %v8396
    %v8398 = vcombine.high %v8397, %v8397
    %v8400 = vunpack.c.l.s4 1983009808
    %v8401 = vunpack.c.0.s8 %v8400
    %v8402 = vlaneseq
    %v8403 = vshrl.u32 %v8402, 7
    %v8404 = vsub.s32 %v8401, %v8403
    %v8405 = vrot.slane %v8150, %v8404
    %v8406 = vcombine.high %v8405, %v8405
    %vm8471 = vcmask 1041408
    %v8472 = vsel %vm8471, %v8157, -inf
    %v8473 = vrot.slane %v8472, 4
    %v8474 = vmax.f32 %v8472, %v8473
    %v8475 = vrot.slane %v8474, 2
    %v8476 = vmax.f32 %v8474, %v8475
    %v8477 = vrot.slane %v8476, 1
    %v8478 = vmax.f32 %v8476, %v8477
    %v8479 = vsel %vm8471, %v8158, -inf
    %v8480 = vrot.slane %v8479, 4
    %v8481 = vmax.f32 %v8479, %v8480
    %v8482 = vrot.slane %v8481, 2
    %v8483 = vmax.f32 %v8481, %v8482
    %v8484 = vrot.slane %v8483, 1
    %v8485 = vmax.f32 %v8483, %v8484
    %v8486 = vsel %vm8471, %v8165, -inf
    %v8487 = vrot.slane %v8486, 4
    %v8488 = vmax.f32 %v8486, %v8487
    %v8489 = vrot.slane %v8488, 2
    %v8490 = vmax.f32 %v8488, %v8489
    %v8491 = vrot.slane %v8490, 1
    %v8492 = vmax.f32 %v8490, %v8491
    %v8493 = vsel %vm8471, %v8166, -inf
    %v8494 = vrot.slane %v8493, 4
    %v8495 = vmax.f32 %v8493, %v8494
    %v8496 = vrot.slane %v8495, 2
    %v8497 = vmax.f32 %v8495, %v8496
    %v8498 = vrot.slane %v8497, 1
    %v8499 = vmax.f32 %v8497, %v8498
    %v8500 = vsel %vm8471, %v8173, -inf
    %v8501 = vrot.slane %v8500, 4
    %v8502 = vmax.f32 %v8500, %v8501
    %v8503 = vrot.slane %v8502, 2
    %v8504 = vmax.f32 %v8502, %v8503
    %v8505 = vrot.slane %v8504, 1
    %v8506 = vmax.f32 %v8504, %v8505
    %v8507 = vsel %vm8471, %v8174, -inf
    %v8508 = vrot.slane %v8507, 4
    %v8509 = vmax.f32 %v8507, %v8508
    %v8510 = vrot.slane %v8509, 2
    %v8511 = vmax.f32 %v8509, %v8510
    %v8512 = vrot.slane %v8511, 1
    %v8513 = vmax.f32 %v8511, %v8512
    %v8514 = vsel %vm8471, %v8181, -inf
    %v8515 = vrot.slane %v8514, 4
    %v8516 = vmax.f32 %v8514, %v8515
    %v8517 = vrot.slane %v8516, 2
    %v8518 = vmax.f32 %v8516, %v8517
    %v8519 = vrot.slane %v8518, 1
    %v8520 = vmax.f32 %v8518, %v8519
    %v8521 = vsel %vm8471, %v8182, -inf
    %v8522 = vrot.slane %v8521, 4
    %v8523 = vmax.f32 %v8521, %v8522
    %v8524 = vrot.slane %v8523, 2
    %v8525 = vmax.f32 %v8523, %v8524
    %v8526 = vrot.slane %v8525, 1
    %v8527 = vmax.f32 %v8525, %v8526
    %v8528 = vsel %vm8471, %v8189, -inf
    %v8529 = vrot.slane %v8528, 4
    %v8530 = vmax.f32 %v8528, %v8529
    %v8531 = vrot.slane %v8530, 2
    %v8532 = vmax.f32 %v8530, %v8531
    %v8533 = vrot.slane %v8532, 1
    %v8534 = vmax.f32 %v8532, %v8533
    %v8535 = vsel %vm8471, %v8190, -inf
    %v8536 = vrot.slane %v8535, 4
    %v8537 = vmax.f32 %v8535, %v8536
    %v8538 = vrot.slane %v8537, 2
    %v8539 = vmax.f32 %v8537, %v8538
    %v8540 = vrot.slane %v8539, 1
    %v8541 = vmax.f32 %v8539, %v8540
    %v8542 = vsel %vm8471, %v8197, -inf
    %v8543 = vrot.slane %v8542, 4
    %v8544 = vmax.f32 %v8542, %v8543
    %v8545 = vrot.slane %v8544, 2
    %v8546 = vmax.f32 %v8544, %v8545
    %v8547 = vrot.slane %v8546, 1
    %v8548 = vmax.f32 %v8546, %v8547
    %v8549 = vsel %vm8471, %v8198, -inf
    %v8550 = vrot.slane %v8549, 4
    %v8551 = vmax.f32 %v8549, %v8550
    %v8552 = vrot.slane %v8551, 2
    %v8553 = vmax.f32 %v8551, %v8552
    %v8554 = vrot.slane %v8553, 1
    %v8555 = vmax.f32 %v8553, %v8554
    %v8556 = vsel %vm8471, %v8205, -inf
    %v8557 = vrot.slane %v8556, 4
    %v8558 = vmax.f32 %v8556, %v8557
    %v8559 = vrot.slane %v8558, 2
    %v8560 = vmax.f32 %v8558, %v8559
    %v8561 = vrot.slane %v8560, 1
    %v8562 = vmax.f32 %v8560, %v8561
    %v8563 = vsel %vm8471, %v8206, -inf
    %v8564 = vrot.slane %v8563, 4
    %v8565 = vmax.f32 %v8563, %v8564
    %v8566 = vrot.slane %v8565, 2
    %v8567 = vmax.f32 %v8565, %v8566
    %v8568 = vrot.slane %v8567, 1
    %v8569 = vmax.f32 %v8567, %v8568
    %v8570 = vsel %vm8471, %v8213, -inf
    %v8571 = vrot.slane %v8570, 4
    %v8572 = vmax.f32 %v8570, %v8571
    %v8573 = vrot.slane %v8572, 2
    %v8574 = vmax.f32 %v8572, %v8573
    %v8575 = vrot.slane %v8574, 1
    %v8576 = vmax.f32 %v8574, %v8575
    %v8577 = vsel %vm8471, %v8214, -inf
    %v8578 = vrot.slane %v8577, 4
    %v8579 = vmax.f32 %v8577, %v8578
    %v8580 = vrot.slane %v8579, 2
    %v8581 = vmax.f32 %v8579, %v8580
    %v8582 = vrot.slane %v8581, 1
    %v8583 = vmax.f32 %v8581, %v8582
    %v8584 = vsel %vm8471, %v8221, -inf
    %v8585 = vrot.slane %v8584, 4
    %v8586 = vmax.f32 %v8584, %v8585
    %v8587 = vrot.slane %v8586, 2
    %v8588 = vmax.f32 %v8586, %v8587
    %v8589 = vrot.slane %v8588, 1
    %v8590 = vmax.f32 %v8588, %v8589
    %v8591 = vsel %vm8471, %v8222, -inf
    %v8592 = vrot.slane %v8591, 4
    %v8593 = vmax.f32 %v8591, %v8592
    %v8594 = vrot.slane %v8593, 2
    %v8595 = vmax.f32 %v8593, %v8594
    %v8596 = vrot.slane %v8595, 1
    %v8597 = vmax.f32 %v8595, %v8596
    %v8598 = vsel %vm8471, %v8229, -inf
    %v8599 = vrot.slane %v8598, 4
    %v8600 = vmax.f32 %v8598, %v8599
    %v8601 = vrot.slane %v8600, 2
    %v8602 = vmax.f32 %v8600, %v8601
    %v8603 = vrot.slane %v8602, 1
    %v8604 = vmax.f32 %v8602, %v8603
    %v8605 = vsel %vm8471, %v8230, -inf
    %v8606 = vrot.slane %v8605, 4
    %v8607 = vmax.f32 %v8605, %v8606
    %v8608 = vrot.slane %v8607, 2
    %v8609 = vmax.f32 %v8607, %v8608
    %v8610 = vrot.slane %v8609, 1
    %v8611 = vmax.f32 %v8609, %v8610
    %v8612 = vsel %vm8471, %v8237, -inf
    %v8613 = vrot.slane %v8612, 4
    %v8614 = vmax.f32 %v8612, %v8613
    %v8615 = vrot.slane %v8614, 2
    %v8616 = vmax.f32 %v8614, %v8615
    %v8617 = vrot.slane %v8616, 1
    %v8618 = vmax.f32 %v8616, %v8617
    %v8619 = vsel %vm8471, %v8238, -inf
    %v8620 = vrot.slane %v8619, 4
    %v8621 = vmax.f32 %v8619, %v8620
    %v8622 = vrot.slane %v8621, 2
    %v8623 = vmax.f32 %v8621, %v8622
    %v8624 = vrot.slane %v8623, 1
    %v8625 = vmax.f32 %v8623, %v8624
    %v8626 = vsel %vm8471, %v8245, -inf
    %v8627 = vrot.slane %v8626, 4
    %v8628 = vmax.f32 %v8626, %v8627
    %v8629 = vrot.slane %v8628, 2
    %v8630 = vmax.f32 %v8628, %v8629
    %v8631 = vrot.slane %v8630, 1
    %v8632 = vmax.f32 %v8630, %v8631
    %v8633 = vsel %vm8471, %v8246, -inf
    %v8634 = vrot.slane %v8633, 4
    %v8635 = vmax.f32 %v8633, %v8634
    %v8636 = vrot.slane %v8635, 2
    %v8637 = vmax.f32 %v8635, %v8636
    %v8638 = vrot.slane %v8637, 1
    %v8639 = vmax.f32 %v8637, %v8638
    %v8640 = vsel %vm8471, %v8253, -inf
    %v8641 = vrot.slane %v8640, 4
    %v8642 = vmax.f32 %v8640, %v8641
    %v8643 = vrot.slane %v8642, 2
    %v8644 = vmax.f32 %v8642, %v8643
    %v8645 = vrot.slane %v8644, 1
    %v8646 = vmax.f32 %v8644, %v8645
    %v8647 = vsel %vm8471, %v8254, -inf
    %v8648 = vrot.slane %v8647, 4
    %v8649 = vmax.f32 %v8647, %v8648
    %v8650 = vrot.slane %v8649, 2
    %v8651 = vmax.f32 %v8649, %v8650
    %v8652 = vrot.slane %v8651, 1
    %v8653 = vmax.f32 %v8651, %v8652
    %v8654 = vsel %vm8471, %v8261, -inf
    %v8655 = vrot.slane %v8654, 4
    %v8656 = vmax.f32 %v8654, %v8655
    %v8657 = vrot.slane %v8656, 2
    %v8658 = vmax.f32 %v8656, %v8657
    %v8659 = vrot.slane %v8658, 1
    %v8660 = vmax.f32 %v8658, %v8659
    %v8661 = vsel %vm8471, %v8262, -inf
    %v8662 = vrot.slane %v8661, 4
    %v8663 = vmax.f32 %v8661, %v8662
    %v8664 = vrot.slane %v8663, 2
    %v8665 = vmax.f32 %v8663, %v8664
    %v8666 = vrot.slane %v8665, 1
    %v8667 = vmax.f32 %v8665, %v8666
    %v8668 = vsel %vm8471, %v8269, -inf
    %v8669 = vrot.slane %v8668, 4
    %v8670 = vmax.f32 %v8668, %v8669
    %v8671 = vrot.slane %v8670, 2
    %v8672 = vmax.f32 %v8670, %v8671
    %v8673 = vrot.slane %v8672, 1
    %v8674 = vmax.f32 %v8672, %v8673
    %v8675 = vsel %vm8471, %v8270, -inf
    %v8676 = vrot.slane %v8675, 4
    %v8677 = vmax.f32 %v8675, %v8676
    %v8678 = vrot.slane %v8677, 2
    %v8679 = vmax.f32 %v8677, %v8678
    %v8680 = vrot.slane %v8679, 1
    %v8681 = vmax.f32 %v8679, %v8680
    %v8682 = vsel %vm8471, %v8277, -inf
    %v8683 = vrot.slane %v8682, 4
    %v8684 = vmax.f32 %v8682, %v8683
    %v8685 = vrot.slane %v8684, 2
    %v8686 = vmax.f32 %v8684, %v8685
    %v8687 = vrot.slane %v8686, 1
    %v8688 = vmax.f32 %v8686, %v8687
    %v8689 = vsel %vm8471, %v8278, -inf
    %v8690 = vrot.slane %v8689, 4
    %v8691 = vmax.f32 %v8689, %v8690
    %v8692 = vrot.slane %v8691, 2
    %v8693 = vmax.f32 %v8691, %v8692
    %v8694 = vrot.slane %v8693, 1
    %v8695 = vmax.f32 %v8693, %v8694
    %v8696 = vsel %vm8471, %v8285, -inf
    %v8697 = vrot.slane %v8696, 4
    %v8698 = vmax.f32 %v8696, %v8697
    %v8699 = vrot.slane %v8698, 2
    %v8700 = vmax.f32 %v8698, %v8699
    %v8701 = vrot.slane %v8700, 1
    %v8702 = vmax.f32 %v8700, %v8701
    %v8703 = vsel %vm8471, %v8286, -inf
    %v8704 = vrot.slane %v8703, 4
    %v8705 = vmax.f32 %v8703, %v8704
    %v8706 = vrot.slane %v8705, 2
    %v8707 = vmax.f32 %v8705, %v8706
    %v8708 = vrot.slane %v8707, 1
    %v8709 = vmax.f32 %v8707, %v8708
    %v8710 = vsel %vm8471, %v8293, -inf
    %v8711 = vrot.slane %v8710, 4
    %v8712 = vmax.f32 %v8710, %v8711
    %v8713 = vrot.slane %v8712, 2
    %v8714 = vmax.f32 %v8712, %v8713
    %v8715 = vrot.slane %v8714, 1
    %v8716 = vmax.f32 %v8714, %v8715
    %v8717 = vsel %vm8471, %v8294, -inf
    %v8718 = vrot.slane %v8717, 4
    %v8719 = vmax.f32 %v8717, %v8718
    %v8720 = vrot.slane %v8719, 2
    %v8721 = vmax.f32 %v8719, %v8720
    %v8722 = vrot.slane %v8721, 1
    %v8723 = vmax.f32 %v8721, %v8722
    %v8724 = vsel %vm8471, %v8301, -inf
    %v8725 = vrot.slane %v8724, 4
    %v8726 = vmax.f32 %v8724, %v8725
    %v8727 = vrot.slane %v8726, 2
    %v8728 = vmax.f32 %v8726, %v8727
    %v8729 = vrot.slane %v8728, 1
    %v8730 = vmax.f32 %v8728, %v8729
    %v8731 = vsel %vm8471, %v8302, -inf
    %v8732 = vrot.slane %v8731, 4
    %v8733 = vmax.f32 %v8731, %v8732
    %v8734 = vrot.slane %v8733, 2
    %v8735 = vmax.f32 %v8733, %v8734
    %v8736 = vrot.slane %v8735, 1
    %v8737 = vmax.f32 %v8735, %v8736
    %v8738 = vsel %vm8471, %v8309, -inf
    %v8739 = vrot.slane %v8738, 4
    %v8740 = vmax.f32 %v8738, %v8739
    %v8741 = vrot.slane %v8740, 2
    %v8742 = vmax.f32 %v8740, %v8741
    %v8743 = vrot.slane %v8742, 1
    %v8744 = vmax.f32 %v8742, %v8743
    %v8745 = vsel %vm8471, %v8310, -inf
    %v8746 = vrot.slane %v8745, 4
    %v8747 = vmax.f32 %v8745, %v8746
    %v8748 = vrot.slane %v8747, 2
    %v8749 = vmax.f32 %v8747, %v8748
    %v8750 = vrot.slane %v8749, 1
    %v8751 = vmax.f32 %v8749, %v8750
    %v8752 = vsel %vm8471, %v8317, -inf
    %v8753 = vrot.slane %v8752, 4
    %v8754 = vmax.f32 %v8752, %v8753
    %v8755 = vrot.slane %v8754, 2
    %v8756 = vmax.f32 %v8754, %v8755
    %v8757 = vrot.slane %v8756, 1
    %v8758 = vmax.f32 %v8756, %v8757
    %v8759 = vsel %vm8471, %v8318, -inf
    %v8760 = vrot.slane %v8759, 4
    %v8761 = vmax.f32 %v8759, %v8760
    %v8762 = vrot.slane %v8761, 2
    %v8763 = vmax.f32 %v8761, %v8762
    %v8764 = vrot.slane %v8763, 1
    %v8765 = vmax.f32 %v8763, %v8764
    %v8766 = vsel %vm8471, %v8325, -inf
    %v8767 = vrot.slane %v8766, 4
    %v8768 = vmax.f32 %v8766, %v8767
    %v8769 = vrot.slane %v8768, 2
    %v8770 = vmax.f32 %v8768, %v8769
    %v8771 = vrot.slane %v8770, 1
    %v8772 = vmax.f32 %v8770, %v8771
    %v8773 = vsel %vm8471, %v8326, -inf
    %v8774 = vrot.slane %v8773, 4
    %v8775 = vmax.f32 %v8773, %v8774
    %v8776 = vrot.slane %v8775, 2
    %v8777 = vmax.f32 %v8775, %v8776
    %v8778 = vrot.slane %v8777, 1
    %v8779 = vmax.f32 %v8777, %v8778
    %v8780 = vsel %vm8471, %v8333, -inf
    %v8781 = vrot.slane %v8780, 4
    %v8782 = vmax.f32 %v8780, %v8781
    %v8783 = vrot.slane %v8782, 2
    %v8784 = vmax.f32 %v8782, %v8783
    %v8785 = vrot.slane %v8784, 1
    %v8786 = vmax.f32 %v8784, %v8785
    %v8787 = vsel %vm8471, %v8334, -inf
    %v8788 = vrot.slane %v8787, 4
    %v8789 = vmax.f32 %v8787, %v8788
    %v8790 = vrot.slane %v8789, 2
    %v8791 = vmax.f32 %v8789, %v8790
    %v8792 = vrot.slane %v8791, 1
    %v8793 = vmax.f32 %v8791, %v8792
    %v8794 = vsel %vm8471, %v8341, -inf
    %v8795 = vrot.slane %v8794, 4
    %v8796 = vmax.f32 %v8794, %v8795
    %v8797 = vrot.slane %v8796, 2
    %v8798 = vmax.f32 %v8796, %v8797
    %v8799 = vrot.slane %v8798, 1
    %v8800 = vmax.f32 %v8798, %v8799
    %v8801 = vsel %vm8471, %v8342, -inf
    %v8802 = vrot.slane %v8801, 4
    %v8803 = vmax.f32 %v8801, %v8802
    %v8804 = vrot.slane %v8803, 2
    %v8805 = vmax.f32 %v8803, %v8804
    %v8806 = vrot.slane %v8805, 1
    %v8807 = vmax.f32 %v8805, %v8806
    %v8808 = vsel %vm8471, %v8349, -inf
    %v8809 = vrot.slane %v8808, 4
    %v8810 = vmax.f32 %v8808, %v8809
    %v8811 = vrot.slane %v8810, 2
    %v8812 = vmax.f32 %v8810, %v8811
    %v8813 = vrot.slane %v8812, 1
    %v8814 = vmax.f32 %v8812, %v8813
    %v8815 = vsel %vm8471, %v8350, -inf
    %v8816 = vrot.slane %v8815, 4
    %v8817 = vmax.f32 %v8815, %v8816
    %v8818 = vrot.slane %v8817, 2
    %v8819 = vmax.f32 %v8817, %v8818
    %v8820 = vrot.slane %v8819, 1
    %v8821 = vmax.f32 %v8819, %v8820
    %v8822 = vsel %vm8471, %v8357, -inf
    %v8823 = vrot.slane %v8822, 4
    %v8824 = vmax.f32 %v8822, %v8823
    %v8825 = vrot.slane %v8824, 2
    %v8826 = vmax.f32 %v8824, %v8825
    %v8827 = vrot.slane %v8826, 1
    %v8828 = vmax.f32 %v8826, %v8827
    %v8829 = vsel %vm8471, %v8358, -inf
    %v8830 = vrot.slane %v8829, 4
    %v8831 = vmax.f32 %v8829, %v8830
    %v8832 = vrot.slane %v8831, 2
    %v8833 = vmax.f32 %v8831, %v8832
    %v8834 = vrot.slane %v8833, 1
    %v8835 = vmax.f32 %v8833, %v8834
    %v8836 = vsel %vm8471, %v8365, -inf
    %v8837 = vrot.slane %v8836, 4
    %v8838 = vmax.f32 %v8836, %v8837
    %v8839 = vrot.slane %v8838, 2
    %v8840 = vmax.f32 %v8838, %v8839
    %v8841 = vrot.slane %v8840, 1
    %v8842 = vmax.f32 %v8840, %v8841
    %v8843 = vsel %vm8471, %v8366, -inf
    %v8844 = vrot.slane %v8843, 4
    %v8845 = vmax.f32 %v8843, %v8844
    %v8846 = vrot.slane %v8845, 2
    %v8847 = vmax.f32 %v8845, %v8846
    %v8848 = vrot.slane %v8847, 1
    %v8849 = vmax.f32 %v8847, %v8848
    %v8850 = vsel %vm8471, %v8373, -inf
    %v8851 = vrot.slane %v8850, 4
    %v8852 = vmax.f32 %v8850, %v8851
    %v8853 = vrot.slane %v8852, 2
    %v8854 = vmax.f32 %v8852, %v8853
    %v8855 = vrot.slane %v8854, 1
    %v8856 = vmax.f32 %v8854, %v8855
    %v8857 = vsel %vm8471, %v8374, -inf
    %v8858 = vrot.slane %v8857, 4
    %v8859 = vmax.f32 %v8857, %v8858
    %v8860 = vrot.slane %v8859, 2
    %v8861 = vmax.f32 %v8859, %v8860
    %v8862 = vrot.slane %v8861, 1
    %v8863 = vmax.f32 %v8861, %v8862
    %v8864 = vsel %vm8471, %v8381, -inf
    %v8865 = vrot.slane %v8864, 4
    %v8866 = vmax.f32 %v8864, %v8865
    %v8867 = vrot.slane %v8866, 2
    %v8868 = vmax.f32 %v8866, %v8867
    %v8869 = vrot.slane %v8868, 1
    %v8870 = vmax.f32 %v8868, %v8869
    %v8871 = vsel %vm8471, %v8382, -inf
    %v8872 = vrot.slane %v8871, 4
    %v8873 = vmax.f32 %v8871, %v8872
    %v8874 = vrot.slane %v8873, 2
    %v8875 = vmax.f32 %v8873, %v8874
    %v8876 = vrot.slane %v8875, 1
    %v8877 = vmax.f32 %v8875, %v8876
    %v8878 = vsel %vm8471, %v8389, -inf
    %v8879 = vrot.slane %v8878, 4
    %v8880 = vmax.f32 %v8878, %v8879
    %v8881 = vrot.slane %v8880, 2
    %v8882 = vmax.f32 %v8880, %v8881
    %v8883 = vrot.slane %v8882, 1
    %v8884 = vmax.f32 %v8882, %v8883
    %v8885 = vsel %vm8471, %v8390, -inf
    %v8886 = vrot.slane %v8885, 4
    %v8887 = vmax.f32 %v8885, %v8886
    %v8888 = vrot.slane %v8887, 2
    %v8889 = vmax.f32 %v8887, %v8888
    %v8890 = vrot.slane %v8889, 1
    %v8891 = vmax.f32 %v8889, %v8890
    %v8892 = vsel %vm8471, %v8397, -inf
    %v8893 = vrot.slane %v8892, 4
    %v8894 = vmax.f32 %v8892, %v8893
    %v8895 = vrot.slane %v8894, 2
    %v8896 = vmax.f32 %v8894, %v8895
    %v8897 = vrot.slane %v8896, 1
    %v8898 = vmax.f32 %v8896, %v8897
    %v8899 = vsel %vm8471, %v8398, -inf
    %v8900 = vrot.slane %v8899, 4
    %v8901 = vmax.f32 %v8899, %v8900
    %v8902 = vrot.slane %v8901, 2
    %v8903 = vmax.f32 %v8901, %v8902
    %v8904 = vrot.slane %v8903, 1
    %v8905 = vmax.f32 %v8903, %v8904
    %v8906 = vsel %vm8471, %v8405, -inf
    %v8907 = vrot.slane %v8906, 4
    %v8908 = vmax.f32 %v8906, %v8907
    %v8909 = vrot.slane %v8908, 2
    %v8910 = vmax.f32 %v8908, %v8909
    %v8911 = vrot.slane %v8910, 1
    %v8912 = vmax.f32 %v8910, %v8911
    %v8913 = vsel %vm8471, %v8406, -inf
    %v8914 = vrot.slane %v8913, 4
    %v8915 = vmax.f32 %v8913, %v8914
    %v8916 = vrot.slane %v8915, 2
    %v8917 = vmax.f32 %v8915, %v8916
    %v8918 = vrot.slane %v8917, 1
    %v8919 = vmax.f32 %v8917, %v8918
    %v8920 = vld [vmem:[#allocation6] sm:$0x3]
    %v8922 = vlaneseq
    %v8923 = vshrl.u32 %v8922, 7
    %v8924 = vsub.s32 0, %v8923
    %v8925 = vrot.slane %v8920, %v8924
    %v8926 = vlaneseq
    %v8927 = vshrl.u32 %v8926, 7
    %v8928 = vsub.s32 1, %v8927
    %v8929 = vrot.slane %v8920, %v8928
    %v8932 = vadd.f32 %v8478, %v8925
    %v8933 = vadd.f32 %v8485, %v8929
    %v8934 = vadd.f32 %v8492, %v8925
    %v8935 = vadd.f32 %v8499, %v8929
    %v8936 = vadd.f32 %v8506, %v8925
    %v8937 = vadd.f32 %v8513, %v8929
    %v8938 = vadd.f32 %v8520, %v8925
    %v8939 = vadd.f32 %v8527, %v8929
    %v8940 = vadd.f32 %v8534, %v8925
    %v8941 = vadd.f32 %v8541, %v8929
    %v8942 = vadd.f32 %v8548, %v8925
    %v8943 = vadd.f32 %v8555, %v8929
    %v8944 = vadd.f32 %v8562, %v8925
    %v8945 = vadd.f32 %v8569, %v8929
    %v8946 = vadd.f32 %v8576, %v8925
    %v8947 = vadd.f32 %v8583, %v8929
    %v8948 = vadd.f32 %v8590, %v8925
    %v8949 = vadd.f32 %v8597, %v8929
    %v8950 = vadd.f32 %v8604, %v8925
    %v8951 = vadd.f32 %v8611, %v8929
    %v8952 = vadd.f32 %v8618, %v8925
    %v8953 = vadd.f32 %v8625, %v8929
    %v8954 = vadd.f32 %v8632, %v8925
    %v8955 = vadd.f32 %v8639, %v8929
    %v8956 = vadd.f32 %v8646, %v8925
    %v8957 = vadd.f32 %v8653, %v8929
    %v8958 = vadd.f32 %v8660, %v8925
    %v8959 = vadd.f32 %v8667, %v8929
    %v8960 = vadd.f32 %v8674, %v8925
    %v8961 = vadd.f32 %v8681, %v8929
    %v8962 = vadd.f32 %v8688, %v8925
    %v8963 = vadd.f32 %v8695, %v8929
    %v8964 = vadd.f32 %v8702, %v8925
    %v8965 = vadd.f32 %v8709, %v8929
    %v8966 = vadd.f32 %v8716, %v8925
    %v8967 = vadd.f32 %v8723, %v8929
    %v8968 = vadd.f32 %v8730, %v8925
    %v8969 = vadd.f32 %v8737, %v8929
    %v8970 = vadd.f32 %v8744, %v8925
    %v8971 = vadd.f32 %v8751, %v8929
    %v8972 = vadd.f32 %v8758, %v8925
    %v8973 = vadd.f32 %v8765, %v8929
    %v8974 = vadd.f32 %v8772, %v8925
    %v8975 = vadd.f32 %v8779, %v8929
    %v8976 = vadd.f32 %v8786, %v8925
    %v8977 = vadd.f32 %v8793, %v8929
    %v8978 = vadd.f32 %v8800, %v8925
    %v8979 = vadd.f32 %v8807, %v8929
    %v8980 = vadd.f32 %v8814, %v8925
    %v8981 = vadd.f32 %v8821, %v8929
    %v8982 = vadd.f32 %v8828, %v8925
    %v8983 = vadd.f32 %v8835, %v8929
    %v8984 = vadd.f32 %v8842, %v8925
    %v8985 = vadd.f32 %v8849, %v8929
    %v8986 = vadd.f32 %v8856, %v8925
    %v8987 = vadd.f32 %v8863, %v8929
    %v8988 = vadd.f32 %v8870, %v8925
    %v8989 = vadd.f32 %v8877, %v8929
    %v8990 = vadd.f32 %v8884, %v8925
    %v8991 = vadd.f32 %v8891, %v8929
    %v8992 = vadd.f32 %v8898, %v8925
    %v8993 = vadd.f32 %v8905, %v8929
    %v8994 = vadd.f32 %v8912, %v8925
    %v8995 = vadd.f32 %v8919, %v8929
    %vm8996 = vcmp.gt.f32.partialorder %v8932, 0.0
    %vm8997 = vcmp.gt.f32.partialorder %v8933, 0.0
    %vm8998 = vcmp.gt.f32.partialorder %v8934, 0.0
    %vm8999 = vcmp.gt.f32.partialorder %v8935, 0.0
    %vm9000 = vcmp.gt.f32.partialorder %v8936, 0.0
    %vm9001 = vcmp.gt.f32.partialorder %v8937, 0.0
    %vm9002 = vcmp.gt.f32.partialorder %v8938, 0.0
    %vm9003 = vcmp.gt.f32.partialorder %v8939, 0.0
    %vm9004 = vcmp.gt.f32.partialorder %v8940, 0.0
    %vm9005 = vcmp.gt.f32.partialorder %v8941, 0.0
    %vm9006 = vcmp.gt.f32.partialorder %v8942, 0.0
    %vm9007 = vcmp.gt.f32.partialorder %v8943, 0.0
    %vm9008 = vcmp.gt.f32.partialorder %v8944, 0.0
    %vm9009 = vcmp.gt.f32.partialorder %v8945, 0.0
    %vm9010 = vcmp.gt.f32.partialorder %v8946, 0.0
    %vm9011 = vcmp.gt.f32.partialorder %v8947, 0.0
    %vm9012 = vcmp.gt.f32.partialorder %v8948, 0.0
    %vm9013 = vcmp.gt.f32.partialorder %v8949, 0.0
    %vm9014 = vcmp.gt.f32.partialorder %v8950, 0.0
    %vm9015 = vcmp.gt.f32.partialorder %v8951, 0.0
    %vm9016 = vcmp.gt.f32.partialorder %v8952, 0.0
    %vm9017 = vcmp.gt.f32.partialorder %v8953, 0.0
    %vm9018 = vcmp.gt.f32.partialorder %v8954, 0.0
    %vm9019 = vcmp.gt.f32.partialorder %v8955, 0.0
    %vm9020 = vcmp.gt.f32.partialorder %v8956, 0.0
    %vm9021 = vcmp.gt.f32.partialorder %v8957, 0.0
    %vm9022 = vcmp.gt.f32.partialorder %v8958, 0.0
    %vm9023 = vcmp.gt.f32.partialorder %v8959, 0.0
    %vm9024 = vcmp.gt.f32.partialorder %v8960, 0.0
    %vm9025 = vcmp.gt.f32.partialorder %v8961, 0.0
    %vm9026 = vcmp.gt.f32.partialorder %v8962, 0.0
    %vm9027 = vcmp.gt.f32.partialorder %v8963, 0.0
    %vm9028 = vcmp.gt.f32.partialorder %v8964, 0.0
    %vm9029 = vcmp.gt.f32.partialorder %v8965, 0.0
    %vm9030 = vcmp.gt.f32.partialorder %v8966, 0.0
    %vm9031 = vcmp.gt.f32.partialorder %v8967, 0.0
    %vm9032 = vcmp.gt.f32.partialorder %v8968, 0.0
    %vm9033 = vcmp.gt.f32.partialorder %v8969, 0.0
    %vm9034 = vcmp.gt.f32.partialorder %v8970, 0.0
    %vm9035 = vcmp.gt.f32.partialorder %v8971, 0.0
    %vm9036 = vcmp.gt.f32.partialorder %v8972, 0.0
    %vm9037 = vcmp.gt.f32.partialorder %v8973, 0.0
    %vm9038 = vcmp.gt.f32.partialorder %v8974, 0.0
    %vm9039 = vcmp.gt.f32.partialorder %v8975, 0.0
    %vm9040 = vcmp.gt.f32.partialorder %v8976, 0.0
    %vm9041 = vcmp.gt.f32.partialorder %v8977, 0.0
    %vm9042 = vcmp.gt.f32.partialorder %v8978, 0.0
    %vm9043 = vcmp.gt.f32.partialorder %v8979, 0.0
    %vm9044 = vcmp.gt.f32.partialorder %v8980, 0.0
    %vm9045 = vcmp.gt.f32.partialorder %v8981, 0.0
    %vm9046 = vcmp.gt.f32.partialorder %v8982, 0.0
    %vm9047 = vcmp.gt.f32.partialorder %v8983, 0.0
    %vm9048 = vcmp.gt.f32.partialorder %v8984, 0.0
    %vm9049 = vcmp.gt.f32.partialorder %v8985, 0.0
    %vm9050 = vcmp.gt.f32.partialorder %v8986, 0.0
    %vm9051 = vcmp.gt.f32.partialorder %v8987, 0.0
    %vm9052 = vcmp.gt.f32.partialorder %v8988, 0.0
    %vm9053 = vcmp.gt.f32.partialorder %v8989, 0.0
    %vm9054 = vcmp.gt.f32.partialorder %v8990, 0.0
    %vm9055 = vcmp.gt.f32.partialorder %v8991, 0.0
    %vm9056 = vcmp.gt.f32.partialorder %v8992, 0.0
    %vm9057 = vcmp.gt.f32.partialorder %v8993, 0.0
    %vm9058 = vcmp.gt.f32.partialorder %v8994, 0.0
    %vm9059 = vcmp.gt.f32.partialorder %v8995, 0.0
    %v9060 = vmul.f32 %v8932, 0.01
    %v9061 = vmul.f32 %v8933, 0.01
    %v9062 = vmul.f32 %v8934, 0.01
    %v9063 = vmul.f32 %v8935, 0.01
    %v9064 = vmul.f32 %v8936, 0.01
    %v9065 = vmul.f32 %v8937, 0.01
    %v9066 = vmul.f32 %v8938, 0.01
    %v9067 = vmul.f32 %v8939, 0.01
    %v9068 = vmul.f32 %v8940, 0.01
    %v9069 = vmul.f32 %v8941, 0.01
    %v9070 = vmul.f32 %v8942, 0.01
    %v9071 = vmul.f32 %v8943, 0.01
    %v9072 = vmul.f32 %v8944, 0.01
    %v9073 = vmul.f32 %v8945, 0.01
    %v9074 = vmul.f32 %v8946, 0.01
    %v9075 = vmul.f32 %v8947, 0.01
    %v9076 = vmul.f32 %v8948, 0.01
    %v9077 = vmul.f32 %v8949, 0.01
    %v9078 = vmul.f32 %v8950, 0.01
    %v9079 = vmul.f32 %v8951, 0.01
    %v9080 = vmul.f32 %v8952, 0.01
    %v9081 = vmul.f32 %v8953, 0.01
    %v9082 = vmul.f32 %v8954, 0.01
    %v9083 = vmul.f32 %v8955, 0.01
    %v9084 = vmul.f32 %v8956, 0.01
    %v9085 = vmul.f32 %v8957, 0.01
    %v9086 = vmul.f32 %v8958, 0.01
    %v9087 = vmul.f32 %v8959, 0.01
    %v9088 = vmul.f32 %v8960, 0.01
    %v9089 = vmul.f32 %v8961, 0.01
    %v9090 = vmul.f32 %v8962, 0.01
    %v9091 = vmul.f32 %v8963, 0.01
    %v9092 = vmul.f32 %v8964, 0.01
    %v9093 = vmul.f32 %v8965, 0.01
    %v9094 = vmul.f32 %v8966, 0.01
    %v9095 = vmul.f32 %v8967, 0.01
    %v9096 = vmul.f32 %v8968, 0.01
    %v9097 = vmul.f32 %v8969, 0.01
    %v9098 = vmul.f32 %v8970, 0.01
    %v9099 = vmul.f32 %v8971, 0.01
    %v9100 = vmul.f32 %v8972, 0.01
    %v9101 = vmul.f32 %v8973, 0.01
    %v9102 = vmul.f32 %v8974, 0.01
    %v9103 = vmul.f32 %v8975, 0.01
    %v9104 = vmul.f32 %v8976, 0.01
    %v9105 = vmul.f32 %v8977, 0.01
    %v9106 = vmul.f32 %v8978, 0.01
    %v9107 = vmul.f32 %v8979, 0.01
    %v9108 = vmul.f32 %v8980, 0.01
    %v9109 = vmul.f32 %v8981, 0.01
    %v9110 = vmul.f32 %v8982, 0.01
    %v9111 = vmul.f32 %v8983, 0.01
    %v9112 = vmul.f32 %v8984, 0.01
    %v9113 = vmul.f32 %v8985, 0.01
    %v9114 = vmul.f32 %v8986, 0.01
    %v9115 = vmul.f32 %v8987, 0.01
    %v9116 = vmul.f32 %v8988, 0.01
    %v9117 = vmul.f32 %v8989, 0.01
    %v9118 = vmul.f32 %v8990, 0.01
    %v9119 = vmul.f32 %v8991, 0.01
    %v9120 = vmul.f32 %v8992, 0.01
    %v9121 = vmul.f32 %v8993, 0.01
    %v9122 = vmul.f32 %v8994, 0.01
    %v9123 = vmul.f32 %v8995, 0.01
    %v9124 = vsel %vm8996, %v8932, %v9060
    %v9125 = vsel %vm8997, %v8933, %v9061
    %v9126 = vsel %vm8998, %v8934, %v9062
    %v9127 = vsel %vm8999, %v8935, %v9063
    %v9128 = vsel %vm9000, %v8936, %v9064
    %v9129 = vsel %vm9001, %v8937, %v9065
    %v9130 = vsel %vm9002, %v8938, %v9066
    %v9131 = vsel %vm9003, %v8939, %v9067
    %v9132 = vsel %vm9004, %v8940, %v9068
    %v9133 = vsel %vm9005, %v8941, %v9069
    %v9134 = vsel %vm9006, %v8942, %v9070
    %v9135 = vsel %vm9007, %v8943, %v9071
    %v9136 = vsel %vm9008, %v8944, %v9072
    %v9137 = vsel %vm9009, %v8945, %v9073
    %v9138 = vsel %vm9010, %v8946, %v9074
    %v9139 = vsel %vm9011, %v8947, %v9075
    %v9140 = vsel %vm9012, %v8948, %v9076
    %v9141 = vsel %vm9013, %v8949, %v9077
    %v9142 = vsel %vm9014, %v8950, %v9078
    %v9143 = vsel %vm9015, %v8951, %v9079
    %v9144 = vsel %vm9016, %v8952, %v9080
    %v9145 = vsel %vm9017, %v8953, %v9081
    %v9146 = vsel %vm9018, %v8954, %v9082
    %v9147 = vsel %vm9019, %v8955, %v9083
    %v9148 = vsel %vm9020, %v8956, %v9084
    %v9149 = vsel %vm9021, %v8957, %v9085
    %v9150 = vsel %vm9022, %v8958, %v9086
    %v9151 = vsel %vm9023, %v8959, %v9087
    %v9152 = vsel %vm9024, %v8960, %v9088
    %v9153 = vsel %vm9025, %v8961, %v9089
    %v9154 = vsel %vm9026, %v8962, %v9090
    %v9155 = vsel %vm9027, %v8963, %v9091
    %v9156 = vsel %vm9028, %v8964, %v9092
    %v9157 = vsel %vm9029, %v8965, %v9093
    %v9158 = vsel %vm9030, %v8966, %v9094
    %v9159 = vsel %vm9031, %v8967, %v9095
    %v9160 = vsel %vm9032, %v8968, %v9096
    %v9161 = vsel %vm9033, %v8969, %v9097
    %v9162 = vsel %vm9034, %v8970, %v9098
    %v9163 = vsel %vm9035, %v8971, %v9099
    %v9164 = vsel %vm9036, %v8972, %v9100
    %v9165 = vsel %vm9037, %v8973, %v9101
    %v9166 = vsel %vm9038, %v8974, %v9102
    %v9167 = vsel %vm9039, %v8975, %v9103
    %v9168 = vsel %vm9040, %v8976, %v9104
    %v9169 = vsel %vm9041, %v8977, %v9105
    %v9170 = vsel %vm9042, %v8978, %v9106
    %v9171 = vsel %vm9043, %v8979, %v9107
    %v9172 = vsel %vm9044, %v8980, %v9108
    %v9173 = vsel %vm9045, %v8981, %v9109
    %v9174 = vsel %vm9046, %v8982, %v9110
    %v9175 = vsel %vm9047, %v8983, %v9111
    %v9176 = vsel %vm9048, %v8984, %v9112
    %v9177 = vsel %vm9049, %v8985, %v9113
    %v9178 = vsel %vm9050, %v8986, %v9114
    %v9179 = vsel %vm9051, %v8987, %v9115
    %v9180 = vsel %vm9052, %v8988, %v9116
    %v9181 = vsel %vm9053, %v8989, %v9117
    %v9182 = vsel %vm9054, %v8990, %v9118
    %v9183 = vsel %vm9055, %v8991, %v9119
    %v9184 = vsel %vm9056, %v8992, %v9120
    %v9185 = vsel %vm9057, %v8993, %v9121
    %v9186 = vsel %vm9058, %v8994, %v9122
    %v9187 = vsel %vm9059, %v8995, %v9123
    %v9188 = vpack.c.bf16 %v9124, %v9124
    %v9189 = vpack.c.bf16 %v9125, %v9125
    %v9190 = vpack.c.bf16 %v9126, %v9126
    %v9191 = vpack.c.bf16 %v9127, %v9127
    %v9192 = vpack.c.bf16 %v9128, %v9128
    %v9193 = vpack.c.bf16 %v9129, %v9129
    %v9194 = vpack.c.bf16 %v9130, %v9130
    %v9195 = vpack.c.bf16 %v9131, %v9131
    %v9196 = vpack.c.bf16 %v9132, %v9132
    %v9197 = vpack.c.bf16 %v9133, %v9133
    %v9198 = vpack.c.bf16 %v9134, %v9134
    %v9199 = vpack.c.bf16 %v9135, %v9135
    %v9200 = vpack.c.bf16 %v9136, %v9136
    %v9201 = vpack.c.bf16 %v9137, %v9137
    %v9202 = vpack.c.bf16 %v9138, %v9138
    %v9203 = vpack.c.bf16 %v9139, %v9139
    %v9204 = vpack.c.bf16 %v9140, %v9140
    %v9205 = vpack.c.bf16 %v9141, %v9141
    %v9206 = vpack.c.bf16 %v9142, %v9142
    %v9207 = vpack.c.bf16 %v9143, %v9143
    %v9208 = vpack.c.bf16 %v9144, %v9144
    %v9209 = vpack.c.bf16 %v9145, %v9145
    %v9210 = vpack.c.bf16 %v9146, %v9146
    %v9211 = vpack.c.bf16 %v9147, %v9147
    %v9212 = vpack.c.bf16 %v9148, %v9148
    %v9213 = vpack.c.bf16 %v9149, %v9149
    %v9214 = vpack.c.bf16 %v9150, %v9150
    %v9215 = vpack.c.bf16 %v9151, %v9151
    %v9216 = vpack.c.bf16 %v9152, %v9152
    %v9217 = vpack.c.bf16 %v9153, %v9153
    %v9218 = vpack.c.bf16 %v9154, %v9154
    %v9219 = vpack.c.bf16 %v9155, %v9155
    %v9220 = vpack.c.bf16 %v9156, %v9156
    %v9221 = vpack.c.bf16 %v9157, %v9157
    %v9222 = vpack.c.bf16 %v9158, %v9158
    %v9223 = vpack.c.bf16 %v9159, %v9159
    %v9224 = vpack.c.bf16 %v9160, %v9160
    %v9225 = vpack.c.bf16 %v9161, %v9161
    %v9226 = vpack.c.bf16 %v9162, %v9162
    %v9227 = vpack.c.bf16 %v9163, %v9163
    %v9228 = vpack.c.bf16 %v9164, %v9164
    %v9229 = vpack.c.bf16 %v9165, %v9165
    %v9230 = vpack.c.bf16 %v9166, %v9166
    %v9231 = vpack.c.bf16 %v9167, %v9167
    %v9232 = vpack.c.bf16 %v9168, %v9168
    %v9233 = vpack.c.bf16 %v9169, %v9169
    %v9234 = vpack.c.bf16 %v9170, %v9170
    %v9235 = vpack.c.bf16 %v9171, %v9171
    %v9236 = vpack.c.bf16 %v9172, %v9172
    %v9237 = vpack.c.bf16 %v9173, %v9173
    %v9238 = vpack.c.bf16 %v9174, %v9174
    %v9239 = vpack.c.bf16 %v9175, %v9175
    %v9240 = vpack.c.bf16 %v9176, %v9176
    %v9241 = vpack.c.bf16 %v9177, %v9177
    %v9242 = vpack.c.bf16 %v9178, %v9178
    %v9243 = vpack.c.bf16 %v9179, %v9179
    %v9244 = vpack.c.bf16 %v9180, %v9180
    %v9245 = vpack.c.bf16 %v9181, %v9181
    %v9246 = vpack.c.bf16 %v9182, %v9182
    %v9247 = vpack.c.bf16 %v9183, %v9183
    %v9248 = vpack.c.bf16 %v9184, %v9184
    %v9249 = vpack.c.bf16 %v9185, %v9185
    %v9250 = vpack.c.bf16 %v9186, %v9186
    %v9251 = vpack.c.bf16 %v9187, %v9187
    %v9316 = vcombine.low %v9188, %v9189
    %v9318 = vunpack.c.l.s4 1983009808
    %v9319 = vunpack.c.0.s8 %v9318
    %v9320 = vlaneseq
    %v9321 = vshrl.u32 %v9320, 7
    %v9322 = vsub.s32 %v9319, %v9321
    %v9323 = vrot.slane %v9316, %v9322
    %v9324 = vcombine.low %v9190, %v9191
    %v9326 = vunpack.c.l.s4 1983009808
    %v9327 = vunpack.c.0.s8 %v9326
    %v9328 = vlaneseq
    %v9329 = vshrl.u32 %v9328, 7
    %v9330 = vsub.s32 %v9327, %v9329
    %v9331 = vrot.slane %v9324, %v9330
    %v9332 = vcombine.low %v9192, %v9193
    %v9334 = vunpack.c.l.s4 1983009808
    %v9335 = vunpack.c.0.s8 %v9334
    %v9336 = vlaneseq
    %v9337 = vshrl.u32 %v9336, 7
    %v9338 = vsub.s32 %v9335, %v9337
    %v9339 = vrot.slane %v9332, %v9338
    %v9340 = vcombine.low %v9194, %v9195
    %v9342 = vunpack.c.l.s4 1983009808
    %v9343 = vunpack.c.0.s8 %v9342
    %v9344 = vlaneseq
    %v9345 = vshrl.u32 %v9344, 7
    %v9346 = vsub.s32 %v9343, %v9345
    %v9347 = vrot.slane %v9340, %v9346
    %v9348 = vcombine.low %v9196, %v9197
    %v9350 = vunpack.c.l.s4 1983009808
    %v9351 = vunpack.c.0.s8 %v9350
    %v9352 = vlaneseq
    %v9353 = vshrl.u32 %v9352, 7
    %v9354 = vsub.s32 %v9351, %v9353
    %v9355 = vrot.slane %v9348, %v9354
    %v9356 = vcombine.low %v9198, %v9199
    %v9358 = vunpack.c.l.s4 1983009808
    %v9359 = vunpack.c.0.s8 %v9358
    %v9360 = vlaneseq
    %v9361 = vshrl.u32 %v9360, 7
    %v9362 = vsub.s32 %v9359, %v9361
    %v9363 = vrot.slane %v9356, %v9362
    %v9364 = vcombine.low %v9200, %v9201
    %v9366 = vunpack.c.l.s4 1983009808
    %v9367 = vunpack.c.0.s8 %v9366
    %v9368 = vlaneseq
    %v9369 = vshrl.u32 %v9368, 7
    %v9370 = vsub.s32 %v9367, %v9369
    %v9371 = vrot.slane %v9364, %v9370
    %v9372 = vcombine.low %v9202, %v9203
    %v9374 = vunpack.c.l.s4 1983009808
    %v9375 = vunpack.c.0.s8 %v9374
    %v9376 = vlaneseq
    %v9377 = vshrl.u32 %v9376, 7
    %v9378 = vsub.s32 %v9375, %v9377
    %v9379 = vrot.slane %v9372, %v9378
    %v9380 = vcombine.low %v9204, %v9205
    %v9382 = vunpack.c.l.s4 1983009808
    %v9383 = vunpack.c.0.s8 %v9382
    %v9384 = vlaneseq
    %v9385 = vshrl.u32 %v9384, 7
    %v9386 = vsub.s32 %v9383, %v9385
    %v9387 = vrot.slane %v9380, %v9386
    %v9388 = vcombine.low %v9206, %v9207
    %v9390 = vunpack.c.l.s4 1983009808
    %v9391 = vunpack.c.0.s8 %v9390
    %v9392 = vlaneseq
    %v9393 = vshrl.u32 %v9392, 7
    %v9394 = vsub.s32 %v9391, %v9393
    %v9395 = vrot.slane %v9388, %v9394
    %v9396 = vcombine.low %v9208, %v9209
    %v9398 = vunpack.c.l.s4 1983009808
    %v9399 = vunpack.c.0.s8 %v9398
    %v9400 = vlaneseq
    %v9401 = vshrl.u32 %v9400, 7
    %v9402 = vsub.s32 %v9399, %v9401
    %v9403 = vrot.slane %v9396, %v9402
    %v9404 = vcombine.low %v9210, %v9211
    %v9406 = vunpack.c.l.s4 1983009808
    %v9407 = vunpack.c.0.s8 %v9406
    %v9408 = vlaneseq
    %v9409 = vshrl.u32 %v9408, 7
    %v9410 = vsub.s32 %v9407, %v9409
    %v9411 = vrot.slane %v9404, %v9410
    %v9412 = vcombine.low %v9212, %v9213
    %v9414 = vunpack.c.l.s4 1983009808
    %v9415 = vunpack.c.0.s8 %v9414
    %v9416 = vlaneseq
    %v9417 = vshrl.u32 %v9416, 7
    %v9418 = vsub.s32 %v9415, %v9417
    %v9419 = vrot.slane %v9412, %v9418
    %v9420 = vcombine.low %v9214, %v9215
    %v9422 = vunpack.c.l.s4 1983009808
    %v9423 = vunpack.c.0.s8 %v9422
    %v9424 = vlaneseq
    %v9425 = vshrl.u32 %v9424, 7
    %v9426 = vsub.s32 %v9423, %v9425
    %v9427 = vrot.slane %v9420, %v9426
    %v9428 = vcombine.low %v9216, %v9217
    %v9430 = vunpack.c.l.s4 1983009808
    %v9431 = vunpack.c.0.s8 %v9430
    %v9432 = vlaneseq
    %v9433 = vshrl.u32 %v9432, 7
    %v9434 = vsub.s32 %v9431, %v9433
    %v9435 = vrot.slane %v9428, %v9434
    %v9436 = vcombine.low %v9218, %v9219
    %v9438 = vunpack.c.l.s4 1983009808
    %v9439 = vunpack.c.0.s8 %v9438
    %v9440 = vlaneseq
    %v9441 = vshrl.u32 %v9440, 7
    %v9442 = vsub.s32 %v9439, %v9441
    %v9443 = vrot.slane %v9436, %v9442
    %v9444 = vcombine.low %v9220, %v9221
    %v9446 = vunpack.c.l.s4 1983009808
    %v9447 = vunpack.c.0.s8 %v9446
    %v9448 = vlaneseq
    %v9449 = vshrl.u32 %v9448, 7
    %v9450 = vsub.s32 %v9447, %v9449
    %v9451 = vrot.slane %v9444, %v9450
    %v9452 = vcombine.low %v9222, %v9223
    %v9454 = vunpack.c.l.s4 1983009808
    %v9455 = vunpack.c.0.s8 %v9454
    %v9456 = vlaneseq
    %v9457 = vshrl.u32 %v9456, 7
    %v9458 = vsub.s32 %v9455, %v9457
    %v9459 = vrot.slane %v9452, %v9458
    %v9460 = vcombine.low %v9224, %v9225
    %v9462 = vunpack.c.l.s4 1983009808
    %v9463 = vunpack.c.0.s8 %v9462
    %v9464 = vlaneseq
    %v9465 = vshrl.u32 %v9464, 7
    %v9466 = vsub.s32 %v9463, %v9465
    %v9467 = vrot.slane %v9460, %v9466
    %v9468 = vcombine.low %v9226, %v9227
    %v9470 = vunpack.c.l.s4 1983009808
    %v9471 = vunpack.c.0.s8 %v9470
    %v9472 = vlaneseq
    %v9473 = vshrl.u32 %v9472, 7
    %v9474 = vsub.s32 %v9471, %v9473
    %v9475 = vrot.slane %v9468, %v9474
    %v9476 = vcombine.low %v9228, %v9229
    %v9478 = vunpack.c.l.s4 1983009808
    %v9479 = vunpack.c.0.s8 %v9478
    %v9480 = vlaneseq
    %v9481 = vshrl.u32 %v9480, 7
    %v9482 = vsub.s32 %v9479, %v9481
    %v9483 = vrot.slane %v9476, %v9482
    %v9484 = vcombine.low %v9230, %v9231
    %v9486 = vunpack.c.l.s4 1983009808
    %v9487 = vunpack.c.0.s8 %v9486
    %v9488 = vlaneseq
    %v9489 = vshrl.u32 %v9488, 7
    %v9490 = vsub.s32 %v9487, %v9489
    %v9491 = vrot.slane %v9484, %v9490
    %v9492 = vcombine.low %v9232, %v9233
    %v9494 = vunpack.c.l.s4 1983009808
    %v9495 = vunpack.c.0.s8 %v9494
    %v9496 = vlaneseq
    %v9497 = vshrl.u32 %v9496, 7
    %v9498 = vsub.s32 %v9495, %v9497
    %v9499 = vrot.slane %v9492, %v9498
    %v9500 = vcombine.low %v9234, %v9235
    %v9502 = vunpack.c.l.s4 1983009808
    %v9503 = vunpack.c.0.s8 %v9502
    %v9504 = vlaneseq
    %v9505 = vshrl.u32 %v9504, 7
    %v9506 = vsub.s32 %v9503, %v9505
    %v9507 = vrot.slane %v9500, %v9506
    %v9508 = vcombine.low %v9236, %v9237
    %v9510 = vunpack.c.l.s4 1983009808
    %v9511 = vunpack.c.0.s8 %v9510
    %v9512 = vlaneseq
    %v9513 = vshrl.u32 %v9512, 7
    %v9514 = vsub.s32 %v9511, %v9513
    %v9515 = vrot.slane %v9508, %v9514
    %v9516 = vcombine.low %v9238, %v9239
    %v9518 = vunpack.c.l.s4 1983009808
    %v9519 = vunpack.c.0.s8 %v9518
    %v9520 = vlaneseq
    %v9521 = vshrl.u32 %v9520, 7
    %v9522 = vsub.s32 %v9519, %v9521
    %v9523 = vrot.slane %v9516, %v9522
    %v9524 = vcombine.low %v9240, %v9241
    %v9526 = vunpack.c.l.s4 1983009808
    %v9527 = vunpack.c.0.s8 %v9526
    %v9528 = vlaneseq
    %v9529 = vshrl.u32 %v9528, 7
    %v9530 = vsub.s32 %v9527, %v9529
    %v9531 = vrot.slane %v9524, %v9530
    %v9532 = vcombine.low %v9242, %v9243
    %v9534 = vunpack.c.l.s4 1983009808
    %v9535 = vunpack.c.0.s8 %v9534
    %v9536 = vlaneseq
    %v9537 = vshrl.u32 %v9536, 7
    %v9538 = vsub.s32 %v9535, %v9537
    %v9539 = vrot.slane %v9532, %v9538
    %v9540 = vcombine.low %v9244, %v9245
    %v9542 = vunpack.c.l.s4 1983009808
    %v9543 = vunpack.c.0.s8 %v9542
    %v9544 = vlaneseq
    %v9545 = vshrl.u32 %v9544, 7
    %v9546 = vsub.s32 %v9543, %v9545
    %v9547 = vrot.slane %v9540, %v9546
    %v9548 = vcombine.low %v9246, %v9247
    %v9550 = vunpack.c.l.s4 1983009808
    %v9551 = vunpack.c.0.s8 %v9550
    %v9552 = vlaneseq
    %v9553 = vshrl.u32 %v9552, 7
    %v9554 = vsub.s32 %v9551, %v9553
    %v9555 = vrot.slane %v9548, %v9554
    %v9556 = vcombine.low %v9248, %v9249
    %v9558 = vunpack.c.l.s4 1983009808
    %v9559 = vunpack.c.0.s8 %v9558
    %v9560 = vlaneseq
    %v9561 = vshrl.u32 %v9560, 7
    %v9562 = vsub.s32 %v9559, %v9561
    %v9563 = vrot.slane %v9556, %v9562
    %v9564 = vcombine.low %v9250, %v9251
    %v9566 = vunpack.c.l.s4 1983009808
    %v9567 = vunpack.c.0.s8 %v9566
    %v9568 = vlaneseq
    %v9569 = vshrl.u32 %v9568, 7
    %v9570 = vsub.s32 %v9567, %v9569
    %v9571 = vrot.slane %v9564, %v9570
    %v9573 = vunpack.c.l.s4 1983009808
    %v9574 = vunpack.c.0.s8 %v9573
    %v9575 = vlaneseq
    %v9576 = vshrl.u32 %v9575, 7
    %v9577 = vsub.s32 %v9574, %v9576
    %v9578 = vrot.slane %v9323, %v9577
    %v9580 = vunpack.c.l.s4 1983009808
    %v9581 = vunpack.c.0.s8 %v9580
    %v9582 = vlaneseq
    %v9583 = vshrl.u32 %v9582, 7
    %v9584 = vsub.s32 %v9581, %v9583
    %v9585 = vrot.slane %v9331, %v9584
    %v9587 = vunpack.c.l.s4 1983009808
    %v9588 = vunpack.c.0.s8 %v9587
    %v9589 = vlaneseq
    %v9590 = vshrl.u32 %v9589, 7
    %v9591 = vsub.s32 %v9588, %v9590
    %v9592 = vrot.slane %v9339, %v9591
    %v9594 = vunpack.c.l.s4 1983009808
    %v9595 = vunpack.c.0.s8 %v9594
    %v9596 = vlaneseq
    %v9597 = vshrl.u32 %v9596, 7
    %v9598 = vsub.s32 %v9595, %v9597
    %v9599 = vrot.slane %v9347, %v9598
    %v9601 = vunpack.c.l.s4 1983009808
    %v9602 = vunpack.c.0.s8 %v9601
    %v9603 = vlaneseq
    %v9604 = vshrl.u32 %v9603, 7
    %v9605 = vsub.s32 %v9602, %v9604
    %v9606 = vrot.slane %v9355, %v9605
    %v9608 = vunpack.c.l.s4 1983009808
    %v9609 = vunpack.c.0.s8 %v9608
    %v9610 = vlaneseq
    %v9611 = vshrl.u32 %v9610, 7
    %v9612 = vsub.s32 %v9609, %v9611
    %v9613 = vrot.slane %v9363, %v9612
    %v9615 = vunpack.c.l.s4 1983009808
    %v9616 = vunpack.c.0.s8 %v9615
    %v9617 = vlaneseq
    %v9618 = vshrl.u32 %v9617, 7
    %v9619 = vsub.s32 %v9616, %v9618
    %v9620 = vrot.slane %v9371, %v9619
    %v9622 = vunpack.c.l.s4 1983009808
    %v9623 = vunpack.c.0.s8 %v9622
    %v9624 = vlaneseq
    %v9625 = vshrl.u32 %v9624, 7
    %v9626 = vsub.s32 %v9623, %v9625
    %v9627 = vrot.slane %v9379, %v9626
    %v9629 = vunpack.c.l.s4 1983009808
    %v9630 = vunpack.c.0.s8 %v9629
    %v9631 = vlaneseq
    %v9632 = vshrl.u32 %v9631, 7
    %v9633 = vsub.s32 %v9630, %v9632
    %v9634 = vrot.slane %v9387, %v9633
    %v9636 = vunpack.c.l.s4 1983009808
    %v9637 = vunpack.c.0.s8 %v9636
    %v9638 = vlaneseq
    %v9639 = vshrl.u32 %v9638, 7
    %v9640 = vsub.s32 %v9637, %v9639
    %v9641 = vrot.slane %v9395, %v9640
    %v9643 = vunpack.c.l.s4 1983009808
    %v9644 = vunpack.c.0.s8 %v9643
    %v9645 = vlaneseq
    %v9646 = vshrl.u32 %v9645, 7
    %v9647 = vsub.s32 %v9644, %v9646
    %v9648 = vrot.slane %v9403, %v9647
    %v9650 = vunpack.c.l.s4 1983009808
    %v9651 = vunpack.c.0.s8 %v9650
    %v9652 = vlaneseq
    %v9653 = vshrl.u32 %v9652, 7
    %v9654 = vsub.s32 %v9651, %v9653
    %v9655 = vrot.slane %v9411, %v9654
    %v9657 = vunpack.c.l.s4 1983009808
    %v9658 = vunpack.c.0.s8 %v9657
    %v9659 = vlaneseq
    %v9660 = vshrl.u32 %v9659, 7
    %v9661 = vsub.s32 %v9658, %v9660
    %v9662 = vrot.slane %v9419, %v9661
    %v9664 = vunpack.c.l.s4 1983009808
    %v9665 = vunpack.c.0.s8 %v9664
    %v9666 = vlaneseq
    %v9667 = vshrl.u32 %v9666, 7
    %v9668 = vsub.s32 %v9665, %v9667
    %v9669 = vrot.slane %v9427, %v9668
    %v9671 = vunpack.c.l.s4 1983009808
    %v9672 = vunpack.c.0.s8 %v9671
    %v9673 = vlaneseq
    %v9674 = vshrl.u32 %v9673, 7
    %v9675 = vsub.s32 %v9672, %v9674
    %v9676 = vrot.slane %v9435, %v9675
    %v9678 = vunpack.c.l.s4 1983009808
    %v9679 = vunpack.c.0.s8 %v9678
    %v9680 = vlaneseq
    %v9681 = vshrl.u32 %v9680, 7
    %v9682 = vsub.s32 %v9679, %v9681
    %v9683 = vrot.slane %v9443, %v9682
    %v9685 = vunpack.c.l.s4 1983009808
    %v9686 = vunpack.c.0.s8 %v9685
    %v9687 = vlaneseq
    %v9688 = vshrl.u32 %v9687, 7
    %v9689 = vsub.s32 %v9686, %v9688
    %v9690 = vrot.slane %v9451, %v9689
    %v9692 = vunpack.c.l.s4 1983009808
    %v9693 = vunpack.c.0.s8 %v9692
    %v9694 = vlaneseq
    %v9695 = vshrl.u32 %v9694, 7
    %v9696 = vsub.s32 %v9693, %v9695
    %v9697 = vrot.slane %v9459, %v9696
    %v9699 = vunpack.c.l.s4 1983009808
    %v9700 = vunpack.c.0.s8 %v9699
    %v9701 = vlaneseq
    %v9702 = vshrl.u32 %v9701, 7
    %v9703 = vsub.s32 %v9700, %v9702
    %v9704 = vrot.slane %v9467, %v9703
    %v9706 = vunpack.c.l.s4 1983009808
    %v9707 = vunpack.c.0.s8 %v9706
    %v9708 = vlaneseq
    %v9709 = vshrl.u32 %v9708, 7
    %v9710 = vsub.s32 %v9707, %v9709
    %v9711 = vrot.slane %v9475, %v9710
    %v9713 = vunpack.c.l.s4 1983009808
    %v9714 = vunpack.c.0.s8 %v9713
    %v9715 = vlaneseq
    %v9716 = vshrl.u32 %v9715, 7
    %v9717 = vsub.s32 %v9714, %v9716
    %v9718 = vrot.slane %v9483, %v9717
    %v9720 = vunpack.c.l.s4 1983009808
    %v9721 = vunpack.c.0.s8 %v9720
    %v9722 = vlaneseq
    %v9723 = vshrl.u32 %v9722, 7
    %v9724 = vsub.s32 %v9721, %v9723
    %v9725 = vrot.slane %v9491, %v9724
    %v9727 = vunpack.c.l.s4 1983009808
    %v9728 = vunpack.c.0.s8 %v9727
    %v9729 = vlaneseq
    %v9730 = vshrl.u32 %v9729, 7
    %v9731 = vsub.s32 %v9728, %v9730
    %v9732 = vrot.slane %v9499, %v9731
    %v9734 = vunpack.c.l.s4 1983009808
    %v9735 = vunpack.c.0.s8 %v9734
    %v9736 = vlaneseq
    %v9737 = vshrl.u32 %v9736, 7
    %v9738 = vsub.s32 %v9735, %v9737
    %v9739 = vrot.slane %v9507, %v9738
    %v9741 = vunpack.c.l.s4 1983009808
    %v9742 = vunpack.c.0.s8 %v9741
    %v9743 = vlaneseq
    %v9744 = vshrl.u32 %v9743, 7
    %v9745 = vsub.s32 %v9742, %v9744
    %v9746 = vrot.slane %v9515, %v9745
    %v9748 = vunpack.c.l.s4 1983009808
    %v9749 = vunpack.c.0.s8 %v9748
    %v9750 = vlaneseq
    %v9751 = vshrl.u32 %v9750, 7
    %v9752 = vsub.s32 %v9749, %v9751
    %v9753 = vrot.slane %v9523, %v9752
    %v9755 = vunpack.c.l.s4 1983009808
    %v9756 = vunpack.c.0.s8 %v9755
    %v9757 = vlaneseq
    %v9758 = vshrl.u32 %v9757, 7
    %v9759 = vsub.s32 %v9756, %v9758
    %v9760 = vrot.slane %v9531, %v9759
    %v9762 = vunpack.c.l.s4 1983009808
    %v9763 = vunpack.c.0.s8 %v9762
    %v9764 = vlaneseq
    %v9765 = vshrl.u32 %v9764, 7
    %v9766 = vsub.s32 %v9763, %v9765
    %v9767 = vrot.slane %v9539, %v9766
    %v9769 = vunpack.c.l.s4 1983009808
    %v9770 = vunpack.c.0.s8 %v9769
    %v9771 = vlaneseq
    %v9772 = vshrl.u32 %v9771, 7
    %v9773 = vsub.s32 %v9770, %v9772
    %v9774 = vrot.slane %v9547, %v9773
    %v9776 = vunpack.c.l.s4 1983009808
    %v9777 = vunpack.c.0.s8 %v9776
    %v9778 = vlaneseq
    %v9779 = vshrl.u32 %v9778, 7
    %v9780 = vsub.s32 %v9777, %v9779
    %v9781 = vrot.slane %v9555, %v9780
    %v9783 = vunpack.c.l.s4 1983009808
    %v9784 = vunpack.c.0.s8 %v9783
    %v9785 = vlaneseq
    %v9786 = vshrl.u32 %v9785, 7
    %v9787 = vsub.s32 %v9784, %v9786
    %v9788 = vrot.slane %v9563, %v9787
    %v9790 = vunpack.c.l.s4 1983009808
    %v9791 = vunpack.c.0.s8 %v9790
    %v9792 = vlaneseq
    %v9793 = vshrl.u32 %v9792, 7
    %v9794 = vsub.s32 %v9791, %v9793
    %v9795 = vrot.slane %v9571, %v9794
    %v9796 = vunpack.c.l.b16 %v9578
    %v9797 = vunpack.c.h.b16 %v9578
    %v9798 = vunpack.c.l.b16 %v9585
    %v9799 = vunpack.c.h.b16 %v9585
    %v9800 = vunpack.c.l.b16 %v9592
    %v9801 = vunpack.c.h.b16 %v9592
    %v9802 = vunpack.c.l.b16 %v9599
    %v9803 = vunpack.c.h.b16 %v9599
    %v9804 = vunpack.c.l.b16 %v9606
    %v9805 = vunpack.c.h.b16 %v9606
    %v9806 = vunpack.c.l.b16 %v9613
    %v9807 = vunpack.c.h.b16 %v9613
    %v9808 = vunpack.c.l.b16 %v9620
    %v9809 = vunpack.c.h.b16 %v9620
    %v9810 = vunpack.c.l.b16 %v9627
    %v9811 = vunpack.c.h.b16 %v9627
    %v9812 = vunpack.c.l.b16 %v9634
    %v9813 = vunpack.c.h.b16 %v9634
    %v9814 = vunpack.c.l.b16 %v9641
    %v9815 = vunpack.c.h.b16 %v9641
    %v9816 = vunpack.c.l.b16 %v9648
    %v9817 = vunpack.c.h.b16 %v9648
    %v9818 = vunpack.c.l.b16 %v9655
    %v9819 = vunpack.c.h.b16 %v9655
    %v9820 = vunpack.c.l.b16 %v9662
    %v9821 = vunpack.c.h.b16 %v9662
    %v9822 = vunpack.c.l.b16 %v9669
    %v9823 = vunpack.c.h.b16 %v9669
    %v9824 = vunpack.c.l.b16 %v9676
    %v9825 = vunpack.c.h.b16 %v9676
    %v9826 = vunpack.c.l.b16 %v9683
    %v9827 = vunpack.c.h.b16 %v9683
    %v9828 = vunpack.c.l.b16 %v9690
    %v9829 = vunpack.c.h.b16 %v9690
    %v9830 = vunpack.c.l.b16 %v9697
    %v9831 = vunpack.c.h.b16 %v9697
    %v9832 = vunpack.c.l.b16 %v9704
    %v9833 = vunpack.c.h.b16 %v9704
    %v9834 = vunpack.c.l.b16 %v9711
    %v9835 = vunpack.c.h.b16 %v9711
    %v9836 = vunpack.c.l.b16 %v9718
    %v9837 = vunpack.c.h.b16 %v9718
    %v9838 = vunpack.c.l.b16 %v9725
    %v9839 = vunpack.c.h.b16 %v9725
    %v9840 = vunpack.c.l.b16 %v9732
    %v9841 = vunpack.c.h.b16 %v9732
    %v9842 = vunpack.c.l.b16 %v9739
    %v9843 = vunpack.c.h.b16 %v9739
    %v9844 = vunpack.c.l.b16 %v9746
    %v9845 = vunpack.c.h.b16 %v9746
    %v9846 = vunpack.c.l.b16 %v9753
    %v9847 = vunpack.c.h.b16 %v9753
    %v9848 = vunpack.c.l.b16 %v9760
    %v9849 = vunpack.c.h.b16 %v9760
    %v9850 = vunpack.c.l.b16 %v9767
    %v9851 = vunpack.c.h.b16 %v9767
    %v9852 = vunpack.c.l.b16 %v9774
    %v9853 = vunpack.c.h.b16 %v9774
    %v9854 = vunpack.c.l.b16 %v9781
    %v9855 = vunpack.c.h.b16 %v9781
    %v9856 = vunpack.c.l.b16 %v9788
    %v9857 = vunpack.c.h.b16 %v9788
    %v9858 = vunpack.c.l.b16 %v9795
    %v9859 = vunpack.c.h.b16 %v9795
    %v9860 = vrot.slane %v9798, 7
    %vm9861 = vcmask 1041409
    %v9862 = vsel %vm9861, %v9860, %v9796
    %v9863 = vrot.slane %v9800, 6
    %vm9864 = vcmask 1042434
    %v9865 = vsel %vm9864, %v9863, %v9862
    %v9866 = vrot.slane %v9802, 5
    %vm9867 = vcmask 1043459
    %v9868 = vsel %vm9867, %v9866, %v9865
    %v9869 = vrot.slane %v9799, 7
    %v9870 = vsel %vm9861, %v9869, %v9797
    %v9871 = vrot.slane %v9801, 6
    %v9872 = vsel %vm9864, %v9871, %v9870
    %v9873 = vrot.slane %v9803, 5
    %v9874 = vsel %vm9867, %v9873, %v9872
    %v9875 = vrot.slane %v9806, 7
    %v9876 = vsel %vm9861, %v9875, %v9804
    %v9877 = vrot.slane %v9808, 6
    %v9878 = vsel %vm9864, %v9877, %v9876
    %v9879 = vrot.slane %v9810, 5
    %v9880 = vsel %vm9867, %v9879, %v9878
    %v9881 = vrot.slane %v9807, 7
    %v9882 = vsel %vm9861, %v9881, %v9805
    %v9883 = vrot.slane %v9809, 6
    %v9884 = vsel %vm9864, %v9883, %v9882
    %v9885 = vrot.slane %v9811, 5
    %v9886 = vsel %vm9867, %v9885, %v9884
    %v9887 = vrot.slane %v9814, 7
    %v9888 = vsel %vm9861, %v9887, %v9812
    %v9889 = vrot.slane %v9816, 6
    %v9890 = vsel %vm9864, %v9889, %v9888
    %v9891 = vrot.slane %v9818, 5
    %v9892 = vsel %vm9867, %v9891, %v9890
    %v9893 = vrot.slane %v9815, 7
    %v9894 = vsel %vm9861, %v9893, %v9813
    %v9895 = vrot.slane %v9817, 6
    %v9896 = vsel %vm9864, %v9895, %v9894
    %v9897 = vrot.slane %v9819, 5
    %v9898 = vsel %vm9867, %v9897, %v9896
    %v9899 = vrot.slane %v9822, 7
    %v9900 = vsel %vm9861, %v9899, %v9820
    %v9901 = vrot.slane %v9824, 6
    %v9902 = vsel %vm9864, %v9901, %v9900
    %v9903 = vrot.slane %v9826, 5
    %v9904 = vsel %vm9867, %v9903, %v9902
    %v9905 = vrot.slane %v9823, 7
    %v9906 = vsel %vm9861, %v9905, %v9821
    %v9907 = vrot.slane %v9825, 6
    %v9908 = vsel %vm9864, %v9907, %v9906
    %v9909 = vrot.slane %v9827, 5
    %v9910 = vsel %vm9867, %v9909, %v9908
    %v9911 = vrot.slane %v9830, 7
    %v9912 = vsel %vm9861, %v9911, %v9828
    %v9913 = vrot.slane %v9832, 6
    %v9914 = vsel %vm9864, %v9913, %v9912
    %v9915 = vrot.slane %v9834, 5
    %v9916 = vsel %vm9867, %v9915, %v9914
    %v9917 = vrot.slane %v9831, 7
    %v9918 = vsel %vm9861, %v9917, %v9829
    %v9919 = vrot.slane %v9833, 6
    %v9920 = vsel %vm9864, %v9919, %v9918
    %v9921 = vrot.slane %v9835, 5
    %v9922 = vsel %vm9867, %v9921, %v9920
    %v9923 = vrot.slane %v9838, 7
    %v9924 = vsel %vm9861, %v9923, %v9836
    %v9925 = vrot.slane %v9840, 6
    %v9926 = vsel %vm9864, %v9925, %v9924
    %v9927 = vrot.slane %v9842, 5
    %v9928 = vsel %vm9867, %v9927, %v9926
    %v9929 = vrot.slane %v9839, 7
    %v9930 = vsel %vm9861, %v9929, %v9837
    %v9931 = vrot.slane %v9841, 6
    %v9932 = vsel %vm9864, %v9931, %v9930
    %v9933 = vrot.slane %v9843, 5
    %v9934 = vsel %vm9867, %v9933, %v9932
    %v9935 = vrot.slane %v9846, 7
    %v9936 = vsel %vm9861, %v9935, %v9844
    %v9937 = vrot.slane %v9848, 6
    %v9938 = vsel %vm9864, %v9937, %v9936
    %v9939 = vrot.slane %v9850, 5
    %v9940 = vsel %vm9867, %v9939, %v9938
    %v9941 = vrot.slane %v9847, 7
    %v9942 = vsel %vm9861, %v9941, %v9845
    %v9943 = vrot.slane %v9849, 6
    %v9944 = vsel %vm9864, %v9943, %v9942
    %v9945 = vrot.slane %v9851, 5
    %v9946 = vsel %vm9867, %v9945, %v9944
    %v9947 = vrot.slane %v9854, 7
    %v9948 = vsel %vm9861, %v9947, %v9852
    %v9949 = vrot.slane %v9856, 6
    %v9950 = vsel %vm9864, %v9949, %v9948
    %v9951 = vrot.slane %v9858, 5
    %v9952 = vsel %vm9867, %v9951, %v9950
    %v9953 = vrot.slane %v9855, 7
    %v9954 = vsel %vm9861, %v9953, %v9853
    %v9955 = vrot.slane %v9857, 6
    %v9956 = vsel %vm9864, %v9955, %v9954
    %v9957 = vrot.slane %v9859, 5
    %v9958 = vsel %vm9867, %v9957, %v9956
    %v9959 = vpack.c.b16 %v9874, %v9868
    %v9960 = vpack.c.b16 %v9886, %v9880
    %v9961 = vpack.c.b16 %v9898, %v9892
    %v9962 = vpack.c.b16 %v9910, %v9904
    %v9963 = vpack.c.b16 %v9922, %v9916
    %v9964 = vpack.c.b16 %v9934, %v9928
    %v9965 = vpack.c.b16 %v9946, %v9940
    %v9966 = vpack.c.b16 %v9958, %v9952
    %v9968 = vunpack.c.l.s4 1983009808
    %v9969 = vunpack.c.0.s8 %v9968
    %v9970 = vlaneseq
    %v9971 = vshrl.u32 %v9970, 7
    %v9972 = vsub.s32 %v9969, %v9971
    %v9973 = vrot.slane %v9959, %v9972
    %v9975 = vunpack.c.l.s4 1983009808
    %v9976 = vunpack.c.0.s8 %v9975
    %v9977 = vlaneseq
    %v9978 = vshrl.u32 %v9977, 7
    %v9979 = vsub.s32 %v9976, %v9978
    %v9980 = vrot.slane %v9960, %v9979
    %v9982 = vunpack.c.l.s4 1983009808
    %v9983 = vunpack.c.0.s8 %v9982
    %v9984 = vlaneseq
    %v9985 = vshrl.u32 %v9984, 7
    %v9986 = vsub.s32 %v9983, %v9985
    %v9987 = vrot.slane %v9961, %v9986
    %v9989 = vunpack.c.l.s4 1983009808
    %v9990 = vunpack.c.0.s8 %v9989
    %v9991 = vlaneseq
    %v9992 = vshrl.u32 %v9991, 7
    %v9993 = vsub.s32 %v9990, %v9992
    %v9994 = vrot.slane %v9962, %v9993
    %v9996 = vunpack.c.l.s4 1983009808
    %v9997 = vunpack.c.0.s8 %v9996
    %v9998 = vlaneseq
    %v9999 = vshrl.u32 %v9998, 7
    %v10000 = vsub.s32 %v9997, %v9999
    %v10001 = vrot.slane %v9963, %v10000
    %v10003 = vunpack.c.l.s4 1983009808
    %v10004 = vunpack.c.0.s8 %v10003
    %v10005 = vlaneseq
    %v10006 = vshrl.u32 %v10005, 7
    %v10007 = vsub.s32 %v10004, %v10006
    %v10008 = vrot.slane %v9964, %v10007
    %v10010 = vunpack.c.l.s4 1983009808
    %v10011 = vunpack.c.0.s8 %v10010
    %v10012 = vlaneseq
    %v10013 = vshrl.u32 %v10012, 7
    %v10014 = vsub.s32 %v10011, %v10013
    %v10015 = vrot.slane %v9965, %v10014
    %v10017 = vunpack.c.l.s4 1983009808
    %v10018 = vunpack.c.0.s8 %v10017
    %v10019 = vlaneseq
    %v10020 = vshrl.u32 %v10019, 7
    %v10021 = vsub.s32 %v10018, %v10020
    %v10022 = vrot.slane %v9966, %v10021
    %10031 = vst [vmem:[%s5] sm:$0xf] %v9973
    %10032 = vst [vmem:[%s5 + $0x4] sm:$0xf] %v9980
    %10033 = vst [vmem:[%s5 + $0x8] sm:$0xf] %v9987
    %10034 = vst [vmem:[%s5 + $0xc] sm:$0xf] %v9994
    %10035 = vst [vmem:[%s5 + $0x10] sm:$0xf] %v10001
    %10036 = vst [vmem:[%s5 + $0x14] sm:$0xf] %v10008
    %10037 = vst [vmem:[%s5 + $0x18] sm:$0xf] %v10015
    %10038 = vst [vmem:[%s5 + $0x1c] sm:$0xf] %v10022
    // Predicated region
    $region34: #{discriminator_forward.2} parent=1 // pred_check
      _
    $region35: #{discriminator_forward.2} parent=1 // pred_check_branch
      %10040 = sbr.rel (0) target = $region37
    $region36: #{discriminator_forward.2} parent=1 // pred_region
      _
    $region37: #{discriminator_forward.2} parent=1 // pred_fallthru
      _
    // Predicated region
    $region38: #{discriminator_forward.2} parent=1 // pred_check
      _
    $region39: #{discriminator_forward.2} parent=1 // pred_check_branch
      %10042 = sbr.rel (0) target = $region41
    $region40: #{discriminator_forward.2} parent=1 // pred_region
      _
    $region41: #{discriminator_forward.2} parent=1 // pred_fallthru
      _
    %10043 = vsyncpa [#allocation3], 1
    %10044 = vsyncpa [#allocation5], 1

</llo_original>
